<compile_context>
chip_gen: v7x
topology: tpu7x:2x2x1
jax: 0.10.0
libtpu: 0.0.40
codegen_flags: <defaults>
</compile_context>

<pallas_src>
import functools

import jax
import jax.numpy as jnp
import numpy as np
from jax import lax
from jax.experimental import pallas as pl
from jax.experimental.pallas import tpu as pltpu

K = 5  # kernel size of every Conv2d / ConvTranspose2d in BasicAutoencoder


# --------------------------------------------------------------------------
# in-kernel building blocks (all activations are channel-major (C, flat_pix))
# --------------------------------------------------------------------------
def _lane_mask(n, wc, valid_w):
    """(1, n) f32 mask: 1.0 where (flat_index % wc) < valid_w else 0.0."""
    q = lax.broadcasted_iota(jnp.int32, (1, n), 1)
    return (q % wc < valid_w).astype(jnp.float32)


def _conv_flat(x_cm, w_ref, b_ref, r_out, wc, *, sigmoid=False):
    """VALID 5x5 conv in carried-width flat, channel-major form.

    x_cm : (cin, r_in) f32 value; flat index p = image_row * wc + image_col.
    w_ref: (K*K, cout, cin) Ref, tap index = kh*K + kw.
    b_ref: (cout, 1) Ref.
    Returns (cout, r_out): out[:, p] = act(b + sum_{kh,kw} w[kh,kw] @ x[:, p+kh*wc+kw]).
    Only flat positions whose column stays inside the valid width are meaningful;
    a VALID conv only looks right/down, so garbage columns never contaminate
    valid ones.
    """
    partials = []
    for kw in range(K):                                  # fully unrolled (K=5)
        acc = None
        for kh in range(K):
            s = kh * wc + kw
            d = jnp.dot(w_ref[kh * K + kw], x_cm[:, s:s + r_out],
                        preferred_element_type=jnp.float32)
            acc = d if acc is None else acc + d
        partials.append(acc)
    # independent per-kw partial sums -> short reduction tree, not a 25-long chain
    y = ((partials[0] + partials[1]) + (partials[2] + partials[3])) + partials[4]
    y = jnp.maximum(y + b_ref[...], 0.0)                 # bias + ReLU(inplace=True)
    if sigmoid:
        y = jax.nn.sigmoid(y)                            # Sigmoid after ReLU (as in module)
    return y


# --------------------------------------------------------------------------
# fused kernels (one image per grid step)
# --------------------------------------------------------------------------
def _autoencoder_kernel(x_ref, w1, b1, w2, b2, w3, b3, w4, b4, o_ref, *, cfg):
    wc, lead, r0, r1, r2, r3, r4, rp1, rp2, w2v, w3v = cfg

    # input arrives channel-major (3, H*W); extend flat axis with zeros so every
    # tap slice of layer 1 stays in bounds.
    x_cm = x_ref[...].astype(jnp.float32)
    c_in, hw = x_cm.shape
    x0 = jnp.concatenate(
        [x_cm, jnp.zeros((c_in, r0 - hw), jnp.float32)], axis=1)        # (3, r0)

    # ---------------- encoder ----------------
    y1 = _conv_flat(x0, w1, b1, r1, wc)                                 # Conv(3->6)  + ReLU
    y2 = _conv_flat(y1, w2, b2, r2, wc)                                 # Conv(6->16) + ReLU

    # ---------------- decoder ----------------
    # ConvT(stride=1, pad=0) == VALID conv of the zero-padded input with the
    # flipped / in-out-swapped weight (weight re-layout done glue-side).
    # The padding is built value-side: garbage columns are masked to zero and a
    # zero frame is concatenated in flat form (no VMEM pad scratch needed).
    y2 = y2 * _lane_mask(r2, wc, w2v)
    xp1 = jnp.concatenate(
        [jnp.zeros((y2.shape[0], lead), jnp.float32), y2,
         jnp.zeros((y2.shape[0], rp1 - lead - r2), jnp.float32)], axis=1)  # (16, rp1)
    y3 = _conv_flat(xp1, w3, b3, r3, wc)                                # ConvT(16->6) + ReLU

    y3 = y3 * _lane_mask(r3, wc, w3v)
    xp2 = jnp.concatenate(
        [jnp.zeros((y3.shape[0], lead), jnp.float32), y3,
         jnp.zeros((y3.shape[0], rp2 - lead - r3), jnp.float32)], axis=1)  # (6, rp2)
    y4 = _conv_flat(xp2, w4, b4, r4, wc, sigmoid=True)                  # ConvT(6->3)+ReLU+Sigmoid

    o_ref[...] = y4                                      # (3, H*W): lane-dense NCHW-native store


def _encoder_kernel(x_ref, w1, b1, w2, b2, o_ref, *, cfg):
    """skip_decoding=True path: encoder only, emitted as (16, h2*w2) channel-major."""
    wc, r0, r1, r2, h2, w2v = cfg

    x_cm = x_ref[...].astype(jnp.float32)
    c_in, hw = x_cm.shape
    x0 = jnp.concatenate(
        [x_cm, jnp.zeros((c_in, r0 - hw), jnp.float32)], axis=1)

    y1 = _conv_flat(x0, w1, b1, r1, wc)
    y2 = _conv_flat(y1, w2, b2, r2, wc)                                 # (16, r2)

    # Compact the valid (h2, w2v) columns out of the carried-width grid with one
    # MXU dot against a 0/1 selection matrix (avoids lane reshapes / wrapper slices).
    nv = h2 * w2v
    src = lax.broadcasted_iota(jnp.int32, (r2, nv), 0)
    dst = lax.broadcasted_iota(jnp.int32, (r2, nv), 1)
    sel = (((dst // w2v) * wc + (dst % w2v)) == src).astype(jnp.float32)  # (r2, nv)
    o_ref[...] = jnp.dot(y2, sel, preferred_element_type=jnp.float32)     # (16, nv)


# --------------------------------------------------------------------------
# glue: weight re-layout (tiny, runs in XLA, fused under jit)
# --------------------------------------------------------------------------
def _conv_w_cm(w_oihw):
    """PyTorch Conv2d weight (Cout, Cin, K, K) -> (K*K, Cout, Cin)."""
    co, ci, k, _ = w_oihw.shape
    return jnp.transpose(w_oihw, (2, 3, 0, 1)).reshape(k * k, co, ci).astype(jnp.float32)


def _deconv_w_cm(w_iohw):
    """PyTorch ConvTranspose2d weight (Cin, Cout, K, K) -> equivalent-conv (K*K, Cout, Cin)."""
    ci, co, k, _ = w_iohw.shape
    w_flip = jnp.flip(w_iohw, axis=(2, 3))
    return jnp.transpose(w_flip, (2, 3, 1, 0)).reshape(k * k, co, ci).astype(jnp.float32)


def _full_spec(shape):
    nd = len(shape)
    return pl.BlockSpec(shape, lambda i, _nd=nd: (0,) * _nd)


# --------------------------------------------------------------------------
# forward wrapper (NCHW in/out, like the torch module)
# --------------------------------------------------------------------------
def basic_autoencoder_forward(x_nchw, params, skip_decoding=False):
    """Matches BasicAutoencoder.forward. x_nchw: (N, 3, H, W)."""
    n, cin, h, w = x_nchw.shape
    k1 = K - 1
    assert cin == params["enc1_w"].shape[1]
    assert h > 2 * k1 and w > 2 * k1, "image too small for two 5x5 VALID convs"

    hw = h * w
    wc = w                                   # carried flat width
    max_shift = k1 * wc + k1                 # largest tap offset in flat form
    h2, w2v = h - 2 * k1, w - 2 * k1         # enc2 output (valid)
    h3, w3v = h2 + k1, w2v + k1              # dec1 output (valid)
    h4 = h                                   # dec2 output (valid) == input size

    # flat row budgets: each layer's input must cover r_out + max_shift lanes
    r4 = h4 * wc
    r3 = h3 * wc
    r2 = h2 * wc
    r1 = r2 + max_shift
    r0 = r1 + max_shift
    rp1 = r3 + max_shift                     # dec1 padded input (flat)
    rp2 = r4 + max_shift                     # dec2 padded input (flat)
    lead = max_shift                         # 4 pad rows + 4 pad cols in flat form

    x_flat = x_nchw.reshape(n, cin, hw).astype(jnp.float32)   # free reshape, NCHW-native

    w1r = _conv_w_cm(params["enc1_w"])
    b1r = params["enc1_b"].reshape(-1, 1).astype(jnp.float32)
    w2r = _conv_w_cm(params["enc2_w"])
    b2r = params["enc2_b"].reshape(-1, 1).astype(jnp.float32)

    x_spec = pl.BlockSpec((None, cin, hw), lambda i: (i, 0, 0))
    cparams = pltpu.CompilerParams(dimension_semantics=("parallel",))
    # TODO(synk): for batch==1 on v7x, add a second "parallel" grid axis over
    # spatial row halves so both TensorCores stay busy.

    if skip_decoding:
        c2 = params["enc2_w"].shape[0]
        cfg = (wc, r0, r1, r2, h2, w2v)
        y = pl.pallas_call(
            functools.partial(_encoder_kernel, cfg=cfg),
            out_shape=jax.ShapeDtypeStruct((n, c2, h2 * w2v), jnp.float32),
            grid=(n,),
            in_specs=[x_spec,
                      _full_spec(w1r.shape), _full_spec(b1r.shape),
                      _full_spec(w2r.shape), _full_spec(b2r.shape)],
            out_specs=pl.BlockSpec((None, c2, h2 * w2v), lambda i: (i, 0, 0)),
            compiler_params=cparams,
        )(x_flat, w1r, b1r, w2r, b2r)
        return y.reshape(n, c2, h2, w2v)

    w3r = _deconv_w_cm(params["dec1_w"])
    b3r = params["dec1_b"].reshape(-1, 1).astype(jnp.float32)
    w4r = _deconv_w_cm(params["dec2_w"])
    b4r = params["dec2_b"].reshape(-1, 1).astype(jnp.float32)
    c4 = params["dec2_w"].shape[1]

    cfg = (wc, lead, r0, r1, r2, r3, r4, rp1, rp2, w2v, w3v)
    y = pl.pallas_call(
        functools.partial(_autoencoder_kernel, cfg=cfg),
        out_shape=jax.ShapeDtypeStruct((n, c4, hw), jnp.float32),
        grid=(n,),
        in_specs=[x_spec,
                  _full_spec(w1r.shape), _full_spec(b1r.shape),
                  _full_spec(w2r.shape), _full_spec(b2r.shape),
                  _full_spec(w3r.shape), _full_spec(b3r.shape),
                  _full_spec(w4r.shape), _full_spec(b4r.shape)],
        out_specs=pl.BlockSpec((None, c4, hw), lambda i: (i, 0, 0)),
        compiler_params=cparams,
    )(x_flat, w1r, b1r, w2r, b2r, w3r, b3r, w4r, b4r)
    return y.reshape(n, c4, h, w)


# --------------------------------------------------------------------------
# params + pure-JAX reference
# --------------------------------------------------------------------------
def init_params(key):
    """Deterministic PyTorch-default-like uniform init (synthetic weights)."""
    def uni(k, shape, fan_in):
        bound = 1.0 / float(np.sqrt(fan_in))
        return jax.random.uniform(k, shape, jnp.float32, -bound, bound)
    ks = jax.random.split(key, 8)
    return {
        # Conv2d weights: (Cout, Cin, K, K)
        "enc1_w": uni(ks[0], (6, 3, 5, 5), 3 * 25),
        "enc1_b": uni(ks[1], (6,), 3 * 25),
        "enc2_w": uni(ks[2], (16, 6, 5, 5), 6 * 25),
        "enc2_b": uni(ks[3], (16,), 6 * 25),
        # ConvTranspose2d weights: (Cin, Cout, K, K)
        "dec1_w": uni(ks[4], (16, 6, 5, 5), 6 * 25),
        "dec1_b": uni(ks[5], (6,), 6 * 25),
        "dec2_w": uni(ks[6], (6, 3, 5, 5), 3 * 25),
        "dec2_b": uni(ks[7], (3,), 3 * 25),
    }


def ref_forward(x_nchw, params, skip_decoding=False):
    """Pure-JAX reference (lax.conv_general_dilated) for correctness check."""
    dnums = ("NCHW", "OIHW", "NCHW")

    def conv(x, w, b):
        y = lax.conv_general_dilated(x, w, (1, 1), "VALID", dimension_numbers=dnums)
        return jax.nn.relu(y + b[None, :, None, None])

    def deconv(x, w, b, last=False):
        k = w.shape[2]
        w_eq = jnp.transpose(jnp.flip(w, axis=(2, 3)), (1, 0, 2, 3))
        y = lax.conv_general_dilated(x, w_eq, (1, 1),
                                     [(k - 1, k - 1), (k - 1, k - 1)],
                                     dimension_numbers=dnums)
        y = jax.nn.relu(y + b[None, :, None, None])
        return jax.nn.sigmoid(y) if last else y

    x = conv(x_nchw, params["enc1_w"], params["enc1_b"])
    x = conv(x, params["enc2_w"], params["enc2_b"])
    if not skip_decoding:
        x = deconv(x, params["dec1_w"], params["dec1_b"])
        x = deconv(x, params["dec2_w"], params["dec2_b"], last=True)
    return x


if __name__ == "__main__":
    key = jax.random.PRNGKey(0)
    pkey, xkey = jax.random.split(key)
    params = init_params(pkey)
    x = jax.random.uniform(xkey, (2, 3, 16, 16), jnp.float32)   # NCHW, like the torch module

    fwd = jax.jit(basic_autoencoder_forward, static_argnames=("skip_decoding",))

    # full forward (encoder + decoder)
    y = jax.block_until_ready(fwd(x, params))
    assert y.shape == (2, 3, 16, 16), y.shape
    y_ref = jax.block_until_ready(ref_forward(x, params))
    np.testing.assert_allclose(np.asarray(y), np.asarray(y_ref), rtol=1e-4, atol=1e-4)

    # skip_decoding=True path (encoder only)
    y_enc = jax.block_until_ready(fwd(x, params, skip_decoding=True))
    assert y_enc.shape == (2, 16, 8, 8), y_enc.shape
    y_enc_ref = jax.block_until_ready(ref_forward(x, params, skip_decoding=True))
    np.testing.assert_allclose(np.asarray(y_enc), np.asarray(y_enc_ref), rtol=1e-4, atol=1e-4)

    print("KERNEL_OK")
</pallas_src>

<mosaic_0001>
module attributes {stable_mosaic.version = 11 : i64} {
  func.func @_autoencoder_kernel(%arg0: i32, %arg1: memref<1x3x256xf32, #tpu.memory_space<vmem>>, %arg2: memref<25x6x3xf32, #tpu.memory_space<vmem>>, %arg3: memref<6x1xf32, #tpu.memory_space<vmem>>, %arg4: memref<25x16x6xf32, #tpu.memory_space<vmem>>, %arg5: memref<16x1xf32, #tpu.memory_space<vmem>>, %arg6: memref<25x6x16xf32, #tpu.memory_space<vmem>>, %arg7: memref<6x1xf32, #tpu.memory_space<vmem>>, %arg8: memref<25x3x6xf32, #tpu.memory_space<vmem>>, %arg9: memref<3x1xf32, #tpu.memory_space<vmem>>, %arg10: memref<1x3x256xf32, #tpu.memory_space<vmem>>) attributes {dimension_semantics = [#tpu.dimension_semantics<parallel>], iteration_bounds = array<i64: 2>, scalar_prefetch = 0 : i64, scratch_operands = 0 : i64, tpu.core_type = #tpu.core_type<tc>, window_params = [{transform_indices = @transform_0, window_bounds = array<i64: 1, 3, 256>}, {pipeline_mode = #tpu.pipeline_mode<synchronous>, transform_indices = @transform_1, window_bounds = array<i64: 25, 6, 3>}, {pipeline_mode = #tpu.pipeline_mode<synchronous>, transform_indices = @transform_2, window_bounds = array<i64: 6, 1>}, {pipeline_mode = #tpu.pipeline_mode<synchronous>, transform_indices = @transform_3, window_bounds = array<i64: 25, 16, 6>}, {pipeline_mode = #tpu.pipeline_mode<synchronous>, transform_indices = @transform_4, window_bounds = array<i64: 16, 1>}, {pipeline_mode = #tpu.pipeline_mode<synchronous>, transform_indices = @transform_5, window_bounds = array<i64: 25, 6, 16>}, {pipeline_mode = #tpu.pipeline_mode<synchronous>, transform_indices = @transform_6, window_bounds = array<i64: 6, 1>}, {pipeline_mode = #tpu.pipeline_mode<synchronous>, transform_indices = @transform_7, window_bounds = array<i64: 25, 3, 6>}, {pipeline_mode = #tpu.pipeline_mode<synchronous>, transform_indices = @transform_8, window_bounds = array<i64: 3, 1>}, {transform_indices = @transform_9, window_bounds = array<i64: 1, 3, 256>}]} {
    %c0 = arith.constant 0 : index
    %c0_0 = arith.constant 0 : index
    %c0_1 = arith.constant 0 : index
    %0 = vector.load %arg1[%c0, %c0_0, %c0_1] : memref<1x3x256xf32, #tpu.memory_space<vmem>>, vector<1x3x256xf32>
    %1 = vector.shape_cast %0 : vector<1x3x256xf32> to vector<3x256xf32>
    %cst = arith.constant 0.000000e+00 : f32
    %2 = vector.broadcast %cst : f32 to vector<3x8xf32>
    %3 = tpu.concatenate %1, %2 in 1 : vector<3x256xf32>, vector<3x8xf32> -> vector<3x264xf32>
    %c0_2 = arith.constant 0 : index
    %c0_3 = arith.constant 0 : index
    %c0_4 = arith.constant 0 : index
    %4 = vector.load %arg2[%c0_2, %c0_3, %c0_4] : memref<25x6x3xf32, #tpu.memory_space<vmem>>, vector<1x6x3xf32>
    %5 = vector.shape_cast %4 : vector<1x6x3xf32> to vector<6x3xf32>
    %6 = vector.extract_strided_slice %3 {offsets = [0, 0], sizes = [3, 196], strides = [1, 1]} : vector<3x264xf32> to vector<3x196xf32>
    %cst_5 = arith.constant dense<0.000000e+00> : vector<6x196xf32>
    %7 = tpu.matmul %5, %6, %cst_5 {dimension_numbers = #tpu.dot_dimension_numbers<[1], [0], [0], [1], [0, 0, 1, 1], [], []>} : vector<6x3xf32>, vector<3x196xf32>, vector<6x196xf32> -> vector<6x196xf32>
    %c5 = arith.constant 5 : index
    %c0_6 = arith.constant 0 : index
    %c0_7 = arith.constant 0 : index
    %8 = vector.load %arg2[%c5, %c0_6, %c0_7] : memref<25x6x3xf32, #tpu.memory_space<vmem>>, vector<1x6x3xf32>
    %9 = vector.shape_cast %8 : vector<1x6x3xf32> to vector<6x3xf32>
    %10 = vector.extract_strided_slice %3 {offsets = [0, 16], sizes = [3, 196], strides = [1, 1]} : vector<3x264xf32> to vector<3x196xf32>
    %cst_8 = arith.constant dense<0.000000e+00> : vector<6x196xf32>
    %11 = tpu.matmul %9, %10, %cst_8 {dimension_numbers = #tpu.dot_dimension_numbers<[1], [0], [0], [1], [0, 0, 1, 1], [], []>} : vector<6x3xf32>, vector<3x196xf32>, vector<6x196xf32> -> vector<6x196xf32>
    %12 = arith.addf %7, %11 : vector<6x196xf32>
    %c10 = arith.constant 10 : index
    %c0_9 = arith.constant 0 : index
    %c0_10 = arith.constant 0 : index
    %13 = vector.load %arg2[%c10, %c0_9, %c0_10] : memref<25x6x3xf32, #tpu.memory_space<vmem>>, vector<1x6x3xf32>
    %14 = vector.shape_cast %13 : vector<1x6x3xf32> to vector<6x3xf32>
    %15 = vector.extract_strided_slice %3 {offsets = [0, 32], sizes = [3, 196], strides = [1, 1]} : vector<3x264xf32> to vector<3x196xf32>
    %cst_11 = arith.constant dense<0.000000e+00> : vector<6x196xf32>
    %16 = tpu.matmul %14, %15, %cst_11 {dimension_numbers = #tpu.dot_dimension_numbers<[1], [0], [0], [1], [0, 0, 1, 1], [], []>} : vector<6x3xf32>, vector<3x196xf32>, vector<6x196xf32> -> vector<6x196xf32>
    %17 = arith.addf %12, %16 : vector<6x196xf32>
    %c15 = arith.constant 15 : index
    %c0_12 = arith.constant 0 : index
    %c0_13 = arith.constant 0 : index
    %18 = vector.load %arg2[%c15, %c0_12, %c0_13] : memref<25x6x3xf32, #tpu.memory_space<vmem>>, vector<1x6x3xf32>
    %19 = vector.shape_cast %18 : vector<1x6x3xf32> to vector<6x3xf32>
    %20 = vector.extract_strided_slice %3 {offsets = [0, 48], sizes = [3, 196], strides = [1, 1]} : vector<3x264xf32> to vector<3x196xf32>
    %cst_14 = arith.constant dense<0.000000e+00> : vector<6x196xf32>
    %21 = tpu.matmul %19, %20, %cst_14 {dimension_numbers = #tpu.dot_dimension_numbers<[1], [0], [0], [1], [0, 0, 1, 1], [], []>} : vector<6x3xf32>, vector<3x196xf32>, vector<6x196xf32> -> vector<6x196xf32>
    %22 = arith.addf %17, %21 : vector<6x196xf32>
    %c20 = arith.constant 20 : index
    %c0_15 = arith.constant 0 : index
    %c0_16 = arith.constant 0 : index
    %23 = vector.load %arg2[%c20, %c0_15, %c0_16] : memref<25x6x3xf32, #tpu.memory_space<vmem>>, vector<1x6x3xf32>
    %24 = vector.shape_cast %23 : vector<1x6x3xf32> to vector<6x3xf32>
    %25 = vector.extract_strided_slice %3 {offsets = [0, 64], sizes = [3, 196], strides = [1, 1]} : vector<3x264xf32> to vector<3x196xf32>
    %cst_17 = arith.constant dense<0.000000e+00> : vector<6x196xf32>
    %26 = tpu.matmul %24, %25, %cst_17 {dimension_numbers = #tpu.dot_dimension_numbers<[1], [0], [0], [1], [0, 0, 1, 1], [], []>} : vector<6x3xf32>, vector<3x196xf32>, vector<6x196xf32> -> vector<6x196xf32>
    %27 = arith.addf %22, %26 : vector<6x196xf32>
    %c1 = arith.constant 1 : index
    %c0_18 = arith.constant 0 : index
    %c0_19 = arith.constant 0 : index
    %28 = vector.load %arg2[%c1, %c0_18, %c0_19] : memref<25x6x3xf32, #tpu.memory_space<vmem>>, vector<1x6x3xf32>
    %29 = vector.shape_cast %28 : vector<1x6x3xf32> to vector<6x3xf32>
    %30 = vector.extract_strided_slice %3 {offsets = [0, 1], sizes = [3, 196], strides = [1, 1]} : vector<3x264xf32> to vector<3x196xf32>
    %cst_20 = arith.constant dense<0.000000e+00> : vector<6x196xf32>
    %31 = tpu.matmul %29, %30, %cst_20 {dimension_numbers = #tpu.dot_dimension_numbers<[1], [0], [0], [1], [0, 0, 1, 1], [], []>} : vector<6x3xf32>, vector<3x196xf32>, vector<6x196xf32> -> vector<6x196xf32>
    %c6 = arith.constant 6 : index
    %c0_21 = arith.constant 0 : index
    %c0_22 = arith.constant 0 : index
    %32 = vector.load %arg2[%c6, %c0_21, %c0_22] : memref<25x6x3xf32, #tpu.memory_space<vmem>>, vector<1x6x3xf32>
    %33 = vector.shape_cast %32 : vector<1x6x3xf32> to vector<6x3xf32>
    %34 = vector.extract_strided_slice %3 {offsets = [0, 17], sizes = [3, 196], strides = [1, 1]} : vector<3x264xf32> to vector<3x196xf32>
    %cst_23 = arith.constant dense<0.000000e+00> : vector<6x196xf32>
    %35 = tpu.matmul %33, %34, %cst_23 {dimension_numbers = #tpu.dot_dimension_numbers<[1], [0], [0], [1], [0, 0, 1, 1], [], []>} : vector<6x3xf32>, vector<3x196xf32>, vector<6x196xf32> -> vector<6x196xf32>
    %36 = arith.addf %31, %35 : vector<6x196xf32>
    %c11 = arith.constant 11 : index
    %c0_24 = arith.constant 0 : index
    %c0_25 = arith.constant 0 : index
    %37 = vector.load %arg2[%c11, %c0_24, %c0_25] : memref<25x6x3xf32, #tpu.memory_space<vmem>>, vector<1x6x3xf32>
    %38 = vector.shape_cast %37 : vector<1x6x3xf32> to vector<6x3xf32>
    %39 = vector.extract_strided_slice %3 {offsets = [0, 33], sizes = [3, 196], strides = [1, 1]} : vector<3x264xf32> to vector<3x196xf32>
    %cst_26 = arith.constant dense<0.000000e+00> : vector<6x196xf32>
    %40 = tpu.matmul %38, %39, %cst_26 {dimension_numbers = #tpu.dot_dimension_numbers<[1], [0], [0], [1], [0, 0, 1, 1], [], []>} : vector<6x3xf32>, vector<3x196xf32>, vector<6x196xf32> -> vector<6x196xf32>
    %41 = arith.addf %36, %40 : vector<6x196xf32>
    %c16 = arith.constant 16 : index
    %c0_27 = arith.constant 0 : index
    %c0_28 = arith.constant 0 : index
    %42 = vector.load %arg2[%c16, %c0_27, %c0_28] : memref<25x6x3xf32, #tpu.memory_space<vmem>>, vector<1x6x3xf32>
    %43 = vector.shape_cast %42 : vector<1x6x3xf32> to vector<6x3xf32>
    %44 = vector.extract_strided_slice %3 {offsets = [0, 49], sizes = [3, 196], strides = [1, 1]} : vector<3x264xf32> to vector<3x196xf32>
    %cst_29 = arith.constant dense<0.000000e+00> : vector<6x196xf32>
    %45 = tpu.matmul %43, %44, %cst_29 {dimension_numbers = #tpu.dot_dimension_numbers<[1], [0], [0], [1], [0, 0, 1, 1], [], []>} : vector<6x3xf32>, vector<3x196xf32>, vector<6x196xf32> -> vector<6x196xf32>
    %46 = arith.addf %41, %45 : vector<6x196xf32>
    %c21 = arith.constant 21 : index
    %c0_30 = arith.constant 0 : index
    %c0_31 = arith.constant 0 : index
    %47 = vector.load %arg2[%c21, %c0_30, %c0_31] : memref<25x6x3xf32, #tpu.memory_space<vmem>>, vector<1x6x3xf32>
    %48 = vector.shape_cast %47 : vector<1x6x3xf32> to vector<6x3xf32>
    %49 = vector.extract_strided_slice %3 {offsets = [0, 65], sizes = [3, 196], strides = [1, 1]} : vector<3x264xf32> to vector<3x196xf32>
    %cst_32 = arith.constant dense<0.000000e+00> : vector<6x196xf32>
    %50 = tpu.matmul %48, %49, %cst_32 {dimension_numbers = #tpu.dot_dimension_numbers<[1], [0], [0], [1], [0, 0, 1, 1], [], []>} : vector<6x3xf32>, vector<3x196xf32>, vector<6x196xf32> -> vector<6x196xf32>
    %51 = arith.addf %46, %50 : vector<6x196xf32>
    %c2 = arith.constant 2 : index
    %c0_33 = arith.constant 0 : index
    %c0_34 = arith.constant 0 : index
    %52 = vector.load %arg2[%c2, %c0_33, %c0_34] : memref<25x6x3xf32, #tpu.memory_space<vmem>>, vector<1x6x3xf32>
    %53 = vector.shape_cast %52 : vector<1x6x3xf32> to vector<6x3xf32>
    %54 = vector.extract_strided_slice %3 {offsets = [0, 2], sizes = [3, 196], strides = [1, 1]} : vector<3x264xf32> to vector<3x196xf32>
    %cst_35 = arith.constant dense<0.000000e+00> : vector<6x196xf32>
    %55 = tpu.matmul %53, %54, %cst_35 {dimension_numbers = #tpu.dot_dimension_numbers<[1], [0], [0], [1], [0, 0, 1, 1], [], []>} : vector<6x3xf32>, vector<3x196xf32>, vector<6x196xf32> -> vector<6x196xf32>
    %c7 = arith.constant 7 : index
    %c0_36 = arith.constant 0 : index
    %c0_37 = arith.constant 0 : index
    %56 = vector.load %arg2[%c7, %c0_36, %c0_37] : memref<25x6x3xf32, #tpu.memory_space<vmem>>, vector<1x6x3xf32>
    %57 = vector.shape_cast %56 : vector<1x6x3xf32> to vector<6x3xf32>
    %58 = vector.extract_strided_slice %3 {offsets = [0, 18], sizes = [3, 196], strides = [1, 1]} : vector<3x264xf32> to vector<3x196xf32>
    %cst_38 = arith.constant dense<0.000000e+00> : vector<6x196xf32>
    %59 = tpu.matmul %57, %58, %cst_38 {dimension_numbers = #tpu.dot_dimension_numbers<[1], [0], [0], [1], [0, 0, 1, 1], [], []>} : vector<6x3xf32>, vector<3x196xf32>, vector<6x196xf32> -> vector<6x196xf32>
    %60 = arith.addf %55, %59 : vector<6x196xf32>
    %c12 = arith.constant 12 : index
    %c0_39 = arith.constant 0 : index
    %c0_40 = arith.constant 0 : index
    %61 = vector.load %arg2[%c12, %c0_39, %c0_40] : memref<25x6x3xf32, #tpu.memory_space<vmem>>, vector<1x6x3xf32>
    %62 = vector.shape_cast %61 : vector<1x6x3xf32> to vector<6x3xf32>
    %63 = vector.extract_strided_slice %3 {offsets = [0, 34], sizes = [3, 196], strides = [1, 1]} : vector<3x264xf32> to vector<3x196xf32>
    %cst_41 = arith.constant dense<0.000000e+00> : vector<6x196xf32>
    %64 = tpu.matmul %62, %63, %cst_41 {dimension_numbers = #tpu.dot_dimension_numbers<[1], [0], [0], [1], [0, 0, 1, 1], [], []>} : vector<6x3xf32>, vector<3x196xf32>, vector<6x196xf32> -> vector<6x196xf32>
    %65 = arith.addf %60, %64 : vector<6x196xf32>
    %c17 = arith.constant 17 : index
    %c0_42 = arith.constant 0 : index
    %c0_43 = arith.constant 0 : index
    %66 = vector.load %arg2[%c17, %c0_42, %c0_43] : memref<25x6x3xf32, #tpu.memory_space<vmem>>, vector<1x6x3xf32>
    %67 = vector.shape_cast %66 : vector<1x6x3xf32> to vector<6x3xf32>
    %68 = vector.extract_strided_slice %3 {offsets = [0, 50], sizes = [3, 196], strides = [1, 1]} : vector<3x264xf32> to vector<3x196xf32>
    %cst_44 = arith.constant dense<0.000000e+00> : vector<6x196xf32>
    %69 = tpu.matmul %67, %68, %cst_44 {dimension_numbers = #tpu.dot_dimension_numbers<[1], [0], [0], [1], [0, 0, 1, 1], [], []>} : vector<6x3xf32>, vector<3x196xf32>, vector<6x196xf32> -> vector<6x196xf32>
    %70 = arith.addf %65, %69 : vector<6x196xf32>
    %c22 = arith.constant 22 : index
    %c0_45 = arith.constant 0 : index
    %c0_46 = arith.constant 0 : index
    %71 = vector.load %arg2[%c22, %c0_45, %c0_46] : memref<25x6x3xf32, #tpu.memory_space<vmem>>, vector<1x6x3xf32>
    %72 = vector.shape_cast %71 : vector<1x6x3xf32> to vector<6x3xf32>
    %73 = vector.extract_strided_slice %3 {offsets = [0, 66], sizes = [3, 196], strides = [1, 1]} : vector<3x264xf32> to vector<3x196xf32>
    %cst_47 = arith.constant dense<0.000000e+00> : vector<6x196xf32>
    %74 = tpu.matmul %72, %73, %cst_47 {dimension_numbers = #tpu.dot_dimension_numbers<[1], [0], [0], [1], [0, 0, 1, 1], [], []>} : vector<6x3xf32>, vector<3x196xf32>, vector<6x196xf32> -> vector<6x196xf32>
    %75 = arith.addf %70, %74 : vector<6x196xf32>
    %c3 = arith.constant 3 : index
    %c0_48 = arith.constant 0 : index
    %c0_49 = arith.constant 0 : index
    %76 = vector.load %arg2[%c3, %c0_48, %c0_49] : memref<25x6x3xf32, #tpu.memory_space<vmem>>, vector<1x6x3xf32>
    %77 = vector.shape_cast %76 : vector<1x6x3xf32> to vector<6x3xf32>
    %78 = vector.extract_strided_slice %3 {offsets = [0, 3], sizes = [3, 196], strides = [1, 1]} : vector<3x264xf32> to vector<3x196xf32>
    %cst_50 = arith.constant dense<0.000000e+00> : vector<6x196xf32>
    %79 = tpu.matmul %77, %78, %cst_50 {dimension_numbers = #tpu.dot_dimension_numbers<[1], [0], [0], [1], [0, 0, 1, 1], [], []>} : vector<6x3xf32>, vector<3x196xf32>, vector<6x196xf32> -> vector<6x196xf32>
    %c8 = arith.constant 8 : index
    %c0_51 = arith.constant 0 : index
    %c0_52 = arith.constant 0 : index
    %80 = vector.load %arg2[%c8, %c0_51, %c0_52] : memref<25x6x3xf32, #tpu.memory_space<vmem>>, vector<1x6x3xf32>
    %81 = vector.shape_cast %80 : vector<1x6x3xf32> to vector<6x3xf32>
    %82 = vector.extract_strided_slice %3 {offsets = [0, 19], sizes = [3, 196], strides = [1, 1]} : vector<3x264xf32> to vector<3x196xf32>
    %cst_53 = arith.constant dense<0.000000e+00> : vector<6x196xf32>
    %83 = tpu.matmul %81, %82, %cst_53 {dimension_numbers = #tpu.dot_dimension_numbers<[1], [0], [0], [1], [0, 0, 1, 1], [], []>} : vector<6x3xf32>, vector<3x196xf32>, vector<6x196xf32> -> vector<6x196xf32>
    %84 = arith.addf %79, %83 : vector<6x196xf32>
    %c13 = arith.constant 13 : index
    %c0_54 = arith.constant 0 : index
    %c0_55 = arith.constant 0 : index
    %85 = vector.load %arg2[%c13, %c0_54, %c0_55] : memref<25x6x3xf32, #tpu.memory_space<vmem>>, vector<1x6x3xf32>
    %86 = vector.shape_cast %85 : vector<1x6x3xf32> to vector<6x3xf32>
    %87 = vector.extract_strided_slice %3 {offsets = [0, 35], sizes = [3, 196], strides = [1, 1]} : vector<3x264xf32> to vector<3x196xf32>
    %cst_56 = arith.constant dense<0.000000e+00> : vector<6x196xf32>
    %88 = tpu.matmul %86, %87, %cst_56 {dimension_numbers = #tpu.dot_dimension_numbers<[1], [0], [0], [1], [0, 0, 1, 1], [], []>} : vector<6x3xf32>, vector<3x196xf32>, vector<6x196xf32> -> vector<6x196xf32>
    %89 = arith.addf %84, %88 : vector<6x196xf32>
    %c18 = arith.constant 18 : index
    %c0_57 = arith.constant 0 : index
    %c0_58 = arith.constant 0 : index
    %90 = vector.load %arg2[%c18, %c0_57, %c0_58] : memref<25x6x3xf32, #tpu.memory_space<vmem>>, vector<1x6x3xf32>
    %91 = vector.shape_cast %90 : vector<1x6x3xf32> to vector<6x3xf32>
    %92 = vector.extract_strided_slice %3 {offsets = [0, 51], sizes = [3, 196], strides = [1, 1]} : vector<3x264xf32> to vector<3x196xf32>
    %cst_59 = arith.constant dense<0.000000e+00> : vector<6x196xf32>
    %93 = tpu.matmul %91, %92, %cst_59 {dimension_numbers = #tpu.dot_dimension_numbers<[1], [0], [0], [1], [0, 0, 1, 1], [], []>} : vector<6x3xf32>, vector<3x196xf32>, vector<6x196xf32> -> vector<6x196xf32>
    %94 = arith.addf %89, %93 : vector<6x196xf32>
    %c23 = arith.constant 23 : index
    %c0_60 = arith.constant 0 : index
    %c0_61 = arith.constant 0 : index
    %95 = vector.load %arg2[%c23, %c0_60, %c0_61] : memref<25x6x3xf32, #tpu.memory_space<vmem>>, vector<1x6x3xf32>
    %96 = vector.shape_cast %95 : vector<1x6x3xf32> to vector<6x3xf32>
    %97 = vector.extract_strided_slice %3 {offsets = [0, 67], sizes = [3, 196], strides = [1, 1]} : vector<3x264xf32> to vector<3x196xf32>
    %cst_62 = arith.constant dense<0.000000e+00> : vector<6x196xf32>
    %98 = tpu.matmul %96, %97, %cst_62 {dimension_numbers = #tpu.dot_dimension_numbers<[1], [0], [0], [1], [0, 0, 1, 1], [], []>} : vector<6x3xf32>, vector<3x196xf32>, vector<6x196xf32> -> vector<6x196xf32>
    %99 = arith.addf %94, %98 : vector<6x196xf32>
    %c4 = arith.constant 4 : index
    %c0_63 = arith.constant 0 : index
    %c0_64 = arith.constant 0 : index
    %100 = vector.load %arg2[%c4, %c0_63, %c0_64] : memref<25x6x3xf32, #tpu.memory_space<vmem>>, vector<1x6x3xf32>
    %101 = vector.shape_cast %100 : vector<1x6x3xf32> to vector<6x3xf32>
    %102 = vector.extract_strided_slice %3 {offsets = [0, 4], sizes = [3, 196], strides = [1, 1]} : vector<3x264xf32> to vector<3x196xf32>
    %cst_65 = arith.constant dense<0.000000e+00> : vector<6x196xf32>
    %103 = tpu.matmul %101, %102, %cst_65 {dimension_numbers = #tpu.dot_dimension_numbers<[1], [0], [0], [1], [0, 0, 1, 1], [], []>} : vector<6x3xf32>, vector<3x196xf32>, vector<6x196xf32> -> vector<6x196xf32>
    %c9 = arith.constant 9 : index
    %c0_66 = arith.constant 0 : index
    %c0_67 = arith.constant 0 : index
    %104 = vector.load %arg2[%c9, %c0_66, %c0_67] : memref<25x6x3xf32, #tpu.memory_space<vmem>>, vector<1x6x3xf32>
    %105 = vector.shape_cast %104 : vector<1x6x3xf32> to vector<6x3xf32>
    %106 = vector.extract_strided_slice %3 {offsets = [0, 20], sizes = [3, 196], strides = [1, 1]} : vector<3x264xf32> to vector<3x196xf32>
    %cst_68 = arith.constant dense<0.000000e+00> : vector<6x196xf32>
    %107 = tpu.matmul %105, %106, %cst_68 {dimension_numbers = #tpu.dot_dimension_numbers<[1], [0], [0], [1], [0, 0, 1, 1], [], []>} : vector<6x3xf32>, vector<3x196xf32>, vector<6x196xf32> -> vector<6x196xf32>
    %108 = arith.addf %103, %107 : vector<6x196xf32>
    %c14 = arith.constant 14 : index
    %c0_69 = arith.constant 0 : index
    %c0_70 = arith.constant 0 : index
    %109 = vector.load %arg2[%c14, %c0_69, %c0_70] : memref<25x6x3xf32, #tpu.memory_space<vmem>>, vector<1x6x3xf32>
    %110 = vector.shape_cast %109 : vector<1x6x3xf32> to vector<6x3xf32>
    %111 = vector.extract_strided_slice %3 {offsets = [0, 36], sizes = [3, 196], strides = [1, 1]} : vector<3x264xf32> to vector<3x196xf32>
    %cst_71 = arith.constant dense<0.000000e+00> : vector<6x196xf32>
    %112 = tpu.matmul %110, %111, %cst_71 {dimension_numbers = #tpu.dot_dimension_numbers<[1], [0], [0], [1], [0, 0, 1, 1], [], []>} : vector<6x3xf32>, vector<3x196xf32>, vector<6x196xf32> -> vector<6x196xf32>
    %113 = arith.addf %108, %112 : vector<6x196xf32>
    %c19 = arith.constant 19 : index
    %c0_72 = arith.constant 0 : index
    %c0_73 = arith.constant 0 : index
    %114 = vector.load %arg2[%c19, %c0_72, %c0_73] : memref<25x6x3xf32, #tpu.memory_space<vmem>>, vector<1x6x3xf32>
    %115 = vector.shape_cast %114 : vector<1x6x3xf32> to vector<6x3xf32>
    %116 = vector.extract_strided_slice %3 {offsets = [0, 52], sizes = [3, 196], strides = [1, 1]} : vector<3x264xf32> to vector<3x196xf32>
    %cst_74 = arith.constant dense<0.000000e+00> : vector<6x196xf32>
    %117 = tpu.matmul %115, %116, %cst_74 {dimension_numbers = #tpu.dot_dimension_numbers<[1], [0], [0], [1], [0, 0, 1, 1], [], []>} : vector<6x3xf32>, vector<3x196xf32>, vector<6x196xf32> -> vector<6x196xf32>
    %118 = arith.addf %113, %117 : vector<6x196xf32>
    %c24 = arith.constant 24 : index
    %c0_75 = arith.constant 0 : index
    %c0_76 = arith.constant 0 : index
    %119 = vector.load %arg2[%c24, %c0_75, %c0_76] : memref<25x6x3xf32, #tpu.memory_space<vmem>>, vector<1x6x3xf32>
    %120 = vector.shape_cast %119 : vector<1x6x3xf32> to vector<6x3xf32>
    %121 = vector.extract_strided_slice %3 {offsets = [0, 68], sizes = [3, 196], strides = [1, 1]} : vector<3x264xf32> to vector<3x196xf32>
    %cst_77 = arith.constant dense<0.000000e+00> : vector<6x196xf32>
    %122 = tpu.matmul %120, %121, %cst_77 {dimension_numbers = #tpu.dot_dimension_numbers<[1], [0], [0], [1], [0, 0, 1, 1], [], []>} : vector<6x3xf32>, vector<3x196xf32>, vector<6x196xf32> -> vector<6x196xf32>
    %123 = arith.addf %118, %122 : vector<6x196xf32>
    %124 = arith.addf %27, %51 : vector<6x196xf32>
    %125 = arith.addf %75, %99 : vector<6x196xf32>
    %126 = arith.addf %124, %125 : vector<6x196xf32>
    %127 = arith.addf %126, %123 : vector<6x196xf32>
    %c0_78 = arith.constant 0 : index
    %c0_79 = arith.constant 0 : index
    %128 = vector.load %arg3[%c0_78, %c0_79] : memref<6x1xf32, #tpu.memory_space<vmem>>, vector<6x1xf32>
    %129 = vector.broadcast %128 : vector<6x1xf32> to vector<6x196xf32>
    %130 = arith.addf %127, %129 : vector<6x196xf32>
    %cst_80 = arith.constant 0.000000e+00 : f32
    %131 = vector.broadcast %cst_80 : f32 to vector<6x196xf32>
    %132 = arith.maximumf %130, %131 : vector<6x196xf32>
    %c0_81 = arith.constant 0 : index
    %c0_82 = arith.constant 0 : index
    %c0_83 = arith.constant 0 : index
    %133 = vector.load %arg4[%c0_81, %c0_82, %c0_83] : memref<25x16x6xf32, #tpu.memory_space<vmem>>, vector<1x16x6xf32>
    %134 = vector.shape_cast %133 : vector<1x16x6xf32> to vector<16x6xf32>
    %135 = vector.extract_strided_slice %132 {offsets = [0, 0], sizes = [6, 128], strides = [1, 1]} : vector<6x196xf32> to vector<6x128xf32>
    %cst_84 = arith.constant dense<0.000000e+00> : vector<16x128xf32>
    %136 = tpu.matmul %134, %135, %cst_84 {dimension_numbers = #tpu.dot_dimension_numbers<[1], [0], [0], [1], [0, 0, 1, 1], [], []>} : vector<16x6xf32>, vector<6x128xf32>, vector<16x128xf32> -> vector<16x128xf32>
    %c5_85 = arith.constant 5 : index
    %c0_86 = arith.constant 0 : index
    %c0_87 = arith.constant 0 : index
    %137 = vector.load %arg4[%c5_85, %c0_86, %c0_87] : memref<25x16x6xf32, #tpu.memory_space<vmem>>, vector<1x16x6xf32>
    %138 = vector.shape_cast %137 : vector<1x16x6xf32> to vector<16x6xf32>
    %139 = vector.extract_strided_slice %132 {offsets = [0, 16], sizes = [6, 128], strides = [1, 1]} : vector<6x196xf32> to vector<6x128xf32>
    %cst_88 = arith.constant dense<0.000000e+00> : vector<16x128xf32>
    %140 = tpu.matmul %138, %139, %cst_88 {dimension_numbers = #tpu.dot_dimension_numbers<[1], [0], [0], [1], [0, 0, 1, 1], [], []>} : vector<16x6xf32>, vector<6x128xf32>, vector<16x128xf32> -> vector<16x128xf32>
    %141 = arith.addf %136, %140 : vector<16x128xf32>
    %c10_89 = arith.constant 10 : index
    %c0_90 = arith.constant 0 : index
    %c0_91 = arith.constant 0 : index
    %142 = vector.load %arg4[%c10_89, %c0_90, %c0_91] : memref<25x16x6xf32, #tpu.memory_space<vmem>>, vector<1x16x6xf32>
    %143 = vector.shape_cast %142 : vector<1x16x6xf32> to vector<16x6xf32>
    %144 = vector.extract_strided_slice %132 {offsets = [0, 32], sizes = [6, 128], strides = [1, 1]} : vector<6x196xf32> to vector<6x128xf32>
    %cst_92 = arith.constant dense<0.000000e+00> : vector<16x128xf32>
    %145 = tpu.matmul %143, %144, %cst_92 {dimension_numbers = #tpu.dot_dimension_numbers<[1], [0], [0], [1], [0, 0, 1, 1], [], []>} : vector<16x6xf32>, vector<6x128xf32>, vector<16x128xf32> -> vector<16x128xf32>
    %146 = arith.addf %141, %145 : vector<16x128xf32>
    %c15_93 = arith.constant 15 : index
    %c0_94 = arith.constant 0 : index
    %c0_95 = arith.constant 0 : index
    %147 = vector.load %arg4[%c15_93, %c0_94, %c0_95] : memref<25x16x6xf32, #tpu.memory_space<vmem>>, vector<1x16x6xf32>
    %148 = vector.shape_cast %147 : vector<1x16x6xf32> to vector<16x6xf32>
    %149 = vector.extract_strided_slice %132 {offsets = [0, 48], sizes = [6, 128], strides = [1, 1]} : vector<6x196xf32> to vector<6x128xf32>
    %cst_96 = arith.constant dense<0.000000e+00> : vector<16x128xf32>
    %150 = tpu.matmul %148, %149, %cst_96 {dimension_numbers = #tpu.dot_dimension_numbers<[1], [0], [0], [1], [0, 0, 1, 1], [], []>} : vector<16x6xf32>, vector<6x128xf32>, vector<16x128xf32> -> vector<16x128xf32>
    %151 = arith.addf %146, %150 : vector<16x128xf32>
    %c20_97 = arith.constant 20 : index
    %c0_98 = arith.constant 0 : index
    %c0_99 = arith.constant 0 : index
    %152 = vector.load %arg4[%c20_97, %c0_98, %c0_99] : memref<25x16x6xf32, #tpu.memory_space<vmem>>, vector<1x16x6xf32>
    %153 = vector.shape_cast %152 : vector<1x16x6xf32> to vector<16x6xf32>
    %154 = vector.extract_strided_slice %132 {offsets = [0, 64], sizes = [6, 128], strides = [1, 1]} : vector<6x196xf32> to vector<6x128xf32>
    %cst_100 = arith.constant dense<0.000000e+00> : vector<16x128xf32>
    %155 = tpu.matmul %153, %154, %cst_100 {dimension_numbers = #tpu.dot_dimension_numbers<[1], [0], [0], [1], [0, 0, 1, 1], [], []>} : vector<16x6xf32>, vector<6x128xf32>, vector<16x128xf32> -> vector<16x128xf32>
    %156 = arith.addf %151, %155 : vector<16x128xf32>
    %c1_101 = arith.constant 1 : index
    %c0_102 = arith.constant 0 : index
    %c0_103 = arith.constant 0 : index
    %157 = vector.load %arg4[%c1_101, %c0_102, %c0_103] : memref<25x16x6xf32, #tpu.memory_space<vmem>>, vector<1x16x6xf32>
    %158 = vector.shape_cast %157 : vector<1x16x6xf32> to vector<16x6xf32>
    %159 = vector.extract_strided_slice %132 {offsets = [0, 1], sizes = [6, 128], strides = [1, 1]} : vector<6x196xf32> to vector<6x128xf32>
    %cst_104 = arith.constant dense<0.000000e+00> : vector<16x128xf32>
    %160 = tpu.matmul %158, %159, %cst_104 {dimension_numbers = #tpu.dot_dimension_numbers<[1], [0], [0], [1], [0, 0, 1, 1], [], []>} : vector<16x6xf32>, vector<6x128xf32>, vector<16x128xf32> -> vector<16x128xf32>
    %c6_105 = arith.constant 6 : index
    %c0_106 = arith.constant 0 : index
    %c0_107 = arith.constant 0 : index
    %161 = vector.load %arg4[%c6_105, %c0_106, %c0_107] : memref<25x16x6xf32, #tpu.memory_space<vmem>>, vector<1x16x6xf32>
    %162 = vector.shape_cast %161 : vector<1x16x6xf32> to vector<16x6xf32>
    %163 = vector.extract_strided_slice %132 {offsets = [0, 17], sizes = [6, 128], strides = [1, 1]} : vector<6x196xf32> to vector<6x128xf32>
    %cst_108 = arith.constant dense<0.000000e+00> : vector<16x128xf32>
    %164 = tpu.matmul %162, %163, %cst_108 {dimension_numbers = #tpu.dot_dimension_numbers<[1], [0], [0], [1], [0, 0, 1, 1], [], []>} : vector<16x6xf32>, vector<6x128xf32>, vector<16x128xf32> -> vector<16x128xf32>
    %165 = arith.addf %160, %164 : vector<16x128xf32>
    %c11_109 = arith.constant 11 : index
    %c0_110 = arith.constant 0 : index
    %c0_111 = arith.constant 0 : index
    %166 = vector.load %arg4[%c11_109, %c0_110, %c0_111] : memref<25x16x6xf32, #tpu.memory_space<vmem>>, vector<1x16x6xf32>
    %167 = vector.shape_cast %166 : vector<1x16x6xf32> to vector<16x6xf32>
    %168 = vector.extract_strided_slice %132 {offsets = [0, 33], sizes = [6, 128], strides = [1, 1]} : vector<6x196xf32> to vector<6x128xf32>
    %cst_112 = arith.constant dense<0.000000e+00> : vector<16x128xf32>
    %169 = tpu.matmul %167, %168, %cst_112 {dimension_numbers = #tpu.dot_dimension_numbers<[1], [0], [0], [1], [0, 0, 1, 1], [], []>} : vector<16x6xf32>, vector<6x128xf32>, vector<16x128xf32> -> vector<16x128xf32>
    %170 = arith.addf %165, %169 : vector<16x128xf32>
    %c16_113 = arith.constant 16 : index
    %c0_114 = arith.constant 0 : index
    %c0_115 = arith.constant 0 : index
    %171 = vector.load %arg4[%c16_113, %c0_114, %c0_115] : memref<25x16x6xf32, #tpu.memory_space<vmem>>, vector<1x16x6xf32>
    %172 = vector.shape_cast %171 : vector<1x16x6xf32> to vector<16x6xf32>
    %173 = vector.extract_strided_slice %132 {offsets = [0, 49], sizes = [6, 128], strides = [1, 1]} : vector<6x196xf32> to vector<6x128xf32>
    %cst_116 = arith.constant dense<0.000000e+00> : vector<16x128xf32>
    %174 = tpu.matmul %172, %173, %cst_116 {dimension_numbers = #tpu.dot_dimension_numbers<[1], [0], [0], [1], [0, 0, 1, 1], [], []>} : vector<16x6xf32>, vector<6x128xf32>, vector<16x128xf32> -> vector<16x128xf32>
    %175 = arith.addf %170, %174 : vector<16x128xf32>
    %c21_117 = arith.constant 21 : index
    %c0_118 = arith.constant 0 : index
    %c0_119 = arith.constant 0 : index
    %176 = vector.load %arg4[%c21_117, %c0_118, %c0_119] : memref<25x16x6xf32, #tpu.memory_space<vmem>>, vector<1x16x6xf32>
    %177 = vector.shape_cast %176 : vector<1x16x6xf32> to vector<16x6xf32>
    %178 = vector.extract_strided_slice %132 {offsets = [0, 65], sizes = [6, 128], strides = [1, 1]} : vector<6x196xf32> to vector<6x128xf32>
    %cst_120 = arith.constant dense<0.000000e+00> : vector<16x128xf32>
    %179 = tpu.matmul %177, %178, %cst_120 {dimension_numbers = #tpu.dot_dimension_numbers<[1], [0], [0], [1], [0, 0, 1, 1], [], []>} : vector<16x6xf32>, vector<6x128xf32>, vector<16x128xf32> -> vector<16x128xf32>
    %180 = arith.addf %175, %179 : vector<16x128xf32>
    %c2_121 = arith.constant 2 : index
    %c0_122 = arith.constant 0 : index
    %c0_123 = arith.constant 0 : index
    %181 = vector.load %arg4[%c2_121, %c0_122, %c0_123] : memref<25x16x6xf32, #tpu.memory_space<vmem>>, vector<1x16x6xf32>
    %182 = vector.shape_cast %181 : vector<1x16x6xf32> to vector<16x6xf32>
    %183 = vector.extract_strided_slice %132 {offsets = [0, 2], sizes = [6, 128], strides = [1, 1]} : vector<6x196xf32> to vector<6x128xf32>
    %cst_124 = arith.constant dense<0.000000e+00> : vector<16x128xf32>
    %184 = tpu.matmul %182, %183, %cst_124 {dimension_numbers = #tpu.dot_dimension_numbers<[1], [0], [0], [1], [0, 0, 1, 1], [], []>} : vector<16x6xf32>, vector<6x128xf32>, vector<16x128xf32> -> vector<16x128xf32>
    %c7_125 = arith.constant 7 : index
    %c0_126 = arith.constant 0 : index
    %c0_127 = arith.constant 0 : index
    %185 = vector.load %arg4[%c7_125, %c0_126, %c0_127] : memref<25x16x6xf32, #tpu.memory_space<vmem>>, vector<1x16x6xf32>
    %186 = vector.shape_cast %185 : vector<1x16x6xf32> to vector<16x6xf32>
    %187 = vector.extract_strided_slice %132 {offsets = [0, 18], sizes = [6, 128], strides = [1, 1]} : vector<6x196xf32> to vector<6x128xf32>
    %cst_128 = arith.constant dense<0.000000e+00> : vector<16x128xf32>
    %188 = tpu.matmul %186, %187, %cst_128 {dimension_numbers = #tpu.dot_dimension_numbers<[1], [0], [0], [1], [0, 0, 1, 1], [], []>} : vector<16x6xf32>, vector<6x128xf32>, vector<16x128xf32> -> vector<16x128xf32>
    %189 = arith.addf %184, %188 : vector<16x128xf32>
    %c12_129 = arith.constant 12 : index
    %c0_130 = arith.constant 0 : index
    %c0_131 = arith.constant 0 : index
    %190 = vector.load %arg4[%c12_129, %c0_130, %c0_131] : memref<25x16x6xf32, #tpu.memory_space<vmem>>, vector<1x16x6xf32>
    %191 = vector.shape_cast %190 : vector<1x16x6xf32> to vector<16x6xf32>
    %192 = vector.extract_strided_slice %132 {offsets = [0, 34], sizes = [6, 128], strides = [1, 1]} : vector<6x196xf32> to vector<6x128xf32>
    %cst_132 = arith.constant dense<0.000000e+00> : vector<16x128xf32>
    %193 = tpu.matmul %191, %192, %cst_132 {dimension_numbers = #tpu.dot_dimension_numbers<[1], [0], [0], [1], [0, 0, 1, 1], [], []>} : vector<16x6xf32>, vector<6x128xf32>, vector<16x128xf32> -> vector<16x128xf32>
    %194 = arith.addf %189, %193 : vector<16x128xf32>
    %c17_133 = arith.constant 17 : index
    %c0_134 = arith.constant 0 : index
    %c0_135 = arith.constant 0 : index
    %195 = vector.load %arg4[%c17_133, %c0_134, %c0_135] : memref<25x16x6xf32, #tpu.memory_space<vmem>>, vector<1x16x6xf32>
    %196 = vector.shape_cast %195 : vector<1x16x6xf32> to vector<16x6xf32>
    %197 = vector.extract_strided_slice %132 {offsets = [0, 50], sizes = [6, 128], strides = [1, 1]} : vector<6x196xf32> to vector<6x128xf32>
    %cst_136 = arith.constant dense<0.000000e+00> : vector<16x128xf32>
    %198 = tpu.matmul %196, %197, %cst_136 {dimension_numbers = #tpu.dot_dimension_numbers<[1], [0], [0], [1], [0, 0, 1, 1], [], []>} : vector<16x6xf32>, vector<6x128xf32>, vector<16x128xf32> -> vector<16x128xf32>
    %199 = arith.addf %194, %198 : vector<16x128xf32>
    %c22_137 = arith.constant 22 : index
    %c0_138 = arith.constant 0 : index
    %c0_139 = arith.constant 0 : index
    %200 = vector.load %arg4[%c22_137, %c0_138, %c0_139] : memref<25x16x6xf32, #tpu.memory_space<vmem>>, vector<1x16x6xf32>
    %201 = vector.shape_cast %200 : vector<1x16x6xf32> to vector<16x6xf32>
    %202 = vector.extract_strided_slice %132 {offsets = [0, 66], sizes = [6, 128], strides = [1, 1]} : vector<6x196xf32> to vector<6x128xf32>
    %cst_140 = arith.constant dense<0.000000e+00> : vector<16x128xf32>
    %203 = tpu.matmul %201, %202, %cst_140 {dimension_numbers = #tpu.dot_dimension_numbers<[1], [0], [0], [1], [0, 0, 1, 1], [], []>} : vector<16x6xf32>, vector<6x128xf32>, vector<16x128xf32> -> vector<16x128xf32>
    %204 = arith.addf %199, %203 : vector<16x128xf32>
    %c3_141 = arith.constant 3 : index
    %c0_142 = arith.constant 0 : index
    %c0_143 = arith.constant 0 : index
    %205 = vector.load %arg4[%c3_141, %c0_142, %c0_143] : memref<25x16x6xf32, #tpu.memory_space<vmem>>, vector<1x16x6xf32>
    %206 = vector.shape_cast %205 : vector<1x16x6xf32> to vector<16x6xf32>
    %207 = vector.extract_strided_slice %132 {offsets = [0, 3], sizes = [6, 128], strides = [1, 1]} : vector<6x196xf32> to vector<6x128xf32>
    %cst_144 = arith.constant dense<0.000000e+00> : vector<16x128xf32>
    %208 = tpu.matmul %206, %207, %cst_144 {dimension_numbers = #tpu.dot_dimension_numbers<[1], [0], [0], [1], [0, 0, 1, 1], [], []>} : vector<16x6xf32>, vector<6x128xf32>, vector<16x128xf32> -> vector<16x128xf32>
    %c8_145 = arith.constant 8 : index
    %c0_146 = arith.constant 0 : index
    %c0_147 = arith.constant 0 : index
    %209 = vector.load %arg4[%c8_145, %c0_146, %c0_147] : memref<25x16x6xf32, #tpu.memory_space<vmem>>, vector<1x16x6xf32>
    %210 = vector.shape_cast %209 : vector<1x16x6xf32> to vector<16x6xf32>
    %211 = vector.extract_strided_slice %132 {offsets = [0, 19], sizes = [6, 128], strides = [1, 1]} : vector<6x196xf32> to vector<6x128xf32>
    %cst_148 = arith.constant dense<0.000000e+00> : vector<16x128xf32>
    %212 = tpu.matmul %210, %211, %cst_148 {dimension_numbers = #tpu.dot_dimension_numbers<[1], [0], [0], [1], [0, 0, 1, 1], [], []>} : vector<16x6xf32>, vector<6x128xf32>, vector<16x128xf32> -> vector<16x128xf32>
    %213 = arith.addf %208, %212 : vector<16x128xf32>
    %c13_149 = arith.constant 13 : index
    %c0_150 = arith.constant 0 : index
    %c0_151 = arith.constant 0 : index
    %214 = vector.load %arg4[%c13_149, %c0_150, %c0_151] : memref<25x16x6xf32, #tpu.memory_space<vmem>>, vector<1x16x6xf32>
    %215 = vector.shape_cast %214 : vector<1x16x6xf32> to vector<16x6xf32>
    %216 = vector.extract_strided_slice %132 {offsets = [0, 35], sizes = [6, 128], strides = [1, 1]} : vector<6x196xf32> to vector<6x128xf32>
    %cst_152 = arith.constant dense<0.000000e+00> : vector<16x128xf32>
    %217 = tpu.matmul %215, %216, %cst_152 {dimension_numbers = #tpu.dot_dimension_numbers<[1], [0], [0], [1], [0, 0, 1, 1], [], []>} : vector<16x6xf32>, vector<6x128xf32>, vector<16x128xf32> -> vector<16x128xf32>
    %218 = arith.addf %213, %217 : vector<16x128xf32>
    %c18_153 = arith.constant 18 : index
    %c0_154 = arith.constant 0 : index
    %c0_155 = arith.constant 0 : index
    %219 = vector.load %arg4[%c18_153, %c0_154, %c0_155] : memref<25x16x6xf32, #tpu.memory_space<vmem>>, vector<1x16x6xf32>
    %220 = vector.shape_cast %219 : vector<1x16x6xf32> to vector<16x6xf32>
    %221 = vector.extract_strided_slice %132 {offsets = [0, 51], sizes = [6, 128], strides = [1, 1]} : vector<6x196xf32> to vector<6x128xf32>
    %cst_156 = arith.constant dense<0.000000e+00> : vector<16x128xf32>
    %222 = tpu.matmul %220, %221, %cst_156 {dimension_numbers = #tpu.dot_dimension_numbers<[1], [0], [0], [1], [0, 0, 1, 1], [], []>} : vector<16x6xf32>, vector<6x128xf32>, vector<16x128xf32> -> vector<16x128xf32>
    %223 = arith.addf %218, %222 : vector<16x128xf32>
    %c23_157 = arith.constant 23 : index
    %c0_158 = arith.constant 0 : index
    %c0_159 = arith.constant 0 : index
    %224 = vector.load %arg4[%c23_157, %c0_158, %c0_159] : memref<25x16x6xf32, #tpu.memory_space<vmem>>, vector<1x16x6xf32>
    %225 = vector.shape_cast %224 : vector<1x16x6xf32> to vector<16x6xf32>
    %226 = vector.extract_strided_slice %132 {offsets = [0, 67], sizes = [6, 128], strides = [1, 1]} : vector<6x196xf32> to vector<6x128xf32>
    %cst_160 = arith.constant dense<0.000000e+00> : vector<16x128xf32>
    %227 = tpu.matmul %225, %226, %cst_160 {dimension_numbers = #tpu.dot_dimension_numbers<[1], [0], [0], [1], [0, 0, 1, 1], [], []>} : vector<16x6xf32>, vector<6x128xf32>, vector<16x128xf32> -> vector<16x128xf32>
    %228 = arith.addf %223, %227 : vector<16x128xf32>
    %c4_161 = arith.constant 4 : index
    %c0_162 = arith.constant 0 : index
    %c0_163 = arith.constant 0 : index
    %229 = vector.load %arg4[%c4_161, %c0_162, %c0_163] : memref<25x16x6xf32, #tpu.memory_space<vmem>>, vector<1x16x6xf32>
    %230 = vector.shape_cast %229 : vector<1x16x6xf32> to vector<16x6xf32>
    %231 = vector.extract_strided_slice %132 {offsets = [0, 4], sizes = [6, 128], strides = [1, 1]} : vector<6x196xf32> to vector<6x128xf32>
    %cst_164 = arith.constant dense<0.000000e+00> : vector<16x128xf32>
    %232 = tpu.matmul %230, %231, %cst_164 {dimension_numbers = #tpu.dot_dimension_numbers<[1], [0], [0], [1], [0, 0, 1, 1], [], []>} : vector<16x6xf32>, vector<6x128xf32>, vector<16x128xf32> -> vector<16x128xf32>
    %c9_165 = arith.constant 9 : index
    %c0_166 = arith.constant 0 : index
    %c0_167 = arith.constant 0 : index
    %233 = vector.load %arg4[%c9_165, %c0_166, %c0_167] : memref<25x16x6xf32, #tpu.memory_space<vmem>>, vector<1x16x6xf32>
    %234 = vector.shape_cast %233 : vector<1x16x6xf32> to vector<16x6xf32>
    %235 = vector.extract_strided_slice %132 {offsets = [0, 20], sizes = [6, 128], strides = [1, 1]} : vector<6x196xf32> to vector<6x128xf32>
    %cst_168 = arith.constant dense<0.000000e+00> : vector<16x128xf32>
    %236 = tpu.matmul %234, %235, %cst_168 {dimension_numbers = #tpu.dot_dimension_numbers<[1], [0], [0], [1], [0, 0, 1, 1], [], []>} : vector<16x6xf32>, vector<6x128xf32>, vector<16x128xf32> -> vector<16x128xf32>
    %237 = arith.addf %232, %236 : vector<16x128xf32>
    %c14_169 = arith.constant 14 : index
    %c0_170 = arith.constant 0 : index
    %c0_171 = arith.constant 0 : index
    %238 = vector.load %arg4[%c14_169, %c0_170, %c0_171] : memref<25x16x6xf32, #tpu.memory_space<vmem>>, vector<1x16x6xf32>
    %239 = vector.shape_cast %238 : vector<1x16x6xf32> to vector<16x6xf32>
    %240 = vector.extract_strided_slice %132 {offsets = [0, 36], sizes = [6, 128], strides = [1, 1]} : vector<6x196xf32> to vector<6x128xf32>
    %cst_172 = arith.constant dense<0.000000e+00> : vector<16x128xf32>
    %241 = tpu.matmul %239, %240, %cst_172 {dimension_numbers = #tpu.dot_dimension_numbers<[1], [0], [0], [1], [0, 0, 1, 1], [], []>} : vector<16x6xf32>, vector<6x128xf32>, vector<16x128xf32> -> vector<16x128xf32>
    %242 = arith.addf %237, %241 : vector<16x128xf32>
    %c19_173 = arith.constant 19 : index
    %c0_174 = arith.constant 0 : index
    %c0_175 = arith.constant 0 : index
    %243 = vector.load %arg4[%c19_173, %c0_174, %c0_175] : memref<25x16x6xf32, #tpu.memory_space<vmem>>, vector<1x16x6xf32>
    %244 = vector.shape_cast %243 : vector<1x16x6xf32> to vector<16x6xf32>
    %245 = vector.extract_strided_slice %132 {offsets = [0, 52], sizes = [6, 128], strides = [1, 1]} : vector<6x196xf32> to vector<6x128xf32>
    %cst_176 = arith.constant dense<0.000000e+00> : vector<16x128xf32>
    %246 = tpu.matmul %244, %245, %cst_176 {dimension_numbers = #tpu.dot_dimension_numbers<[1], [0], [0], [1], [0, 0, 1, 1], [], []>} : vector<16x6xf32>, vector<6x128xf32>, vector<16x128xf32> -> vector<16x128xf32>
    %247 = arith.addf %242, %246 : vector<16x128xf32>
    %c24_177 = arith.constant 24 : index
    %c0_178 = arith.constant 0 : index
    %c0_179 = arith.constant 0 : index
    %248 = vector.load %arg4[%c24_177, %c0_178, %c0_179] : memref<25x16x6xf32, #tpu.memory_space<vmem>>, vector<1x16x6xf32>
    %249 = vector.shape_cast %248 : vector<1x16x6xf32> to vector<16x6xf32>
    %250 = vector.extract_strided_slice %132 {offsets = [0, 68], sizes = [6, 128], strides = [1, 1]} : vector<6x196xf32> to vector<6x128xf32>
    %cst_180 = arith.constant dense<0.000000e+00> : vector<16x128xf32>
    %251 = tpu.matmul %249, %250, %cst_180 {dimension_numbers = #tpu.dot_dimension_numbers<[1], [0], [0], [1], [0, 0, 1, 1], [], []>} : vector<16x6xf32>, vector<6x128xf32>, vector<16x128xf32> -> vector<16x128xf32>
    %252 = arith.addf %247, %251 : vector<16x128xf32>
    %253 = arith.addf %156, %180 : vector<16x128xf32>
    %254 = arith.addf %204, %228 : vector<16x128xf32>
    %255 = arith.addf %253, %254 : vector<16x128xf32>
    %256 = arith.addf %255, %252 : vector<16x128xf32>
    %c0_181 = arith.constant 0 : index
    %c0_182 = arith.constant 0 : index
    %257 = vector.load %arg5[%c0_181, %c0_182] : memref<16x1xf32, #tpu.memory_space<vmem>>, vector<16x1xf32>
    %258 = vector.broadcast %257 : vector<16x1xf32> to vector<16x128xf32>
    %259 = arith.addf %256, %258 : vector<16x128xf32>
    %cst_183 = arith.constant 0.000000e+00 : f32
    %260 = vector.broadcast %cst_183 : f32 to vector<16x128xf32>
    %261 = arith.maximumf %259, %260 : vector<16x128xf32>
    %262 = tpu.iota {dimensions = array<i32: 1>} : vector<1x128xi32>
    %c16_i32 = arith.constant 16 : i32
    %c0_i32 = arith.constant 0 : i32
    %263 = arith.cmpi eq, %c16_i32, %c0_i32 : i32
    %c1_i32 = arith.constant 1 : i32
    %264 = arith.select %263, %c1_i32, %c16_i32 : i32
    %265 = vector.broadcast %264 : i32 to vector<1x128xi32>
    %266 = arith.remsi %262, %265 : vector<1x128xi32>
    %c0_i32_184 = arith.constant 0 : i32
    %267 = vector.broadcast %c0_i32_184 : i32 to vector<1x128xi32>
    %268 = arith.cmpi ne, %266, %267 : vector<1x128xi32>
    %c0_i32_185 = arith.constant 0 : i32
    %269 = vector.broadcast %c0_i32_185 : i32 to vector<1x128xi32>
    %270 = arith.cmpi slt, %266, %269 : vector<1x128xi32>
    %c0_i32_186 = arith.constant 0 : i32
    %271 = arith.cmpi slt, %264, %c0_i32_186 : i32
    %272 = vector.broadcast %271 : i1 to vector<1x128xi1>
    %273 = vector.broadcast %272 : vector<1x128xi1> to vector<1x128xi1>
    %274 = arith.xori %270, %273 : vector<1x128xi1>
    %275 = arith.andi %274, %268 : vector<1x128xi1>
    %276 = vector.broadcast %264 : i32 to vector<1x128xi32>
    %277 = arith.addi %266, %276 : vector<1x128xi32>
    %278 = arith.select %275, %277, %266 : vector<1x128xi1>, vector<1x128xi32>
    %c8_i32 = arith.constant 8 : i32
    %279 = vector.broadcast %c8_i32 : i32 to vector<1x128xi32>
    %280 = arith.cmpi slt, %278, %279 : vector<1x128xi32>
    %281 = arith.extui %280 : vector<1x128xi1> to vector<1x128xi32>
    %282 = arith.sitofp %281 : vector<1x128xi32> to vector<1x128xf32>
    %283 = vector.broadcast %282 : vector<1x128xf32> to vector<16x128xf32>
    %284 = arith.mulf %261, %283 : vector<16x128xf32>
    %cst_187 = arith.constant 0.000000e+00 : f32
    %285 = vector.broadcast %cst_187 : f32 to vector<16x68xf32>
    %cst_188 = arith.constant 0.000000e+00 : f32
    %286 = vector.broadcast %cst_188 : f32 to vector<16x64xf32>
    %287 = tpu.concatenate %285, %284, %286 in 1 : vector<16x68xf32>, vector<16x128xf32>, vector<16x64xf32> -> vector<16x260xf32>
    %c0_189 = arith.constant 0 : index
    %c0_190 = arith.constant 0 : index
    %c0_191 = arith.constant 0 : index
    %288 = vector.load %arg6[%c0_189, %c0_190, %c0_191] : memref<25x6x16xf32, #tpu.memory_space<vmem>>, vector<1x6x16xf32>
    %289 = vector.shape_cast %288 : vector<1x6x16xf32> to vector<6x16xf32>
    %290 = vector.extract_strided_slice %287 {offsets = [0, 0], sizes = [16, 192], strides = [1, 1]} : vector<16x260xf32> to vector<16x192xf32>
    %cst_192 = arith.constant dense<0.000000e+00> : vector<6x192xf32>
    %291 = tpu.matmul %289, %290, %cst_192 {dimension_numbers = #tpu.dot_dimension_numbers<[1], [0], [0], [1], [0, 0, 1, 1], [], []>} : vector<6x16xf32>, vector<16x192xf32>, vector<6x192xf32> -> vector<6x192xf32>
    %c5_193 = arith.constant 5 : index
    %c0_194 = arith.constant 0 : index
    %c0_195 = arith.constant 0 : index
    %292 = vector.load %arg6[%c5_193, %c0_194, %c0_195] : memref<25x6x16xf32, #tpu.memory_space<vmem>>, vector<1x6x16xf32>
    %293 = vector.shape_cast %292 : vector<1x6x16xf32> to vector<6x16xf32>
    %294 = vector.extract_strided_slice %287 {offsets = [0, 16], sizes = [16, 192], strides = [1, 1]} : vector<16x260xf32> to vector<16x192xf32>
    %cst_196 = arith.constant dense<0.000000e+00> : vector<6x192xf32>
    %295 = tpu.matmul %293, %294, %cst_196 {dimension_numbers = #tpu.dot_dimension_numbers<[1], [0], [0], [1], [0, 0, 1, 1], [], []>} : vector<6x16xf32>, vector<16x192xf32>, vector<6x192xf32> -> vector<6x192xf32>
    %296 = arith.addf %291, %295 : vector<6x192xf32>
    %c10_197 = arith.constant 10 : index
    %c0_198 = arith.constant 0 : index
    %c0_199 = arith.constant 0 : index
    %297 = vector.load %arg6[%c10_197, %c0_198, %c0_199] : memref<25x6x16xf32, #tpu.memory_space<vmem>>, vector<1x6x16xf32>
    %298 = vector.shape_cast %297 : vector<1x6x16xf32> to vector<6x16xf32>
    %299 = vector.extract_strided_slice %287 {offsets = [0, 32], sizes = [16, 192], strides = [1, 1]} : vector<16x260xf32> to vector<16x192xf32>
    %cst_200 = arith.constant dense<0.000000e+00> : vector<6x192xf32>
    %300 = tpu.matmul %298, %299, %cst_200 {dimension_numbers = #tpu.dot_dimension_numbers<[1], [0], [0], [1], [0, 0, 1, 1], [], []>} : vector<6x16xf32>, vector<16x192xf32>, vector<6x192xf32> -> vector<6x192xf32>
    %301 = arith.addf %296, %300 : vector<6x192xf32>
    %c15_201 = arith.constant 15 : index
    %c0_202 = arith.constant 0 : index
    %c0_203 = arith.constant 0 : index
    %302 = vector.load %arg6[%c15_201, %c0_202, %c0_203] : memref<25x6x16xf32, #tpu.memory_space<vmem>>, vector<1x6x16xf32>
    %303 = vector.shape_cast %302 : vector<1x6x16xf32> to vector<6x16xf32>
    %304 = vector.extract_strided_slice %287 {offsets = [0, 48], sizes = [16, 192], strides = [1, 1]} : vector<16x260xf32> to vector<16x192xf32>
    %cst_204 = arith.constant dense<0.000000e+00> : vector<6x192xf32>
    %305 = tpu.matmul %303, %304, %cst_204 {dimension_numbers = #tpu.dot_dimension_numbers<[1], [0], [0], [1], [0, 0, 1, 1], [], []>} : vector<6x16xf32>, vector<16x192xf32>, vector<6x192xf32> -> vector<6x192xf32>
    %306 = arith.addf %301, %305 : vector<6x192xf32>
    %c20_205 = arith.constant 20 : index
    %c0_206 = arith.constant 0 : index
    %c0_207 = arith.constant 0 : index
    %307 = vector.load %arg6[%c20_205, %c0_206, %c0_207] : memref<25x6x16xf32, #tpu.memory_space<vmem>>, vector<1x6x16xf32>
    %308 = vector.shape_cast %307 : vector<1x6x16xf32> to vector<6x16xf32>
    %309 = vector.extract_strided_slice %287 {offsets = [0, 64], sizes = [16, 192], strides = [1, 1]} : vector<16x260xf32> to vector<16x192xf32>
    %cst_208 = arith.constant dense<0.000000e+00> : vector<6x192xf32>
    %310 = tpu.matmul %308, %309, %cst_208 {dimension_numbers = #tpu.dot_dimension_numbers<[1], [0], [0], [1], [0, 0, 1, 1], [], []>} : vector<6x16xf32>, vector<16x192xf32>, vector<6x192xf32> -> vector<6x192xf32>
    %311 = arith.addf %306, %310 : vector<6x192xf32>
    %c1_209 = arith.constant 1 : index
    %c0_210 = arith.constant 0 : index
    %c0_211 = arith.constant 0 : index
    %312 = vector.load %arg6[%c1_209, %c0_210, %c0_211] : memref<25x6x16xf32, #tpu.memory_space<vmem>>, vector<1x6x16xf32>
    %313 = vector.shape_cast %312 : vector<1x6x16xf32> to vector<6x16xf32>
    %314 = vector.extract_strided_slice %287 {offsets = [0, 1], sizes = [16, 192], strides = [1, 1]} : vector<16x260xf32> to vector<16x192xf32>
    %cst_212 = arith.constant dense<0.000000e+00> : vector<6x192xf32>
    %315 = tpu.matmul %313, %314, %cst_212 {dimension_numbers = #tpu.dot_dimension_numbers<[1], [0], [0], [1], [0, 0, 1, 1], [], []>} : vector<6x16xf32>, vector<16x192xf32>, vector<6x192xf32> -> vector<6x192xf32>
    %c6_213 = arith.constant 6 : index
    %c0_214 = arith.constant 0 : index
    %c0_215 = arith.constant 0 : index
    %316 = vector.load %arg6[%c6_213, %c0_214, %c0_215] : memref<25x6x16xf32, #tpu.memory_space<vmem>>, vector<1x6x16xf32>
    %317 = vector.shape_cast %316 : vector<1x6x16xf32> to vector<6x16xf32>
    %318 = vector.extract_strided_slice %287 {offsets = [0, 17], sizes = [16, 192], strides = [1, 1]} : vector<16x260xf32> to vector<16x192xf32>
    %cst_216 = arith.constant dense<0.000000e+00> : vector<6x192xf32>
    %319 = tpu.matmul %317, %318, %cst_216 {dimension_numbers = #tpu.dot_dimension_numbers<[1], [0], [0], [1], [0, 0, 1, 1], [], []>} : vector<6x16xf32>, vector<16x192xf32>, vector<6x192xf32> -> vector<6x192xf32>
    %320 = arith.addf %315, %319 : vector<6x192xf32>
    %c11_217 = arith.constant 11 : index
    %c0_218 = arith.constant 0 : index
    %c0_219 = arith.constant 0 : index
    %321 = vector.load %arg6[%c11_217, %c0_218, %c0_219] : memref<25x6x16xf32, #tpu.memory_space<vmem>>, vector<1x6x16xf32>
    %322 = vector.shape_cast %321 : vector<1x6x16xf32> to vector<6x16xf32>
    %323 = vector.extract_strided_slice %287 {offsets = [0, 33], sizes = [16, 192], strides = [1, 1]} : vector<16x260xf32> to vector<16x192xf32>
    %cst_220 = arith.constant dense<0.000000e+00> : vector<6x192xf32>
    %324 = tpu.matmul %322, %323, %cst_220 {dimension_numbers = #tpu.dot_dimension_numbers<[1], [0], [0], [1], [0, 0, 1, 1], [], []>} : vector<6x16xf32>, vector<16x192xf32>, vector<6x192xf32> -> vector<6x192xf32>
    %325 = arith.addf %320, %324 : vector<6x192xf32>
    %c16_221 = arith.constant 16 : index
    %c0_222 = arith.constant 0 : index
    %c0_223 = arith.constant 0 : index
    %326 = vector.load %arg6[%c16_221, %c0_222, %c0_223] : memref<25x6x16xf32, #tpu.memory_space<vmem>>, vector<1x6x16xf32>
    %327 = vector.shape_cast %326 : vector<1x6x16xf32> to vector<6x16xf32>
    %328 = vector.extract_strided_slice %287 {offsets = [0, 49], sizes = [16, 192], strides = [1, 1]} : vector<16x260xf32> to vector<16x192xf32>
    %cst_224 = arith.constant dense<0.000000e+00> : vector<6x192xf32>
    %329 = tpu.matmul %327, %328, %cst_224 {dimension_numbers = #tpu.dot_dimension_numbers<[1], [0], [0], [1], [0, 0, 1, 1], [], []>} : vector<6x16xf32>, vector<16x192xf32>, vector<6x192xf32> -> vector<6x192xf32>
    %330 = arith.addf %325, %329 : vector<6x192xf32>
    %c21_225 = arith.constant 21 : index
    %c0_226 = arith.constant 0 : index
    %c0_227 = arith.constant 0 : index
    %331 = vector.load %arg6[%c21_225, %c0_226, %c0_227] : memref<25x6x16xf32, #tpu.memory_space<vmem>>, vector<1x6x16xf32>
    %332 = vector.shape_cast %331 : vector<1x6x16xf32> to vector<6x16xf32>
    %333 = vector.extract_strided_slice %287 {offsets = [0, 65], sizes = [16, 192], strides = [1, 1]} : vector<16x260xf32> to vector<16x192xf32>
    %cst_228 = arith.constant dense<0.000000e+00> : vector<6x192xf32>
    %334 = tpu.matmul %332, %333, %cst_228 {dimension_numbers = #tpu.dot_dimension_numbers<[1], [0], [0], [1], [0, 0, 1, 1], [], []>} : vector<6x16xf32>, vector<16x192xf32>, vector<6x192xf32> -> vector<6x192xf32>
    %335 = arith.addf %330, %334 : vector<6x192xf32>
    %c2_229 = arith.constant 2 : index
    %c0_230 = arith.constant 0 : index
    %c0_231 = arith.constant 0 : index
    %336 = vector.load %arg6[%c2_229, %c0_230, %c0_231] : memref<25x6x16xf32, #tpu.memory_space<vmem>>, vector<1x6x16xf32>
    %337 = vector.shape_cast %336 : vector<1x6x16xf32> to vector<6x16xf32>
    %338 = vector.extract_strided_slice %287 {offsets = [0, 2], sizes = [16, 192], strides = [1, 1]} : vector<16x260xf32> to vector<16x192xf32>
    %cst_232 = arith.constant dense<0.000000e+00> : vector<6x192xf32>
    %339 = tpu.matmul %337, %338, %cst_232 {dimension_numbers = #tpu.dot_dimension_numbers<[1], [0], [0], [1], [0, 0, 1, 1], [], []>} : vector<6x16xf32>, vector<16x192xf32>, vector<6x192xf32> -> vector<6x192xf32>
    %c7_233 = arith.constant 7 : index
    %c0_234 = arith.constant 0 : index
    %c0_235 = arith.constant 0 : index
    %340 = vector.load %arg6[%c7_233, %c0_234, %c0_235] : memref<25x6x16xf32, #tpu.memory_space<vmem>>, vector<1x6x16xf32>
    %341 = vector.shape_cast %340 : vector<1x6x16xf32> to vector<6x16xf32>
    %342 = vector.extract_strided_slice %287 {offsets = [0, 18], sizes = [16, 192], strides = [1, 1]} : vector<16x260xf32> to vector<16x192xf32>
    %cst_236 = arith.constant dense<0.000000e+00> : vector<6x192xf32>
    %343 = tpu.matmul %341, %342, %cst_236 {dimension_numbers = #tpu.dot_dimension_numbers<[1], [0], [0], [1], [0, 0, 1, 1], [], []>} : vector<6x16xf32>, vector<16x192xf32>, vector<6x192xf32> -> vector<6x192xf32>
    %344 = arith.addf %339, %343 : vector<6x192xf32>
    %c12_237 = arith.constant 12 : index
    %c0_238 = arith.constant 0 : index
    %c0_239 = arith.constant 0 : index
    %345 = vector.load %arg6[%c12_237, %c0_238, %c0_239] : memref<25x6x16xf32, #tpu.memory_space<vmem>>, vector<1x6x16xf32>
    %346 = vector.shape_cast %345 : vector<1x6x16xf32> to vector<6x16xf32>
    %347 = vector.extract_strided_slice %287 {offsets = [0, 34], sizes = [16, 192], strides = [1, 1]} : vector<16x260xf32> to vector<16x192xf32>
    %cst_240 = arith.constant dense<0.000000e+00> : vector<6x192xf32>
    %348 = tpu.matmul %346, %347, %cst_240 {dimension_numbers = #tpu.dot_dimension_numbers<[1], [0], [0], [1], [0, 0, 1, 1], [], []>} : vector<6x16xf32>, vector<16x192xf32>, vector<6x192xf32> -> vector<6x192xf32>
    %349 = arith.addf %344, %348 : vector<6x192xf32>
    %c17_241 = arith.constant 17 : index
    %c0_242 = arith.constant 0 : index
    %c0_243 = arith.constant 0 : index
    %350 = vector.load %arg6[%c17_241, %c0_242, %c0_243] : memref<25x6x16xf32, #tpu.memory_space<vmem>>, vector<1x6x16xf32>
    %351 = vector.shape_cast %350 : vector<1x6x16xf32> to vector<6x16xf32>
    %352 = vector.extract_strided_slice %287 {offsets = [0, 50], sizes = [16, 192], strides = [1, 1]} : vector<16x260xf32> to vector<16x192xf32>
    %cst_244 = arith.constant dense<0.000000e+00> : vector<6x192xf32>
    %353 = tpu.matmul %351, %352, %cst_244 {dimension_numbers = #tpu.dot_dimension_numbers<[1], [0], [0], [1], [0, 0, 1, 1], [], []>} : vector<6x16xf32>, vector<16x192xf32>, vector<6x192xf32> -> vector<6x192xf32>
    %354 = arith.addf %349, %353 : vector<6x192xf32>
    %c22_245 = arith.constant 22 : index
    %c0_246 = arith.constant 0 : index
    %c0_247 = arith.constant 0 : index
    %355 = vector.load %arg6[%c22_245, %c0_246, %c0_247] : memref<25x6x16xf32, #tpu.memory_space<vmem>>, vector<1x6x16xf32>
    %356 = vector.shape_cast %355 : vector<1x6x16xf32> to vector<6x16xf32>
    %357 = vector.extract_strided_slice %287 {offsets = [0, 66], sizes = [16, 192], strides = [1, 1]} : vector<16x260xf32> to vector<16x192xf32>
    %cst_248 = arith.constant dense<0.000000e+00> : vector<6x192xf32>
    %358 = tpu.matmul %356, %357, %cst_248 {dimension_numbers = #tpu.dot_dimension_numbers<[1], [0], [0], [1], [0, 0, 1, 1], [], []>} : vector<6x16xf32>, vector<16x192xf32>, vector<6x192xf32> -> vector<6x192xf32>
    %359 = arith.addf %354, %358 : vector<6x192xf32>
    %c3_249 = arith.constant 3 : index
    %c0_250 = arith.constant 0 : index
    %c0_251 = arith.constant 0 : index
    %360 = vector.load %arg6[%c3_249, %c0_250, %c0_251] : memref<25x6x16xf32, #tpu.memory_space<vmem>>, vector<1x6x16xf32>
    %361 = vector.shape_cast %360 : vector<1x6x16xf32> to vector<6x16xf32>
    %362 = vector.extract_strided_slice %287 {offsets = [0, 3], sizes = [16, 192], strides = [1, 1]} : vector<16x260xf32> to vector<16x192xf32>
    %cst_252 = arith.constant dense<0.000000e+00> : vector<6x192xf32>
    %363 = tpu.matmul %361, %362, %cst_252 {dimension_numbers = #tpu.dot_dimension_numbers<[1], [0], [0], [1], [0, 0, 1, 1], [], []>} : vector<6x16xf32>, vector<16x192xf32>, vector<6x192xf32> -> vector<6x192xf32>
    %c8_253 = arith.constant 8 : index
    %c0_254 = arith.constant 0 : index
    %c0_255 = arith.constant 0 : index
    %364 = vector.load %arg6[%c8_253, %c0_254, %c0_255] : memref<25x6x16xf32, #tpu.memory_space<vmem>>, vector<1x6x16xf32>
    %365 = vector.shape_cast %364 : vector<1x6x16xf32> to vector<6x16xf32>
    %366 = vector.extract_strided_slice %287 {offsets = [0, 19], sizes = [16, 192], strides = [1, 1]} : vector<16x260xf32> to vector<16x192xf32>
    %cst_256 = arith.constant dense<0.000000e+00> : vector<6x192xf32>
    %367 = tpu.matmul %365, %366, %cst_256 {dimension_numbers = #tpu.dot_dimension_numbers<[1], [0], [0], [1], [0, 0, 1, 1], [], []>} : vector<6x16xf32>, vector<16x192xf32>, vector<6x192xf32> -> vector<6x192xf32>
    %368 = arith.addf %363, %367 : vector<6x192xf32>
    %c13_257 = arith.constant 13 : index
    %c0_258 = arith.constant 0 : index
    %c0_259 = arith.constant 0 : index
    %369 = vector.load %arg6[%c13_257, %c0_258, %c0_259] : memref<25x6x16xf32, #tpu.memory_space<vmem>>, vector<1x6x16xf32>
    %370 = vector.shape_cast %369 : vector<1x6x16xf32> to vector<6x16xf32>
    %371 = vector.extract_strided_slice %287 {offsets = [0, 35], sizes = [16, 192], strides = [1, 1]} : vector<16x260xf32> to vector<16x192xf32>
    %cst_260 = arith.constant dense<0.000000e+00> : vector<6x192xf32>
    %372 = tpu.matmul %370, %371, %cst_260 {dimension_numbers = #tpu.dot_dimension_numbers<[1], [0], [0], [1], [0, 0, 1, 1], [], []>} : vector<6x16xf32>, vector<16x192xf32>, vector<6x192xf32> -> vector<6x192xf32>
    %373 = arith.addf %368, %372 : vector<6x192xf32>
    %c18_261 = arith.constant 18 : index
    %c0_262 = arith.constant 0 : index
    %c0_263 = arith.constant 0 : index
    %374 = vector.load %arg6[%c18_261, %c0_262, %c0_263] : memref<25x6x16xf32, #tpu.memory_space<vmem>>, vector<1x6x16xf32>
    %375 = vector.shape_cast %374 : vector<1x6x16xf32> to vector<6x16xf32>
    %376 = vector.extract_strided_slice %287 {offsets = [0, 51], sizes = [16, 192], strides = [1, 1]} : vector<16x260xf32> to vector<16x192xf32>
    %cst_264 = arith.constant dense<0.000000e+00> : vector<6x192xf32>
    %377 = tpu.matmul %375, %376, %cst_264 {dimension_numbers = #tpu.dot_dimension_numbers<[1], [0], [0], [1], [0, 0, 1, 1], [], []>} : vector<6x16xf32>, vector<16x192xf32>, vector<6x192xf32> -> vector<6x192xf32>
    %378 = arith.addf %373, %377 : vector<6x192xf32>
    %c23_265 = arith.constant 23 : index
    %c0_266 = arith.constant 0 : index
    %c0_267 = arith.constant 0 : index
    %379 = vector.load %arg6[%c23_265, %c0_266, %c0_267] : memref<25x6x16xf32, #tpu.memory_space<vmem>>, vector<1x6x16xf32>
    %380 = vector.shape_cast %379 : vector<1x6x16xf32> to vector<6x16xf32>
    %381 = vector.extract_strided_slice %287 {offsets = [0, 67], sizes = [16, 192], strides = [1, 1]} : vector<16x260xf32> to vector<16x192xf32>
    %cst_268 = arith.constant dense<0.000000e+00> : vector<6x192xf32>
    %382 = tpu.matmul %380, %381, %cst_268 {dimension_numbers = #tpu.dot_dimension_numbers<[1], [0], [0], [1], [0, 0, 1, 1], [], []>} : vector<6x16xf32>, vector<16x192xf32>, vector<6x192xf32> -> vector<6x192xf32>
    %383 = arith.addf %378, %382 : vector<6x192xf32>
    %c4_269 = arith.constant 4 : index
    %c0_270 = arith.constant 0 : index
    %c0_271 = arith.constant 0 : index
    %384 = vector.load %arg6[%c4_269, %c0_270, %c0_271] : memref<25x6x16xf32, #tpu.memory_space<vmem>>, vector<1x6x16xf32>
    %385 = vector.shape_cast %384 : vector<1x6x16xf32> to vector<6x16xf32>
    %386 = vector.extract_strided_slice %287 {offsets = [0, 4], sizes = [16, 192], strides = [1, 1]} : vector<16x260xf32> to vector<16x192xf32>
    %cst_272 = arith.constant dense<0.000000e+00> : vector<6x192xf32>
    %387 = tpu.matmul %385, %386, %cst_272 {dimension_numbers = #tpu.dot_dimension_numbers<[1], [0], [0], [1], [0, 0, 1, 1], [], []>} : vector<6x16xf32>, vector<16x192xf32>, vector<6x192xf32> -> vector<6x192xf32>
    %c9_273 = arith.constant 9 : index
    %c0_274 = arith.constant 0 : index
    %c0_275 = arith.constant 0 : index
    %388 = vector.load %arg6[%c9_273, %c0_274, %c0_275] : memref<25x6x16xf32, #tpu.memory_space<vmem>>, vector<1x6x16xf32>
    %389 = vector.shape_cast %388 : vector<1x6x16xf32> to vector<6x16xf32>
    %390 = vector.extract_strided_slice %287 {offsets = [0, 20], sizes = [16, 192], strides = [1, 1]} : vector<16x260xf32> to vector<16x192xf32>
    %cst_276 = arith.constant dense<0.000000e+00> : vector<6x192xf32>
    %391 = tpu.matmul %389, %390, %cst_276 {dimension_numbers = #tpu.dot_dimension_numbers<[1], [0], [0], [1], [0, 0, 1, 1], [], []>} : vector<6x16xf32>, vector<16x192xf32>, vector<6x192xf32> -> vector<6x192xf32>
    %392 = arith.addf %387, %391 : vector<6x192xf32>
    %c14_277 = arith.constant 14 : index
    %c0_278 = arith.constant 0 : index
    %c0_279 = arith.constant 0 : index
    %393 = vector.load %arg6[%c14_277, %c0_278, %c0_279] : memref<25x6x16xf32, #tpu.memory_space<vmem>>, vector<1x6x16xf32>
    %394 = vector.shape_cast %393 : vector<1x6x16xf32> to vector<6x16xf32>
    %395 = vector.extract_strided_slice %287 {offsets = [0, 36], sizes = [16, 192], strides = [1, 1]} : vector<16x260xf32> to vector<16x192xf32>
    %cst_280 = arith.constant dense<0.000000e+00> : vector<6x192xf32>
    %396 = tpu.matmul %394, %395, %cst_280 {dimension_numbers = #tpu.dot_dimension_numbers<[1], [0], [0], [1], [0, 0, 1, 1], [], []>} : vector<6x16xf32>, vector<16x192xf32>, vector<6x192xf32> -> vector<6x192xf32>
    %397 = arith.addf %392, %396 : vector<6x192xf32>
    %c19_281 = arith.constant 19 : index
    %c0_282 = arith.constant 0 : index
    %c0_283 = arith.constant 0 : index
    %398 = vector.load %arg6[%c19_281, %c0_282, %c0_283] : memref<25x6x16xf32, #tpu.memory_space<vmem>>, vector<1x6x16xf32>
    %399 = vector.shape_cast %398 : vector<1x6x16xf32> to vector<6x16xf32>
    %400 = vector.extract_strided_slice %287 {offsets = [0, 52], sizes = [16, 192], strides = [1, 1]} : vector<16x260xf32> to vector<16x192xf32>
    %cst_284 = arith.constant dense<0.000000e+00> : vector<6x192xf32>
    %401 = tpu.matmul %399, %400, %cst_284 {dimension_numbers = #tpu.dot_dimension_numbers<[1], [0], [0], [1], [0, 0, 1, 1], [], []>} : vector<6x16xf32>, vector<16x192xf32>, vector<6x192xf32> -> vector<6x192xf32>
    %402 = arith.addf %397, %401 : vector<6x192xf32>
    %c24_285 = arith.constant 24 : index
    %c0_286 = arith.constant 0 : index
    %c0_287 = arith.constant 0 : index
    %403 = vector.load %arg6[%c24_285, %c0_286, %c0_287] : memref<25x6x16xf32, #tpu.memory_space<vmem>>, vector<1x6x16xf32>
    %404 = vector.shape_cast %403 : vector<1x6x16xf32> to vector<6x16xf32>
    %405 = vector.extract_strided_slice %287 {offsets = [0, 68], sizes = [16, 192], strides = [1, 1]} : vector<16x260xf32> to vector<16x192xf32>
    %cst_288 = arith.constant dense<0.000000e+00> : vector<6x192xf32>
    %406 = tpu.matmul %404, %405, %cst_288 {dimension_numbers = #tpu.dot_dimension_numbers<[1], [0], [0], [1], [0, 0, 1, 1], [], []>} : vector<6x16xf32>, vector<16x192xf32>, vector<6x192xf32> -> vector<6x192xf32>
    %407 = arith.addf %402, %406 : vector<6x192xf32>
    %408 = arith.addf %311, %335 : vector<6x192xf32>
    %409 = arith.addf %359, %383 : vector<6x192xf32>
    %410 = arith.addf %408, %409 : vector<6x192xf32>
    %411 = arith.addf %410, %407 : vector<6x192xf32>
    %c0_289 = arith.constant 0 : index
    %c0_290 = arith.constant 0 : index
    %412 = vector.load %arg7[%c0_289, %c0_290] : memref<6x1xf32, #tpu.memory_space<vmem>>, vector<6x1xf32>
    %413 = vector.broadcast %412 : vector<6x1xf32> to vector<6x192xf32>
    %414 = arith.addf %411, %413 : vector<6x192xf32>
    %cst_291 = arith.constant 0.000000e+00 : f32
    %415 = vector.broadcast %cst_291 : f32 to vector<6x192xf32>
    %416 = arith.maximumf %414, %415 : vector<6x192xf32>
    %417 = tpu.iota {dimensions = array<i32: 1>} : vector<1x192xi32>
    %c16_i32_292 = arith.constant 16 : i32
    %c0_i32_293 = arith.constant 0 : i32
    %418 = arith.cmpi eq, %c16_i32_292, %c0_i32_293 : i32
    %c1_i32_294 = arith.constant 1 : i32
    %419 = arith.select %418, %c1_i32_294, %c16_i32_292 : i32
    %420 = vector.broadcast %419 : i32 to vector<1x192xi32>
    %421 = arith.remsi %417, %420 : vector<1x192xi32>
    %c0_i32_295 = arith.constant 0 : i32
    %422 = vector.broadcast %c0_i32_295 : i32 to vector<1x192xi32>
    %423 = arith.cmpi ne, %421, %422 : vector<1x192xi32>
    %c0_i32_296 = arith.constant 0 : i32
    %424 = vector.broadcast %c0_i32_296 : i32 to vector<1x192xi32>
    %425 = arith.cmpi slt, %421, %424 : vector<1x192xi32>
    %c0_i32_297 = arith.constant 0 : i32
    %426 = arith.cmpi slt, %419, %c0_i32_297 : i32
    %427 = vector.broadcast %426 : i1 to vector<1x192xi1>
    %428 = vector.broadcast %427 : vector<1x192xi1> to vector<1x192xi1>
    %429 = arith.xori %425, %428 : vector<1x192xi1>
    %430 = arith.andi %429, %423 : vector<1x192xi1>
    %431 = vector.broadcast %419 : i32 to vector<1x192xi32>
    %432 = arith.addi %421, %431 : vector<1x192xi32>
    %433 = arith.select %430, %432, %421 : vector<1x192xi1>, vector<1x192xi32>
    %c12_i32 = arith.constant 12 : i32
    %434 = vector.broadcast %c12_i32 : i32 to vector<1x192xi32>
    %435 = arith.cmpi slt, %433, %434 : vector<1x192xi32>
    %436 = arith.extui %435 : vector<1x192xi1> to vector<1x192xi32>
    %437 = arith.sitofp %436 : vector<1x192xi32> to vector<1x192xf32>
    %438 = vector.broadcast %437 : vector<1x192xf32> to vector<6x192xf32>
    %439 = arith.mulf %416, %438 : vector<6x192xf32>
    %cst_298 = arith.constant 0.000000e+00 : f32
    %440 = vector.broadcast %cst_298 : f32 to vector<6x68xf32>
    %cst_299 = arith.constant 0.000000e+00 : f32
    %441 = vector.broadcast %cst_299 : f32 to vector<6x64xf32>
    %442 = tpu.concatenate %440, %439, %441 in 1 : vector<6x68xf32>, vector<6x192xf32>, vector<6x64xf32> -> vector<6x324xf32>
    %c0_300 = arith.constant 0 : index
    %c0_301 = arith.constant 0 : index
    %c0_302 = arith.constant 0 : index
    %443 = vector.load %arg8[%c0_300, %c0_301, %c0_302] : memref<25x3x6xf32, #tpu.memory_space<vmem>>, vector<1x3x6xf32>
    %444 = vector.shape_cast %443 : vector<1x3x6xf32> to vector<3x6xf32>
    %445 = vector.extract_strided_slice %442 {offsets = [0, 0], sizes = [6, 256], strides = [1, 1]} : vector<6x324xf32> to vector<6x256xf32>
    %cst_303 = arith.constant dense<0.000000e+00> : vector<3x256xf32>
    %446 = tpu.matmul %444, %445, %cst_303 {dimension_numbers = #tpu.dot_dimension_numbers<[1], [0], [0], [1], [0, 0, 1, 1], [], []>} : vector<3x6xf32>, vector<6x256xf32>, vector<3x256xf32> -> vector<3x256xf32>
    %c5_304 = arith.constant 5 : index
    %c0_305 = arith.constant 0 : index
    %c0_306 = arith.constant 0 : index
    %447 = vector.load %arg8[%c5_304, %c0_305, %c0_306] : memref<25x3x6xf32, #tpu.memory_space<vmem>>, vector<1x3x6xf32>
    %448 = vector.shape_cast %447 : vector<1x3x6xf32> to vector<3x6xf32>
    %449 = vector.extract_strided_slice %442 {offsets = [0, 16], sizes = [6, 256], strides = [1, 1]} : vector<6x324xf32> to vector<6x256xf32>
    %cst_307 = arith.constant dense<0.000000e+00> : vector<3x256xf32>
    %450 = tpu.matmul %448, %449, %cst_307 {dimension_numbers = #tpu.dot_dimension_numbers<[1], [0], [0], [1], [0, 0, 1, 1], [], []>} : vector<3x6xf32>, vector<6x256xf32>, vector<3x256xf32> -> vector<3x256xf32>
    %451 = arith.addf %446, %450 : vector<3x256xf32>
    %c10_308 = arith.constant 10 : index
    %c0_309 = arith.constant 0 : index
    %c0_310 = arith.constant 0 : index
    %452 = vector.load %arg8[%c10_308, %c0_309, %c0_310] : memref<25x3x6xf32, #tpu.memory_space<vmem>>, vector<1x3x6xf32>
    %453 = vector.shape_cast %452 : vector<1x3x6xf32> to vector<3x6xf32>
    %454 = vector.extract_strided_slice %442 {offsets = [0, 32], sizes = [6, 256], strides = [1, 1]} : vector<6x324xf32> to vector<6x256xf32>
    %cst_311 = arith.constant dense<0.000000e+00> : vector<3x256xf32>
    %455 = tpu.matmul %453, %454, %cst_311 {dimension_numbers = #tpu.dot_dimension_numbers<[1], [0], [0], [1], [0, 0, 1, 1], [], []>} : vector<3x6xf32>, vector<6x256xf32>, vector<3x256xf32> -> vector<3x256xf32>
    %456 = arith.addf %451, %455 : vector<3x256xf32>
    %c15_312 = arith.constant 15 : index
    %c0_313 = arith.constant 0 : index
    %c0_314 = arith.constant 0 : index
    %457 = vector.load %arg8[%c15_312, %c0_313, %c0_314] : memref<25x3x6xf32, #tpu.memory_space<vmem>>, vector<1x3x6xf32>
    %458 = vector.shape_cast %457 : vector<1x3x6xf32> to vector<3x6xf32>
    %459 = vector.extract_strided_slice %442 {offsets = [0, 48], sizes = [6, 256], strides = [1, 1]} : vector<6x324xf32> to vector<6x256xf32>
    %cst_315 = arith.constant dense<0.000000e+00> : vector<3x256xf32>
    %460 = tpu.matmul %458, %459, %cst_315 {dimension_numbers = #tpu.dot_dimension_numbers<[1], [0], [0], [1], [0, 0, 1, 1], [], []>} : vector<3x6xf32>, vector<6x256xf32>, vector<3x256xf32> -> vector<3x256xf32>
    %461 = arith.addf %456, %460 : vector<3x256xf32>
    %c20_316 = arith.constant 20 : index
    %c0_317 = arith.constant 0 : index
    %c0_318 = arith.constant 0 : index
    %462 = vector.load %arg8[%c20_316, %c0_317, %c0_318] : memref<25x3x6xf32, #tpu.memory_space<vmem>>, vector<1x3x6xf32>
    %463 = vector.shape_cast %462 : vector<1x3x6xf32> to vector<3x6xf32>
    %464 = vector.extract_strided_slice %442 {offsets = [0, 64], sizes = [6, 256], strides = [1, 1]} : vector<6x324xf32> to vector<6x256xf32>
    %cst_319 = arith.constant dense<0.000000e+00> : vector<3x256xf32>
    %465 = tpu.matmul %463, %464, %cst_319 {dimension_numbers = #tpu.dot_dimension_numbers<[1], [0], [0], [1], [0, 0, 1, 1], [], []>} : vector<3x6xf32>, vector<6x256xf32>, vector<3x256xf32> -> vector<3x256xf32>
    %466 = arith.addf %461, %465 : vector<3x256xf32>
    %c1_320 = arith.constant 1 : index
    %c0_321 = arith.constant 0 : index
    %c0_322 = arith.constant 0 : index
    %467 = vector.load %arg8[%c1_320, %c0_321, %c0_322] : memref<25x3x6xf32, #tpu.memory_space<vmem>>, vector<1x3x6xf32>
    %468 = vector.shape_cast %467 : vector<1x3x6xf32> to vector<3x6xf32>
    %469 = vector.extract_strided_slice %442 {offsets = [0, 1], sizes = [6, 256], strides = [1, 1]} : vector<6x324xf32> to vector<6x256xf32>
    %cst_323 = arith.constant dense<0.000000e+00> : vector<3x256xf32>
    %470 = tpu.matmul %468, %469, %cst_323 {dimension_numbers = #tpu.dot_dimension_numbers<[1], [0], [0], [1], [0, 0, 1, 1], [], []>} : vector<3x6xf32>, vector<6x256xf32>, vector<3x256xf32> -> vector<3x256xf32>
    %c6_324 = arith.constant 6 : index
    %c0_325 = arith.constant 0 : index
    %c0_326 = arith.constant 0 : index
    %471 = vector.load %arg8[%c6_324, %c0_325, %c0_326] : memref<25x3x6xf32, #tpu.memory_space<vmem>>, vector<1x3x6xf32>
    %472 = vector.shape_cast %471 : vector<1x3x6xf32> to vector<3x6xf32>
    %473 = vector.extract_strided_slice %442 {offsets = [0, 17], sizes = [6, 256], strides = [1, 1]} : vector<6x324xf32> to vector<6x256xf32>
    %cst_327 = arith.constant dense<0.000000e+00> : vector<3x256xf32>
    %474 = tpu.matmul %472, %473, %cst_327 {dimension_numbers = #tpu.dot_dimension_numbers<[1], [0], [0], [1], [0, 0, 1, 1], [], []>} : vector<3x6xf32>, vector<6x256xf32>, vector<3x256xf32> -> vector<3x256xf32>
    %475 = arith.addf %470, %474 : vector<3x256xf32>
    %c11_328 = arith.constant 11 : index
    %c0_329 = arith.constant 0 : index
    %c0_330 = arith.constant 0 : index
    %476 = vector.load %arg8[%c11_328, %c0_329, %c0_330] : memref<25x3x6xf32, #tpu.memory_space<vmem>>, vector<1x3x6xf32>
    %477 = vector.shape_cast %476 : vector<1x3x6xf32> to vector<3x6xf32>
    %478 = vector.extract_strided_slice %442 {offsets = [0, 33], sizes = [6, 256], strides = [1, 1]} : vector<6x324xf32> to vector<6x256xf32>
    %cst_331 = arith.constant dense<0.000000e+00> : vector<3x256xf32>
    %479 = tpu.matmul %477, %478, %cst_331 {dimension_numbers = #tpu.dot_dimension_numbers<[1], [0], [0], [1], [0, 0, 1, 1], [], []>} : vector<3x6xf32>, vector<6x256xf32>, vector<3x256xf32> -> vector<3x256xf32>
    %480 = arith.addf %475, %479 : vector<3x256xf32>
    %c16_332 = arith.constant 16 : index
    %c0_333 = arith.constant 0 : index
    %c0_334 = arith.constant 0 : index
    %481 = vector.load %arg8[%c16_332, %c0_333, %c0_334] : memref<25x3x6xf32, #tpu.memory_space<vmem>>, vector<1x3x6xf32>
    %482 = vector.shape_cast %481 : vector<1x3x6xf32> to vector<3x6xf32>
    %483 = vector.extract_strided_slice %442 {offsets = [0, 49], sizes = [6, 256], strides = [1, 1]} : vector<6x324xf32> to vector<6x256xf32>
    %cst_335 = arith.constant dense<0.000000e+00> : vector<3x256xf32>
    %484 = tpu.matmul %482, %483, %cst_335 {dimension_numbers = #tpu.dot_dimension_numbers<[1], [0], [0], [1], [0, 0, 1, 1], [], []>} : vector<3x6xf32>, vector<6x256xf32>, vector<3x256xf32> -> vector<3x256xf32>
    %485 = arith.addf %480, %484 : vector<3x256xf32>
    %c21_336 = arith.constant 21 : index
    %c0_337 = arith.constant 0 : index
    %c0_338 = arith.constant 0 : index
    %486 = vector.load %arg8[%c21_336, %c0_337, %c0_338] : memref<25x3x6xf32, #tpu.memory_space<vmem>>, vector<1x3x6xf32>
    %487 = vector.shape_cast %486 : vector<1x3x6xf32> to vector<3x6xf32>
    %488 = vector.extract_strided_slice %442 {offsets = [0, 65], sizes = [6, 256], strides = [1, 1]} : vector<6x324xf32> to vector<6x256xf32>
    %cst_339 = arith.constant dense<0.000000e+00> : vector<3x256xf32>
    %489 = tpu.matmul %487, %488, %cst_339 {dimension_numbers = #tpu.dot_dimension_numbers<[1], [0], [0], [1], [0, 0, 1, 1], [], []>} : vector<3x6xf32>, vector<6x256xf32>, vector<3x256xf32> -> vector<3x256xf32>
    %490 = arith.addf %485, %489 : vector<3x256xf32>
    %c2_340 = arith.constant 2 : index
    %c0_341 = arith.constant 0 : index
    %c0_342 = arith.constant 0 : index
    %491 = vector.load %arg8[%c2_340, %c0_341, %c0_342] : memref<25x3x6xf32, #tpu.memory_space<vmem>>, vector<1x3x6xf32>
    %492 = vector.shape_cast %491 : vector<1x3x6xf32> to vector<3x6xf32>
    %493 = vector.extract_strided_slice %442 {offsets = [0, 2], sizes = [6, 256], strides = [1, 1]} : vector<6x324xf32> to vector<6x256xf32>
    %cst_343 = arith.constant dense<0.000000e+00> : vector<3x256xf32>
    %494 = tpu.matmul %492, %493, %cst_343 {dimension_numbers = #tpu.dot_dimension_numbers<[1], [0], [0], [1], [0, 0, 1, 1], [], []>} : vector<3x6xf32>, vector<6x256xf32>, vector<3x256xf32> -> vector<3x256xf32>
    %c7_344 = arith.constant 7 : index
    %c0_345 = arith.constant 0 : index
    %c0_346 = arith.constant 0 : index
    %495 = vector.load %arg8[%c7_344, %c0_345, %c0_346] : memref<25x3x6xf32, #tpu.memory_space<vmem>>, vector<1x3x6xf32>
    %496 = vector.shape_cast %495 : vector<1x3x6xf32> to vector<3x6xf32>
    %497 = vector.extract_strided_slice %442 {offsets = [0, 18], sizes = [6, 256], strides = [1, 1]} : vector<6x324xf32> to vector<6x256xf32>
    %cst_347 = arith.constant dense<0.000000e+00> : vector<3x256xf32>
    %498 = tpu.matmul %496, %497, %cst_347 {dimension_numbers = #tpu.dot_dimension_numbers<[1], [0], [0], [1], [0, 0, 1, 1], [], []>} : vector<3x6xf32>, vector<6x256xf32>, vector<3x256xf32> -> vector<3x256xf32>
    %499 = arith.addf %494, %498 : vector<3x256xf32>
    %c12_348 = arith.constant 12 : index
    %c0_349 = arith.constant 0 : index
    %c0_350 = arith.constant 0 : index
    %500 = vector.load %arg8[%c12_348, %c0_349, %c0_350] : memref<25x3x6xf32, #tpu.memory_space<vmem>>, vector<1x3x6xf32>
    %501 = vector.shape_cast %500 : vector<1x3x6xf32> to vector<3x6xf32>
    %502 = vector.extract_strided_slice %442 {offsets = [0, 34], sizes = [6, 256], strides = [1, 1]} : vector<6x324xf32> to vector<6x256xf32>
    %cst_351 = arith.constant dense<0.000000e+00> : vector<3x256xf32>
    %503 = tpu.matmul %501, %502, %cst_351 {dimension_numbers = #tpu.dot_dimension_numbers<[1], [0], [0], [1], [0, 0, 1, 1], [], []>} : vector<3x6xf32>, vector<6x256xf32>, vector<3x256xf32> -> vector<3x256xf32>
    %504 = arith.addf %499, %503 : vector<3x256xf32>
    %c17_352 = arith.constant 17 : index
    %c0_353 = arith.constant 0 : index
    %c0_354 = arith.constant 0 : index
    %505 = vector.load %arg8[%c17_352, %c0_353, %c0_354] : memref<25x3x6xf32, #tpu.memory_space<vmem>>, vector<1x3x6xf32>
    %506 = vector.shape_cast %505 : vector<1x3x6xf32> to vector<3x6xf32>
    %507 = vector.extract_strided_slice %442 {offsets = [0, 50], sizes = [6, 256], strides = [1, 1]} : vector<6x324xf32> to vector<6x256xf32>
    %cst_355 = arith.constant dense<0.000000e+00> : vector<3x256xf32>
    %508 = tpu.matmul %506, %507, %cst_355 {dimension_numbers = #tpu.dot_dimension_numbers<[1], [0], [0], [1], [0, 0, 1, 1], [], []>} : vector<3x6xf32>, vector<6x256xf32>, vector<3x256xf32> -> vector<3x256xf32>
    %509 = arith.addf %504, %508 : vector<3x256xf32>
    %c22_356 = arith.constant 22 : index
    %c0_357 = arith.constant 0 : index
    %c0_358 = arith.constant 0 : index
    %510 = vector.load %arg8[%c22_356, %c0_357, %c0_358] : memref<25x3x6xf32, #tpu.memory_space<vmem>>, vector<1x3x6xf32>
    %511 = vector.shape_cast %510 : vector<1x3x6xf32> to vector<3x6xf32>
    %512 = vector.extract_strided_slice %442 {offsets = [0, 66], sizes = [6, 256], strides = [1, 1]} : vector<6x324xf32> to vector<6x256xf32>
    %cst_359 = arith.constant dense<0.000000e+00> : vector<3x256xf32>
    %513 = tpu.matmul %511, %512, %cst_359 {dimension_numbers = #tpu.dot_dimension_numbers<[1], [0], [0], [1], [0, 0, 1, 1], [], []>} : vector<3x6xf32>, vector<6x256xf32>, vector<3x256xf32> -> vector<3x256xf32>
    %514 = arith.addf %509, %513 : vector<3x256xf32>
    %c3_360 = arith.constant 3 : index
    %c0_361 = arith.constant 0 : index
    %c0_362 = arith.constant 0 : index
    %515 = vector.load %arg8[%c3_360, %c0_361, %c0_362] : memref<25x3x6xf32, #tpu.memory_space<vmem>>, vector<1x3x6xf32>
    %516 = vector.shape_cast %515 : vector<1x3x6xf32> to vector<3x6xf32>
    %517 = vector.extract_strided_slice %442 {offsets = [0, 3], sizes = [6, 256], strides = [1, 1]} : vector<6x324xf32> to vector<6x256xf32>
    %cst_363 = arith.constant dense<0.000000e+00> : vector<3x256xf32>
    %518 = tpu.matmul %516, %517, %cst_363 {dimension_numbers = #tpu.dot_dimension_numbers<[1], [0], [0], [1], [0, 0, 1, 1], [], []>} : vector<3x6xf32>, vector<6x256xf32>, vector<3x256xf32> -> vector<3x256xf32>
    %c8_364 = arith.constant 8 : index
    %c0_365 = arith.constant 0 : index
    %c0_366 = arith.constant 0 : index
    %519 = vector.load %arg8[%c8_364, %c0_365, %c0_366] : memref<25x3x6xf32, #tpu.memory_space<vmem>>, vector<1x3x6xf32>
    %520 = vector.shape_cast %519 : vector<1x3x6xf32> to vector<3x6xf32>
    %521 = vector.extract_strided_slice %442 {offsets = [0, 19], sizes = [6, 256], strides = [1, 1]} : vector<6x324xf32> to vector<6x256xf32>
    %cst_367 = arith.constant dense<0.000000e+00> : vector<3x256xf32>
    %522 = tpu.matmul %520, %521, %cst_367 {dimension_numbers = #tpu.dot_dimension_numbers<[1], [0], [0], [1], [0, 0, 1, 1], [], []>} : vector<3x6xf32>, vector<6x256xf32>, vector<3x256xf32> -> vector<3x256xf32>
    %523 = arith.addf %518, %522 : vector<3x256xf32>
    %c13_368 = arith.constant 13 : index
    %c0_369 = arith.constant 0 : index
    %c0_370 = arith.constant 0 : index
    %524 = vector.load %arg8[%c13_368, %c0_369, %c0_370] : memref<25x3x6xf32, #tpu.memory_space<vmem>>, vector<1x3x6xf32>
    %525 = vector.shape_cast %524 : vector<1x3x6xf32> to vector<3x6xf32>
    %526 = vector.extract_strided_slice %442 {offsets = [0, 35], sizes = [6, 256], strides = [1, 1]} : vector<6x324xf32> to vector<6x256xf32>
    %cst_371 = arith.constant dense<0.000000e+00> : vector<3x256xf32>
    %527 = tpu.matmul %525, %526, %cst_371 {dimension_numbers = #tpu.dot_dimension_numbers<[1], [0], [0], [1], [0, 0, 1, 1], [], []>} : vector<3x6xf32>, vector<6x256xf32>, vector<3x256xf32> -> vector<3x256xf32>
    %528 = arith.addf %523, %527 : vector<3x256xf32>
    %c18_372 = arith.constant 18 : index
    %c0_373 = arith.constant 0 : index
    %c0_374 = arith.constant 0 : index
    %529 = vector.load %arg8[%c18_372, %c0_373, %c0_374] : memref<25x3x6xf32, #tpu.memory_space<vmem>>, vector<1x3x6xf32>
    %530 = vector.shape_cast %529 : vector<1x3x6xf32> to vector<3x6xf32>
    %531 = vector.extract_strided_slice %442 {offsets = [0, 51], sizes = [6, 256], strides = [1, 1]} : vector<6x324xf32> to vector<6x256xf32>
    %cst_375 = arith.constant dense<0.000000e+00> : vector<3x256xf32>
    %532 = tpu.matmul %530, %531, %cst_375 {dimension_numbers = #tpu.dot_dimension_numbers<[1], [0], [0], [1], [0, 0, 1, 1], [], []>} : vector<3x6xf32>, vector<6x256xf32>, vector<3x256xf32> -> vector<3x256xf32>
    %533 = arith.addf %528, %532 : vector<3x256xf32>
    %c23_376 = arith.constant 23 : index
    %c0_377 = arith.constant 0 : index
    %c0_378 = arith.constant 0 : index
    %534 = vector.load %arg8[%c23_376, %c0_377, %c0_378] : memref<25x3x6xf32, #tpu.memory_space<vmem>>, vector<1x3x6xf32>
    %535 = vector.shape_cast %534 : vector<1x3x6xf32> to vector<3x6xf32>
    %536 = vector.extract_strided_slice %442 {offsets = [0, 67], sizes = [6, 256], strides = [1, 1]} : vector<6x324xf32> to vector<6x256xf32>
    %cst_379 = arith.constant dense<0.000000e+00> : vector<3x256xf32>
    %537 = tpu.matmul %535, %536, %cst_379 {dimension_numbers = #tpu.dot_dimension_numbers<[1], [0], [0], [1], [0, 0, 1, 1], [], []>} : vector<3x6xf32>, vector<6x256xf32>, vector<3x256xf32> -> vector<3x256xf32>
    %538 = arith.addf %533, %537 : vector<3x256xf32>
    %c4_380 = arith.constant 4 : index
    %c0_381 = arith.constant 0 : index
    %c0_382 = arith.constant 0 : index
    %539 = vector.load %arg8[%c4_380, %c0_381, %c0_382] : memref<25x3x6xf32, #tpu.memory_space<vmem>>, vector<1x3x6xf32>
    %540 = vector.shape_cast %539 : vector<1x3x6xf32> to vector<3x6xf32>
    %541 = vector.extract_strided_slice %442 {offsets = [0, 4], sizes = [6, 256], strides = [1, 1]} : vector<6x324xf32> to vector<6x256xf32>
    %cst_383 = arith.constant dense<0.000000e+00> : vector<3x256xf32>
    %542 = tpu.matmul %540, %541, %cst_383 {dimension_numbers = #tpu.dot_dimension_numbers<[1], [0], [0], [1], [0, 0, 1, 1], [], []>} : vector<3x6xf32>, vector<6x256xf32>, vector<3x256xf32> -> vector<3x256xf32>
    %c9_384 = arith.constant 9 : index
    %c0_385 = arith.constant 0 : index
    %c0_386 = arith.constant 0 : index
    %543 = vector.load %arg8[%c9_384, %c0_385, %c0_386] : memref<25x3x6xf32, #tpu.memory_space<vmem>>, vector<1x3x6xf32>
    %544 = vector.shape_cast %543 : vector<1x3x6xf32> to vector<3x6xf32>
    %545 = vector.extract_strided_slice %442 {offsets = [0, 20], sizes = [6, 256], strides = [1, 1]} : vector<6x324xf32> to vector<6x256xf32>
    %cst_387 = arith.constant dense<0.000000e+00> : vector<3x256xf32>
    %546 = tpu.matmul %544, %545, %cst_387 {dimension_numbers = #tpu.dot_dimension_numbers<[1], [0], [0], [1], [0, 0, 1, 1], [], []>} : vector<3x6xf32>, vector<6x256xf32>, vector<3x256xf32> -> vector<3x256xf32>
    %547 = arith.addf %542, %546 : vector<3x256xf32>
    %c14_388 = arith.constant 14 : index
    %c0_389 = arith.constant 0 : index
    %c0_390 = arith.constant 0 : index
    %548 = vector.load %arg8[%c14_388, %c0_389, %c0_390] : memref<25x3x6xf32, #tpu.memory_space<vmem>>, vector<1x3x6xf32>
    %549 = vector.shape_cast %548 : vector<1x3x6xf32> to vector<3x6xf32>
    %550 = vector.extract_strided_slice %442 {offsets = [0, 36], sizes = [6, 256], strides = [1, 1]} : vector<6x324xf32> to vector<6x256xf32>
    %cst_391 = arith.constant dense<0.000000e+00> : vector<3x256xf32>
    %551 = tpu.matmul %549, %550, %cst_391 {dimension_numbers = #tpu.dot_dimension_numbers<[1], [0], [0], [1], [0, 0, 1, 1], [], []>} : vector<3x6xf32>, vector<6x256xf32>, vector<3x256xf32> -> vector<3x256xf32>
    %552 = arith.addf %547, %551 : vector<3x256xf32>
    %c19_392 = arith.constant 19 : index
    %c0_393 = arith.constant 0 : index
    %c0_394 = arith.constant 0 : index
    %553 = vector.load %arg8[%c19_392, %c0_393, %c0_394] : memref<25x3x6xf32, #tpu.memory_space<vmem>>, vector<1x3x6xf32>
    %554 = vector.shape_cast %553 : vector<1x3x6xf32> to vector<3x6xf32>
    %555 = vector.extract_strided_slice %442 {offsets = [0, 52], sizes = [6, 256], strides = [1, 1]} : vector<6x324xf32> to vector<6x256xf32>
    %cst_395 = arith.constant dense<0.000000e+00> : vector<3x256xf32>
    %556 = tpu.matmul %554, %555, %cst_395 {dimension_numbers = #tpu.dot_dimension_numbers<[1], [0], [0], [1], [0, 0, 1, 1], [], []>} : vector<3x6xf32>, vector<6x256xf32>, vector<3x256xf32> -> vector<3x256xf32>
    %557 = arith.addf %552, %556 : vector<3x256xf32>
    %c24_396 = arith.constant 24 : index
    %c0_397 = arith.constant 0 : index
    %c0_398 = arith.constant 0 : index
    %558 = vector.load %arg8[%c24_396, %c0_397, %c0_398] : memref<25x3x6xf32, #tpu.memory_space<vmem>>, vector<1x3x6xf32>
    %559 = vector.shape_cast %558 : vector<1x3x6xf32> to vector<3x6xf32>
    %560 = vector.extract_strided_slice %442 {offsets = [0, 68], sizes = [6, 256], strides = [1, 1]} : vector<6x324xf32> to vector<6x256xf32>
    %cst_399 = arith.constant dense<0.000000e+00> : vector<3x256xf32>
    %561 = tpu.matmul %559, %560, %cst_399 {dimension_numbers = #tpu.dot_dimension_numbers<[1], [0], [0], [1], [0, 0, 1, 1], [], []>} : vector<3x6xf32>, vector<6x256xf32>, vector<3x256xf32> -> vector<3x256xf32>
    %562 = arith.addf %557, %561 : vector<3x256xf32>
    %563 = arith.addf %466, %490 : vector<3x256xf32>
    %564 = arith.addf %514, %538 : vector<3x256xf32>
    %565 = arith.addf %563, %564 : vector<3x256xf32>
    %566 = arith.addf %565, %562 : vector<3x256xf32>
    %c0_400 = arith.constant 0 : index
    %c0_401 = arith.constant 0 : index
    %567 = vector.load %arg9[%c0_400, %c0_401] : memref<3x1xf32, #tpu.memory_space<vmem>>, vector<3x1xf32>
    %568 = vector.broadcast %567 : vector<3x1xf32> to vector<3x256xf32>
    %569 = arith.addf %566, %568 : vector<3x256xf32>
    %cst_402 = arith.constant 0.000000e+00 : f32
    %570 = vector.broadcast %cst_402 : f32 to vector<3x256xf32>
    %571 = arith.maximumf %569, %570 : vector<3x256xf32>
    %572 = arith.negf %571 : vector<3x256xf32>
    %573 = math.exp %572 : vector<3x256xf32>
    %cst_403 = arith.constant 1.000000e+00 : f32
    %574 = vector.broadcast %cst_403 : f32 to vector<3x256xf32>
    %575 = arith.addf %574, %573 : vector<3x256xf32>
    %576 = arith.divf %574, %575 : vector<3x256xf32>
    %c0_404 = arith.constant 0 : index
    %c0_405 = arith.constant 0 : index
    %c0_406 = arith.constant 0 : index
    %577 = vector.load %arg10[%c0_404, %c0_405, %c0_406] : memref<1x3x256xf32, #tpu.memory_space<vmem>>, vector<1x3x256xf32>
    %578 = vector.shape_cast %577 : vector<1x3x256xf32> to vector<3x256xf32>
    %579 = vector.shape_cast %576 : vector<3x256xf32> to vector<1x3x256xf32>
    tpu.vector_store %arg10[%c0_404, %c0_405, %c0_406], %579 {strides = array<i32>} : memref<1x3x256xf32, #tpu.memory_space<vmem>>, vector<1x3x256xf32>,
    return
  }
  func.func @transform_0(%arg0: i32) -> (i32, i32, i32) {
    %c0_i32 = arith.constant 0 : i32
    %c0_i32_0 = arith.constant 0 : i32
    %c0_i32_1 = arith.constant 0 : i32
    return %arg0, %c0_i32, %c0_i32_0 : i32, i32, i32
  }
  func.func @transform_1(%arg0: i32) -> (i32, i32, i32) {
    %c0_i32 = arith.constant 0 : i32
    %c0_i32_0 = arith.constant 0 : i32
    %c0_i32_1 = arith.constant 0 : i32
    %c0_i32_2 = arith.constant 0 : i32
    return %c0_i32, %c0_i32_0, %c0_i32_1 : i32, i32, i32
  }
  func.func @transform_2(%arg0: i32) -> (i32, i32) {
    %c0_i32 = arith.constant 0 : i32
    %c0_i32_0 = arith.constant 0 : i32
    %c0_i32_1 = arith.constant 0 : i32
    return %c0_i32, %c0_i32_0 : i32, i32
  }
  func.func @transform_3(%arg0: i32) -> (i32, i32, i32) {
    %c0_i32 = arith.constant 0 : i32
    %c0_i32_0 = arith.constant 0 : i32
    %c0_i32_1 = arith.constant 0 : i32
    %c0_i32_2 = arith.constant 0 : i32
    return %c0_i32, %c0_i32_0, %c0_i32_1 : i32, i32, i32
  }
  func.func @transform_4(%arg0: i32) -> (i32, i32) {
    %c0_i32 = arith.constant 0 : i32
    %c0_i32_0 = arith.constant 0 : i32
    %c0_i32_1 = arith.constant 0 : i32
    return %c0_i32, %c0_i32_0 : i32, i32
  }
  func.func @transform_5(%arg0: i32) -> (i32, i32, i32) {
    %c0_i32 = arith.constant 0 : i32
    %c0_i32_0 = arith.constant 0 : i32
    %c0_i32_1 = arith.constant 0 : i32
    %c0_i32_2 = arith.constant 0 : i32
    return %c0_i32, %c0_i32_0, %c0_i32_1 : i32, i32, i32
  }
  func.func @transform_6(%arg0: i32) -> (i32, i32) {
    %c0_i32 = arith.constant 0 : i32
    %c0_i32_0 = arith.constant 0 : i32
    %c0_i32_1 = arith.constant 0 : i32
    return %c0_i32, %c0_i32_0 : i32, i32
  }
  func.func @transform_7(%arg0: i32) -> (i32, i32, i32) {
    %c0_i32 = arith.constant 0 : i32
    %c0_i32_0 = arith.constant 0 : i32
    %c0_i32_1 = arith.constant 0 : i32
    %c0_i32_2 = arith.constant 0 : i32
    return %c0_i32, %c0_i32_0, %c0_i32_1 : i32, i32, i32
  }
  func.func @transform_8(%arg0: i32) -> (i32, i32) {
    %c0_i32 = arith.constant 0 : i32
    %c0_i32_0 = arith.constant 0 : i32
    %c0_i32_1 = arith.constant 0 : i32
    return %c0_i32, %c0_i32_0 : i32, i32
  }
  func.func @transform_9(%arg0: i32) -> (i32, i32, i32) {
    %c0_i32 = arith.constant 0 : i32
    %c0_i32_0 = arith.constant 0 : i32
    %c0_i32_1 = arith.constant 0 : i32
    return %arg0, %c0_i32, %c0_i32_0 : i32, i32, i32
  }
}

</mosaic_0001>

<llo_original>
// kernel: basic_autoencoder_forward.1
$region0: #{basic_autoencoder_forward.1}
  #allocation0 [shape = 'u32[]', space=smem, size = 0x4, offset = 0x4, fixed_abs, tag = 'smem constant byte address 0x4 - core index']
  #allocation1 [shape = 'u32[144,128]{1,0:T(1,128)}', space=vmem, size = 0x12000, scoped, tag = 'internal scratch']
  %s0 = inlined_call_operand.vmem [shape: f32[2,3,256], index: 0, kind: input, shape index: {}]
  %s1 = inlined_call_operand.vmem [shape: f32[25,6,3], index: 1, kind: input, shape index: {}]
  %s2 = inlined_call_operand.vmem [shape: f32[6,1], index: 2, kind: input, shape index: {}]
  %s3 = inlined_call_operand.vmem [shape: f32[25,16,6], index: 3, kind: input, shape index: {}]
  %s4 = inlined_call_operand.vmem [shape: f32[16,1], index: 4, kind: input, shape index: {}]
  %s5 = inlined_call_operand.vmem [shape: f32[25,6,16], index: 5, kind: input, shape index: {}]
  %s6 = inlined_call_operand.vmem [shape: f32[6,1], index: 6, kind: input, shape index: {}]
  %s7 = inlined_call_operand.vmem [shape: f32[25,3,6], index: 7, kind: input, shape index: {}]
  %s8 = inlined_call_operand.vmem [shape: f32[3,1], index: 8, kind: input, shape index: {}]
  %s9 = inlined_call_operand.vmem [shape: f32[2,3,256], index: 9, kind: output, shape index: {}]
  %s10 = sld [smem:[#allocation0]]
  $region69: #{basic_autoencoder_forward.1} parent=0
    _
  %s12 = ssub.s32 1, %s10
  %s13 = scalar_select 0, %s12, %s10
  loop: start=0, step=1, limit=4
  $region2: #{basic_autoencoder_forward.1} parent=0 // loop_pre_header
    _
  $region3: #{basic_autoencoder_forward.1} parent=0 // loop_header
    %s15 = sphi 0, %s19
    %p16 = scmp.ge.s32.totalorder %s15, 4
    %s25 = sphi 0, %s27
    %s28 = sphi 0, %s25
    %s29 = sphi 0, %s28
    %s45 = sphi 0, %s29
    %s49 = sphi 0, %s49
    %s51 = sphi 0, %s49
    %s52 = sphi 0, %s51
    %s66 = sphi 0, %s52
    %s70 = sphi 0, %s70
    %s72 = sphi 0, %s70
    %s73 = sphi 0, %s72
    %s87 = sphi 0, %s73
    %s91 = sphi 0, %s91
    %s93 = sphi 0, %s91
    %s94 = sphi 0, %s93
    %s108 = sphi 0, %s94
    %s112 = sphi 0, %s112
    %s114 = sphi 0, %s112
    %s115 = sphi 0, %s114
    %s129 = sphi 0, %s115
    %s133 = sphi 0, %s133
    %s135 = sphi 0, %s133
    %s136 = sphi 0, %s135
    %s150 = sphi 0, %s136
    %s154 = sphi 0, %s154
    %s156 = sphi 0, %s154
    %s157 = sphi 0, %s156
    %s171 = sphi 0, %s157
    %s175 = sphi 0, %s175
    %s177 = sphi 0, %s175
    %s178 = sphi 0, %s177
    %s192 = sphi 0, %s178
    %s196 = sphi 0, %s196
    %s198 = sphi 0, %s196
    %s199 = sphi 0, %s198
    %s213 = sphi 0, %s199
    %s219 = sphi 0, %s221
    %s222 = sphi 0, %s219
    %s223 = sphi 0, %s222
    %s239 = sphi 0, %s223
  $region4: #{basic_autoencoder_forward.1} parent=0 // loop_header_branch
    %18 = sbr.rel (%p16) target = $region8
  $region5: #{basic_autoencoder_forward.1} parent=0 // loop_body
    %s20 = ssub.s32 %s15, 1
    %s21 = ssub.s32 %s15, 2
    %s22 = sadd.s32 %s15, 1
    %s23 = ssub.s32 %s15, %s22
    %p24 = scmp.eq.s32.totalorder %s23, 0
    %s26 = sadd.s32 %s25, 1
    %s27 = scalar_select %p24, %s25, %s26
    %p30 = pneg %p24
    %p31 = scmp.eq.s32.totalorder %s15, 1
    %p32 = por %p30, %p31
    %p33 = scmp.ne.s32.totalorder %s25, %s28
    %p34 = scmp.eq.s32.totalorder %s15, 0
    %p35 = por %p33, %p34
    %p36 = scmp.ne.s32.totalorder %s25, %s28
    %p37 = scmp.eq.s32.totalorder %s20, 1
    %p38 = por %p36, %p37
    %p39 = scmp.ne.s32.totalorder %s28, %s29
    %p40 = scmp.eq.s32.totalorder %s20, 0
    %p41 = por %p39, %p40
    %p42 = scmp.ne.s32.totalorder %s28, %s29
    %p43 = scmp.eq.s32.totalorder %s21, 1
    %p44 = por %p42, %p43
    %p46 = scmp.ne.s32.totalorder %s29, %s45
    %p47 = scmp.eq.s32.totalorder %s21, 0
    %p48 = por %p46, %p47
    %s50 = sadd.s32 %s49, 1
    %p53 = scmp.eq.s32.totalorder %s15, 1
    %p54 = scmp.ne.s32.totalorder %s49, %s51
    %p55 = scmp.eq.s32.totalorder %s15, 0
    %p56 = por %p54, %p55
    %p57 = scmp.ne.s32.totalorder %s49, %s51
    %p58 = scmp.eq.s32.totalorder %s20, 1
    %p59 = por %p57, %p58
    %p60 = scmp.ne.s32.totalorder %s51, %s52
    %p61 = scmp.eq.s32.totalorder %s20, 0
    %p62 = por %p60, %p61
    %p63 = scmp.ne.s32.totalorder %s51, %s52
    %p64 = scmp.eq.s32.totalorder %s21, 1
    %p65 = por %p63, %p64
    %p67 = scmp.ne.s32.totalorder %s52, %s66
    %p68 = scmp.eq.s32.totalorder %s21, 0
    %p69 = por %p67, %p68
    %s71 = sadd.s32 %s70, 1
    %p74 = scmp.eq.s32.totalorder %s15, 1
    %p75 = scmp.ne.s32.totalorder %s70, %s72
    %p76 = scmp.eq.s32.totalorder %s15, 0
    %p77 = por %p75, %p76
    %p78 = scmp.ne.s32.totalorder %s70, %s72
    %p79 = scmp.eq.s32.totalorder %s20, 1
    %p80 = por %p78, %p79
    %p81 = scmp.ne.s32.totalorder %s72, %s73
    %p82 = scmp.eq.s32.totalorder %s20, 0
    %p83 = por %p81, %p82
    %p84 = scmp.ne.s32.totalorder %s72, %s73
    %p85 = scmp.eq.s32.totalorder %s21, 1
    %p86 = por %p84, %p85
    %p88 = scmp.ne.s32.totalorder %s73, %s87
    %p89 = scmp.eq.s32.totalorder %s21, 0
    %p90 = por %p88, %p89
    %s92 = sadd.s32 %s91, 1
    %p95 = scmp.eq.s32.totalorder %s15, 1
    %p96 = scmp.ne.s32.totalorder %s91, %s93
    %p97 = scmp.eq.s32.totalorder %s15, 0
    %p98 = por %p96, %p97
    %p99 = scmp.ne.s32.totalorder %s91, %s93
    %p100 = scmp.eq.s32.totalorder %s20, 1
    %p101 = por %p99, %p100
    %p102 = scmp.ne.s32.totalorder %s93, %s94
    %p103 = scmp.eq.s32.totalorder %s20, 0
    %p104 = por %p102, %p103
    %p105 = scmp.ne.s32.totalorder %s93, %s94
    %p106 = scmp.eq.s32.totalorder %s21, 1
    %p107 = por %p105, %p106
    %p109 = scmp.ne.s32.totalorder %s94, %s108
    %p110 = scmp.eq.s32.totalorder %s21, 0
    %p111 = por %p109, %p110
    %s113 = sadd.s32 %s112, 1
    %p116 = scmp.eq.s32.totalorder %s15, 1
    %p117 = scmp.ne.s32.totalorder %s112, %s114
    %p118 = scmp.eq.s32.totalorder %s15, 0
    %p119 = por %p117, %p118
    %p120 = scmp.ne.s32.totalorder %s112, %s114
    %p121 = scmp.eq.s32.totalorder %s20, 1
    %p122 = por %p120, %p121
    %p123 = scmp.ne.s32.totalorder %s114, %s115
    %p124 = scmp.eq.s32.totalorder %s20, 0
    %p125 = por %p123, %p124
    %p126 = scmp.ne.s32.totalorder %s114, %s115
    %p127 = scmp.eq.s32.totalorder %s21, 1
    %p128 = por %p126, %p127
    %p130 = scmp.ne.s32.totalorder %s115, %s129
    %p131 = scmp.eq.s32.totalorder %s21, 0
    %p132 = por %p130, %p131
    %s134 = sadd.s32 %s133, 1
    %p137 = scmp.eq.s32.totalorder %s15, 1
    %p138 = scmp.ne.s32.totalorder %s133, %s135
    %p139 = scmp.eq.s32.totalorder %s15, 0
    %p140 = por %p138, %p139
    %p141 = scmp.ne.s32.totalorder %s133, %s135
    %p142 = scmp.eq.s32.totalorder %s20, 1
    %p143 = por %p141, %p142
    %p144 = scmp.ne.s32.totalorder %s135, %s136
    %p145 = scmp.eq.s32.totalorder %s20, 0
    %p146 = por %p144, %p145
    %p147 = scmp.ne.s32.totalorder %s135, %s136
    %p148 = scmp.eq.s32.totalorder %s21, 1
    %p149 = por %p147, %p148
    %p151 = scmp.ne.s32.totalorder %s136, %s150
    %p152 = scmp.eq.s32.totalorder %s21, 0
    %p153 = por %p151, %p152
    %s155 = sadd.s32 %s154, 1
    %p158 = scmp.eq.s32.totalorder %s15, 1
    %p159 = scmp.ne.s32.totalorder %s154, %s156
    %p160 = scmp.eq.s32.totalorder %s15, 0
    %p161 = por %p159, %p160
    %p162 = scmp.ne.s32.totalorder %s154, %s156
    %p163 = scmp.eq.s32.totalorder %s20, 1
    %p164 = por %p162, %p163
    %p165 = scmp.ne.s32.totalorder %s156, %s157
    %p166 = scmp.eq.s32.totalorder %s20, 0
    %p167 = por %p165, %p166
    %p168 = scmp.ne.s32.totalorder %s156, %s157
    %p169 = scmp.eq.s32.totalorder %s21, 1
    %p170 = por %p168, %p169
    %p172 = scmp.ne.s32.totalorder %s157, %s171
    %p173 = scmp.eq.s32.totalorder %s21, 0
    %p174 = por %p172, %p173
    %s176 = sadd.s32 %s175, 1
    %p179 = scmp.eq.s32.totalorder %s15, 1
    %p180 = scmp.ne.s32.totalorder %s175, %s177
    %p181 = scmp.eq.s32.totalorder %s15, 0
    %p182 = por %p180, %p181
    %p183 = scmp.ne.s32.totalorder %s175, %s177
    %p184 = scmp.eq.s32.totalorder %s20, 1
    %p185 = por %p183, %p184
    %p186 = scmp.ne.s32.totalorder %s177, %s178
    %p187 = scmp.eq.s32.totalorder %s20, 0
    %p188 = por %p186, %p187
    %p189 = scmp.ne.s32.totalorder %s177, %s178
    %p190 = scmp.eq.s32.totalorder %s21, 1
    %p191 = por %p189, %p190
    %p193 = scmp.ne.s32.totalorder %s178, %s192
    %p194 = scmp.eq.s32.totalorder %s21, 0
    %p195 = por %p193, %p194
    %s197 = sadd.s32 %s196, 1
    %p200 = scmp.eq.s32.totalorder %s15, 1
    %p201 = scmp.ne.s32.totalorder %s196, %s198
    %p202 = scmp.eq.s32.totalorder %s15, 0
    %p203 = por %p201, %p202
    %p204 = scmp.ne.s32.totalorder %s196, %s198
    %p205 = scmp.eq.s32.totalorder %s20, 1
    %p206 = por %p204, %p205
    %p207 = scmp.ne.s32.totalorder %s198, %s199
    %p208 = scmp.eq.s32.totalorder %s20, 0
    %p209 = por %p207, %p208
    %p210 = scmp.ne.s32.totalorder %s198, %s199
    %p211 = scmp.eq.s32.totalorder %s21, 1
    %p212 = por %p210, %p211
    %p214 = scmp.ne.s32.totalorder %s199, %s213
    %p215 = scmp.eq.s32.totalorder %s21, 0
    %p216 = por %p214, %p215
    %s217 = ssub.s32 %s15, %s22
    %p218 = scmp.eq.s32.totalorder %s217, 0
    %s220 = sadd.s32 %s219, 1
    %s221 = scalar_select %p218, %s219, %s220
    %p224 = pneg %p218
    %p225 = scmp.eq.s32.totalorder %s15, 1
    %p226 = por %p224, %p225
    %p227 = scmp.ne.s32.totalorder %s219, %s222
    %p228 = scmp.eq.s32.totalorder %s15, 0
    %p229 = por %p227, %p228
    %p230 = scmp.ne.s32.totalorder %s219, %s222
    %p231 = scmp.eq.s32.totalorder %s20, 1
    %p232 = por %p230, %p231
    %p233 = scmp.ne.s32.totalorder %s222, %s223
    %p234 = scmp.eq.s32.totalorder %s20, 0
    %p235 = por %p233, %p234
    %p236 = scmp.ne.s32.totalorder %s222, %s223
    %p237 = scmp.eq.s32.totalorder %s21, 1
    %p238 = por %p236, %p237
    %p240 = scmp.ne.s32.totalorder %s223, %s239
    %p241 = scmp.eq.s32.totalorder %s21, 0
    %p242 = por %p240, %p241
    %p243 = scmp.le.s32.totalorder 1, %s15
    %p244 = scmp.lt.s32.totalorder %s15, 3
    %p245 = pnand %p243, %p244
    %p246 = pneg %p245
    // Predicated region
    $region9: #{basic_autoencoder_forward.1} parent=5 // pred_check
      _
    $region10: #{basic_autoencoder_forward.1} parent=5 // pred_check_branch
      %248 = sbr.rel (%p245) target = $region12
    $region11: #{basic_autoencoder_forward.1} parent=5 // pred_region
      %s249 = ssub.s32 %s15, 1
      // Predicated region
      $region13: #{basic_autoencoder_forward.1} parent=11 // pred_check
        %p250 = pneg %p62
      $region14: #{basic_autoencoder_forward.1} parent=11 // pred_check_branch
        %252 = sbr.rel (%p250) target = $region16
      $region15: #{basic_autoencoder_forward.1} parent=11 // pred_region
        _
      $region16: #{basic_autoencoder_forward.1} parent=11 // pred_fallthru
        _
      // Predicated region
      $region17: #{basic_autoencoder_forward.1} parent=11 // pred_check
        %p253 = pneg %p83
      $region18: #{basic_autoencoder_forward.1} parent=11 // pred_check_branch
        %255 = sbr.rel (%p253) target = $region20
      $region19: #{basic_autoencoder_forward.1} parent=11 // pred_region
        _
      $region20: #{basic_autoencoder_forward.1} parent=11 // pred_fallthru
        _
      // Predicated region
      $region21: #{basic_autoencoder_forward.1} parent=11 // pred_check
        %p256 = pneg %p104
      $region22: #{basic_autoencoder_forward.1} parent=11 // pred_check_branch
        %258 = sbr.rel (%p256) target = $region24
      $region23: #{basic_autoencoder_forward.1} parent=11 // pred_region
        _
      $region24: #{basic_autoencoder_forward.1} parent=11 // pred_fallthru
        _
      // Predicated region
      $region25: #{basic_autoencoder_forward.1} parent=11 // pred_check
        %p259 = pneg %p125
      $region26: #{basic_autoencoder_forward.1} parent=11 // pred_check_branch
        %261 = sbr.rel (%p259) target = $region28
      $region27: #{basic_autoencoder_forward.1} parent=11 // pred_region
        _
      $region28: #{basic_autoencoder_forward.1} parent=11 // pred_fallthru
        _
      // Predicated region
      $region29: #{basic_autoencoder_forward.1} parent=11 // pred_check
        %p262 = pneg %p146
      $region30: #{basic_autoencoder_forward.1} parent=11 // pred_check_branch
        %264 = sbr.rel (%p262) target = $region32
      $region31: #{basic_autoencoder_forward.1} parent=11 // pred_region
        _
      $region32: #{basic_autoencoder_forward.1} parent=11 // pred_fallthru
        _
      // Predicated region
      $region33: #{basic_autoencoder_forward.1} parent=11 // pred_check
        %p265 = pneg %p167
      $region34: #{basic_autoencoder_forward.1} parent=11 // pred_check_branch
        %267 = sbr.rel (%p265) target = $region36
      $region35: #{basic_autoencoder_forward.1} parent=11 // pred_region
        _
      $region36: #{basic_autoencoder_forward.1} parent=11 // pred_fallthru
        _
      // Predicated region
      $region37: #{basic_autoencoder_forward.1} parent=11 // pred_check
        %p268 = pneg %p188
      $region38: #{basic_autoencoder_forward.1} parent=11 // pred_check_branch
        %270 = sbr.rel (%p268) target = $region40
      $region39: #{basic_autoencoder_forward.1} parent=11 // pred_region
        _
      $region40: #{basic_autoencoder_forward.1} parent=11 // pred_fallthru
        _
      // Predicated region
      $region41: #{basic_autoencoder_forward.1} parent=11 // pred_check
        %p271 = pneg %p209
      $region42: #{basic_autoencoder_forward.1} parent=11 // pred_check_branch
        %273 = sbr.rel (%p271) target = $region44
      $region43: #{basic_autoencoder_forward.1} parent=11 // pred_region
        _
      $region44: #{basic_autoencoder_forward.1} parent=11 // pred_fallthru
        _
    $region12: #{basic_autoencoder_forward.1} parent=5 // pred_fallthru
      _
    %p274 = scmp.lt.s32.totalorder %s15, 2
    // Predicated region
    $region45: #{basic_autoencoder_forward.1} parent=5 // pred_check
      %p275 = pneg %p274
    $region46: #{basic_autoencoder_forward.1} parent=5 // pred_check_branch
      %277 = sbr.rel (%p275) target = $region48
    $region47: #{basic_autoencoder_forward.1} parent=5 // pred_region
      // Predicated region
      $region49: #{basic_autoencoder_forward.1} parent=47 // pred_check
        %p278 = pneg %p35
      $region50: #{basic_autoencoder_forward.1} parent=47 // pred_check_branch
        %280 = sbr.rel (%p278) target = $region52
      $region51: #{basic_autoencoder_forward.1} parent=47 // pred_region
        %p281 = scmp.lt.s32.totalorder %s15, 1
        %s282 = scalar_select %p281, %s15, 1
        %s283 = smul.addr %s282, 2
        %s284 = smul.addr %s283, 4
        %s285 = scalar_lea.vmem %s0, %s284
      $region52: #{basic_autoencoder_forward.1} parent=47 // pred_fallthru
        _
    $region48: #{basic_autoencoder_forward.1} parent=5 // pred_fallthru
      _
    %p286 = scmp.le.s32.totalorder 1, %s15
    %p287 = scmp.lt.s32.totalorder %s15, 3
    %p288 = pnand %p286, %p287
    %p289 = pneg %p288
    // Predicated region
    $region53: #{basic_autoencoder_forward.1} parent=5 // pred_check
      _
    $region54: #{basic_autoencoder_forward.1} parent=5 // pred_check_branch
      %291 = sbr.rel (%p288) target = $region56
    $region55: #{basic_autoencoder_forward.1} parent=5 // pred_region
      %s292 = ssub.s32 %s15, 1
      %p293 = scmp.lt.s32.totalorder %s20, 1
      %s294 = scalar_select %p293, %s20, 1
      %s295 = smul.addr %s294, 2
      %s296 = smul.addr %s295, 4
      %s297 = scalar_lea.vmem %s0, %s296
      %p298 = pneg %p41
      %p299 = pneg %p38
      %p300 = pneg %p62
      %p301 = pneg %p59
      %p302 = pneg %p83
      %p303 = pneg %p80
      %p304 = pneg %p104
      %p305 = pneg %p101
      %p306 = pneg %p125
      %p307 = pneg %p122
      %p308 = pneg %p146
      %p309 = pneg %p143
      %p310 = pneg %p167
      %p311 = pneg %p164
      %p312 = pneg %p188
      %p313 = pneg %p185
      %p314 = pneg %p209
      %p315 = pneg %p206
      %p316 = pneg %p235
      %p317 = pneg %p232
      %p318 = scmp.lt.s32.totalorder %s20, 1
      %s319 = scalar_select %p318, %s20, 1
      %s320 = smul.addr %s319, 2
      %s321 = smul.addr %s320, 4
      %s322 = scalar_lea.vmem %s9, %s321
      %p323 = scmp.lt.s32.totalorder %s20, 1
      %s324 = scalar_select %p323, %s20, 1
      %s325 = smul.addr %s324, 2
      %s326 = smul.addr %s325, 4
      %s327 = scalar_lea.vmem %s0, %s326
      %p328 = scmp.lt.s32.totalorder %s20, 1
      %s329 = scalar_select %p328, %s20, 1
      %s330 = smul.addr %s329, 2
      %s331 = smul.addr %s330, 4
      %s332 = scalar_lea.vmem %s9, %s331
      %v333 = vld [vmem:[%s327] sm:$0x77]
      %v335 = vcombine.high %v333, %v333
      %v336 = vld [vmem:[%s1] sm:$0x3f]
      %s337 = scalar_lea.vmem %s1, 40
      %v338 = vld [vmem:[%s337] sm:$0x3f]
      %339 = vrot.lane.b32.xlu0 %v333, 112
      %v340 = vpop.permute.xlu0 %339
      %341 = vrot.lane.b32.xlu0 %v335, 112
      %v342 = vpop.permute.xlu0 %341
      %vm343 = vcmask 916480
      %v344 = vsel %vm343, %v340, %v342
      %vm345 = vcmask 23552
      %v347 = vsel %vm345, %v338, 0
      %vm349 = vcmask 1042432
      %v350 = vsel %vm349, %v344, 0
      %v352 = vsel %vm349, %v342, 0
      %354 = vmatprep.subr.mxu0 %v352
      %355 = vmatpush1.msra.mxu0 %v350
      %356 = vmatprep.subr.mxu0 0.0
      %357 = vmatpush1.msra.mxu0 0.0
      %358 = vmatprep.subr.mxu0 0.0
      %359 = vmatpush1.msra.mxu0 0.0
      %360 = vmatprep.subr.mxu0 0.0
      %361 = vmatpush1.msra.mxu0 0.0
      %362 = vmatprep.subr.mxu0 0.0
      %363 = vmatpush1.msra.mxu0 0.0
      %364 = vmatprep.subr.mxu0 0.0
      %365 = vmatpush1.msra.mxu0 0.0
      %366 = vmatprep.subr.mxu0 0.0
      %367 = vmatpush1.msra.mxu0 0.0
      %368 = vmatprep.subr.mxu0 0.0
      %369 = vmatpush1.msra.mxu0 0.0
      %370 = vmatprep.subr.mxu0 0.0
      %371 = vmatpush1.msra.mxu0 0.0
      %372 = vmatprep.subr.mxu0 0.0
      %373 = vmatpush1.msra.mxu0 0.0
      %374 = vmatprep.subr.mxu0 0.0
      %375 = vmatpush1.msra.mxu0 0.0
      %376 = vmatprep.subr.mxu0 0.0
      %377 = vmatpush1.msra.mxu0 0.0
      %378 = vmatprep.subr.mxu0 0.0
      %379 = vmatpush1.msra.mxu0 0.0
      %380 = vmatprep.subr.mxu0 0.0
      %381 = vmatpush1.msra.mxu0 0.0
      %382 = vmatprep.subr.mxu0 0.0
      %383 = vmatpush1.msra.mxu0 0.0
      %384 = vmatprep.subr.mxu0 0.0
      %385 = vmatpush1.msra.mxu0 0.0
      %386 = vmatprep.subr.mxu0 0.0
      %387 = vmatpush1.msra.mxu0 0.0
      %388 = vmatprep.subr.mxu0 0.0
      %389 = vmatpush1.msra.mxu0 0.0
      %390 = vmatprep.subr.mxu0 0.0
      %391 = vmatpush1.msra.mxu0 0.0
      %392 = vmatprep.subr.mxu0 0.0
      %393 = vmatpush1.msra.mxu0 0.0
      %394 = vmatprep.subr.mxu0 0.0
      %395 = vmatpush1.msra.mxu0 0.0
      %396 = vmatprep.subr.mxu0 0.0
      %397 = vmatpush1.msra.mxu0 0.0
      %398 = vmatprep.subr.mxu0 0.0
      %399 = vmatpush1.msra.mxu0 0.0
      %400 = vmatprep.subr.mxu0 0.0
      %401 = vmatpush1.msra.mxu0 0.0
      %402 = vmatprep.subr.mxu0 0.0
      %403 = vmatpush1.msra.mxu0 0.0
      %404 = vmatprep.subr.mxu0 0.0
      %405 = vmatpush1.msra.mxu0 0.0
      %406 = vmatprep.subr.mxu0 0.0
      %407 = vmatpush1.msra.mxu0 0.0
      %408 = vmatprep.subr.mxu0 0.0
      %409 = vmatpush1.msra.mxu0 0.0
      %410 = vmatprep.subr.mxu0 0.0
      %411 = vmatpush1.msra.mxu0 0.0
      %412 = vmatprep.subr.mxu0 0.0
      %413 = vmatpush1.msra.mxu0 0.0
      %414 = vmatprep.subr.mxu0 0.0
      %415 = vmatpush1.msra.mxu0 0.0
      %416 = vmatprep.subr.mxu0 0.0
      %417 = vmatpush1.msra.mxu0 0.0
      %418 = vmatprep.mubr.f32.mxu0 0.0
      %419 = vmatmul.mubr.f32.gmra.mrb[0].mxu0 %v347
      %v420 = vpop.f32.mrb[0].mxu0
      %v421 = vadd.f32 0.0, %v420
      %v422 = vpop.f32.mrb[0].mxu0
      %v423 = vadd.f32 0.0, %v422
      %424 = vdwg.mxu0
      %v426 = vsel %vm345, %v336, 0
      %v428 = vsel %vm349, %v333, 0
      %v430 = vsel %vm349, %v335, 0
      %432 = vmatprep.subr.mxu0 %v430
      %433 = vmatpush1.msra.mxu0 %v428
      %434 = vmatprep.subr.mxu0 0.0
      %435 = vmatpush1.msra.mxu0 0.0
      %436 = vmatprep.subr.mxu0 0.0
      %437 = vmatpush1.msra.mxu0 0.0
      %438 = vmatprep.subr.mxu0 0.0
      %439 = vmatpush1.msra.mxu0 0.0
      %440 = vmatprep.subr.mxu0 0.0
      %441 = vmatpush1.msra.mxu0 0.0
      %442 = vmatprep.subr.mxu0 0.0
      %443 = vmatpush1.msra.mxu0 0.0
      %444 = vmatprep.subr.mxu0 0.0
      %445 = vmatpush1.msra.mxu0 0.0
      %446 = vmatprep.subr.mxu0 0.0
      %447 = vmatpush1.msra.mxu0 0.0
      %448 = vmatprep.subr.mxu0 0.0
      %449 = vmatpush1.msra.mxu0 0.0
      %450 = vmatprep.subr.mxu0 0.0
      %451 = vmatpush1.msra.mxu0 0.0
      %452 = vmatprep.subr.mxu0 0.0
      %453 = vmatpush1.msra.mxu0 0.0
      %454 = vmatprep.subr.mxu0 0.0
      %455 = vmatpush1.msra.mxu0 0.0
      %456 = vmatprep.subr.mxu0 0.0
      %457 = vmatpush1.msra.mxu0 0.0
      %458 = vmatprep.subr.mxu0 0.0
      %459 = vmatpush1.msra.mxu0 0.0
      %460 = vmatprep.subr.mxu0 0.0
      %461 = vmatpush1.msra.mxu0 0.0
      %462 = vmatprep.subr.mxu0 0.0
      %463 = vmatpush1.msra.mxu0 0.0
      %464 = vmatprep.subr.mxu0 0.0
      %465 = vmatpush1.msra.mxu0 0.0
      %466 = vmatprep.subr.mxu0 0.0
      %467 = vmatpush1.msra.mxu0 0.0
      %468 = vmatprep.subr.mxu0 0.0
      %469 = vmatpush1.msra.mxu0 0.0
      %470 = vmatprep.subr.mxu0 0.0
      %471 = vmatpush1.msra.mxu0 0.0
      %472 = vmatprep.subr.mxu0 0.0
      %473 = vmatpush1.msra.mxu0 0.0
      %474 = vmatprep.subr.mxu0 0.0
      %475 = vmatpush1.msra.mxu0 0.0
      %476 = vmatprep.subr.mxu0 0.0
      %477 = vmatpush1.msra.mxu0 0.0
      %478 = vmatprep.subr.mxu0 0.0
      %479 = vmatpush1.msra.mxu0 0.0
      %480 = vmatprep.subr.mxu0 0.0
      %481 = vmatpush1.msra.mxu0 0.0
      %482 = vmatprep.subr.mxu0 0.0
      %483 = vmatpush1.msra.mxu0 0.0
      %484 = vmatprep.subr.mxu0 0.0
      %485 = vmatpush1.msra.mxu0 0.0
      %486 = vmatprep.subr.mxu0 0.0
      %487 = vmatpush1.msra.mxu0 0.0
      %488 = vmatprep.subr.mxu0 0.0
      %489 = vmatpush1.msra.mxu0 0.0
      %490 = vmatprep.subr.mxu0 0.0
      %491 = vmatpush1.msra.mxu0 0.0
      %492 = vmatprep.subr.mxu0 0.0
      %493 = vmatpush1.msra.mxu0 0.0
      %494 = vmatprep.subr.mxu0 0.0
      %495 = vmatpush1.msra.mxu0 0.0
      %496 = vmatprep.mubr.f32.mxu0 0.0
      %497 = vmatmul.mubr.f32.gmra.mrb[0].mxu0 %v426
      %v498 = vpop.f32.mrb[0].mxu0
      %v499 = vadd.f32 %v421, %v498
      %v500 = vpop.f32.mrb[0].mxu0
      %v501 = vadd.f32 %v423, %v500
      %502 = vdwg.mxu0
      %s503 = scalar_lea.vmem %s1, 80
      %v504 = vld [vmem:[%s503] sm:$0x3f]
      %505 = vrot.lane.b32.xlu0 %v333, 96
      %v506 = vpop.permute.xlu0 %505
      %507 = vrot.lane.b32.xlu0 %v335, 96
      %v508 = vpop.permute.xlu0 %507
      %vm509 = vcmask 785408
      %v510 = vsel %vm509, %v506, %v508
      %v512 = vsel %vm345, %v504, 0
      %v514 = vsel %vm349, %v510, 0
      %v516 = vsel %vm349, %v508, 0
      %518 = vmatprep.subr.mxu0 %v516
      %519 = vmatpush1.msra.mxu0 %v514
      %520 = vmatprep.subr.mxu0 0.0
      %521 = vmatpush1.msra.mxu0 0.0
      %522 = vmatprep.subr.mxu0 0.0
      %523 = vmatpush1.msra.mxu0 0.0
      %524 = vmatprep.subr.mxu0 0.0
      %525 = vmatpush1.msra.mxu0 0.0
      %526 = vmatprep.subr.mxu0 0.0
      %527 = vmatpush1.msra.mxu0 0.0
      %528 = vmatprep.subr.mxu0 0.0
      %529 = vmatpush1.msra.mxu0 0.0
      %530 = vmatprep.subr.mxu0 0.0
      %531 = vmatpush1.msra.mxu0 0.0
      %532 = vmatprep.subr.mxu0 0.0
      %533 = vmatpush1.msra.mxu0 0.0
      %534 = vmatprep.subr.mxu0 0.0
      %535 = vmatpush1.msra.mxu0 0.0
      %536 = vmatprep.subr.mxu0 0.0
      %537 = vmatpush1.msra.mxu0 0.0
      %538 = vmatprep.subr.mxu0 0.0
      %539 = vmatpush1.msra.mxu0 0.0
      %540 = vmatprep.subr.mxu0 0.0
      %541 = vmatpush1.msra.mxu0 0.0
      %542 = vmatprep.subr.mxu0 0.0
      %543 = vmatpush1.msra.mxu0 0.0
      %544 = vmatprep.subr.mxu0 0.0
      %545 = vmatpush1.msra.mxu0 0.0
      %546 = vmatprep.subr.mxu0 0.0
      %547 = vmatpush1.msra.mxu0 0.0
      %548 = vmatprep.subr.mxu0 0.0
      %549 = vmatpush1.msra.mxu0 0.0
      %550 = vmatprep.subr.mxu0 0.0
      %551 = vmatpush1.msra.mxu0 0.0
      %552 = vmatprep.subr.mxu0 0.0
      %553 = vmatpush1.msra.mxu0 0.0
      %554 = vmatprep.subr.mxu0 0.0
      %555 = vmatpush1.msra.mxu0 0.0
      %556 = vmatprep.subr.mxu0 0.0
      %557 = vmatpush1.msra.mxu0 0.0
      %558 = vmatprep.subr.mxu0 0.0
      %559 = vmatpush1.msra.mxu0 0.0
      %560 = vmatprep.subr.mxu0 0.0
      %561 = vmatpush1.msra.mxu0 0.0
      %562 = vmatprep.subr.mxu0 0.0
      %563 = vmatpush1.msra.mxu0 0.0
      %564 = vmatprep.subr.mxu0 0.0
      %565 = vmatpush1.msra.mxu0 0.0
      %566 = vmatprep.subr.mxu0 0.0
      %567 = vmatpush1.msra.mxu0 0.0
      %568 = vmatprep.subr.mxu0 0.0
      %569 = vmatpush1.msra.mxu0 0.0
      %570 = vmatprep.subr.mxu0 0.0
      %571 = vmatpush1.msra.mxu0 0.0
      %572 = vmatprep.subr.mxu0 0.0
      %573 = vmatpush1.msra.mxu0 0.0
      %574 = vmatprep.subr.mxu0 0.0
      %575 = vmatpush1.msra.mxu0 0.0
      %576 = vmatprep.subr.mxu0 0.0
      %577 = vmatpush1.msra.mxu0 0.0
      %578 = vmatprep.subr.mxu0 0.0
      %579 = vmatpush1.msra.mxu0 0.0
      %580 = vmatprep.subr.mxu0 0.0
      %581 = vmatpush1.msra.mxu0 0.0
      %582 = vmatprep.mubr.f32.mxu0 0.0
      %583 = vmatmul.mubr.f32.gmra.mrb[0].mxu0 %v512
      %v584 = vpop.f32.mrb[0].mxu0
      %v585 = vadd.f32 0.0, %v584
      %v586 = vpop.f32.mrb[0].mxu0
      %v587 = vadd.f32 0.0, %v586
      %588 = vdwg.mxu0
      %v589 = vadd.f32 %v499, %v585
      %v590 = vadd.f32 %v501, %v587
      %s591 = scalar_lea.vmem %s1, 120
      %v592 = vld [vmem:[%s591] sm:$0x3f]
      %593 = vrot.lane.b32.xlu0 %v333, 80
      %v594 = vpop.permute.xlu0 %593
      %595 = vrot.lane.b32.xlu0 %v335, 80
      %v596 = vpop.permute.xlu0 %595
      %vm597 = vcmask 654336
      %v598 = vsel %vm597, %v594, %v596
      %v600 = vsel %vm345, %v592, 0
      %v602 = vsel %vm349, %v598, 0
      %v604 = vsel %vm349, %v596, 0
      %606 = vmatprep.subr.mxu0 %v604
      %607 = vmatpush1.msra.mxu0 %v602
      %608 = vmatprep.subr.mxu0 0.0
      %609 = vmatpush1.msra.mxu0 0.0
      %610 = vmatprep.subr.mxu0 0.0
      %611 = vmatpush1.msra.mxu0 0.0
      %612 = vmatprep.subr.mxu0 0.0
      %613 = vmatpush1.msra.mxu0 0.0
      %614 = vmatprep.subr.mxu0 0.0
      %615 = vmatpush1.msra.mxu0 0.0
      %616 = vmatprep.subr.mxu0 0.0
      %617 = vmatpush1.msra.mxu0 0.0
      %618 = vmatprep.subr.mxu0 0.0
      %619 = vmatpush1.msra.mxu0 0.0
      %620 = vmatprep.subr.mxu0 0.0
      %621 = vmatpush1.msra.mxu0 0.0
      %622 = vmatprep.subr.mxu0 0.0
      %623 = vmatpush1.msra.mxu0 0.0
      %624 = vmatprep.subr.mxu0 0.0
      %625 = vmatpush1.msra.mxu0 0.0
      %626 = vmatprep.subr.mxu0 0.0
      %627 = vmatpush1.msra.mxu0 0.0
      %628 = vmatprep.subr.mxu0 0.0
      %629 = vmatpush1.msra.mxu0 0.0
      %630 = vmatprep.subr.mxu0 0.0
      %631 = vmatpush1.msra.mxu0 0.0
      %632 = vmatprep.subr.mxu0 0.0
      %633 = vmatpush1.msra.mxu0 0.0
      %634 = vmatprep.subr.mxu0 0.0
      %635 = vmatpush1.msra.mxu0 0.0
      %636 = vmatprep.subr.mxu0 0.0
      %637 = vmatpush1.msra.mxu0 0.0
      %638 = vmatprep.subr.mxu0 0.0
      %639 = vmatpush1.msra.mxu0 0.0
      %640 = vmatprep.subr.mxu0 0.0
      %641 = vmatpush1.msra.mxu0 0.0
      %642 = vmatprep.subr.mxu0 0.0
      %643 = vmatpush1.msra.mxu0 0.0
      %644 = vmatprep.subr.mxu0 0.0
      %645 = vmatpush1.msra.mxu0 0.0
      %646 = vmatprep.subr.mxu0 0.0
      %647 = vmatpush1.msra.mxu0 0.0
      %648 = vmatprep.subr.mxu0 0.0
      %649 = vmatpush1.msra.mxu0 0.0
      %650 = vmatprep.subr.mxu0 0.0
      %651 = vmatpush1.msra.mxu0 0.0
      %652 = vmatprep.subr.mxu0 0.0
      %653 = vmatpush1.msra.mxu0 0.0
      %654 = vmatprep.subr.mxu0 0.0
      %655 = vmatpush1.msra.mxu0 0.0
      %656 = vmatprep.subr.mxu0 0.0
      %657 = vmatpush1.msra.mxu0 0.0
      %658 = vmatprep.subr.mxu0 0.0
      %659 = vmatpush1.msra.mxu0 0.0
      %660 = vmatprep.subr.mxu0 0.0
      %661 = vmatpush1.msra.mxu0 0.0
      %662 = vmatprep.subr.mxu0 0.0
      %663 = vmatpush1.msra.mxu0 0.0
      %664 = vmatprep.subr.mxu0 0.0
      %665 = vmatpush1.msra.mxu0 0.0
      %666 = vmatprep.subr.mxu0 0.0
      %667 = vmatpush1.msra.mxu0 0.0
      %668 = vmatprep.subr.mxu0 0.0
      %669 = vmatpush1.msra.mxu0 0.0
      %670 = vmatprep.mubr.f32.mxu0 0.0
      %671 = vmatmul.mubr.f32.gmra.mrb[0].mxu0 %v600
      %v672 = vpop.f32.mrb[0].mxu0
      %v673 = vadd.f32 0.0, %v672
      %v674 = vpop.f32.mrb[0].mxu0
      %v675 = vadd.f32 0.0, %v674
      %676 = vdwg.mxu0
      %v677 = vadd.f32 %v589, %v673
      %v678 = vadd.f32 %v590, %v675
      %s679 = scalar_lea.vmem %s1, 160
      %v680 = vld [vmem:[%s679] sm:$0x3f]
      %682 = vrot.lane.b32.xlu0 %v333, 64
      %v683 = vpop.permute.xlu0 %682
      %684 = vrot.lane.b32.xlu0 %v335, 64
      %v685 = vpop.permute.xlu0 %684
      %686 = vrot.lane.b32.xlu0 0.0, 64
      %v687 = vpop.permute.xlu0 %686
      %vm688 = vcmask 523264
      %v689 = vsel %vm688, %v683, %v685
      %v690 = vsel %vm688, %v685, %v687
      %v692 = vsel %vm345, %v680, 0
      %v694 = vsel %vm349, %v689, 0
      %v696 = vsel %vm349, %v690, 0
      %698 = vmatprep.subr.mxu0 %v696
      %699 = vmatpush1.msra.mxu0 %v694
      %700 = vmatprep.subr.mxu0 0.0
      %701 = vmatpush1.msra.mxu0 0.0
      %702 = vmatprep.subr.mxu0 0.0
      %703 = vmatpush1.msra.mxu0 0.0
      %704 = vmatprep.subr.mxu0 0.0
      %705 = vmatpush1.msra.mxu0 0.0
      %706 = vmatprep.subr.mxu0 0.0
      %707 = vmatpush1.msra.mxu0 0.0
      %708 = vmatprep.subr.mxu0 0.0
      %709 = vmatpush1.msra.mxu0 0.0
      %710 = vmatprep.subr.mxu0 0.0
      %711 = vmatpush1.msra.mxu0 0.0
      %712 = vmatprep.subr.mxu0 0.0
      %713 = vmatpush1.msra.mxu0 0.0
      %714 = vmatprep.subr.mxu0 0.0
      %715 = vmatpush1.msra.mxu0 0.0
      %716 = vmatprep.subr.mxu0 0.0
      %717 = vmatpush1.msra.mxu0 0.0
      %718 = vmatprep.subr.mxu0 0.0
      %719 = vmatpush1.msra.mxu0 0.0
      %720 = vmatprep.subr.mxu0 0.0
      %721 = vmatpush1.msra.mxu0 0.0
      %722 = vmatprep.subr.mxu0 0.0
      %723 = vmatpush1.msra.mxu0 0.0
      %724 = vmatprep.subr.mxu0 0.0
      %725 = vmatpush1.msra.mxu0 0.0
      %726 = vmatprep.subr.mxu0 0.0
      %727 = vmatpush1.msra.mxu0 0.0
      %728 = vmatprep.subr.mxu0 0.0
      %729 = vmatpush1.msra.mxu0 0.0
      %730 = vmatprep.subr.mxu0 0.0
      %731 = vmatpush1.msra.mxu0 0.0
      %732 = vmatprep.subr.mxu0 0.0
      %733 = vmatpush1.msra.mxu0 0.0
      %734 = vmatprep.subr.mxu0 0.0
      %735 = vmatpush1.msra.mxu0 0.0
      %736 = vmatprep.subr.mxu0 0.0
      %737 = vmatpush1.msra.mxu0 0.0
      %738 = vmatprep.subr.mxu0 0.0
      %739 = vmatpush1.msra.mxu0 0.0
      %740 = vmatprep.subr.mxu0 0.0
      %741 = vmatpush1.msra.mxu0 0.0
      %742 = vmatprep.subr.mxu0 0.0
      %743 = vmatpush1.msra.mxu0 0.0
      %744 = vmatprep.subr.mxu0 0.0
      %745 = vmatpush1.msra.mxu0 0.0
      %746 = vmatprep.subr.mxu0 0.0
      %747 = vmatpush1.msra.mxu0 0.0
      %748 = vmatprep.subr.mxu0 0.0
      %749 = vmatpush1.msra.mxu0 0.0
      %750 = vmatprep.subr.mxu0 0.0
      %751 = vmatpush1.msra.mxu0 0.0
      %752 = vmatprep.subr.mxu0 0.0
      %753 = vmatpush1.msra.mxu0 0.0
      %754 = vmatprep.subr.mxu0 0.0
      %755 = vmatpush1.msra.mxu0 0.0
      %756 = vmatprep.subr.mxu0 0.0
      %757 = vmatpush1.msra.mxu0 0.0
      %758 = vmatprep.subr.mxu0 0.0
      %759 = vmatpush1.msra.mxu0 0.0
      %760 = vmatprep.subr.mxu0 0.0
      %761 = vmatpush1.msra.mxu0 0.0
      %762 = vmatprep.mubr.f32.mxu0 0.0
      %763 = vmatmul.mubr.f32.gmra.mrb[0].mxu0 %v692
      %v764 = vpop.f32.mrb[0].mxu0
      %v765 = vadd.f32 0.0, %v764
      %v766 = vpop.f32.mrb[0].mxu0
      %v767 = vadd.f32 0.0, %v766
      %768 = vdwg.mxu0
      %v769 = vadd.f32 %v677, %v765
      %v770 = vadd.f32 %v678, %v767
      %s771 = scalar_lea.vmem %s1, 8
      %v772 = vld [vmem:[%s771] sm:$0x3f]
      %s773 = scalar_lea.vmem %s1, 48
      %v774 = vld [vmem:[%s773] sm:$0x3f]
      %775 = vrot.lane.b32.xlu0 %v333, 111
      %v776 = vpop.permute.xlu0 %775
      %777 = vrot.lane.b32.xlu0 %v335, 111
      %v778 = vpop.permute.xlu0 %777
      %vm779 = vcmask 908288
      %v780 = vsel %vm779, %v776, %v778
      %v782 = vsel %vm345, %v774, 0
      %v784 = vsel %vm349, %v780, 0
      %v786 = vsel %vm349, %v778, 0
      %788 = vmatprep.subr.mxu0 %v786
      %789 = vmatpush1.msra.mxu0 %v784
      %790 = vmatprep.subr.mxu0 0.0
      %791 = vmatpush1.msra.mxu0 0.0
      %792 = vmatprep.subr.mxu0 0.0
      %793 = vmatpush1.msra.mxu0 0.0
      %794 = vmatprep.subr.mxu0 0.0
      %795 = vmatpush1.msra.mxu0 0.0
      %796 = vmatprep.subr.mxu0 0.0
      %797 = vmatpush1.msra.mxu0 0.0
      %798 = vmatprep.subr.mxu0 0.0
      %799 = vmatpush1.msra.mxu0 0.0
      %800 = vmatprep.subr.mxu0 0.0
      %801 = vmatpush1.msra.mxu0 0.0
      %802 = vmatprep.subr.mxu0 0.0
      %803 = vmatpush1.msra.mxu0 0.0
      %804 = vmatprep.subr.mxu0 0.0
      %805 = vmatpush1.msra.mxu0 0.0
      %806 = vmatprep.subr.mxu0 0.0
      %807 = vmatpush1.msra.mxu0 0.0
      %808 = vmatprep.subr.mxu0 0.0
      %809 = vmatpush1.msra.mxu0 0.0
      %810 = vmatprep.subr.mxu0 0.0
      %811 = vmatpush1.msra.mxu0 0.0
      %812 = vmatprep.subr.mxu0 0.0
      %813 = vmatpush1.msra.mxu0 0.0
      %814 = vmatprep.subr.mxu0 0.0
      %815 = vmatpush1.msra.mxu0 0.0
      %816 = vmatprep.subr.mxu0 0.0
      %817 = vmatpush1.msra.mxu0 0.0
      %818 = vmatprep.subr.mxu0 0.0
      %819 = vmatpush1.msra.mxu0 0.0
      %820 = vmatprep.subr.mxu0 0.0
      %821 = vmatpush1.msra.mxu0 0.0
      %822 = vmatprep.subr.mxu0 0.0
      %823 = vmatpush1.msra.mxu0 0.0
      %824 = vmatprep.subr.mxu0 0.0
      %825 = vmatpush1.msra.mxu0 0.0
      %826 = vmatprep.subr.mxu0 0.0
      %827 = vmatpush1.msra.mxu0 0.0
      %828 = vmatprep.subr.mxu0 0.0
      %829 = vmatpush1.msra.mxu0 0.0
      %830 = vmatprep.subr.mxu0 0.0
      %831 = vmatpush1.msra.mxu0 0.0
      %832 = vmatprep.subr.mxu0 0.0
      %833 = vmatpush1.msra.mxu0 0.0
      %834 = vmatprep.subr.mxu0 0.0
      %835 = vmatpush1.msra.mxu0 0.0
      %836 = vmatprep.subr.mxu0 0.0
      %837 = vmatpush1.msra.mxu0 0.0
      %838 = vmatprep.subr.mxu0 0.0
      %839 = vmatpush1.msra.mxu0 0.0
      %840 = vmatprep.subr.mxu0 0.0
      %841 = vmatpush1.msra.mxu0 0.0
      %842 = vmatprep.subr.mxu0 0.0
      %843 = vmatpush1.msra.mxu0 0.0
      %844 = vmatprep.subr.mxu0 0.0
      %845 = vmatpush1.msra.mxu0 0.0
      %846 = vmatprep.subr.mxu0 0.0
      %847 = vmatpush1.msra.mxu0 0.0
      %848 = vmatprep.subr.mxu0 0.0
      %849 = vmatpush1.msra.mxu0 0.0
      %850 = vmatprep.subr.mxu0 0.0
      %851 = vmatpush1.msra.mxu0 0.0
      %852 = vmatprep.mubr.f32.mxu0 0.0
      %853 = vmatmul.mubr.f32.gmra.mrb[0].mxu0 %v782
      %v854 = vpop.f32.mrb[0].mxu0
      %v855 = vadd.f32 0.0, %v854
      %v856 = vpop.f32.mrb[0].mxu0
      %v857 = vadd.f32 0.0, %v856
      %858 = vdwg.mxu0
      %859 = vrot.lane.b32.xlu0 %v333, 127
      %v860 = vpop.permute.xlu0 %859
      %861 = vrot.lane.b32.xlu0 %v335, 127
      %v862 = vpop.permute.xlu0 %861
      %vm863 = vcmask 1039360
      %v864 = vsel %vm863, %v860, %v862
      %v866 = vsel %vm345, %v772, 0
      %v868 = vsel %vm349, %v864, 0
      %v870 = vsel %vm349, %v862, 0
      %872 = vmatprep.subr.mxu0 %v870
      %873 = vmatpush1.msra.mxu0 %v868
      %874 = vmatprep.subr.mxu0 0.0
      %875 = vmatpush1.msra.mxu0 0.0
      %876 = vmatprep.subr.mxu0 0.0
      %877 = vmatpush1.msra.mxu0 0.0
      %878 = vmatprep.subr.mxu0 0.0
      %879 = vmatpush1.msra.mxu0 0.0
      %880 = vmatprep.subr.mxu0 0.0
      %881 = vmatpush1.msra.mxu0 0.0
      %882 = vmatprep.subr.mxu0 0.0
      %883 = vmatpush1.msra.mxu0 0.0
      %884 = vmatprep.subr.mxu0 0.0
      %885 = vmatpush1.msra.mxu0 0.0
      %886 = vmatprep.subr.mxu0 0.0
      %887 = vmatpush1.msra.mxu0 0.0
      %888 = vmatprep.subr.mxu0 0.0
      %889 = vmatpush1.msra.mxu0 0.0
      %890 = vmatprep.subr.mxu0 0.0
      %891 = vmatpush1.msra.mxu0 0.0
      %892 = vmatprep.subr.mxu0 0.0
      %893 = vmatpush1.msra.mxu0 0.0
      %894 = vmatprep.subr.mxu0 0.0
      %895 = vmatpush1.msra.mxu0 0.0
      %896 = vmatprep.subr.mxu0 0.0
      %897 = vmatpush1.msra.mxu0 0.0
      %898 = vmatprep.subr.mxu0 0.0
      %899 = vmatpush1.msra.mxu0 0.0
      %900 = vmatprep.subr.mxu0 0.0
      %901 = vmatpush1.msra.mxu0 0.0
      %902 = vmatprep.subr.mxu0 0.0
      %903 = vmatpush1.msra.mxu0 0.0
      %904 = vmatprep.subr.mxu0 0.0
      %905 = vmatpush1.msra.mxu0 0.0
      %906 = vmatprep.subr.mxu0 0.0
      %907 = vmatpush1.msra.mxu0 0.0
      %908 = vmatprep.subr.mxu0 0.0
      %909 = vmatpush1.msra.mxu0 0.0
      %910 = vmatprep.subr.mxu0 0.0
      %911 = vmatpush1.msra.mxu0 0.0
      %912 = vmatprep.subr.mxu0 0.0
      %913 = vmatpush1.msra.mxu0 0.0
      %914 = vmatprep.subr.mxu0 0.0
      %915 = vmatpush1.msra.mxu0 0.0
      %916 = vmatprep.subr.mxu0 0.0
      %917 = vmatpush1.msra.mxu0 0.0
      %918 = vmatprep.subr.mxu0 0.0
      %919 = vmatpush1.msra.mxu0 0.0
      %920 = vmatprep.subr.mxu0 0.0
      %921 = vmatpush1.msra.mxu0 0.0
      %922 = vmatprep.subr.mxu0 0.0
      %923 = vmatpush1.msra.mxu0 0.0
      %924 = vmatprep.subr.mxu0 0.0
      %925 = vmatpush1.msra.mxu0 0.0
      %926 = vmatprep.subr.mxu0 0.0
      %927 = vmatpush1.msra.mxu0 0.0
      %928 = vmatprep.subr.mxu0 0.0
      %929 = vmatpush1.msra.mxu0 0.0
      %930 = vmatprep.subr.mxu0 0.0
      %931 = vmatpush1.msra.mxu0 0.0
      %932 = vmatprep.subr.mxu0 0.0
      %933 = vmatpush1.msra.mxu0 0.0
      %934 = vmatprep.subr.mxu0 0.0
      %935 = vmatpush1.msra.mxu0 0.0
      %936 = vmatprep.mubr.f32.mxu0 0.0
      %937 = vmatmul.mubr.f32.gmra.mrb[0].mxu0 %v866
      %v938 = vpop.f32.mrb[0].mxu0
      %v939 = vadd.f32 %v855, %v938
      %v940 = vpop.f32.mrb[0].mxu0
      %v941 = vadd.f32 %v857, %v940
      %942 = vdwg.mxu0
      %s943 = scalar_lea.vmem %s1, 88
      %v944 = vld [vmem:[%s943] sm:$0x3f]
      %945 = vrot.lane.b32.xlu0 %v333, 95
      %v946 = vpop.permute.xlu0 %945
      %947 = vrot.lane.b32.xlu0 %v335, 95
      %v948 = vpop.permute.xlu0 %947
      %vm949 = vcmask 777216
      %v950 = vsel %vm949, %v946, %v948
      %v952 = vsel %vm345, %v944, 0
      %v954 = vsel %vm349, %v950, 0
      %v956 = vsel %vm349, %v948, 0
      %958 = vmatprep.subr.mxu0 %v956
      %959 = vmatpush1.msra.mxu0 %v954
      %960 = vmatprep.subr.mxu0 0.0
      %961 = vmatpush1.msra.mxu0 0.0
      %962 = vmatprep.subr.mxu0 0.0
      %963 = vmatpush1.msra.mxu0 0.0
      %964 = vmatprep.subr.mxu0 0.0
      %965 = vmatpush1.msra.mxu0 0.0
      %966 = vmatprep.subr.mxu0 0.0
      %967 = vmatpush1.msra.mxu0 0.0
      %968 = vmatprep.subr.mxu0 0.0
      %969 = vmatpush1.msra.mxu0 0.0
      %970 = vmatprep.subr.mxu0 0.0
      %971 = vmatpush1.msra.mxu0 0.0
      %972 = vmatprep.subr.mxu0 0.0
      %973 = vmatpush1.msra.mxu0 0.0
      %974 = vmatprep.subr.mxu0 0.0
      %975 = vmatpush1.msra.mxu0 0.0
      %976 = vmatprep.subr.mxu0 0.0
      %977 = vmatpush1.msra.mxu0 0.0
      %978 = vmatprep.subr.mxu0 0.0
      %979 = vmatpush1.msra.mxu0 0.0
      %980 = vmatprep.subr.mxu0 0.0
      %981 = vmatpush1.msra.mxu0 0.0
      %982 = vmatprep.subr.mxu0 0.0
      %983 = vmatpush1.msra.mxu0 0.0
      %984 = vmatprep.subr.mxu0 0.0
      %985 = vmatpush1.msra.mxu0 0.0
      %986 = vmatprep.subr.mxu0 0.0
      %987 = vmatpush1.msra.mxu0 0.0
      %988 = vmatprep.subr.mxu0 0.0
      %989 = vmatpush1.msra.mxu0 0.0
      %990 = vmatprep.subr.mxu0 0.0
      %991 = vmatpush1.msra.mxu0 0.0
      %992 = vmatprep.subr.mxu0 0.0
      %993 = vmatpush1.msra.mxu0 0.0
      %994 = vmatprep.subr.mxu0 0.0
      %995 = vmatpush1.msra.mxu0 0.0
      %996 = vmatprep.subr.mxu0 0.0
      %997 = vmatpush1.msra.mxu0 0.0
      %998 = vmatprep.subr.mxu0 0.0
      %999 = vmatpush1.msra.mxu0 0.0
      %1000 = vmatprep.subr.mxu0 0.0
      %1001 = vmatpush1.msra.mxu0 0.0
      %1002 = vmatprep.subr.mxu0 0.0
      %1003 = vmatpush1.msra.mxu0 0.0
      %1004 = vmatprep.subr.mxu0 0.0
      %1005 = vmatpush1.msra.mxu0 0.0
      %1006 = vmatprep.subr.mxu0 0.0
      %1007 = vmatpush1.msra.mxu0 0.0
      %1008 = vmatprep.subr.mxu0 0.0
      %1009 = vmatpush1.msra.mxu0 0.0
      %1010 = vmatprep.subr.mxu0 0.0
      %1011 = vmatpush1.msra.mxu0 0.0
      %1012 = vmatprep.subr.mxu0 0.0
      %1013 = vmatpush1.msra.mxu0 0.0
      %1014 = vmatprep.subr.mxu0 0.0
      %1015 = vmatpush1.msra.mxu0 0.0
      %1016 = vmatprep.subr.mxu0 0.0
      %1017 = vmatpush1.msra.mxu0 0.0
      %1018 = vmatprep.subr.mxu0 0.0
      %1019 = vmatpush1.msra.mxu0 0.0
      %1020 = vmatprep.subr.mxu0 0.0
      %1021 = vmatpush1.msra.mxu0 0.0
      %1022 = vmatprep.mubr.f32.mxu0 0.0
      %1023 = vmatmul.mubr.f32.gmra.mrb[0].mxu0 %v952
      %v1024 = vpop.f32.mrb[0].mxu0
      %v1025 = vadd.f32 0.0, %v1024
      %v1026 = vpop.f32.mrb[0].mxu0
      %v1027 = vadd.f32 0.0, %v1026
      %1028 = vdwg.mxu0
      %v1029 = vadd.f32 %v939, %v1025
      %v1030 = vadd.f32 %v941, %v1027
      %s1031 = scalar_lea.vmem %s1, 128
      %v1032 = vld [vmem:[%s1031] sm:$0x3f]
      %1033 = vrot.lane.b32.xlu0 %v333, 79
      %v1034 = vpop.permute.xlu0 %1033
      %1035 = vrot.lane.b32.xlu0 %v335, 79
      %v1036 = vpop.permute.xlu0 %1035
      %vm1037 = vcmask 646144
      %v1038 = vsel %vm1037, %v1034, %v1036
      %v1040 = vsel %vm345, %v1032, 0
      %v1042 = vsel %vm349, %v1038, 0
      %v1044 = vsel %vm349, %v1036, 0
      %1046 = vmatprep.subr.mxu0 %v1044
      %1047 = vmatpush1.msra.mxu0 %v1042
      %1048 = vmatprep.subr.mxu0 0.0
      %1049 = vmatpush1.msra.mxu0 0.0
      %1050 = vmatprep.subr.mxu0 0.0
      %1051 = vmatpush1.msra.mxu0 0.0
      %1052 = vmatprep.subr.mxu0 0.0
      %1053 = vmatpush1.msra.mxu0 0.0
      %1054 = vmatprep.subr.mxu0 0.0
      %1055 = vmatpush1.msra.mxu0 0.0
      %1056 = vmatprep.subr.mxu0 0.0
      %1057 = vmatpush1.msra.mxu0 0.0
      %1058 = vmatprep.subr.mxu0 0.0
      %1059 = vmatpush1.msra.mxu0 0.0
      %1060 = vmatprep.subr.mxu0 0.0
      %1061 = vmatpush1.msra.mxu0 0.0
      %1062 = vmatprep.subr.mxu0 0.0
      %1063 = vmatpush1.msra.mxu0 0.0
      %1064 = vmatprep.subr.mxu0 0.0
      %1065 = vmatpush1.msra.mxu0 0.0
      %1066 = vmatprep.subr.mxu0 0.0
      %1067 = vmatpush1.msra.mxu0 0.0
      %1068 = vmatprep.subr.mxu0 0.0
      %1069 = vmatpush1.msra.mxu0 0.0
      %1070 = vmatprep.subr.mxu0 0.0
      %1071 = vmatpush1.msra.mxu0 0.0
      %1072 = vmatprep.subr.mxu0 0.0
      %1073 = vmatpush1.msra.mxu0 0.0
      %1074 = vmatprep.subr.mxu0 0.0
      %1075 = vmatpush1.msra.mxu0 0.0
      %1076 = vmatprep.subr.mxu0 0.0
      %1077 = vmatpush1.msra.mxu0 0.0
      %1078 = vmatprep.subr.mxu0 0.0
      %1079 = vmatpush1.msra.mxu0 0.0
      %1080 = vmatprep.subr.mxu0 0.0
      %1081 = vmatpush1.msra.mxu0 0.0
      %1082 = vmatprep.subr.mxu0 0.0
      %1083 = vmatpush1.msra.mxu0 0.0
      %1084 = vmatprep.subr.mxu0 0.0
      %1085 = vmatpush1.msra.mxu0 0.0
      %1086 = vmatprep.subr.mxu0 0.0
      %1087 = vmatpush1.msra.mxu0 0.0
      %1088 = vmatprep.subr.mxu0 0.0
      %1089 = vmatpush1.msra.mxu0 0.0
      %1090 = vmatprep.subr.mxu0 0.0
      %1091 = vmatpush1.msra.mxu0 0.0
      %1092 = vmatprep.subr.mxu0 0.0
      %1093 = vmatpush1.msra.mxu0 0.0
      %1094 = vmatprep.subr.mxu0 0.0
      %1095 = vmatpush1.msra.mxu0 0.0
      %1096 = vmatprep.subr.mxu0 0.0
      %1097 = vmatpush1.msra.mxu0 0.0
      %1098 = vmatprep.subr.mxu0 0.0
      %1099 = vmatpush1.msra.mxu0 0.0
      %1100 = vmatprep.subr.mxu0 0.0
      %1101 = vmatpush1.msra.mxu0 0.0
      %1102 = vmatprep.subr.mxu0 0.0
      %1103 = vmatpush1.msra.mxu0 0.0
      %1104 = vmatprep.subr.mxu0 0.0
      %1105 = vmatpush1.msra.mxu0 0.0
      %1106 = vmatprep.subr.mxu0 0.0
      %1107 = vmatpush1.msra.mxu0 0.0
      %1108 = vmatprep.subr.mxu0 0.0
      %1109 = vmatpush1.msra.mxu0 0.0
      %1110 = vmatprep.mubr.f32.mxu0 0.0
      %1111 = vmatmul.mubr.f32.gmra.mrb[0].mxu0 %v1040
      %v1112 = vpop.f32.mrb[0].mxu0
      %v1113 = vadd.f32 0.0, %v1112
      %v1114 = vpop.f32.mrb[0].mxu0
      %v1115 = vadd.f32 0.0, %v1114
      %1116 = vdwg.mxu0
      %v1117 = vadd.f32 %v1029, %v1113
      %v1118 = vadd.f32 %v1030, %v1115
      %s1119 = scalar_lea.vmem %s1, 168
      %v1120 = vld [vmem:[%s1119] sm:$0x3f]
      %1121 = vrot.lane.b32.xlu0 %v333, 63
      %v1122 = vpop.permute.xlu0 %1121
      %1123 = vrot.lane.b32.xlu0 %v335, 63
      %v1124 = vpop.permute.xlu0 %1123
      %1125 = vrot.lane.b32.xlu0 0.0, 63
      %v1126 = vpop.permute.xlu0 %1125
      %vm1127 = vcmask 515072
      %v1128 = vsel %vm1127, %v1122, %v1124
      %v1129 = vsel %vm1127, %v1124, %v1126
      %v1131 = vsel %vm345, %v1120, 0
      %v1133 = vsel %vm349, %v1128, 0
      %v1135 = vsel %vm349, %v1129, 0
      %1137 = vmatprep.subr.mxu0 %v1135
      %1138 = vmatpush1.msra.mxu0 %v1133
      %1139 = vmatprep.subr.mxu0 0.0
      %1140 = vmatpush1.msra.mxu0 0.0
      %1141 = vmatprep.subr.mxu0 0.0
      %1142 = vmatpush1.msra.mxu0 0.0
      %1143 = vmatprep.subr.mxu0 0.0
      %1144 = vmatpush1.msra.mxu0 0.0
      %1145 = vmatprep.subr.mxu0 0.0
      %1146 = vmatpush1.msra.mxu0 0.0
      %1147 = vmatprep.subr.mxu0 0.0
      %1148 = vmatpush1.msra.mxu0 0.0
      %1149 = vmatprep.subr.mxu0 0.0
      %1150 = vmatpush1.msra.mxu0 0.0
      %1151 = vmatprep.subr.mxu0 0.0
      %1152 = vmatpush1.msra.mxu0 0.0
      %1153 = vmatprep.subr.mxu0 0.0
      %1154 = vmatpush1.msra.mxu0 0.0
      %1155 = vmatprep.subr.mxu0 0.0
      %1156 = vmatpush1.msra.mxu0 0.0
      %1157 = vmatprep.subr.mxu0 0.0
      %1158 = vmatpush1.msra.mxu0 0.0
      %1159 = vmatprep.subr.mxu0 0.0
      %1160 = vmatpush1.msra.mxu0 0.0
      %1161 = vmatprep.subr.mxu0 0.0
      %1162 = vmatpush1.msra.mxu0 0.0
      %1163 = vmatprep.subr.mxu0 0.0
      %1164 = vmatpush1.msra.mxu0 0.0
      %1165 = vmatprep.subr.mxu0 0.0
      %1166 = vmatpush1.msra.mxu0 0.0
      %1167 = vmatprep.subr.mxu0 0.0
      %1168 = vmatpush1.msra.mxu0 0.0
      %1169 = vmatprep.subr.mxu0 0.0
      %1170 = vmatpush1.msra.mxu0 0.0
      %1171 = vmatprep.subr.mxu0 0.0
      %1172 = vmatpush1.msra.mxu0 0.0
      %1173 = vmatprep.subr.mxu0 0.0
      %1174 = vmatpush1.msra.mxu0 0.0
      %1175 = vmatprep.subr.mxu0 0.0
      %1176 = vmatpush1.msra.mxu0 0.0
      %1177 = vmatprep.subr.mxu0 0.0
      %1178 = vmatpush1.msra.mxu0 0.0
      %1179 = vmatprep.subr.mxu0 0.0
      %1180 = vmatpush1.msra.mxu0 0.0
      %1181 = vmatprep.subr.mxu0 0.0
      %1182 = vmatpush1.msra.mxu0 0.0
      %1183 = vmatprep.subr.mxu0 0.0
      %1184 = vmatpush1.msra.mxu0 0.0
      %1185 = vmatprep.subr.mxu0 0.0
      %1186 = vmatpush1.msra.mxu0 0.0
      %1187 = vmatprep.subr.mxu0 0.0
      %1188 = vmatpush1.msra.mxu0 0.0
      %1189 = vmatprep.subr.mxu0 0.0
      %1190 = vmatpush1.msra.mxu0 0.0
      %1191 = vmatprep.subr.mxu0 0.0
      %1192 = vmatpush1.msra.mxu0 0.0
      %1193 = vmatprep.subr.mxu0 0.0
      %1194 = vmatpush1.msra.mxu0 0.0
      %1195 = vmatprep.subr.mxu0 0.0
      %1196 = vmatpush1.msra.mxu0 0.0
      %1197 = vmatprep.subr.mxu0 0.0
      %1198 = vmatpush1.msra.mxu0 0.0
      %1199 = vmatprep.subr.mxu0 0.0
      %1200 = vmatpush1.msra.mxu0 0.0
      %1201 = vmatprep.mubr.f32.mxu0 0.0
      %1202 = vmatmul.mubr.f32.gmra.mrb[0].mxu0 %v1131
      %v1203 = vpop.f32.mrb[0].mxu0
      %v1204 = vadd.f32 0.0, %v1203
      %v1205 = vpop.f32.mrb[0].mxu0
      %v1206 = vadd.f32 0.0, %v1205
      %1207 = vdwg.mxu0
      %v1208 = vadd.f32 %v1117, %v1204
      %v1209 = vadd.f32 %v1118, %v1206
      %s1210 = scalar_lea.vmem %s1, 16
      %v1211 = vld [vmem:[%s1210] sm:$0x3f]
      %s1212 = scalar_lea.vmem %s1, 56
      %v1213 = vld [vmem:[%s1212] sm:$0x3f]
      %1214 = vrot.lane.b32.xlu0 %v333, 110
      %v1215 = vpop.permute.xlu0 %1214
      %1216 = vrot.lane.b32.xlu0 %v335, 110
      %v1217 = vpop.permute.xlu0 %1216
      %vm1218 = vcmask 900096
      %v1219 = vsel %vm1218, %v1215, %v1217
      %v1221 = vsel %vm345, %v1213, 0
      %v1223 = vsel %vm349, %v1219, 0
      %v1225 = vsel %vm349, %v1217, 0
      %1227 = vmatprep.subr.mxu0 %v1225
      %1228 = vmatpush1.msra.mxu0 %v1223
      %1229 = vmatprep.subr.mxu0 0.0
      %1230 = vmatpush1.msra.mxu0 0.0
      %1231 = vmatprep.subr.mxu0 0.0
      %1232 = vmatpush1.msra.mxu0 0.0
      %1233 = vmatprep.subr.mxu0 0.0
      %1234 = vmatpush1.msra.mxu0 0.0
      %1235 = vmatprep.subr.mxu0 0.0
      %1236 = vmatpush1.msra.mxu0 0.0
      %1237 = vmatprep.subr.mxu0 0.0
      %1238 = vmatpush1.msra.mxu0 0.0
      %1239 = vmatprep.subr.mxu0 0.0
      %1240 = vmatpush1.msra.mxu0 0.0
      %1241 = vmatprep.subr.mxu0 0.0
      %1242 = vmatpush1.msra.mxu0 0.0
      %1243 = vmatprep.subr.mxu0 0.0
      %1244 = vmatpush1.msra.mxu0 0.0
      %1245 = vmatprep.subr.mxu0 0.0
      %1246 = vmatpush1.msra.mxu0 0.0
      %1247 = vmatprep.subr.mxu0 0.0
      %1248 = vmatpush1.msra.mxu0 0.0
      %1249 = vmatprep.subr.mxu0 0.0
      %1250 = vmatpush1.msra.mxu0 0.0
      %1251 = vmatprep.subr.mxu0 0.0
      %1252 = vmatpush1.msra.mxu0 0.0
      %1253 = vmatprep.subr.mxu0 0.0
      %1254 = vmatpush1.msra.mxu0 0.0
      %1255 = vmatprep.subr.mxu0 0.0
      %1256 = vmatpush1.msra.mxu0 0.0
      %1257 = vmatprep.subr.mxu0 0.0
      %1258 = vmatpush1.msra.mxu0 0.0
      %1259 = vmatprep.subr.mxu0 0.0
      %1260 = vmatpush1.msra.mxu0 0.0
      %1261 = vmatprep.subr.mxu0 0.0
      %1262 = vmatpush1.msra.mxu0 0.0
      %1263 = vmatprep.subr.mxu0 0.0
      %1264 = vmatpush1.msra.mxu0 0.0
      %1265 = vmatprep.subr.mxu0 0.0
      %1266 = vmatpush1.msra.mxu0 0.0
      %1267 = vmatprep.subr.mxu0 0.0
      %1268 = vmatpush1.msra.mxu0 0.0
      %1269 = vmatprep.subr.mxu0 0.0
      %1270 = vmatpush1.msra.mxu0 0.0
      %1271 = vmatprep.subr.mxu0 0.0
      %1272 = vmatpush1.msra.mxu0 0.0
      %1273 = vmatprep.subr.mxu0 0.0
      %1274 = vmatpush1.msra.mxu0 0.0
      %1275 = vmatprep.subr.mxu0 0.0
      %1276 = vmatpush1.msra.mxu0 0.0
      %1277 = vmatprep.subr.mxu0 0.0
      %1278 = vmatpush1.msra.mxu0 0.0
      %1279 = vmatprep.subr.mxu0 0.0
      %1280 = vmatpush1.msra.mxu0 0.0
      %1281 = vmatprep.subr.mxu0 0.0
      %1282 = vmatpush1.msra.mxu0 0.0
      %1283 = vmatprep.subr.mxu0 0.0
      %1284 = vmatpush1.msra.mxu0 0.0
      %1285 = vmatprep.subr.mxu0 0.0
      %1286 = vmatpush1.msra.mxu0 0.0
      %1287 = vmatprep.subr.mxu0 0.0
      %1288 = vmatpush1.msra.mxu0 0.0
      %1289 = vmatprep.subr.mxu0 0.0
      %1290 = vmatpush1.msra.mxu0 0.0
      %1291 = vmatprep.mubr.f32.mxu0 0.0
      %1292 = vmatmul.mubr.f32.gmra.mrb[0].mxu0 %v1221
      %v1293 = vpop.f32.mrb[0].mxu0
      %v1294 = vadd.f32 0.0, %v1293
      %v1295 = vpop.f32.mrb[0].mxu0
      %v1296 = vadd.f32 0.0, %v1295
      %1297 = vdwg.mxu0
      %1298 = vrot.lane.b32.xlu0 %v333, 126
      %v1299 = vpop.permute.xlu0 %1298
      %1300 = vrot.lane.b32.xlu0 %v335, 126
      %v1301 = vpop.permute.xlu0 %1300
      %vm1302 = vcmask 1031168
      %v1303 = vsel %vm1302, %v1299, %v1301
      %v1305 = vsel %vm345, %v1211, 0
      %v1307 = vsel %vm349, %v1303, 0
      %v1309 = vsel %vm349, %v1301, 0
      %1311 = vmatprep.subr.mxu0 %v1309
      %1312 = vmatpush1.msra.mxu0 %v1307
      %1313 = vmatprep.subr.mxu0 0.0
      %1314 = vmatpush1.msra.mxu0 0.0
      %1315 = vmatprep.subr.mxu0 0.0
      %1316 = vmatpush1.msra.mxu0 0.0
      %1317 = vmatprep.subr.mxu0 0.0
      %1318 = vmatpush1.msra.mxu0 0.0
      %1319 = vmatprep.subr.mxu0 0.0
      %1320 = vmatpush1.msra.mxu0 0.0
      %1321 = vmatprep.subr.mxu0 0.0
      %1322 = vmatpush1.msra.mxu0 0.0
      %1323 = vmatprep.subr.mxu0 0.0
      %1324 = vmatpush1.msra.mxu0 0.0
      %1325 = vmatprep.subr.mxu0 0.0
      %1326 = vmatpush1.msra.mxu0 0.0
      %1327 = vmatprep.subr.mxu0 0.0
      %1328 = vmatpush1.msra.mxu0 0.0
      %1329 = vmatprep.subr.mxu0 0.0
      %1330 = vmatpush1.msra.mxu0 0.0
      %1331 = vmatprep.subr.mxu0 0.0
      %1332 = vmatpush1.msra.mxu0 0.0
      %1333 = vmatprep.subr.mxu0 0.0
      %1334 = vmatpush1.msra.mxu0 0.0
      %1335 = vmatprep.subr.mxu0 0.0
      %1336 = vmatpush1.msra.mxu0 0.0
      %1337 = vmatprep.subr.mxu0 0.0
      %1338 = vmatpush1.msra.mxu0 0.0
      %1339 = vmatprep.subr.mxu0 0.0
      %1340 = vmatpush1.msra.mxu0 0.0
      %1341 = vmatprep.subr.mxu0 0.0
      %1342 = vmatpush1.msra.mxu0 0.0
      %1343 = vmatprep.subr.mxu0 0.0
      %1344 = vmatpush1.msra.mxu0 0.0
      %1345 = vmatprep.subr.mxu0 0.0
      %1346 = vmatpush1.msra.mxu0 0.0
      %1347 = vmatprep.subr.mxu0 0.0
      %1348 = vmatpush1.msra.mxu0 0.0
      %1349 = vmatprep.subr.mxu0 0.0
      %1350 = vmatpush1.msra.mxu0 0.0
      %1351 = vmatprep.subr.mxu0 0.0
      %1352 = vmatpush1.msra.mxu0 0.0
      %1353 = vmatprep.subr.mxu0 0.0
      %1354 = vmatpush1.msra.mxu0 0.0
      %1355 = vmatprep.subr.mxu0 0.0
      %1356 = vmatpush1.msra.mxu0 0.0
      %1357 = vmatprep.subr.mxu0 0.0
      %1358 = vmatpush1.msra.mxu0 0.0
      %1359 = vmatprep.subr.mxu0 0.0
      %1360 = vmatpush1.msra.mxu0 0.0
      %1361 = vmatprep.subr.mxu0 0.0
      %1362 = vmatpush1.msra.mxu0 0.0
      %1363 = vmatprep.subr.mxu0 0.0
      %1364 = vmatpush1.msra.mxu0 0.0
      %1365 = vmatprep.subr.mxu0 0.0
      %1366 = vmatpush1.msra.mxu0 0.0
      %1367 = vmatprep.subr.mxu0 0.0
      %1368 = vmatpush1.msra.mxu0 0.0
      %1369 = vmatprep.subr.mxu0 0.0
      %1370 = vmatpush1.msra.mxu0 0.0
      %1371 = vmatprep.subr.mxu0 0.0
      %1372 = vmatpush1.msra.mxu0 0.0
      %1373 = vmatprep.subr.mxu0 0.0
      %1374 = vmatpush1.msra.mxu0 0.0
      %1375 = vmatprep.mubr.f32.mxu0 0.0
      %1376 = vmatmul.mubr.f32.gmra.mrb[0].mxu0 %v1305
      %v1377 = vpop.f32.mrb[0].mxu0
      %v1378 = vadd.f32 %v1294, %v1377
      %v1379 = vpop.f32.mrb[0].mxu0
      %v1380 = vadd.f32 %v1296, %v1379
      %1381 = vdwg.mxu0
      %s1382 = scalar_lea.vmem %s1, 96
      %v1383 = vld [vmem:[%s1382] sm:$0x3f]
      %1384 = vrot.lane.b32.xlu0 %v333, 94
      %v1385 = vpop.permute.xlu0 %1384
      %1386 = vrot.lane.b32.xlu0 %v335, 94
      %v1387 = vpop.permute.xlu0 %1386
      %vm1388 = vcmask 769024
      %v1389 = vsel %vm1388, %v1385, %v1387
      %v1391 = vsel %vm345, %v1383, 0
      %v1393 = vsel %vm349, %v1389, 0
      %v1395 = vsel %vm349, %v1387, 0
      %1397 = vmatprep.subr.mxu0 %v1395
      %1398 = vmatpush1.msra.mxu0 %v1393
      %1399 = vmatprep.subr.mxu0 0.0
      %1400 = vmatpush1.msra.mxu0 0.0
      %1401 = vmatprep.subr.mxu0 0.0
      %1402 = vmatpush1.msra.mxu0 0.0
      %1403 = vmatprep.subr.mxu0 0.0
      %1404 = vmatpush1.msra.mxu0 0.0
      %1405 = vmatprep.subr.mxu0 0.0
      %1406 = vmatpush1.msra.mxu0 0.0
      %1407 = vmatprep.subr.mxu0 0.0
      %1408 = vmatpush1.msra.mxu0 0.0
      %1409 = vmatprep.subr.mxu0 0.0
      %1410 = vmatpush1.msra.mxu0 0.0
      %1411 = vmatprep.subr.mxu0 0.0
      %1412 = vmatpush1.msra.mxu0 0.0
      %1413 = vmatprep.subr.mxu0 0.0
      %1414 = vmatpush1.msra.mxu0 0.0
      %1415 = vmatprep.subr.mxu0 0.0
      %1416 = vmatpush1.msra.mxu0 0.0
      %1417 = vmatprep.subr.mxu0 0.0
      %1418 = vmatpush1.msra.mxu0 0.0
      %1419 = vmatprep.subr.mxu0 0.0
      %1420 = vmatpush1.msra.mxu0 0.0
      %1421 = vmatprep.subr.mxu0 0.0
      %1422 = vmatpush1.msra.mxu0 0.0
      %1423 = vmatprep.subr.mxu0 0.0
      %1424 = vmatpush1.msra.mxu0 0.0
      %1425 = vmatprep.subr.mxu0 0.0
      %1426 = vmatpush1.msra.mxu0 0.0
      %1427 = vmatprep.subr.mxu0 0.0
      %1428 = vmatpush1.msra.mxu0 0.0
      %1429 = vmatprep.subr.mxu0 0.0
      %1430 = vmatpush1.msra.mxu0 0.0
      %1431 = vmatprep.subr.mxu0 0.0
      %1432 = vmatpush1.msra.mxu0 0.0
      %1433 = vmatprep.subr.mxu0 0.0
      %1434 = vmatpush1.msra.mxu0 0.0
      %1435 = vmatprep.subr.mxu0 0.0
      %1436 = vmatpush1.msra.mxu0 0.0
      %1437 = vmatprep.subr.mxu0 0.0
      %1438 = vmatpush1.msra.mxu0 0.0
      %1439 = vmatprep.subr.mxu0 0.0
      %1440 = vmatpush1.msra.mxu0 0.0
      %1441 = vmatprep.subr.mxu0 0.0
      %1442 = vmatpush1.msra.mxu0 0.0
      %1443 = vmatprep.subr.mxu0 0.0
      %1444 = vmatpush1.msra.mxu0 0.0
      %1445 = vmatprep.subr.mxu0 0.0
      %1446 = vmatpush1.msra.mxu0 0.0
      %1447 = vmatprep.subr.mxu0 0.0
      %1448 = vmatpush1.msra.mxu0 0.0
      %1449 = vmatprep.subr.mxu0 0.0
      %1450 = vmatpush1.msra.mxu0 0.0
      %1451 = vmatprep.subr.mxu0 0.0
      %1452 = vmatpush1.msra.mxu0 0.0
      %1453 = vmatprep.subr.mxu0 0.0
      %1454 = vmatpush1.msra.mxu0 0.0
      %1455 = vmatprep.subr.mxu0 0.0
      %1456 = vmatpush1.msra.mxu0 0.0
      %1457 = vmatprep.subr.mxu0 0.0
      %1458 = vmatpush1.msra.mxu0 0.0
      %1459 = vmatprep.subr.mxu0 0.0
      %1460 = vmatpush1.msra.mxu0 0.0
      %1461 = vmatprep.mubr.f32.mxu0 0.0
      %1462 = vmatmul.mubr.f32.gmra.mrb[0].mxu0 %v1391
      %v1463 = vpop.f32.mrb[0].mxu0
      %v1464 = vadd.f32 0.0, %v1463
      %v1465 = vpop.f32.mrb[0].mxu0
      %v1466 = vadd.f32 0.0, %v1465
      %1467 = vdwg.mxu0
      %v1468 = vadd.f32 %v1378, %v1464
      %v1469 = vadd.f32 %v1380, %v1466
      %s1470 = scalar_lea.vmem %s1, 136
      %v1471 = vld [vmem:[%s1470] sm:$0x3f]
      %1472 = vrot.lane.b32.xlu0 %v333, 78
      %v1473 = vpop.permute.xlu0 %1472
      %1474 = vrot.lane.b32.xlu0 %v335, 78
      %v1475 = vpop.permute.xlu0 %1474
      %vm1476 = vcmask 637952
      %v1477 = vsel %vm1476, %v1473, %v1475
      %v1479 = vsel %vm345, %v1471, 0
      %v1481 = vsel %vm349, %v1477, 0
      %v1483 = vsel %vm349, %v1475, 0
      %1485 = vmatprep.subr.mxu0 %v1483
      %1486 = vmatpush1.msra.mxu0 %v1481
      %1487 = vmatprep.subr.mxu0 0.0
      %1488 = vmatpush1.msra.mxu0 0.0
      %1489 = vmatprep.subr.mxu0 0.0
      %1490 = vmatpush1.msra.mxu0 0.0
      %1491 = vmatprep.subr.mxu0 0.0
      %1492 = vmatpush1.msra.mxu0 0.0
      %1493 = vmatprep.subr.mxu0 0.0
      %1494 = vmatpush1.msra.mxu0 0.0
      %1495 = vmatprep.subr.mxu0 0.0
      %1496 = vmatpush1.msra.mxu0 0.0
      %1497 = vmatprep.subr.mxu0 0.0
      %1498 = vmatpush1.msra.mxu0 0.0
      %1499 = vmatprep.subr.mxu0 0.0
      %1500 = vmatpush1.msra.mxu0 0.0
      %1501 = vmatprep.subr.mxu0 0.0
      %1502 = vmatpush1.msra.mxu0 0.0
      %1503 = vmatprep.subr.mxu0 0.0
      %1504 = vmatpush1.msra.mxu0 0.0
      %1505 = vmatprep.subr.mxu0 0.0
      %1506 = vmatpush1.msra.mxu0 0.0
      %1507 = vmatprep.subr.mxu0 0.0
      %1508 = vmatpush1.msra.mxu0 0.0
      %1509 = vmatprep.subr.mxu0 0.0
      %1510 = vmatpush1.msra.mxu0 0.0
      %1511 = vmatprep.subr.mxu0 0.0
      %1512 = vmatpush1.msra.mxu0 0.0
      %1513 = vmatprep.subr.mxu0 0.0
      %1514 = vmatpush1.msra.mxu0 0.0
      %1515 = vmatprep.subr.mxu0 0.0
      %1516 = vmatpush1.msra.mxu0 0.0
      %1517 = vmatprep.subr.mxu0 0.0
      %1518 = vmatpush1.msra.mxu0 0.0
      %1519 = vmatprep.subr.mxu0 0.0
      %1520 = vmatpush1.msra.mxu0 0.0
      %1521 = vmatprep.subr.mxu0 0.0
      %1522 = vmatpush1.msra.mxu0 0.0
      %1523 = vmatprep.subr.mxu0 0.0
      %1524 = vmatpush1.msra.mxu0 0.0
      %1525 = vmatprep.subr.mxu0 0.0
      %1526 = vmatpush1.msra.mxu0 0.0
      %1527 = vmatprep.subr.mxu0 0.0
      %1528 = vmatpush1.msra.mxu0 0.0
      %1529 = vmatprep.subr.mxu0 0.0
      %1530 = vmatpush1.msra.mxu0 0.0
      %1531 = vmatprep.subr.mxu0 0.0
      %1532 = vmatpush1.msra.mxu0 0.0
      %1533 = vmatprep.subr.mxu0 0.0
      %1534 = vmatpush1.msra.mxu0 0.0
      %1535 = vmatprep.subr.mxu0 0.0
      %1536 = vmatpush1.msra.mxu0 0.0
      %1537 = vmatprep.subr.mxu0 0.0
      %1538 = vmatpush1.msra.mxu0 0.0
      %1539 = vmatprep.subr.mxu0 0.0
      %1540 = vmatpush1.msra.mxu0 0.0
      %1541 = vmatprep.subr.mxu0 0.0
      %1542 = vmatpush1.msra.mxu0 0.0
      %1543 = vmatprep.subr.mxu0 0.0
      %1544 = vmatpush1.msra.mxu0 0.0
      %1545 = vmatprep.subr.mxu0 0.0
      %1546 = vmatpush1.msra.mxu0 0.0
      %1547 = vmatprep.subr.mxu0 0.0
      %1548 = vmatpush1.msra.mxu0 0.0
      %1549 = vmatprep.mubr.f32.mxu0 0.0
      %1550 = vmatmul.mubr.f32.gmra.mrb[0].mxu0 %v1479
      %v1551 = vpop.f32.mrb[0].mxu0
      %v1552 = vadd.f32 0.0, %v1551
      %v1553 = vpop.f32.mrb[0].mxu0
      %v1554 = vadd.f32 0.0, %v1553
      %1555 = vdwg.mxu0
      %v1556 = vadd.f32 %v1468, %v1552
      %v1557 = vadd.f32 %v1469, %v1554
      %s1558 = scalar_lea.vmem %s1, 176
      %v1559 = vld [vmem:[%s1558] sm:$0x3f]
      %1560 = vrot.lane.b32.xlu0 %v333, 62
      %v1561 = vpop.permute.xlu0 %1560
      %1562 = vrot.lane.b32.xlu0 %v335, 62
      %v1563 = vpop.permute.xlu0 %1562
      %1564 = vrot.lane.b32.xlu0 0.0, 62
      %v1565 = vpop.permute.xlu0 %1564
      %vm1566 = vcmask 506880
      %v1567 = vsel %vm1566, %v1561, %v1563
      %v1568 = vsel %vm1566, %v1563, %v1565
      %v1570 = vsel %vm345, %v1559, 0
      %v1572 = vsel %vm349, %v1567, 0
      %v1574 = vsel %vm349, %v1568, 0
      %1576 = vmatprep.subr.mxu0 %v1574
      %1577 = vmatpush1.msra.mxu0 %v1572
      %1578 = vmatprep.subr.mxu0 0.0
      %1579 = vmatpush1.msra.mxu0 0.0
      %1580 = vmatprep.subr.mxu0 0.0
      %1581 = vmatpush1.msra.mxu0 0.0
      %1582 = vmatprep.subr.mxu0 0.0
      %1583 = vmatpush1.msra.mxu0 0.0
      %1584 = vmatprep.subr.mxu0 0.0
      %1585 = vmatpush1.msra.mxu0 0.0
      %1586 = vmatprep.subr.mxu0 0.0
      %1587 = vmatpush1.msra.mxu0 0.0
      %1588 = vmatprep.subr.mxu0 0.0
      %1589 = vmatpush1.msra.mxu0 0.0
      %1590 = vmatprep.subr.mxu0 0.0
      %1591 = vmatpush1.msra.mxu0 0.0
      %1592 = vmatprep.subr.mxu0 0.0
      %1593 = vmatpush1.msra.mxu0 0.0
      %1594 = vmatprep.subr.mxu0 0.0
      %1595 = vmatpush1.msra.mxu0 0.0
      %1596 = vmatprep.subr.mxu0 0.0
      %1597 = vmatpush1.msra.mxu0 0.0
      %1598 = vmatprep.subr.mxu0 0.0
      %1599 = vmatpush1.msra.mxu0 0.0
      %1600 = vmatprep.subr.mxu0 0.0
      %1601 = vmatpush1.msra.mxu0 0.0
      %1602 = vmatprep.subr.mxu0 0.0
      %1603 = vmatpush1.msra.mxu0 0.0
      %1604 = vmatprep.subr.mxu0 0.0
      %1605 = vmatpush1.msra.mxu0 0.0
      %1606 = vmatprep.subr.mxu0 0.0
      %1607 = vmatpush1.msra.mxu0 0.0
      %1608 = vmatprep.subr.mxu0 0.0
      %1609 = vmatpush1.msra.mxu0 0.0
      %1610 = vmatprep.subr.mxu0 0.0
      %1611 = vmatpush1.msra.mxu0 0.0
      %1612 = vmatprep.subr.mxu0 0.0
      %1613 = vmatpush1.msra.mxu0 0.0
      %1614 = vmatprep.subr.mxu0 0.0
      %1615 = vmatpush1.msra.mxu0 0.0
      %1616 = vmatprep.subr.mxu0 0.0
      %1617 = vmatpush1.msra.mxu0 0.0
      %1618 = vmatprep.subr.mxu0 0.0
      %1619 = vmatpush1.msra.mxu0 0.0
      %1620 = vmatprep.subr.mxu0 0.0
      %1621 = vmatpush1.msra.mxu0 0.0
      %1622 = vmatprep.subr.mxu0 0.0
      %1623 = vmatpush1.msra.mxu0 0.0
      %1624 = vmatprep.subr.mxu0 0.0
      %1625 = vmatpush1.msra.mxu0 0.0
      %1626 = vmatprep.subr.mxu0 0.0
      %1627 = vmatpush1.msra.mxu0 0.0
      %1628 = vmatprep.subr.mxu0 0.0
      %1629 = vmatpush1.msra.mxu0 0.0
      %1630 = vmatprep.subr.mxu0 0.0
      %1631 = vmatpush1.msra.mxu0 0.0
      %1632 = vmatprep.subr.mxu0 0.0
      %1633 = vmatpush1.msra.mxu0 0.0
      %1634 = vmatprep.subr.mxu0 0.0
      %1635 = vmatpush1.msra.mxu0 0.0
      %1636 = vmatprep.subr.mxu0 0.0
      %1637 = vmatpush1.msra.mxu0 0.0
      %1638 = vmatprep.subr.mxu0 0.0
      %1639 = vmatpush1.msra.mxu0 0.0
      %1640 = vmatprep.mubr.f32.mxu0 0.0
      %1641 = vmatmul.mubr.f32.gmra.mrb[0].mxu0 %v1570
      %v1642 = vpop.f32.mrb[0].mxu0
      %v1643 = vadd.f32 0.0, %v1642
      %v1644 = vpop.f32.mrb[0].mxu0
      %v1645 = vadd.f32 0.0, %v1644
      %1646 = vdwg.mxu0
      %v1647 = vadd.f32 %v1556, %v1643
      %v1648 = vadd.f32 %v1557, %v1645
      %s1649 = scalar_lea.vmem %s1, 24
      %v1650 = vld [vmem:[%s1649] sm:$0x3f]
      %s1651 = scalar_lea.vmem %s1, 64
      %v1652 = vld [vmem:[%s1651] sm:$0x3f]
      %1653 = vrot.lane.b32.xlu0 %v333, 109
      %v1654 = vpop.permute.xlu0 %1653
      %1655 = vrot.lane.b32.xlu0 %v335, 109
      %v1656 = vpop.permute.xlu0 %1655
      %vm1657 = vcmask 891904
      %v1658 = vsel %vm1657, %v1654, %v1656
      %v1660 = vsel %vm345, %v1652, 0
      %v1662 = vsel %vm349, %v1658, 0
      %v1664 = vsel %vm349, %v1656, 0
      %1666 = vmatprep.subr.mxu0 %v1664
      %1667 = vmatpush1.msra.mxu0 %v1662
      %1668 = vmatprep.subr.mxu0 0.0
      %1669 = vmatpush1.msra.mxu0 0.0
      %1670 = vmatprep.subr.mxu0 0.0
      %1671 = vmatpush1.msra.mxu0 0.0
      %1672 = vmatprep.subr.mxu0 0.0
      %1673 = vmatpush1.msra.mxu0 0.0
      %1674 = vmatprep.subr.mxu0 0.0
      %1675 = vmatpush1.msra.mxu0 0.0
      %1676 = vmatprep.subr.mxu0 0.0
      %1677 = vmatpush1.msra.mxu0 0.0
      %1678 = vmatprep.subr.mxu0 0.0
      %1679 = vmatpush1.msra.mxu0 0.0
      %1680 = vmatprep.subr.mxu0 0.0
      %1681 = vmatpush1.msra.mxu0 0.0
      %1682 = vmatprep.subr.mxu0 0.0
      %1683 = vmatpush1.msra.mxu0 0.0
      %1684 = vmatprep.subr.mxu0 0.0
      %1685 = vmatpush1.msra.mxu0 0.0
      %1686 = vmatprep.subr.mxu0 0.0
      %1687 = vmatpush1.msra.mxu0 0.0
      %1688 = vmatprep.subr.mxu0 0.0
      %1689 = vmatpush1.msra.mxu0 0.0
      %1690 = vmatprep.subr.mxu0 0.0
      %1691 = vmatpush1.msra.mxu0 0.0
      %1692 = vmatprep.subr.mxu0 0.0
      %1693 = vmatpush1.msra.mxu0 0.0
      %1694 = vmatprep.subr.mxu0 0.0
      %1695 = vmatpush1.msra.mxu0 0.0
      %1696 = vmatprep.subr.mxu0 0.0
      %1697 = vmatpush1.msra.mxu0 0.0
      %1698 = vmatprep.subr.mxu0 0.0
      %1699 = vmatpush1.msra.mxu0 0.0
      %1700 = vmatprep.subr.mxu0 0.0
      %1701 = vmatpush1.msra.mxu0 0.0
      %1702 = vmatprep.subr.mxu0 0.0
      %1703 = vmatpush1.msra.mxu0 0.0
      %1704 = vmatprep.subr.mxu0 0.0
      %1705 = vmatpush1.msra.mxu0 0.0
      %1706 = vmatprep.subr.mxu0 0.0
      %1707 = vmatpush1.msra.mxu0 0.0
      %1708 = vmatprep.subr.mxu0 0.0
      %1709 = vmatpush1.msra.mxu0 0.0
      %1710 = vmatprep.subr.mxu0 0.0
      %1711 = vmatpush1.msra.mxu0 0.0
      %1712 = vmatprep.subr.mxu0 0.0
      %1713 = vmatpush1.msra.mxu0 0.0
      %1714 = vmatprep.subr.mxu0 0.0
      %1715 = vmatpush1.msra.mxu0 0.0
      %1716 = vmatprep.subr.mxu0 0.0
      %1717 = vmatpush1.msra.mxu0 0.0
      %1718 = vmatprep.subr.mxu0 0.0
      %1719 = vmatpush1.msra.mxu0 0.0
      %1720 = vmatprep.subr.mxu0 0.0
      %1721 = vmatpush1.msra.mxu0 0.0
      %1722 = vmatprep.subr.mxu0 0.0
      %1723 = vmatpush1.msra.mxu0 0.0
      %1724 = vmatprep.subr.mxu0 0.0
      %1725 = vmatpush1.msra.mxu0 0.0
      %1726 = vmatprep.subr.mxu0 0.0
      %1727 = vmatpush1.msra.mxu0 0.0
      %1728 = vmatprep.subr.mxu0 0.0
      %1729 = vmatpush1.msra.mxu0 0.0
      %1730 = vmatprep.mubr.f32.mxu0 0.0
      %1731 = vmatmul.mubr.f32.gmra.mrb[0].mxu0 %v1660
      %v1732 = vpop.f32.mrb[0].mxu0
      %v1733 = vadd.f32 0.0, %v1732
      %v1734 = vpop.f32.mrb[0].mxu0
      %v1735 = vadd.f32 0.0, %v1734
      %1736 = vdwg.mxu0
      %1737 = vrot.lane.b32.xlu0 %v333, 125
      %v1738 = vpop.permute.xlu0 %1737
      %1739 = vrot.lane.b32.xlu0 %v335, 125
      %v1740 = vpop.permute.xlu0 %1739
      %vm1741 = vcmask 1022976
      %v1742 = vsel %vm1741, %v1738, %v1740
      %v1744 = vsel %vm345, %v1650, 0
      %v1746 = vsel %vm349, %v1742, 0
      %v1748 = vsel %vm349, %v1740, 0
      %1750 = vmatprep.subr.mxu0 %v1748
      %1751 = vmatpush1.msra.mxu0 %v1746
      %1752 = vmatprep.subr.mxu0 0.0
      %1753 = vmatpush1.msra.mxu0 0.0
      %1754 = vmatprep.subr.mxu0 0.0
      %1755 = vmatpush1.msra.mxu0 0.0
      %1756 = vmatprep.subr.mxu0 0.0
      %1757 = vmatpush1.msra.mxu0 0.0
      %1758 = vmatprep.subr.mxu0 0.0
      %1759 = vmatpush1.msra.mxu0 0.0
      %1760 = vmatprep.subr.mxu0 0.0
      %1761 = vmatpush1.msra.mxu0 0.0
      %1762 = vmatprep.subr.mxu0 0.0
      %1763 = vmatpush1.msra.mxu0 0.0
      %1764 = vmatprep.subr.mxu0 0.0
      %1765 = vmatpush1.msra.mxu0 0.0
      %1766 = vmatprep.subr.mxu0 0.0
      %1767 = vmatpush1.msra.mxu0 0.0
      %1768 = vmatprep.subr.mxu0 0.0
      %1769 = vmatpush1.msra.mxu0 0.0
      %1770 = vmatprep.subr.mxu0 0.0
      %1771 = vmatpush1.msra.mxu0 0.0
      %1772 = vmatprep.subr.mxu0 0.0
      %1773 = vmatpush1.msra.mxu0 0.0
      %1774 = vmatprep.subr.mxu0 0.0
      %1775 = vmatpush1.msra.mxu0 0.0
      %1776 = vmatprep.subr.mxu0 0.0
      %1777 = vmatpush1.msra.mxu0 0.0
      %1778 = vmatprep.subr.mxu0 0.0
      %1779 = vmatpush1.msra.mxu0 0.0
      %1780 = vmatprep.subr.mxu0 0.0
      %1781 = vmatpush1.msra.mxu0 0.0
      %1782 = vmatprep.subr.mxu0 0.0
      %1783 = vmatpush1.msra.mxu0 0.0
      %1784 = vmatprep.subr.mxu0 0.0
      %1785 = vmatpush1.msra.mxu0 0.0
      %1786 = vmatprep.subr.mxu0 0.0
      %1787 = vmatpush1.msra.mxu0 0.0
      %1788 = vmatprep.subr.mxu0 0.0
      %1789 = vmatpush1.msra.mxu0 0.0
      %1790 = vmatprep.subr.mxu0 0.0
      %1791 = vmatpush1.msra.mxu0 0.0
      %1792 = vmatprep.subr.mxu0 0.0
      %1793 = vmatpush1.msra.mxu0 0.0
      %1794 = vmatprep.subr.mxu0 0.0
      %1795 = vmatpush1.msra.mxu0 0.0
      %1796 = vmatprep.subr.mxu0 0.0
      %1797 = vmatpush1.msra.mxu0 0.0
      %1798 = vmatprep.subr.mxu0 0.0
      %1799 = vmatpush1.msra.mxu0 0.0
      %1800 = vmatprep.subr.mxu0 0.0
      %1801 = vmatpush1.msra.mxu0 0.0
      %1802 = vmatprep.subr.mxu0 0.0
      %1803 = vmatpush1.msra.mxu0 0.0
      %1804 = vmatprep.subr.mxu0 0.0
      %1805 = vmatpush1.msra.mxu0 0.0
      %1806 = vmatprep.subr.mxu0 0.0
      %1807 = vmatpush1.msra.mxu0 0.0
      %1808 = vmatprep.subr.mxu0 0.0
      %1809 = vmatpush1.msra.mxu0 0.0
      %1810 = vmatprep.subr.mxu0 0.0
      %1811 = vmatpush1.msra.mxu0 0.0
      %1812 = vmatprep.subr.mxu0 0.0
      %1813 = vmatpush1.msra.mxu0 0.0
      %1814 = vmatprep.mubr.f32.mxu0 0.0
      %1815 = vmatmul.mubr.f32.gmra.mrb[0].mxu0 %v1744
      %v1816 = vpop.f32.mrb[0].mxu0
      %v1817 = vadd.f32 %v1733, %v1816
      %v1818 = vpop.f32.mrb[0].mxu0
      %v1819 = vadd.f32 %v1735, %v1818
      %1820 = vdwg.mxu0
      %s1821 = scalar_lea.vmem %s1, 104
      %v1822 = vld [vmem:[%s1821] sm:$0x3f]
      %1823 = vrot.lane.b32.xlu0 %v333, 93
      %v1824 = vpop.permute.xlu0 %1823
      %1825 = vrot.lane.b32.xlu0 %v335, 93
      %v1826 = vpop.permute.xlu0 %1825
      %vm1827 = vcmask 760832
      %v1828 = vsel %vm1827, %v1824, %v1826
      %v1830 = vsel %vm345, %v1822, 0
      %v1832 = vsel %vm349, %v1828, 0
      %v1834 = vsel %vm349, %v1826, 0
      %1836 = vmatprep.subr.mxu0 %v1834
      %1837 = vmatpush1.msra.mxu0 %v1832
      %1838 = vmatprep.subr.mxu0 0.0
      %1839 = vmatpush1.msra.mxu0 0.0
      %1840 = vmatprep.subr.mxu0 0.0
      %1841 = vmatpush1.msra.mxu0 0.0
      %1842 = vmatprep.subr.mxu0 0.0
      %1843 = vmatpush1.msra.mxu0 0.0
      %1844 = vmatprep.subr.mxu0 0.0
      %1845 = vmatpush1.msra.mxu0 0.0
      %1846 = vmatprep.subr.mxu0 0.0
      %1847 = vmatpush1.msra.mxu0 0.0
      %1848 = vmatprep.subr.mxu0 0.0
      %1849 = vmatpush1.msra.mxu0 0.0
      %1850 = vmatprep.subr.mxu0 0.0
      %1851 = vmatpush1.msra.mxu0 0.0
      %1852 = vmatprep.subr.mxu0 0.0
      %1853 = vmatpush1.msra.mxu0 0.0
      %1854 = vmatprep.subr.mxu0 0.0
      %1855 = vmatpush1.msra.mxu0 0.0
      %1856 = vmatprep.subr.mxu0 0.0
      %1857 = vmatpush1.msra.mxu0 0.0
      %1858 = vmatprep.subr.mxu0 0.0
      %1859 = vmatpush1.msra.mxu0 0.0
      %1860 = vmatprep.subr.mxu0 0.0
      %1861 = vmatpush1.msra.mxu0 0.0
      %1862 = vmatprep.subr.mxu0 0.0
      %1863 = vmatpush1.msra.mxu0 0.0
      %1864 = vmatprep.subr.mxu0 0.0
      %1865 = vmatpush1.msra.mxu0 0.0
      %1866 = vmatprep.subr.mxu0 0.0
      %1867 = vmatpush1.msra.mxu0 0.0
      %1868 = vmatprep.subr.mxu0 0.0
      %1869 = vmatpush1.msra.mxu0 0.0
      %1870 = vmatprep.subr.mxu0 0.0
      %1871 = vmatpush1.msra.mxu0 0.0
      %1872 = vmatprep.subr.mxu0 0.0
      %1873 = vmatpush1.msra.mxu0 0.0
      %1874 = vmatprep.subr.mxu0 0.0
      %1875 = vmatpush1.msra.mxu0 0.0
      %1876 = vmatprep.subr.mxu0 0.0
      %1877 = vmatpush1.msra.mxu0 0.0
      %1878 = vmatprep.subr.mxu0 0.0
      %1879 = vmatpush1.msra.mxu0 0.0
      %1880 = vmatprep.subr.mxu0 0.0
      %1881 = vmatpush1.msra.mxu0 0.0
      %1882 = vmatprep.subr.mxu0 0.0
      %1883 = vmatpush1.msra.mxu0 0.0
      %1884 = vmatprep.subr.mxu0 0.0
      %1885 = vmatpush1.msra.mxu0 0.0
      %1886 = vmatprep.subr.mxu0 0.0
      %1887 = vmatpush1.msra.mxu0 0.0
      %1888 = vmatprep.subr.mxu0 0.0
      %1889 = vmatpush1.msra.mxu0 0.0
      %1890 = vmatprep.subr.mxu0 0.0
      %1891 = vmatpush1.msra.mxu0 0.0
      %1892 = vmatprep.subr.mxu0 0.0
      %1893 = vmatpush1.msra.mxu0 0.0
      %1894 = vmatprep.subr.mxu0 0.0
      %1895 = vmatpush1.msra.mxu0 0.0
      %1896 = vmatprep.subr.mxu0 0.0
      %1897 = vmatpush1.msra.mxu0 0.0
      %1898 = vmatprep.subr.mxu0 0.0
      %1899 = vmatpush1.msra.mxu0 0.0
      %1900 = vmatprep.mubr.f32.mxu0 0.0
      %1901 = vmatmul.mubr.f32.gmra.mrb[0].mxu0 %v1830
      %v1902 = vpop.f32.mrb[0].mxu0
      %v1903 = vadd.f32 0.0, %v1902
      %v1904 = vpop.f32.mrb[0].mxu0
      %v1905 = vadd.f32 0.0, %v1904
      %1906 = vdwg.mxu0
      %v1907 = vadd.f32 %v1817, %v1903
      %v1908 = vadd.f32 %v1819, %v1905
      %s1909 = scalar_lea.vmem %s1, 144
      %v1910 = vld [vmem:[%s1909] sm:$0x3f]
      %1911 = vrot.lane.b32.xlu0 %v333, 77
      %v1912 = vpop.permute.xlu0 %1911
      %1913 = vrot.lane.b32.xlu0 %v335, 77
      %v1914 = vpop.permute.xlu0 %1913
      %vm1915 = vcmask 629760
      %v1916 = vsel %vm1915, %v1912, %v1914
      %v1918 = vsel %vm345, %v1910, 0
      %v1920 = vsel %vm349, %v1916, 0
      %v1922 = vsel %vm349, %v1914, 0
      %1924 = vmatprep.subr.mxu0 %v1922
      %1925 = vmatpush1.msra.mxu0 %v1920
      %1926 = vmatprep.subr.mxu0 0.0
      %1927 = vmatpush1.msra.mxu0 0.0
      %1928 = vmatprep.subr.mxu0 0.0
      %1929 = vmatpush1.msra.mxu0 0.0
      %1930 = vmatprep.subr.mxu0 0.0
      %1931 = vmatpush1.msra.mxu0 0.0
      %1932 = vmatprep.subr.mxu0 0.0
      %1933 = vmatpush1.msra.mxu0 0.0
      %1934 = vmatprep.subr.mxu0 0.0
      %1935 = vmatpush1.msra.mxu0 0.0
      %1936 = vmatprep.subr.mxu0 0.0
      %1937 = vmatpush1.msra.mxu0 0.0
      %1938 = vmatprep.subr.mxu0 0.0
      %1939 = vmatpush1.msra.mxu0 0.0
      %1940 = vmatprep.subr.mxu0 0.0
      %1941 = vmatpush1.msra.mxu0 0.0
      %1942 = vmatprep.subr.mxu0 0.0
      %1943 = vmatpush1.msra.mxu0 0.0
      %1944 = vmatprep.subr.mxu0 0.0
      %1945 = vmatpush1.msra.mxu0 0.0
      %1946 = vmatprep.subr.mxu0 0.0
      %1947 = vmatpush1.msra.mxu0 0.0
      %1948 = vmatprep.subr.mxu0 0.0
      %1949 = vmatpush1.msra.mxu0 0.0
      %1950 = vmatprep.subr.mxu0 0.0
      %1951 = vmatpush1.msra.mxu0 0.0
      %1952 = vmatprep.subr.mxu0 0.0
      %1953 = vmatpush1.msra.mxu0 0.0
      %1954 = vmatprep.subr.mxu0 0.0
      %1955 = vmatpush1.msra.mxu0 0.0
      %1956 = vmatprep.subr.mxu0 0.0
      %1957 = vmatpush1.msra.mxu0 0.0
      %1958 = vmatprep.subr.mxu0 0.0
      %1959 = vmatpush1.msra.mxu0 0.0
      %1960 = vmatprep.subr.mxu0 0.0
      %1961 = vmatpush1.msra.mxu0 0.0
      %1962 = vmatprep.subr.mxu0 0.0
      %1963 = vmatpush1.msra.mxu0 0.0
      %1964 = vmatprep.subr.mxu0 0.0
      %1965 = vmatpush1.msra.mxu0 0.0
      %1966 = vmatprep.subr.mxu0 0.0
      %1967 = vmatpush1.msra.mxu0 0.0
      %1968 = vmatprep.subr.mxu0 0.0
      %1969 = vmatpush1.msra.mxu0 0.0
      %1970 = vmatprep.subr.mxu0 0.0
      %1971 = vmatpush1.msra.mxu0 0.0
      %1972 = vmatprep.subr.mxu0 0.0
      %1973 = vmatpush1.msra.mxu0 0.0
      %1974 = vmatprep.subr.mxu0 0.0
      %1975 = vmatpush1.msra.mxu0 0.0
      %1976 = vmatprep.subr.mxu0 0.0
      %1977 = vmatpush1.msra.mxu0 0.0
      %1978 = vmatprep.subr.mxu0 0.0
      %1979 = vmatpush1.msra.mxu0 0.0
      %1980 = vmatprep.subr.mxu0 0.0
      %1981 = vmatpush1.msra.mxu0 0.0
      %1982 = vmatprep.subr.mxu0 0.0
      %1983 = vmatpush1.msra.mxu0 0.0
      %1984 = vmatprep.subr.mxu0 0.0
      %1985 = vmatpush1.msra.mxu0 0.0
      %1986 = vmatprep.subr.mxu0 0.0
      %1987 = vmatpush1.msra.mxu0 0.0
      %1988 = vmatprep.mubr.f32.mxu0 0.0
      %1989 = vmatmul.mubr.f32.gmra.mrb[0].mxu0 %v1918
      %v1990 = vpop.f32.mrb[0].mxu0
      %v1991 = vadd.f32 0.0, %v1990
      %v1992 = vpop.f32.mrb[0].mxu0
      %v1993 = vadd.f32 0.0, %v1992
      %1994 = vdwg.mxu0
      %v1995 = vadd.f32 %v1907, %v1991
      %v1996 = vadd.f32 %v1908, %v1993
      %s1997 = scalar_lea.vmem %s1, 184
      %v1998 = vld [vmem:[%s1997] sm:$0x3f]
      %1999 = vrot.lane.b32.xlu0 %v333, 61
      %v2000 = vpop.permute.xlu0 %1999
      %2001 = vrot.lane.b32.xlu0 %v335, 61
      %v2002 = vpop.permute.xlu0 %2001
      %2003 = vrot.lane.b32.xlu0 0.0, 61
      %v2004 = vpop.permute.xlu0 %2003
      %vm2005 = vcmask 498688
      %v2006 = vsel %vm2005, %v2000, %v2002
      %v2007 = vsel %vm2005, %v2002, %v2004
      %v2009 = vsel %vm345, %v1998, 0
      %v2011 = vsel %vm349, %v2006, 0
      %v2013 = vsel %vm349, %v2007, 0
      %2015 = vmatprep.subr.mxu0 %v2013
      %2016 = vmatpush1.msra.mxu0 %v2011
      %2017 = vmatprep.subr.mxu0 0.0
      %2018 = vmatpush1.msra.mxu0 0.0
      %2019 = vmatprep.subr.mxu0 0.0
      %2020 = vmatpush1.msra.mxu0 0.0
      %2021 = vmatprep.subr.mxu0 0.0
      %2022 = vmatpush1.msra.mxu0 0.0
      %2023 = vmatprep.subr.mxu0 0.0
      %2024 = vmatpush1.msra.mxu0 0.0
      %2025 = vmatprep.subr.mxu0 0.0
      %2026 = vmatpush1.msra.mxu0 0.0
      %2027 = vmatprep.subr.mxu0 0.0
      %2028 = vmatpush1.msra.mxu0 0.0
      %2029 = vmatprep.subr.mxu0 0.0
      %2030 = vmatpush1.msra.mxu0 0.0
      %2031 = vmatprep.subr.mxu0 0.0
      %2032 = vmatpush1.msra.mxu0 0.0
      %2033 = vmatprep.subr.mxu0 0.0
      %2034 = vmatpush1.msra.mxu0 0.0
      %2035 = vmatprep.subr.mxu0 0.0
      %2036 = vmatpush1.msra.mxu0 0.0
      %2037 = vmatprep.subr.mxu0 0.0
      %2038 = vmatpush1.msra.mxu0 0.0
      %2039 = vmatprep.subr.mxu0 0.0
      %2040 = vmatpush1.msra.mxu0 0.0
      %2041 = vmatprep.subr.mxu0 0.0
      %2042 = vmatpush1.msra.mxu0 0.0
      %2043 = vmatprep.subr.mxu0 0.0
      %2044 = vmatpush1.msra.mxu0 0.0
      %2045 = vmatprep.subr.mxu0 0.0
      %2046 = vmatpush1.msra.mxu0 0.0
      %2047 = vmatprep.subr.mxu0 0.0
      %2048 = vmatpush1.msra.mxu0 0.0
      %2049 = vmatprep.subr.mxu0 0.0
      %2050 = vmatpush1.msra.mxu0 0.0
      %2051 = vmatprep.subr.mxu0 0.0
      %2052 = vmatpush1.msra.mxu0 0.0
      %2053 = vmatprep.subr.mxu0 0.0
      %2054 = vmatpush1.msra.mxu0 0.0
      %2055 = vmatprep.subr.mxu0 0.0
      %2056 = vmatpush1.msra.mxu0 0.0
      %2057 = vmatprep.subr.mxu0 0.0
      %2058 = vmatpush1.msra.mxu0 0.0
      %2059 = vmatprep.subr.mxu0 0.0
      %2060 = vmatpush1.msra.mxu0 0.0
      %2061 = vmatprep.subr.mxu0 0.0
      %2062 = vmatpush1.msra.mxu0 0.0
      %2063 = vmatprep.subr.mxu0 0.0
      %2064 = vmatpush1.msra.mxu0 0.0
      %2065 = vmatprep.subr.mxu0 0.0
      %2066 = vmatpush1.msra.mxu0 0.0
      %2067 = vmatprep.subr.mxu0 0.0
      %2068 = vmatpush1.msra.mxu0 0.0
      %2069 = vmatprep.subr.mxu0 0.0
      %2070 = vmatpush1.msra.mxu0 0.0
      %2071 = vmatprep.subr.mxu0 0.0
      %2072 = vmatpush1.msra.mxu0 0.0
      %2073 = vmatprep.subr.mxu0 0.0
      %2074 = vmatpush1.msra.mxu0 0.0
      %2075 = vmatprep.subr.mxu0 0.0
      %2076 = vmatpush1.msra.mxu0 0.0
      %2077 = vmatprep.subr.mxu0 0.0
      %2078 = vmatpush1.msra.mxu0 0.0
      %2079 = vmatprep.mubr.f32.mxu0 0.0
      %2080 = vmatmul.mubr.f32.gmra.mrb[0].mxu0 %v2009
      %v2081 = vpop.f32.mrb[0].mxu0
      %v2082 = vadd.f32 0.0, %v2081
      %v2083 = vpop.f32.mrb[0].mxu0
      %v2084 = vadd.f32 0.0, %v2083
      %2085 = vdwg.mxu0
      %v2086 = vadd.f32 %v1995, %v2082
      %v2087 = vadd.f32 %v1996, %v2084
      %s2088 = scalar_lea.vmem %s1, 32
      %v2089 = vld [vmem:[%s2088] sm:$0x3f]
      %s2090 = scalar_lea.vmem %s1, 72
      %v2091 = vld [vmem:[%s2090] sm:$0x3f]
      %2092 = vrot.lane.b32.xlu0 %v333, 108
      %v2093 = vpop.permute.xlu0 %2092
      %2094 = vrot.lane.b32.xlu0 %v335, 108
      %v2095 = vpop.permute.xlu0 %2094
      %vm2096 = vcmask 883712
      %v2097 = vsel %vm2096, %v2093, %v2095
      %v2099 = vsel %vm345, %v2091, 0
      %v2101 = vsel %vm349, %v2097, 0
      %v2103 = vsel %vm349, %v2095, 0
      %2105 = vmatprep.subr.mxu0 %v2103
      %2106 = vmatpush1.msra.mxu0 %v2101
      %2107 = vmatprep.subr.mxu0 0.0
      %2108 = vmatpush1.msra.mxu0 0.0
      %2109 = vmatprep.subr.mxu0 0.0
      %2110 = vmatpush1.msra.mxu0 0.0
      %2111 = vmatprep.subr.mxu0 0.0
      %2112 = vmatpush1.msra.mxu0 0.0
      %2113 = vmatprep.subr.mxu0 0.0
      %2114 = vmatpush1.msra.mxu0 0.0
      %2115 = vmatprep.subr.mxu0 0.0
      %2116 = vmatpush1.msra.mxu0 0.0
      %2117 = vmatprep.subr.mxu0 0.0
      %2118 = vmatpush1.msra.mxu0 0.0
      %2119 = vmatprep.subr.mxu0 0.0
      %2120 = vmatpush1.msra.mxu0 0.0
      %2121 = vmatprep.subr.mxu0 0.0
      %2122 = vmatpush1.msra.mxu0 0.0
      %2123 = vmatprep.subr.mxu0 0.0
      %2124 = vmatpush1.msra.mxu0 0.0
      %2125 = vmatprep.subr.mxu0 0.0
      %2126 = vmatpush1.msra.mxu0 0.0
      %2127 = vmatprep.subr.mxu0 0.0
      %2128 = vmatpush1.msra.mxu0 0.0
      %2129 = vmatprep.subr.mxu0 0.0
      %2130 = vmatpush1.msra.mxu0 0.0
      %2131 = vmatprep.subr.mxu0 0.0
      %2132 = vmatpush1.msra.mxu0 0.0
      %2133 = vmatprep.subr.mxu0 0.0
      %2134 = vmatpush1.msra.mxu0 0.0
      %2135 = vmatprep.subr.mxu0 0.0
      %2136 = vmatpush1.msra.mxu0 0.0
      %2137 = vmatprep.subr.mxu0 0.0
      %2138 = vmatpush1.msra.mxu0 0.0
      %2139 = vmatprep.subr.mxu0 0.0
      %2140 = vmatpush1.msra.mxu0 0.0
      %2141 = vmatprep.subr.mxu0 0.0
      %2142 = vmatpush1.msra.mxu0 0.0
      %2143 = vmatprep.subr.mxu0 0.0
      %2144 = vmatpush1.msra.mxu0 0.0
      %2145 = vmatprep.subr.mxu0 0.0
      %2146 = vmatpush1.msra.mxu0 0.0
      %2147 = vmatprep.subr.mxu0 0.0
      %2148 = vmatpush1.msra.mxu0 0.0
      %2149 = vmatprep.subr.mxu0 0.0
      %2150 = vmatpush1.msra.mxu0 0.0
      %2151 = vmatprep.subr.mxu0 0.0
      %2152 = vmatpush1.msra.mxu0 0.0
      %2153 = vmatprep.subr.mxu0 0.0
      %2154 = vmatpush1.msra.mxu0 0.0
      %2155 = vmatprep.subr.mxu0 0.0
      %2156 = vmatpush1.msra.mxu0 0.0
      %2157 = vmatprep.subr.mxu0 0.0
      %2158 = vmatpush1.msra.mxu0 0.0
      %2159 = vmatprep.subr.mxu0 0.0
      %2160 = vmatpush1.msra.mxu0 0.0
      %2161 = vmatprep.subr.mxu0 0.0
      %2162 = vmatpush1.msra.mxu0 0.0
      %2163 = vmatprep.subr.mxu0 0.0
      %2164 = vmatpush1.msra.mxu0 0.0
      %2165 = vmatprep.subr.mxu0 0.0
      %2166 = vmatpush1.msra.mxu0 0.0
      %2167 = vmatprep.subr.mxu0 0.0
      %2168 = vmatpush1.msra.mxu0 0.0
      %2169 = vmatprep.mubr.f32.mxu0 0.0
      %2170 = vmatmul.mubr.f32.gmra.mrb[0].mxu0 %v2099
      %v2171 = vpop.f32.mrb[0].mxu0
      %v2172 = vadd.f32 0.0, %v2171
      %v2173 = vpop.f32.mrb[0].mxu0
      %v2174 = vadd.f32 0.0, %v2173
      %2175 = vdwg.mxu0
      %2176 = vrot.lane.b32.xlu0 %v333, 124
      %v2177 = vpop.permute.xlu0 %2176
      %2178 = vrot.lane.b32.xlu0 %v335, 124
      %v2179 = vpop.permute.xlu0 %2178
      %vm2180 = vcmask 1014784
      %v2181 = vsel %vm2180, %v2177, %v2179
      %v2183 = vsel %vm345, %v2089, 0
      %v2185 = vsel %vm349, %v2181, 0
      %v2187 = vsel %vm349, %v2179, 0
      %2189 = vmatprep.subr.mxu0 %v2187
      %2190 = vmatpush1.msra.mxu0 %v2185
      %2191 = vmatprep.subr.mxu0 0.0
      %2192 = vmatpush1.msra.mxu0 0.0
      %2193 = vmatprep.subr.mxu0 0.0
      %2194 = vmatpush1.msra.mxu0 0.0
      %2195 = vmatprep.subr.mxu0 0.0
      %2196 = vmatpush1.msra.mxu0 0.0
      %2197 = vmatprep.subr.mxu0 0.0
      %2198 = vmatpush1.msra.mxu0 0.0
      %2199 = vmatprep.subr.mxu0 0.0
      %2200 = vmatpush1.msra.mxu0 0.0
      %2201 = vmatprep.subr.mxu0 0.0
      %2202 = vmatpush1.msra.mxu0 0.0
      %2203 = vmatprep.subr.mxu0 0.0
      %2204 = vmatpush1.msra.mxu0 0.0
      %2205 = vmatprep.subr.mxu0 0.0
      %2206 = vmatpush1.msra.mxu0 0.0
      %2207 = vmatprep.subr.mxu0 0.0
      %2208 = vmatpush1.msra.mxu0 0.0
      %2209 = vmatprep.subr.mxu0 0.0
      %2210 = vmatpush1.msra.mxu0 0.0
      %2211 = vmatprep.subr.mxu0 0.0
      %2212 = vmatpush1.msra.mxu0 0.0
      %2213 = vmatprep.subr.mxu0 0.0
      %2214 = vmatpush1.msra.mxu0 0.0
      %2215 = vmatprep.subr.mxu0 0.0
      %2216 = vmatpush1.msra.mxu0 0.0
      %2217 = vmatprep.subr.mxu0 0.0
      %2218 = vmatpush1.msra.mxu0 0.0
      %2219 = vmatprep.subr.mxu0 0.0
      %2220 = vmatpush1.msra.mxu0 0.0
      %2221 = vmatprep.subr.mxu0 0.0
      %2222 = vmatpush1.msra.mxu0 0.0
      %2223 = vmatprep.subr.mxu0 0.0
      %2224 = vmatpush1.msra.mxu0 0.0
      %2225 = vmatprep.subr.mxu0 0.0
      %2226 = vmatpush1.msra.mxu0 0.0
      %2227 = vmatprep.subr.mxu0 0.0
      %2228 = vmatpush1.msra.mxu0 0.0
      %2229 = vmatprep.subr.mxu0 0.0
      %2230 = vmatpush1.msra.mxu0 0.0
      %2231 = vmatprep.subr.mxu0 0.0
      %2232 = vmatpush1.msra.mxu0 0.0
      %2233 = vmatprep.subr.mxu0 0.0
      %2234 = vmatpush1.msra.mxu0 0.0
      %2235 = vmatprep.subr.mxu0 0.0
      %2236 = vmatpush1.msra.mxu0 0.0
      %2237 = vmatprep.subr.mxu0 0.0
      %2238 = vmatpush1.msra.mxu0 0.0
      %2239 = vmatprep.subr.mxu0 0.0
      %2240 = vmatpush1.msra.mxu0 0.0
      %2241 = vmatprep.subr.mxu0 0.0
      %2242 = vmatpush1.msra.mxu0 0.0
      %2243 = vmatprep.subr.mxu0 0.0
      %2244 = vmatpush1.msra.mxu0 0.0
      %2245 = vmatprep.subr.mxu0 0.0
      %2246 = vmatpush1.msra.mxu0 0.0
      %2247 = vmatprep.subr.mxu0 0.0
      %2248 = vmatpush1.msra.mxu0 0.0
      %2249 = vmatprep.subr.mxu0 0.0
      %2250 = vmatpush1.msra.mxu0 0.0
      %2251 = vmatprep.subr.mxu0 0.0
      %2252 = vmatpush1.msra.mxu0 0.0
      %2253 = vmatprep.mubr.f32.mxu0 0.0
      %2254 = vmatmul.mubr.f32.gmra.mrb[0].mxu0 %v2183
      %v2255 = vpop.f32.mrb[0].mxu0
      %v2256 = vadd.f32 %v2172, %v2255
      %v2257 = vpop.f32.mrb[0].mxu0
      %v2258 = vadd.f32 %v2174, %v2257
      %2259 = vdwg.mxu0
      %s2260 = scalar_lea.vmem %s1, 112
      %v2261 = vld [vmem:[%s2260] sm:$0x3f]
      %2262 = vrot.lane.b32.xlu0 %v333, 92
      %v2263 = vpop.permute.xlu0 %2262
      %2264 = vrot.lane.b32.xlu0 %v335, 92
      %v2265 = vpop.permute.xlu0 %2264
      %vm2266 = vcmask 752640
      %v2267 = vsel %vm2266, %v2263, %v2265
      %v2269 = vsel %vm345, %v2261, 0
      %v2271 = vsel %vm349, %v2267, 0
      %v2273 = vsel %vm349, %v2265, 0
      %2275 = vmatprep.subr.mxu0 %v2273
      %2276 = vmatpush1.msra.mxu0 %v2271
      %2277 = vmatprep.subr.mxu0 0.0
      %2278 = vmatpush1.msra.mxu0 0.0
      %2279 = vmatprep.subr.mxu0 0.0
      %2280 = vmatpush1.msra.mxu0 0.0
      %2281 = vmatprep.subr.mxu0 0.0
      %2282 = vmatpush1.msra.mxu0 0.0
      %2283 = vmatprep.subr.mxu0 0.0
      %2284 = vmatpush1.msra.mxu0 0.0
      %2285 = vmatprep.subr.mxu0 0.0
      %2286 = vmatpush1.msra.mxu0 0.0
      %2287 = vmatprep.subr.mxu0 0.0
      %2288 = vmatpush1.msra.mxu0 0.0
      %2289 = vmatprep.subr.mxu0 0.0
      %2290 = vmatpush1.msra.mxu0 0.0
      %2291 = vmatprep.subr.mxu0 0.0
      %2292 = vmatpush1.msra.mxu0 0.0
      %2293 = vmatprep.subr.mxu0 0.0
      %2294 = vmatpush1.msra.mxu0 0.0
      %2295 = vmatprep.subr.mxu0 0.0
      %2296 = vmatpush1.msra.mxu0 0.0
      %2297 = vmatprep.subr.mxu0 0.0
      %2298 = vmatpush1.msra.mxu0 0.0
      %2299 = vmatprep.subr.mxu0 0.0
      %2300 = vmatpush1.msra.mxu0 0.0
      %2301 = vmatprep.subr.mxu0 0.0
      %2302 = vmatpush1.msra.mxu0 0.0
      %2303 = vmatprep.subr.mxu0 0.0
      %2304 = vmatpush1.msra.mxu0 0.0
      %2305 = vmatprep.subr.mxu0 0.0
      %2306 = vmatpush1.msra.mxu0 0.0
      %2307 = vmatprep.subr.mxu0 0.0
      %2308 = vmatpush1.msra.mxu0 0.0
      %2309 = vmatprep.subr.mxu0 0.0
      %2310 = vmatpush1.msra.mxu0 0.0
      %2311 = vmatprep.subr.mxu0 0.0
      %2312 = vmatpush1.msra.mxu0 0.0
      %2313 = vmatprep.subr.mxu0 0.0
      %2314 = vmatpush1.msra.mxu0 0.0
      %2315 = vmatprep.subr.mxu0 0.0
      %2316 = vmatpush1.msra.mxu0 0.0
      %2317 = vmatprep.subr.mxu0 0.0
      %2318 = vmatpush1.msra.mxu0 0.0
      %2319 = vmatprep.subr.mxu0 0.0
      %2320 = vmatpush1.msra.mxu0 0.0
      %2321 = vmatprep.subr.mxu0 0.0
      %2322 = vmatpush1.msra.mxu0 0.0
      %2323 = vmatprep.subr.mxu0 0.0
      %2324 = vmatpush1.msra.mxu0 0.0
      %2325 = vmatprep.subr.mxu0 0.0
      %2326 = vmatpush1.msra.mxu0 0.0
      %2327 = vmatprep.subr.mxu0 0.0
      %2328 = vmatpush1.msra.mxu0 0.0
      %2329 = vmatprep.subr.mxu0 0.0
      %2330 = vmatpush1.msra.mxu0 0.0
      %2331 = vmatprep.subr.mxu0 0.0
      %2332 = vmatpush1.msra.mxu0 0.0
      %2333 = vmatprep.subr.mxu0 0.0
      %2334 = vmatpush1.msra.mxu0 0.0
      %2335 = vmatprep.subr.mxu0 0.0
      %2336 = vmatpush1.msra.mxu0 0.0
      %2337 = vmatprep.subr.mxu0 0.0
      %2338 = vmatpush1.msra.mxu0 0.0
      %2339 = vmatprep.mubr.f32.mxu0 0.0
      %2340 = vmatmul.mubr.f32.gmra.mrb[0].mxu0 %v2269
      %v2341 = vpop.f32.mrb[0].mxu0
      %v2342 = vadd.f32 0.0, %v2341
      %v2343 = vpop.f32.mrb[0].mxu0
      %v2344 = vadd.f32 0.0, %v2343
      %2345 = vdwg.mxu0
      %v2346 = vadd.f32 %v2256, %v2342
      %v2347 = vadd.f32 %v2258, %v2344
      %s2348 = scalar_lea.vmem %s1, 152
      %v2349 = vld [vmem:[%s2348] sm:$0x3f]
      %2350 = vrot.lane.b32.xlu0 %v333, 76
      %v2351 = vpop.permute.xlu0 %2350
      %2352 = vrot.lane.b32.xlu0 %v335, 76
      %v2353 = vpop.permute.xlu0 %2352
      %vm2354 = vcmask 621568
      %v2355 = vsel %vm2354, %v2351, %v2353
      %v2357 = vsel %vm345, %v2349, 0
      %v2359 = vsel %vm349, %v2355, 0
      %v2361 = vsel %vm349, %v2353, 0
      %2363 = vmatprep.subr.mxu0 %v2361
      %2364 = vmatpush1.msra.mxu0 %v2359
      %2365 = vmatprep.subr.mxu0 0.0
      %2366 = vmatpush1.msra.mxu0 0.0
      %2367 = vmatprep.subr.mxu0 0.0
      %2368 = vmatpush1.msra.mxu0 0.0
      %2369 = vmatprep.subr.mxu0 0.0
      %2370 = vmatpush1.msra.mxu0 0.0
      %2371 = vmatprep.subr.mxu0 0.0
      %2372 = vmatpush1.msra.mxu0 0.0
      %2373 = vmatprep.subr.mxu0 0.0
      %2374 = vmatpush1.msra.mxu0 0.0
      %2375 = vmatprep.subr.mxu0 0.0
      %2376 = vmatpush1.msra.mxu0 0.0
      %2377 = vmatprep.subr.mxu0 0.0
      %2378 = vmatpush1.msra.mxu0 0.0
      %2379 = vmatprep.subr.mxu0 0.0
      %2380 = vmatpush1.msra.mxu0 0.0
      %2381 = vmatprep.subr.mxu0 0.0
      %2382 = vmatpush1.msra.mxu0 0.0
      %2383 = vmatprep.subr.mxu0 0.0
      %2384 = vmatpush1.msra.mxu0 0.0
      %2385 = vmatprep.subr.mxu0 0.0
      %2386 = vmatpush1.msra.mxu0 0.0
      %2387 = vmatprep.subr.mxu0 0.0
      %2388 = vmatpush1.msra.mxu0 0.0
      %2389 = vmatprep.subr.mxu0 0.0
      %2390 = vmatpush1.msra.mxu0 0.0
      %2391 = vmatprep.subr.mxu0 0.0
      %2392 = vmatpush1.msra.mxu0 0.0
      %2393 = vmatprep.subr.mxu0 0.0
      %2394 = vmatpush1.msra.mxu0 0.0
      %2395 = vmatprep.subr.mxu0 0.0
      %2396 = vmatpush1.msra.mxu0 0.0
      %2397 = vmatprep.subr.mxu0 0.0
      %2398 = vmatpush1.msra.mxu0 0.0
      %2399 = vmatprep.subr.mxu0 0.0
      %2400 = vmatpush1.msra.mxu0 0.0
      %2401 = vmatprep.subr.mxu0 0.0
      %2402 = vmatpush1.msra.mxu0 0.0
      %2403 = vmatprep.subr.mxu0 0.0
      %2404 = vmatpush1.msra.mxu0 0.0
      %2405 = vmatprep.subr.mxu0 0.0
      %2406 = vmatpush1.msra.mxu0 0.0
      %2407 = vmatprep.subr.mxu0 0.0
      %2408 = vmatpush1.msra.mxu0 0.0
      %2409 = vmatprep.subr.mxu0 0.0
      %2410 = vmatpush1.msra.mxu0 0.0
      %2411 = vmatprep.subr.mxu0 0.0
      %2412 = vmatpush1.msra.mxu0 0.0
      %2413 = vmatprep.subr.mxu0 0.0
      %2414 = vmatpush1.msra.mxu0 0.0
      %2415 = vmatprep.subr.mxu0 0.0
      %2416 = vmatpush1.msra.mxu0 0.0
      %2417 = vmatprep.subr.mxu0 0.0
      %2418 = vmatpush1.msra.mxu0 0.0
      %2419 = vmatprep.subr.mxu0 0.0
      %2420 = vmatpush1.msra.mxu0 0.0
      %2421 = vmatprep.subr.mxu0 0.0
      %2422 = vmatpush1.msra.mxu0 0.0
      %2423 = vmatprep.subr.mxu0 0.0
      %2424 = vmatpush1.msra.mxu0 0.0
      %2425 = vmatprep.subr.mxu0 0.0
      %2426 = vmatpush1.msra.mxu0 0.0
      %2427 = vmatprep.mubr.f32.mxu0 0.0
      %2428 = vmatmul.mubr.f32.gmra.mrb[0].mxu0 %v2357
      %v2429 = vpop.f32.mrb[0].mxu0
      %v2430 = vadd.f32 0.0, %v2429
      %v2431 = vpop.f32.mrb[0].mxu0
      %v2432 = vadd.f32 0.0, %v2431
      %2433 = vdwg.mxu0
      %v2434 = vadd.f32 %v2346, %v2430
      %v2435 = vadd.f32 %v2347, %v2432
      %s2436 = scalar_lea.vmem %s1, 192
      %v2437 = vld [vmem:[%s2436] sm:$0x3f]
      %2438 = vrot.lane.b32.xlu0 %v333, 60
      %v2439 = vpop.permute.xlu0 %2438
      %2440 = vrot.lane.b32.xlu0 %v335, 60
      %v2441 = vpop.permute.xlu0 %2440
      %2442 = vrot.lane.b32.xlu0 0.0, 60
      %v2443 = vpop.permute.xlu0 %2442
      %vm2444 = vcmask 490496
      %v2445 = vsel %vm2444, %v2439, %v2441
      %v2446 = vsel %vm2444, %v2441, %v2443
      %v2448 = vsel %vm345, %v2437, 0
      %v2450 = vsel %vm349, %v2445, 0
      %v2452 = vsel %vm349, %v2446, 0
      %2454 = vmatprep.subr.mxu0 %v2452
      %2455 = vmatpush1.msra.mxu0 %v2450
      %2456 = vmatprep.subr.mxu0 0.0
      %2457 = vmatpush1.msra.mxu0 0.0
      %2458 = vmatprep.subr.mxu0 0.0
      %2459 = vmatpush1.msra.mxu0 0.0
      %2460 = vmatprep.subr.mxu0 0.0
      %2461 = vmatpush1.msra.mxu0 0.0
      %2462 = vmatprep.subr.mxu0 0.0
      %2463 = vmatpush1.msra.mxu0 0.0
      %2464 = vmatprep.subr.mxu0 0.0
      %2465 = vmatpush1.msra.mxu0 0.0
      %2466 = vmatprep.subr.mxu0 0.0
      %2467 = vmatpush1.msra.mxu0 0.0
      %2468 = vmatprep.subr.mxu0 0.0
      %2469 = vmatpush1.msra.mxu0 0.0
      %2470 = vmatprep.subr.mxu0 0.0
      %2471 = vmatpush1.msra.mxu0 0.0
      %2472 = vmatprep.subr.mxu0 0.0
      %2473 = vmatpush1.msra.mxu0 0.0
      %2474 = vmatprep.subr.mxu0 0.0
      %2475 = vmatpush1.msra.mxu0 0.0
      %2476 = vmatprep.subr.mxu0 0.0
      %2477 = vmatpush1.msra.mxu0 0.0
      %2478 = vmatprep.subr.mxu0 0.0
      %2479 = vmatpush1.msra.mxu0 0.0
      %2480 = vmatprep.subr.mxu0 0.0
      %2481 = vmatpush1.msra.mxu0 0.0
      %2482 = vmatprep.subr.mxu0 0.0
      %2483 = vmatpush1.msra.mxu0 0.0
      %2484 = vmatprep.subr.mxu0 0.0
      %2485 = vmatpush1.msra.mxu0 0.0
      %2486 = vmatprep.subr.mxu0 0.0
      %2487 = vmatpush1.msra.mxu0 0.0
      %2488 = vmatprep.subr.mxu0 0.0
      %2489 = vmatpush1.msra.mxu0 0.0
      %2490 = vmatprep.subr.mxu0 0.0
      %2491 = vmatpush1.msra.mxu0 0.0
      %2492 = vmatprep.subr.mxu0 0.0
      %2493 = vmatpush1.msra.mxu0 0.0
      %2494 = vmatprep.subr.mxu0 0.0
      %2495 = vmatpush1.msra.mxu0 0.0
      %2496 = vmatprep.subr.mxu0 0.0
      %2497 = vmatpush1.msra.mxu0 0.0
      %2498 = vmatprep.subr.mxu0 0.0
      %2499 = vmatpush1.msra.mxu0 0.0
      %2500 = vmatprep.subr.mxu0 0.0
      %2501 = vmatpush1.msra.mxu0 0.0
      %2502 = vmatprep.subr.mxu0 0.0
      %2503 = vmatpush1.msra.mxu0 0.0
      %2504 = vmatprep.subr.mxu0 0.0
      %2505 = vmatpush1.msra.mxu0 0.0
      %2506 = vmatprep.subr.mxu0 0.0
      %2507 = vmatpush1.msra.mxu0 0.0
      %2508 = vmatprep.subr.mxu0 0.0
      %2509 = vmatpush1.msra.mxu0 0.0
      %2510 = vmatprep.subr.mxu0 0.0
      %2511 = vmatpush1.msra.mxu0 0.0
      %2512 = vmatprep.subr.mxu0 0.0
      %2513 = vmatpush1.msra.mxu0 0.0
      %2514 = vmatprep.subr.mxu0 0.0
      %2515 = vmatpush1.msra.mxu0 0.0
      %2516 = vmatprep.subr.mxu0 0.0
      %2517 = vmatpush1.msra.mxu0 0.0
      %2518 = vmatprep.mubr.f32.mxu0 0.0
      %2519 = vmatmul.mubr.f32.gmra.mrb[0].mxu0 %v2448
      %v2520 = vpop.f32.mrb[0].mxu0
      %v2521 = vadd.f32 0.0, %v2520
      %v2522 = vpop.f32.mrb[0].mxu0
      %v2523 = vadd.f32 0.0, %v2522
      %2524 = vdwg.mxu0
      %v2525 = vadd.f32 %v2434, %v2521
      %v2526 = vadd.f32 %v2435, %v2523
      %v2527 = vadd.f32 %v769, %v1208
      %v2528 = vadd.f32 %v770, %v1209
      %v2529 = vadd.f32 %v1647, %v2086
      %v2530 = vadd.f32 %v1648, %v2087
      %v2531 = vadd.f32 %v2527, %v2529
      %v2532 = vadd.f32 %v2528, %v2530
      %v2533 = vadd.f32 %v2531, %v2525
      %v2534 = vadd.f32 %v2532, %v2526
      %v2535 = vld [vmem:[%s2] sm:$0x3f]
      %2537 = vset.pattern.permute.xlu0 0
      %2538 = vperm.xlu0 %2537, %v2535
      %v2539 = vpop.permute.xlu0 %2538
      %v2541 = vadd.f32 %v2533, %v2539
      %v2542 = vadd.f32 %v2534, %v2539
      %v2543 = vmax.f32 %v2541, 0.0
      %v2544 = vmax.f32 %v2542, 0.0
      %v2545 = vld [vmem:[%s3] sm:$0xff]
      %v2546 = vld [vmem:[%s3 + $0x8] sm:$0xff]
      %s2547 = scalar_lea.vmem %s3, 80
      %v2548 = vld [vmem:[%s2547] sm:$0xff]
      %v2549 = vld [vmem:[%s2547 + $0x8] sm:$0xff]
      %2552 = vrot.lane.b32.xlu0 %v2543, 112
      %v2553 = vpop.permute.xlu0 %2552
      %2554 = vrot.lane.b32.xlu0 %v2544, 112
      %v2555 = vpop.permute.xlu0 %2554
      %v2556 = vsel %vm343, %v2553, %v2555
      %vm2557 = vcmask 48128
      %v2559 = vsel %vm2557, %v2548, 0
      %v2562 = vsel %vm2557, %v2549, 0
      %vm2564 = vcmask 1045504
      %v2565 = vsel %vm2564, %v2556, 0
      %2567 = vmatprep.subr.mxu0 0.0
      %2568 = vmatpush1.msra.mxu0 %v2565
      %2569 = vmatprep.subr.mxu0 0.0
      %2570 = vmatpush1.msra.mxu0 0.0
      %2571 = vmatprep.subr.mxu0 0.0
      %2572 = vmatpush1.msra.mxu0 0.0
      %2573 = vmatprep.subr.mxu0 0.0
      %2574 = vmatpush1.msra.mxu0 0.0
      %2575 = vmatprep.subr.mxu0 0.0
      %2576 = vmatpush1.msra.mxu0 0.0
      %2577 = vmatprep.subr.mxu0 0.0
      %2578 = vmatpush1.msra.mxu0 0.0
      %2579 = vmatprep.subr.mxu0 0.0
      %2580 = vmatpush1.msra.mxu0 0.0
      %2581 = vmatprep.subr.mxu0 0.0
      %2582 = vmatpush1.msra.mxu0 0.0
      %2583 = vmatprep.subr.mxu0 0.0
      %2584 = vmatpush1.msra.mxu0 0.0
      %2585 = vmatprep.subr.mxu0 0.0
      %2586 = vmatpush1.msra.mxu0 0.0
      %2587 = vmatprep.subr.mxu0 0.0
      %2588 = vmatpush1.msra.mxu0 0.0
      %2589 = vmatprep.subr.mxu0 0.0
      %2590 = vmatpush1.msra.mxu0 0.0
      %2591 = vmatprep.subr.mxu0 0.0
      %2592 = vmatpush1.msra.mxu0 0.0
      %2593 = vmatprep.subr.mxu0 0.0
      %2594 = vmatpush1.msra.mxu0 0.0
      %2595 = vmatprep.subr.mxu0 0.0
      %2596 = vmatpush1.msra.mxu0 0.0
      %2597 = vmatprep.subr.mxu0 0.0
      %2598 = vmatpush1.msra.mxu0 0.0
      %2599 = vmatprep.subr.mxu0 0.0
      %2600 = vmatpush1.msra.mxu0 0.0
      %2601 = vmatprep.subr.mxu0 0.0
      %2602 = vmatpush1.msra.mxu0 0.0
      %2603 = vmatprep.subr.mxu0 0.0
      %2604 = vmatpush1.msra.mxu0 0.0
      %2605 = vmatprep.subr.mxu0 0.0
      %2606 = vmatpush1.msra.mxu0 0.0
      %2607 = vmatprep.subr.mxu0 0.0
      %2608 = vmatpush1.msra.mxu0 0.0
      %2609 = vmatprep.subr.mxu0 0.0
      %2610 = vmatpush1.msra.mxu0 0.0
      %2611 = vmatprep.subr.mxu0 0.0
      %2612 = vmatpush1.msra.mxu0 0.0
      %2613 = vmatprep.subr.mxu0 0.0
      %2614 = vmatpush1.msra.mxu0 0.0
      %2615 = vmatprep.subr.mxu0 0.0
      %2616 = vmatpush1.msra.mxu0 0.0
      %2617 = vmatprep.subr.mxu0 0.0
      %2618 = vmatpush1.msra.mxu0 0.0
      %2619 = vmatprep.subr.mxu0 0.0
      %2620 = vmatpush1.msra.mxu0 0.0
      %2621 = vmatprep.subr.mxu0 0.0
      %2622 = vmatpush1.msra.mxu0 0.0
      %2623 = vmatprep.subr.mxu0 0.0
      %2624 = vmatpush1.msra.mxu0 0.0
      %2625 = vmatprep.subr.mxu0 0.0
      %2626 = vmatpush1.msra.mxu0 0.0
      %2627 = vmatprep.subr.mxu0 0.0
      %2628 = vmatpush1.msra.mxu0 0.0
      %2629 = vmatprep.subr.mxu0 0.0
      %2630 = vmatpush1.msra.mxu0 0.0
      %2631 = vmatprep.mubr.f32.mxu0 0.0
      %2632 = vmatmul.mubr.f32.gmra.mrb[0].mxu0 %v2559
      %v2633 = vpop.f32.mrb[0].mxu0
      %v2634 = vadd.f32 0.0, %v2633
      %v2635 = vpop.f32.mrb[0].mxu0
      %2636 = vmatprep.mubr.f32.mxu0 0.0
      %2637 = vmatmul.mubr.f32.gmra.mrb[0].mxu0 %v2562
      %v2638 = vpop.f32.mrb[0].mxu0
      %v2639 = vadd.f32 0.0, %v2638
      %v2640 = vpop.f32.mrb[0].mxu0
      %2641 = vdwg.mxu0
      %v2643 = vsel %vm2557, %v2545, 0
      %v2646 = vsel %vm2557, %v2546, 0
      %v2648 = vsel %vm2564, %v2543, 0
      %2650 = vmatprep.subr.mxu0 0.0
      %2651 = vmatpush1.msra.mxu0 %v2648
      %2652 = vmatprep.subr.mxu0 0.0
      %2653 = vmatpush1.msra.mxu0 0.0
      %2654 = vmatprep.subr.mxu0 0.0
      %2655 = vmatpush1.msra.mxu0 0.0
      %2656 = vmatprep.subr.mxu0 0.0
      %2657 = vmatpush1.msra.mxu0 0.0
      %2658 = vmatprep.subr.mxu0 0.0
      %2659 = vmatpush1.msra.mxu0 0.0
      %2660 = vmatprep.subr.mxu0 0.0
      %2661 = vmatpush1.msra.mxu0 0.0
      %2662 = vmatprep.subr.mxu0 0.0
      %2663 = vmatpush1.msra.mxu0 0.0
      %2664 = vmatprep.subr.mxu0 0.0
      %2665 = vmatpush1.msra.mxu0 0.0
      %2666 = vmatprep.subr.mxu0 0.0
      %2667 = vmatpush1.msra.mxu0 0.0
      %2668 = vmatprep.subr.mxu0 0.0
      %2669 = vmatpush1.msra.mxu0 0.0
      %2670 = vmatprep.subr.mxu0 0.0
      %2671 = vmatpush1.msra.mxu0 0.0
      %2672 = vmatprep.subr.mxu0 0.0
      %2673 = vmatpush1.msra.mxu0 0.0
      %2674 = vmatprep.subr.mxu0 0.0
      %2675 = vmatpush1.msra.mxu0 0.0
      %2676 = vmatprep.subr.mxu0 0.0
      %2677 = vmatpush1.msra.mxu0 0.0
      %2678 = vmatprep.subr.mxu0 0.0
      %2679 = vmatpush1.msra.mxu0 0.0
      %2680 = vmatprep.subr.mxu0 0.0
      %2681 = vmatpush1.msra.mxu0 0.0
      %2682 = vmatprep.subr.mxu0 0.0
      %2683 = vmatpush1.msra.mxu0 0.0
      %2684 = vmatprep.subr.mxu0 0.0
      %2685 = vmatpush1.msra.mxu0 0.0
      %2686 = vmatprep.subr.mxu0 0.0
      %2687 = vmatpush1.msra.mxu0 0.0
      %2688 = vmatprep.subr.mxu0 0.0
      %2689 = vmatpush1.msra.mxu0 0.0
      %2690 = vmatprep.subr.mxu0 0.0
      %2691 = vmatpush1.msra.mxu0 0.0
      %2692 = vmatprep.subr.mxu0 0.0
      %2693 = vmatpush1.msra.mxu0 0.0
      %2694 = vmatprep.subr.mxu0 0.0
      %2695 = vmatpush1.msra.mxu0 0.0
      %2696 = vmatprep.subr.mxu0 0.0
      %2697 = vmatpush1.msra.mxu0 0.0
      %2698 = vmatprep.subr.mxu0 0.0
      %2699 = vmatpush1.msra.mxu0 0.0
      %2700 = vmatprep.subr.mxu0 0.0
      %2701 = vmatpush1.msra.mxu0 0.0
      %2702 = vmatprep.subr.mxu0 0.0
      %2703 = vmatpush1.msra.mxu0 0.0
      %2704 = vmatprep.subr.mxu0 0.0
      %2705 = vmatpush1.msra.mxu0 0.0
      %2706 = vmatprep.subr.mxu0 0.0
      %2707 = vmatpush1.msra.mxu0 0.0
      %2708 = vmatprep.subr.mxu0 0.0
      %2709 = vmatpush1.msra.mxu0 0.0
      %2710 = vmatprep.subr.mxu0 0.0
      %2711 = vmatpush1.msra.mxu0 0.0
      %2712 = vmatprep.subr.mxu0 0.0
      %2713 = vmatpush1.msra.mxu0 0.0
      %2714 = vmatprep.mubr.f32.mxu0 0.0
      %2715 = vmatmul.mubr.f32.gmra.mrb[0].mxu0 %v2643
      %v2716 = vpop.f32.mrb[0].mxu0
      %v2717 = vadd.f32 %v2634, %v2716
      %v2718 = vpop.f32.mrb[0].mxu0
      %2719 = vmatprep.mubr.f32.mxu0 0.0
      %2720 = vmatmul.mubr.f32.gmra.mrb[0].mxu0 %v2646
      %v2721 = vpop.f32.mrb[0].mxu0
      %v2722 = vadd.f32 %v2639, %v2721
      %v2723 = vpop.f32.mrb[0].mxu0
      %2724 = vdwg.mxu0
      %s2725 = scalar_lea.vmem %s3, 160
      %v2726 = vld [vmem:[%s2725] sm:$0xff]
      %v2727 = vld [vmem:[%s2725 + $0x8] sm:$0xff]
      %2728 = vrot.lane.b32.xlu0 %v2543, 96
      %v2729 = vpop.permute.xlu0 %2728
      %2730 = vrot.lane.b32.xlu0 %v2544, 96
      %v2731 = vpop.permute.xlu0 %2730
      %v2732 = vsel %vm509, %v2729, %v2731
      %v2734 = vsel %vm2557, %v2726, 0
      %v2737 = vsel %vm2557, %v2727, 0
      %v2739 = vsel %vm2564, %v2732, 0
      %2741 = vmatprep.subr.mxu0 0.0
      %2742 = vmatpush1.msra.mxu0 %v2739
      %2743 = vmatprep.subr.mxu0 0.0
      %2744 = vmatpush1.msra.mxu0 0.0
      %2745 = vmatprep.subr.mxu0 0.0
      %2746 = vmatpush1.msra.mxu0 0.0
      %2747 = vmatprep.subr.mxu0 0.0
      %2748 = vmatpush1.msra.mxu0 0.0
      %2749 = vmatprep.subr.mxu0 0.0
      %2750 = vmatpush1.msra.mxu0 0.0
      %2751 = vmatprep.subr.mxu0 0.0
      %2752 = vmatpush1.msra.mxu0 0.0
      %2753 = vmatprep.subr.mxu0 0.0
      %2754 = vmatpush1.msra.mxu0 0.0
      %2755 = vmatprep.subr.mxu0 0.0
      %2756 = vmatpush1.msra.mxu0 0.0
      %2757 = vmatprep.subr.mxu0 0.0
      %2758 = vmatpush1.msra.mxu0 0.0
      %2759 = vmatprep.subr.mxu0 0.0
      %2760 = vmatpush1.msra.mxu0 0.0
      %2761 = vmatprep.subr.mxu0 0.0
      %2762 = vmatpush1.msra.mxu0 0.0
      %2763 = vmatprep.subr.mxu0 0.0
      %2764 = vmatpush1.msra.mxu0 0.0
      %2765 = vmatprep.subr.mxu0 0.0
      %2766 = vmatpush1.msra.mxu0 0.0
      %2767 = vmatprep.subr.mxu0 0.0
      %2768 = vmatpush1.msra.mxu0 0.0
      %2769 = vmatprep.subr.mxu0 0.0
      %2770 = vmatpush1.msra.mxu0 0.0
      %2771 = vmatprep.subr.mxu0 0.0
      %2772 = vmatpush1.msra.mxu0 0.0
      %2773 = vmatprep.subr.mxu0 0.0
      %2774 = vmatpush1.msra.mxu0 0.0
      %2775 = vmatprep.subr.mxu0 0.0
      %2776 = vmatpush1.msra.mxu0 0.0
      %2777 = vmatprep.subr.mxu0 0.0
      %2778 = vmatpush1.msra.mxu0 0.0
      %2779 = vmatprep.subr.mxu0 0.0
      %2780 = vmatpush1.msra.mxu0 0.0
      %2781 = vmatprep.subr.mxu0 0.0
      %2782 = vmatpush1.msra.mxu0 0.0
      %2783 = vmatprep.subr.mxu0 0.0
      %2784 = vmatpush1.msra.mxu0 0.0
      %2785 = vmatprep.subr.mxu0 0.0
      %2786 = vmatpush1.msra.mxu0 0.0
      %2787 = vmatprep.subr.mxu0 0.0
      %2788 = vmatpush1.msra.mxu0 0.0
      %2789 = vmatprep.subr.mxu0 0.0
      %2790 = vmatpush1.msra.mxu0 0.0
      %2791 = vmatprep.subr.mxu0 0.0
      %2792 = vmatpush1.msra.mxu0 0.0
      %2793 = vmatprep.subr.mxu0 0.0
      %2794 = vmatpush1.msra.mxu0 0.0
      %2795 = vmatprep.subr.mxu0 0.0
      %2796 = vmatpush1.msra.mxu0 0.0
      %2797 = vmatprep.subr.mxu0 0.0
      %2798 = vmatpush1.msra.mxu0 0.0
      %2799 = vmatprep.subr.mxu0 0.0
      %2800 = vmatpush1.msra.mxu0 0.0
      %2801 = vmatprep.subr.mxu0 0.0
      %2802 = vmatpush1.msra.mxu0 0.0
      %2803 = vmatprep.subr.mxu0 0.0
      %2804 = vmatpush1.msra.mxu0 0.0
      %2805 = vmatprep.mubr.f32.mxu0 0.0
      %2806 = vmatmul.mubr.f32.gmra.mrb[0].mxu0 %v2734
      %v2807 = vpop.f32.mrb[0].mxu0
      %v2808 = vadd.f32 0.0, %v2807
      %v2809 = vpop.f32.mrb[0].mxu0
      %2810 = vmatprep.mubr.f32.mxu0 0.0
      %2811 = vmatmul.mubr.f32.gmra.mrb[0].mxu0 %v2737
      %v2812 = vpop.f32.mrb[0].mxu0
      %v2813 = vadd.f32 0.0, %v2812
      %v2814 = vpop.f32.mrb[0].mxu0
      %2815 = vdwg.mxu0
      %v2816 = vadd.f32 %v2717, %v2808
      %v2817 = vadd.f32 %v2722, %v2813
      %s2818 = scalar_lea.vmem %s3, 240
      %v2819 = vld [vmem:[%s2818] sm:$0xff]
      %v2820 = vld [vmem:[%s2818 + $0x8] sm:$0xff]
      %2821 = vrot.lane.b32.xlu0 %v2543, 80
      %v2822 = vpop.permute.xlu0 %2821
      %2823 = vrot.lane.b32.xlu0 %v2544, 80
      %v2824 = vpop.permute.xlu0 %2823
      %v2825 = vsel %vm597, %v2822, %v2824
      %v2827 = vsel %vm2557, %v2819, 0
      %v2830 = vsel %vm2557, %v2820, 0
      %v2832 = vsel %vm2564, %v2825, 0
      %2834 = vmatprep.subr.mxu0 0.0
      %2835 = vmatpush1.msra.mxu0 %v2832
      %2836 = vmatprep.subr.mxu0 0.0
      %2837 = vmatpush1.msra.mxu0 0.0
      %2838 = vmatprep.subr.mxu0 0.0
      %2839 = vmatpush1.msra.mxu0 0.0
      %2840 = vmatprep.subr.mxu0 0.0
      %2841 = vmatpush1.msra.mxu0 0.0
      %2842 = vmatprep.subr.mxu0 0.0
      %2843 = vmatpush1.msra.mxu0 0.0
      %2844 = vmatprep.subr.mxu0 0.0
      %2845 = vmatpush1.msra.mxu0 0.0
      %2846 = vmatprep.subr.mxu0 0.0
      %2847 = vmatpush1.msra.mxu0 0.0
      %2848 = vmatprep.subr.mxu0 0.0
      %2849 = vmatpush1.msra.mxu0 0.0
      %2850 = vmatprep.subr.mxu0 0.0
      %2851 = vmatpush1.msra.mxu0 0.0
      %2852 = vmatprep.subr.mxu0 0.0
      %2853 = vmatpush1.msra.mxu0 0.0
      %2854 = vmatprep.subr.mxu0 0.0
      %2855 = vmatpush1.msra.mxu0 0.0
      %2856 = vmatprep.subr.mxu0 0.0
      %2857 = vmatpush1.msra.mxu0 0.0
      %2858 = vmatprep.subr.mxu0 0.0
      %2859 = vmatpush1.msra.mxu0 0.0
      %2860 = vmatprep.subr.mxu0 0.0
      %2861 = vmatpush1.msra.mxu0 0.0
      %2862 = vmatprep.subr.mxu0 0.0
      %2863 = vmatpush1.msra.mxu0 0.0
      %2864 = vmatprep.subr.mxu0 0.0
      %2865 = vmatpush1.msra.mxu0 0.0
      %2866 = vmatprep.subr.mxu0 0.0
      %2867 = vmatpush1.msra.mxu0 0.0
      %2868 = vmatprep.subr.mxu0 0.0
      %2869 = vmatpush1.msra.mxu0 0.0
      %2870 = vmatprep.subr.mxu0 0.0
      %2871 = vmatpush1.msra.mxu0 0.0
      %2872 = vmatprep.subr.mxu0 0.0
      %2873 = vmatpush1.msra.mxu0 0.0
      %2874 = vmatprep.subr.mxu0 0.0
      %2875 = vmatpush1.msra.mxu0 0.0
      %2876 = vmatprep.subr.mxu0 0.0
      %2877 = vmatpush1.msra.mxu0 0.0
      %2878 = vmatprep.subr.mxu0 0.0
      %2879 = vmatpush1.msra.mxu0 0.0
      %2880 = vmatprep.subr.mxu0 0.0
      %2881 = vmatpush1.msra.mxu0 0.0
      %2882 = vmatprep.subr.mxu0 0.0
      %2883 = vmatpush1.msra.mxu0 0.0
      %2884 = vmatprep.subr.mxu0 0.0
      %2885 = vmatpush1.msra.mxu0 0.0
      %2886 = vmatprep.subr.mxu0 0.0
      %2887 = vmatpush1.msra.mxu0 0.0
      %2888 = vmatprep.subr.mxu0 0.0
      %2889 = vmatpush1.msra.mxu0 0.0
      %2890 = vmatprep.subr.mxu0 0.0
      %2891 = vmatpush1.msra.mxu0 0.0
      %2892 = vmatprep.subr.mxu0 0.0
      %2893 = vmatpush1.msra.mxu0 0.0
      %2894 = vmatprep.subr.mxu0 0.0
      %2895 = vmatpush1.msra.mxu0 0.0
      %2896 = vmatprep.subr.mxu0 0.0
      %2897 = vmatpush1.msra.mxu0 0.0
      %2898 = vmatprep.mubr.f32.mxu0 0.0
      %2899 = vmatmul.mubr.f32.gmra.mrb[0].mxu0 %v2827
      %v2900 = vpop.f32.mrb[0].mxu0
      %v2901 = vadd.f32 0.0, %v2900
      %v2902 = vpop.f32.mrb[0].mxu0
      %2903 = vmatprep.mubr.f32.mxu0 0.0
      %2904 = vmatmul.mubr.f32.gmra.mrb[0].mxu0 %v2830
      %v2905 = vpop.f32.mrb[0].mxu0
      %v2906 = vadd.f32 0.0, %v2905
      %v2907 = vpop.f32.mrb[0].mxu0
      %2908 = vdwg.mxu0
      %v2909 = vadd.f32 %v2816, %v2901
      %v2910 = vadd.f32 %v2817, %v2906
      %s2911 = scalar_lea.vmem %s3, 320
      %v2912 = vld [vmem:[%s2911] sm:$0xff]
      %v2913 = vld [vmem:[%s2911 + $0x8] sm:$0xff]
      %2914 = vrot.lane.b32.xlu0 %v2543, 64
      %v2915 = vpop.permute.xlu0 %2914
      %2916 = vrot.lane.b32.xlu0 %v2544, 64
      %v2917 = vpop.permute.xlu0 %2916
      %v2918 = vsel %vm688, %v2915, %v2917
      %v2920 = vsel %vm2557, %v2912, 0
      %v2923 = vsel %vm2557, %v2913, 0
      %v2925 = vsel %vm2564, %v2918, 0
      %2927 = vmatprep.subr.mxu0 0.0
      %2928 = vmatpush1.msra.mxu0 %v2925
      %2929 = vmatprep.subr.mxu0 0.0
      %2930 = vmatpush1.msra.mxu0 0.0
      %2931 = vmatprep.subr.mxu0 0.0
      %2932 = vmatpush1.msra.mxu0 0.0
      %2933 = vmatprep.subr.mxu0 0.0
      %2934 = vmatpush1.msra.mxu0 0.0
      %2935 = vmatprep.subr.mxu0 0.0
      %2936 = vmatpush1.msra.mxu0 0.0
      %2937 = vmatprep.subr.mxu0 0.0
      %2938 = vmatpush1.msra.mxu0 0.0
      %2939 = vmatprep.subr.mxu0 0.0
      %2940 = vmatpush1.msra.mxu0 0.0
      %2941 = vmatprep.subr.mxu0 0.0
      %2942 = vmatpush1.msra.mxu0 0.0
      %2943 = vmatprep.subr.mxu0 0.0
      %2944 = vmatpush1.msra.mxu0 0.0
      %2945 = vmatprep.subr.mxu0 0.0
      %2946 = vmatpush1.msra.mxu0 0.0
      %2947 = vmatprep.subr.mxu0 0.0
      %2948 = vmatpush1.msra.mxu0 0.0
      %2949 = vmatprep.subr.mxu0 0.0
      %2950 = vmatpush1.msra.mxu0 0.0
      %2951 = vmatprep.subr.mxu0 0.0
      %2952 = vmatpush1.msra.mxu0 0.0
      %2953 = vmatprep.subr.mxu0 0.0
      %2954 = vmatpush1.msra.mxu0 0.0
      %2955 = vmatprep.subr.mxu0 0.0
      %2956 = vmatpush1.msra.mxu0 0.0
      %2957 = vmatprep.subr.mxu0 0.0
      %2958 = vmatpush1.msra.mxu0 0.0
      %2959 = vmatprep.subr.mxu0 0.0
      %2960 = vmatpush1.msra.mxu0 0.0
      %2961 = vmatprep.subr.mxu0 0.0
      %2962 = vmatpush1.msra.mxu0 0.0
      %2963 = vmatprep.subr.mxu0 0.0
      %2964 = vmatpush1.msra.mxu0 0.0
      %2965 = vmatprep.subr.mxu0 0.0
      %2966 = vmatpush1.msra.mxu0 0.0
      %2967 = vmatprep.subr.mxu0 0.0
      %2968 = vmatpush1.msra.mxu0 0.0
      %2969 = vmatprep.subr.mxu0 0.0
      %2970 = vmatpush1.msra.mxu0 0.0
      %2971 = vmatprep.subr.mxu0 0.0
      %2972 = vmatpush1.msra.mxu0 0.0
      %2973 = vmatprep.subr.mxu0 0.0
      %2974 = vmatpush1.msra.mxu0 0.0
      %2975 = vmatprep.subr.mxu0 0.0
      %2976 = vmatpush1.msra.mxu0 0.0
      %2977 = vmatprep.subr.mxu0 0.0
      %2978 = vmatpush1.msra.mxu0 0.0
      %2979 = vmatprep.subr.mxu0 0.0
      %2980 = vmatpush1.msra.mxu0 0.0
      %2981 = vmatprep.subr.mxu0 0.0
      %2982 = vmatpush1.msra.mxu0 0.0
      %2983 = vmatprep.subr.mxu0 0.0
      %2984 = vmatpush1.msra.mxu0 0.0
      %2985 = vmatprep.subr.mxu0 0.0
      %2986 = vmatpush1.msra.mxu0 0.0
      %2987 = vmatprep.subr.mxu0 0.0
      %2988 = vmatpush1.msra.mxu0 0.0
      %2989 = vmatprep.subr.mxu0 0.0
      %2990 = vmatpush1.msra.mxu0 0.0
      %2991 = vmatprep.mubr.f32.mxu0 0.0
      %2992 = vmatmul.mubr.f32.gmra.mrb[0].mxu0 %v2920
      %v2993 = vpop.f32.mrb[0].mxu0
      %v2994 = vadd.f32 0.0, %v2993
      %v2995 = vpop.f32.mrb[0].mxu0
      %2996 = vmatprep.mubr.f32.mxu0 0.0
      %2997 = vmatmul.mubr.f32.gmra.mrb[0].mxu0 %v2923
      %v2998 = vpop.f32.mrb[0].mxu0
      %v2999 = vadd.f32 0.0, %v2998
      %v3000 = vpop.f32.mrb[0].mxu0
      %3001 = vdwg.mxu0
      %v3002 = vadd.f32 %v2909, %v2994
      %v3003 = vadd.f32 %v2910, %v2999
      %s3004 = scalar_lea.vmem %s3, 16
      %v3005 = vld [vmem:[%s3004] sm:$0xff]
      %v3006 = vld [vmem:[%s3004 + $0x8] sm:$0xff]
      %s3007 = scalar_lea.vmem %s3, 96
      %v3008 = vld [vmem:[%s3007] sm:$0xff]
      %v3009 = vld [vmem:[%s3007 + $0x8] sm:$0xff]
      %3010 = vrot.lane.b32.xlu0 %v2543, 111
      %v3011 = vpop.permute.xlu0 %3010
      %3012 = vrot.lane.b32.xlu0 %v2544, 111
      %v3013 = vpop.permute.xlu0 %3012
      %v3014 = vsel %vm779, %v3011, %v3013
      %v3016 = vsel %vm2557, %v3008, 0
      %v3019 = vsel %vm2557, %v3009, 0
      %v3021 = vsel %vm2564, %v3014, 0
      %3023 = vmatprep.subr.mxu0 0.0
      %3024 = vmatpush1.msra.mxu0 %v3021
      %3025 = vmatprep.subr.mxu0 0.0
      %3026 = vmatpush1.msra.mxu0 0.0
      %3027 = vmatprep.subr.mxu0 0.0
      %3028 = vmatpush1.msra.mxu0 0.0
      %3029 = vmatprep.subr.mxu0 0.0
      %3030 = vmatpush1.msra.mxu0 0.0
      %3031 = vmatprep.subr.mxu0 0.0
      %3032 = vmatpush1.msra.mxu0 0.0
      %3033 = vmatprep.subr.mxu0 0.0
      %3034 = vmatpush1.msra.mxu0 0.0
      %3035 = vmatprep.subr.mxu0 0.0
      %3036 = vmatpush1.msra.mxu0 0.0
      %3037 = vmatprep.subr.mxu0 0.0
      %3038 = vmatpush1.msra.mxu0 0.0
      %3039 = vmatprep.subr.mxu0 0.0
      %3040 = vmatpush1.msra.mxu0 0.0
      %3041 = vmatprep.subr.mxu0 0.0
      %3042 = vmatpush1.msra.mxu0 0.0
      %3043 = vmatprep.subr.mxu0 0.0
      %3044 = vmatpush1.msra.mxu0 0.0
      %3045 = vmatprep.subr.mxu0 0.0
      %3046 = vmatpush1.msra.mxu0 0.0
      %3047 = vmatprep.subr.mxu0 0.0
      %3048 = vmatpush1.msra.mxu0 0.0
      %3049 = vmatprep.subr.mxu0 0.0
      %3050 = vmatpush1.msra.mxu0 0.0
      %3051 = vmatprep.subr.mxu0 0.0
      %3052 = vmatpush1.msra.mxu0 0.0
      %3053 = vmatprep.subr.mxu0 0.0
      %3054 = vmatpush1.msra.mxu0 0.0
      %3055 = vmatprep.subr.mxu0 0.0
      %3056 = vmatpush1.msra.mxu0 0.0
      %3057 = vmatprep.subr.mxu0 0.0
      %3058 = vmatpush1.msra.mxu0 0.0
      %3059 = vmatprep.subr.mxu0 0.0
      %3060 = vmatpush1.msra.mxu0 0.0
      %3061 = vmatprep.subr.mxu0 0.0
      %3062 = vmatpush1.msra.mxu0 0.0
      %3063 = vmatprep.subr.mxu0 0.0
      %3064 = vmatpush1.msra.mxu0 0.0
      %3065 = vmatprep.subr.mxu0 0.0
      %3066 = vmatpush1.msra.mxu0 0.0
      %3067 = vmatprep.subr.mxu0 0.0
      %3068 = vmatpush1.msra.mxu0 0.0
      %3069 = vmatprep.subr.mxu0 0.0
      %3070 = vmatpush1.msra.mxu0 0.0
      %3071 = vmatprep.subr.mxu0 0.0
      %3072 = vmatpush1.msra.mxu0 0.0
      %3073 = vmatprep.subr.mxu0 0.0
      %3074 = vmatpush1.msra.mxu0 0.0
      %3075 = vmatprep.subr.mxu0 0.0
      %3076 = vmatpush1.msra.mxu0 0.0
      %3077 = vmatprep.subr.mxu0 0.0
      %3078 = vmatpush1.msra.mxu0 0.0
      %3079 = vmatprep.subr.mxu0 0.0
      %3080 = vmatpush1.msra.mxu0 0.0
      %3081 = vmatprep.subr.mxu0 0.0
      %3082 = vmatpush1.msra.mxu0 0.0
      %3083 = vmatprep.subr.mxu0 0.0
      %3084 = vmatpush1.msra.mxu0 0.0
      %3085 = vmatprep.subr.mxu0 0.0
      %3086 = vmatpush1.msra.mxu0 0.0
      %3087 = vmatprep.mubr.f32.mxu0 0.0
      %3088 = vmatmul.mubr.f32.gmra.mrb[0].mxu0 %v3016
      %v3089 = vpop.f32.mrb[0].mxu0
      %v3090 = vadd.f32 0.0, %v3089
      %v3091 = vpop.f32.mrb[0].mxu0
      %3092 = vmatprep.mubr.f32.mxu0 0.0
      %3093 = vmatmul.mubr.f32.gmra.mrb[0].mxu0 %v3019
      %v3094 = vpop.f32.mrb[0].mxu0
      %v3095 = vadd.f32 0.0, %v3094
      %v3096 = vpop.f32.mrb[0].mxu0
      %3097 = vdwg.mxu0
      %3098 = vrot.lane.b32.xlu0 %v2543, 127
      %v3099 = vpop.permute.xlu0 %3098
      %3100 = vrot.lane.b32.xlu0 %v2544, 127
      %v3101 = vpop.permute.xlu0 %3100
      %v3102 = vsel %vm863, %v3099, %v3101
      %v3104 = vsel %vm2557, %v3005, 0
      %v3107 = vsel %vm2557, %v3006, 0
      %v3109 = vsel %vm2564, %v3102, 0
      %3111 = vmatprep.subr.mxu0 0.0
      %3112 = vmatpush1.msra.mxu0 %v3109
      %3113 = vmatprep.subr.mxu0 0.0
      %3114 = vmatpush1.msra.mxu0 0.0
      %3115 = vmatprep.subr.mxu0 0.0
      %3116 = vmatpush1.msra.mxu0 0.0
      %3117 = vmatprep.subr.mxu0 0.0
      %3118 = vmatpush1.msra.mxu0 0.0
      %3119 = vmatprep.subr.mxu0 0.0
      %3120 = vmatpush1.msra.mxu0 0.0
      %3121 = vmatprep.subr.mxu0 0.0
      %3122 = vmatpush1.msra.mxu0 0.0
      %3123 = vmatprep.subr.mxu0 0.0
      %3124 = vmatpush1.msra.mxu0 0.0
      %3125 = vmatprep.subr.mxu0 0.0
      %3126 = vmatpush1.msra.mxu0 0.0
      %3127 = vmatprep.subr.mxu0 0.0
      %3128 = vmatpush1.msra.mxu0 0.0
      %3129 = vmatprep.subr.mxu0 0.0
      %3130 = vmatpush1.msra.mxu0 0.0
      %3131 = vmatprep.subr.mxu0 0.0
      %3132 = vmatpush1.msra.mxu0 0.0
      %3133 = vmatprep.subr.mxu0 0.0
      %3134 = vmatpush1.msra.mxu0 0.0
      %3135 = vmatprep.subr.mxu0 0.0
      %3136 = vmatpush1.msra.mxu0 0.0
      %3137 = vmatprep.subr.mxu0 0.0
      %3138 = vmatpush1.msra.mxu0 0.0
      %3139 = vmatprep.subr.mxu0 0.0
      %3140 = vmatpush1.msra.mxu0 0.0
      %3141 = vmatprep.subr.mxu0 0.0
      %3142 = vmatpush1.msra.mxu0 0.0
      %3143 = vmatprep.subr.mxu0 0.0
      %3144 = vmatpush1.msra.mxu0 0.0
      %3145 = vmatprep.subr.mxu0 0.0
      %3146 = vmatpush1.msra.mxu0 0.0
      %3147 = vmatprep.subr.mxu0 0.0
      %3148 = vmatpush1.msra.mxu0 0.0
      %3149 = vmatprep.subr.mxu0 0.0
      %3150 = vmatpush1.msra.mxu0 0.0
      %3151 = vmatprep.subr.mxu0 0.0
      %3152 = vmatpush1.msra.mxu0 0.0
      %3153 = vmatprep.subr.mxu0 0.0
      %3154 = vmatpush1.msra.mxu0 0.0
      %3155 = vmatprep.subr.mxu0 0.0
      %3156 = vmatpush1.msra.mxu0 0.0
      %3157 = vmatprep.subr.mxu0 0.0
      %3158 = vmatpush1.msra.mxu0 0.0
      %3159 = vmatprep.subr.mxu0 0.0
      %3160 = vmatpush1.msra.mxu0 0.0
      %3161 = vmatprep.subr.mxu0 0.0
      %3162 = vmatpush1.msra.mxu0 0.0
      %3163 = vmatprep.subr.mxu0 0.0
      %3164 = vmatpush1.msra.mxu0 0.0
      %3165 = vmatprep.subr.mxu0 0.0
      %3166 = vmatpush1.msra.mxu0 0.0
      %3167 = vmatprep.subr.mxu0 0.0
      %3168 = vmatpush1.msra.mxu0 0.0
      %3169 = vmatprep.subr.mxu0 0.0
      %3170 = vmatpush1.msra.mxu0 0.0
      %3171 = vmatprep.subr.mxu0 0.0
      %3172 = vmatpush1.msra.mxu0 0.0
      %3173 = vmatprep.subr.mxu0 0.0
      %3174 = vmatpush1.msra.mxu0 0.0
      %3175 = vmatprep.mubr.f32.mxu0 0.0
      %3176 = vmatmul.mubr.f32.gmra.mrb[0].mxu0 %v3104
      %v3177 = vpop.f32.mrb[0].mxu0
      %v3178 = vadd.f32 %v3090, %v3177
      %v3179 = vpop.f32.mrb[0].mxu0
      %3180 = vmatprep.mubr.f32.mxu0 0.0
      %3181 = vmatmul.mubr.f32.gmra.mrb[0].mxu0 %v3107
      %v3182 = vpop.f32.mrb[0].mxu0
      %v3183 = vadd.f32 %v3095, %v3182
      %v3184 = vpop.f32.mrb[0].mxu0
      %3185 = vdwg.mxu0
      %s3186 = scalar_lea.vmem %s3, 176
      %v3187 = vld [vmem:[%s3186] sm:$0xff]
      %v3188 = vld [vmem:[%s3186 + $0x8] sm:$0xff]
      %3189 = vrot.lane.b32.xlu0 %v2543, 95
      %v3190 = vpop.permute.xlu0 %3189
      %3191 = vrot.lane.b32.xlu0 %v2544, 95
      %v3192 = vpop.permute.xlu0 %3191
      %v3193 = vsel %vm949, %v3190, %v3192
      %v3195 = vsel %vm2557, %v3187, 0
      %v3198 = vsel %vm2557, %v3188, 0
      %v3200 = vsel %vm2564, %v3193, 0
      %3202 = vmatprep.subr.mxu0 0.0
      %3203 = vmatpush1.msra.mxu0 %v3200
      %3204 = vmatprep.subr.mxu0 0.0
      %3205 = vmatpush1.msra.mxu0 0.0
      %3206 = vmatprep.subr.mxu0 0.0
      %3207 = vmatpush1.msra.mxu0 0.0
      %3208 = vmatprep.subr.mxu0 0.0
      %3209 = vmatpush1.msra.mxu0 0.0
      %3210 = vmatprep.subr.mxu0 0.0
      %3211 = vmatpush1.msra.mxu0 0.0
      %3212 = vmatprep.subr.mxu0 0.0
      %3213 = vmatpush1.msra.mxu0 0.0
      %3214 = vmatprep.subr.mxu0 0.0
      %3215 = vmatpush1.msra.mxu0 0.0
      %3216 = vmatprep.subr.mxu0 0.0
      %3217 = vmatpush1.msra.mxu0 0.0
      %3218 = vmatprep.subr.mxu0 0.0
      %3219 = vmatpush1.msra.mxu0 0.0
      %3220 = vmatprep.subr.mxu0 0.0
      %3221 = vmatpush1.msra.mxu0 0.0
      %3222 = vmatprep.subr.mxu0 0.0
      %3223 = vmatpush1.msra.mxu0 0.0
      %3224 = vmatprep.subr.mxu0 0.0
      %3225 = vmatpush1.msra.mxu0 0.0
      %3226 = vmatprep.subr.mxu0 0.0
      %3227 = vmatpush1.msra.mxu0 0.0
      %3228 = vmatprep.subr.mxu0 0.0
      %3229 = vmatpush1.msra.mxu0 0.0
      %3230 = vmatprep.subr.mxu0 0.0
      %3231 = vmatpush1.msra.mxu0 0.0
      %3232 = vmatprep.subr.mxu0 0.0
      %3233 = vmatpush1.msra.mxu0 0.0
      %3234 = vmatprep.subr.mxu0 0.0
      %3235 = vmatpush1.msra.mxu0 0.0
      %3236 = vmatprep.subr.mxu0 0.0
      %3237 = vmatpush1.msra.mxu0 0.0
      %3238 = vmatprep.subr.mxu0 0.0
      %3239 = vmatpush1.msra.mxu0 0.0
      %3240 = vmatprep.subr.mxu0 0.0
      %3241 = vmatpush1.msra.mxu0 0.0
      %3242 = vmatprep.subr.mxu0 0.0
      %3243 = vmatpush1.msra.mxu0 0.0
      %3244 = vmatprep.subr.mxu0 0.0
      %3245 = vmatpush1.msra.mxu0 0.0
      %3246 = vmatprep.subr.mxu0 0.0
      %3247 = vmatpush1.msra.mxu0 0.0
      %3248 = vmatprep.subr.mxu0 0.0
      %3249 = vmatpush1.msra.mxu0 0.0
      %3250 = vmatprep.subr.mxu0 0.0
      %3251 = vmatpush1.msra.mxu0 0.0
      %3252 = vmatprep.subr.mxu0 0.0
      %3253 = vmatpush1.msra.mxu0 0.0
      %3254 = vmatprep.subr.mxu0 0.0
      %3255 = vmatpush1.msra.mxu0 0.0
      %3256 = vmatprep.subr.mxu0 0.0
      %3257 = vmatpush1.msra.mxu0 0.0
      %3258 = vmatprep.subr.mxu0 0.0
      %3259 = vmatpush1.msra.mxu0 0.0
      %3260 = vmatprep.subr.mxu0 0.0
      %3261 = vmatpush1.msra.mxu0 0.0
      %3262 = vmatprep.subr.mxu0 0.0
      %3263 = vmatpush1.msra.mxu0 0.0
      %3264 = vmatprep.subr.mxu0 0.0
      %3265 = vmatpush1.msra.mxu0 0.0
      %3266 = vmatprep.mubr.f32.mxu0 0.0
      %3267 = vmatmul.mubr.f32.gmra.mrb[0].mxu0 %v3195
      %v3268 = vpop.f32.mrb[0].mxu0
      %v3269 = vadd.f32 0.0, %v3268
      %v3270 = vpop.f32.mrb[0].mxu0
      %3271 = vmatprep.mubr.f32.mxu0 0.0
      %3272 = vmatmul.mubr.f32.gmra.mrb[0].mxu0 %v3198
      %v3273 = vpop.f32.mrb[0].mxu0
      %v3274 = vadd.f32 0.0, %v3273
      %v3275 = vpop.f32.mrb[0].mxu0
      %3276 = vdwg.mxu0
      %v3277 = vadd.f32 %v3178, %v3269
      %v3278 = vadd.f32 %v3183, %v3274
      %s3279 = scalar_lea.vmem %s3, 256
      %v3280 = vld [vmem:[%s3279] sm:$0xff]
      %v3281 = vld [vmem:[%s3279 + $0x8] sm:$0xff]
      %3282 = vrot.lane.b32.xlu0 %v2543, 79
      %v3283 = vpop.permute.xlu0 %3282
      %3284 = vrot.lane.b32.xlu0 %v2544, 79
      %v3285 = vpop.permute.xlu0 %3284
      %v3286 = vsel %vm1037, %v3283, %v3285
      %v3288 = vsel %vm2557, %v3280, 0
      %v3291 = vsel %vm2557, %v3281, 0
      %v3293 = vsel %vm2564, %v3286, 0
      %3295 = vmatprep.subr.mxu0 0.0
      %3296 = vmatpush1.msra.mxu0 %v3293
      %3297 = vmatprep.subr.mxu0 0.0
      %3298 = vmatpush1.msra.mxu0 0.0
      %3299 = vmatprep.subr.mxu0 0.0
      %3300 = vmatpush1.msra.mxu0 0.0
      %3301 = vmatprep.subr.mxu0 0.0
      %3302 = vmatpush1.msra.mxu0 0.0
      %3303 = vmatprep.subr.mxu0 0.0
      %3304 = vmatpush1.msra.mxu0 0.0
      %3305 = vmatprep.subr.mxu0 0.0
      %3306 = vmatpush1.msra.mxu0 0.0
      %3307 = vmatprep.subr.mxu0 0.0
      %3308 = vmatpush1.msra.mxu0 0.0
      %3309 = vmatprep.subr.mxu0 0.0
      %3310 = vmatpush1.msra.mxu0 0.0
      %3311 = vmatprep.subr.mxu0 0.0
      %3312 = vmatpush1.msra.mxu0 0.0
      %3313 = vmatprep.subr.mxu0 0.0
      %3314 = vmatpush1.msra.mxu0 0.0
      %3315 = vmatprep.subr.mxu0 0.0
      %3316 = vmatpush1.msra.mxu0 0.0
      %3317 = vmatprep.subr.mxu0 0.0
      %3318 = vmatpush1.msra.mxu0 0.0
      %3319 = vmatprep.subr.mxu0 0.0
      %3320 = vmatpush1.msra.mxu0 0.0
      %3321 = vmatprep.subr.mxu0 0.0
      %3322 = vmatpush1.msra.mxu0 0.0
      %3323 = vmatprep.subr.mxu0 0.0
      %3324 = vmatpush1.msra.mxu0 0.0
      %3325 = vmatprep.subr.mxu0 0.0
      %3326 = vmatpush1.msra.mxu0 0.0
      %3327 = vmatprep.subr.mxu0 0.0
      %3328 = vmatpush1.msra.mxu0 0.0
      %3329 = vmatprep.subr.mxu0 0.0
      %3330 = vmatpush1.msra.mxu0 0.0
      %3331 = vmatprep.subr.mxu0 0.0
      %3332 = vmatpush1.msra.mxu0 0.0
      %3333 = vmatprep.subr.mxu0 0.0
      %3334 = vmatpush1.msra.mxu0 0.0
      %3335 = vmatprep.subr.mxu0 0.0
      %3336 = vmatpush1.msra.mxu0 0.0
      %3337 = vmatprep.subr.mxu0 0.0
      %3338 = vmatpush1.msra.mxu0 0.0
      %3339 = vmatprep.subr.mxu0 0.0
      %3340 = vmatpush1.msra.mxu0 0.0
      %3341 = vmatprep.subr.mxu0 0.0
      %3342 = vmatpush1.msra.mxu0 0.0
      %3343 = vmatprep.subr.mxu0 0.0
      %3344 = vmatpush1.msra.mxu0 0.0
      %3345 = vmatprep.subr.mxu0 0.0
      %3346 = vmatpush1.msra.mxu0 0.0
      %3347 = vmatprep.subr.mxu0 0.0
      %3348 = vmatpush1.msra.mxu0 0.0
      %3349 = vmatprep.subr.mxu0 0.0
      %3350 = vmatpush1.msra.mxu0 0.0
      %3351 = vmatprep.subr.mxu0 0.0
      %3352 = vmatpush1.msra.mxu0 0.0
      %3353 = vmatprep.subr.mxu0 0.0
      %3354 = vmatpush1.msra.mxu0 0.0
      %3355 = vmatprep.subr.mxu0 0.0
      %3356 = vmatpush1.msra.mxu0 0.0
      %3357 = vmatprep.subr.mxu0 0.0
      %3358 = vmatpush1.msra.mxu0 0.0
      %3359 = vmatprep.mubr.f32.mxu0 0.0
      %3360 = vmatmul.mubr.f32.gmra.mrb[0].mxu0 %v3288
      %v3361 = vpop.f32.mrb[0].mxu0
      %v3362 = vadd.f32 0.0, %v3361
      %v3363 = vpop.f32.mrb[0].mxu0
      %3364 = vmatprep.mubr.f32.mxu0 0.0
      %3365 = vmatmul.mubr.f32.gmra.mrb[0].mxu0 %v3291
      %v3366 = vpop.f32.mrb[0].mxu0
      %v3367 = vadd.f32 0.0, %v3366
      %v3368 = vpop.f32.mrb[0].mxu0
      %3369 = vdwg.mxu0
      %v3370 = vadd.f32 %v3277, %v3362
      %v3371 = vadd.f32 %v3278, %v3367
      %s3372 = scalar_lea.vmem %s3, 336
      %v3373 = vld [vmem:[%s3372] sm:$0xff]
      %v3374 = vld [vmem:[%s3372 + $0x8] sm:$0xff]
      %3375 = vrot.lane.b32.xlu0 %v2543, 63
      %v3376 = vpop.permute.xlu0 %3375
      %3377 = vrot.lane.b32.xlu0 %v2544, 63
      %v3378 = vpop.permute.xlu0 %3377
      %v3379 = vsel %vm1127, %v3376, %v3378
      %v3381 = vsel %vm2557, %v3373, 0
      %v3384 = vsel %vm2557, %v3374, 0
      %v3386 = vsel %vm2564, %v3379, 0
      %3388 = vmatprep.subr.mxu0 0.0
      %3389 = vmatpush1.msra.mxu0 %v3386
      %3390 = vmatprep.subr.mxu0 0.0
      %3391 = vmatpush1.msra.mxu0 0.0
      %3392 = vmatprep.subr.mxu0 0.0
      %3393 = vmatpush1.msra.mxu0 0.0
      %3394 = vmatprep.subr.mxu0 0.0
      %3395 = vmatpush1.msra.mxu0 0.0
      %3396 = vmatprep.subr.mxu0 0.0
      %3397 = vmatpush1.msra.mxu0 0.0
      %3398 = vmatprep.subr.mxu0 0.0
      %3399 = vmatpush1.msra.mxu0 0.0
      %3400 = vmatprep.subr.mxu0 0.0
      %3401 = vmatpush1.msra.mxu0 0.0
      %3402 = vmatprep.subr.mxu0 0.0
      %3403 = vmatpush1.msra.mxu0 0.0
      %3404 = vmatprep.subr.mxu0 0.0
      %3405 = vmatpush1.msra.mxu0 0.0
      %3406 = vmatprep.subr.mxu0 0.0
      %3407 = vmatpush1.msra.mxu0 0.0
      %3408 = vmatprep.subr.mxu0 0.0
      %3409 = vmatpush1.msra.mxu0 0.0
      %3410 = vmatprep.subr.mxu0 0.0
      %3411 = vmatpush1.msra.mxu0 0.0
      %3412 = vmatprep.subr.mxu0 0.0
      %3413 = vmatpush1.msra.mxu0 0.0
      %3414 = vmatprep.subr.mxu0 0.0
      %3415 = vmatpush1.msra.mxu0 0.0
      %3416 = vmatprep.subr.mxu0 0.0
      %3417 = vmatpush1.msra.mxu0 0.0
      %3418 = vmatprep.subr.mxu0 0.0
      %3419 = vmatpush1.msra.mxu0 0.0
      %3420 = vmatprep.subr.mxu0 0.0
      %3421 = vmatpush1.msra.mxu0 0.0
      %3422 = vmatprep.subr.mxu0 0.0
      %3423 = vmatpush1.msra.mxu0 0.0
      %3424 = vmatprep.subr.mxu0 0.0
      %3425 = vmatpush1.msra.mxu0 0.0
      %3426 = vmatprep.subr.mxu0 0.0
      %3427 = vmatpush1.msra.mxu0 0.0
      %3428 = vmatprep.subr.mxu0 0.0
      %3429 = vmatpush1.msra.mxu0 0.0
      %3430 = vmatprep.subr.mxu0 0.0
      %3431 = vmatpush1.msra.mxu0 0.0
      %3432 = vmatprep.subr.mxu0 0.0
      %3433 = vmatpush1.msra.mxu0 0.0
      %3434 = vmatprep.subr.mxu0 0.0
      %3435 = vmatpush1.msra.mxu0 0.0
      %3436 = vmatprep.subr.mxu0 0.0
      %3437 = vmatpush1.msra.mxu0 0.0
      %3438 = vmatprep.subr.mxu0 0.0
      %3439 = vmatpush1.msra.mxu0 0.0
      %3440 = vmatprep.subr.mxu0 0.0
      %3441 = vmatpush1.msra.mxu0 0.0
      %3442 = vmatprep.subr.mxu0 0.0
      %3443 = vmatpush1.msra.mxu0 0.0
      %3444 = vmatprep.subr.mxu0 0.0
      %3445 = vmatpush1.msra.mxu0 0.0
      %3446 = vmatprep.subr.mxu0 0.0
      %3447 = vmatpush1.msra.mxu0 0.0
      %3448 = vmatprep.subr.mxu0 0.0
      %3449 = vmatpush1.msra.mxu0 0.0
      %3450 = vmatprep.subr.mxu0 0.0
      %3451 = vmatpush1.msra.mxu0 0.0
      %3452 = vmatprep.mubr.f32.mxu0 0.0
      %3453 = vmatmul.mubr.f32.gmra.mrb[0].mxu0 %v3381
      %v3454 = vpop.f32.mrb[0].mxu0
      %v3455 = vadd.f32 0.0, %v3454
      %v3456 = vpop.f32.mrb[0].mxu0
      %3457 = vmatprep.mubr.f32.mxu0 0.0
      %3458 = vmatmul.mubr.f32.gmra.mrb[0].mxu0 %v3384
      %v3459 = vpop.f32.mrb[0].mxu0
      %v3460 = vadd.f32 0.0, %v3459
      %v3461 = vpop.f32.mrb[0].mxu0
      %3462 = vdwg.mxu0
      %v3463 = vadd.f32 %v3370, %v3455
      %v3464 = vadd.f32 %v3371, %v3460
      %s3465 = scalar_lea.vmem %s3, 32
      %v3466 = vld [vmem:[%s3465] sm:$0xff]
      %v3467 = vld [vmem:[%s3465 + $0x8] sm:$0xff]
      %s3468 = scalar_lea.vmem %s3, 112
      %v3469 = vld [vmem:[%s3468] sm:$0xff]
      %v3470 = vld [vmem:[%s3468 + $0x8] sm:$0xff]
      %3471 = vrot.lane.b32.xlu0 %v2543, 110
      %v3472 = vpop.permute.xlu0 %3471
      %3473 = vrot.lane.b32.xlu0 %v2544, 110
      %v3474 = vpop.permute.xlu0 %3473
      %v3475 = vsel %vm1218, %v3472, %v3474
      %v3477 = vsel %vm2557, %v3469, 0
      %v3480 = vsel %vm2557, %v3470, 0
      %v3482 = vsel %vm2564, %v3475, 0
      %3484 = vmatprep.subr.mxu0 0.0
      %3485 = vmatpush1.msra.mxu0 %v3482
      %3486 = vmatprep.subr.mxu0 0.0
      %3487 = vmatpush1.msra.mxu0 0.0
      %3488 = vmatprep.subr.mxu0 0.0
      %3489 = vmatpush1.msra.mxu0 0.0
      %3490 = vmatprep.subr.mxu0 0.0
      %3491 = vmatpush1.msra.mxu0 0.0
      %3492 = vmatprep.subr.mxu0 0.0
      %3493 = vmatpush1.msra.mxu0 0.0
      %3494 = vmatprep.subr.mxu0 0.0
      %3495 = vmatpush1.msra.mxu0 0.0
      %3496 = vmatprep.subr.mxu0 0.0
      %3497 = vmatpush1.msra.mxu0 0.0
      %3498 = vmatprep.subr.mxu0 0.0
      %3499 = vmatpush1.msra.mxu0 0.0
      %3500 = vmatprep.subr.mxu0 0.0
      %3501 = vmatpush1.msra.mxu0 0.0
      %3502 = vmatprep.subr.mxu0 0.0
      %3503 = vmatpush1.msra.mxu0 0.0
      %3504 = vmatprep.subr.mxu0 0.0
      %3505 = vmatpush1.msra.mxu0 0.0
      %3506 = vmatprep.subr.mxu0 0.0
      %3507 = vmatpush1.msra.mxu0 0.0
      %3508 = vmatprep.subr.mxu0 0.0
      %3509 = vmatpush1.msra.mxu0 0.0
      %3510 = vmatprep.subr.mxu0 0.0
      %3511 = vmatpush1.msra.mxu0 0.0
      %3512 = vmatprep.subr.mxu0 0.0
      %3513 = vmatpush1.msra.mxu0 0.0
      %3514 = vmatprep.subr.mxu0 0.0
      %3515 = vmatpush1.msra.mxu0 0.0
      %3516 = vmatprep.subr.mxu0 0.0
      %3517 = vmatpush1.msra.mxu0 0.0
      %3518 = vmatprep.subr.mxu0 0.0
      %3519 = vmatpush1.msra.mxu0 0.0
      %3520 = vmatprep.subr.mxu0 0.0
      %3521 = vmatpush1.msra.mxu0 0.0
      %3522 = vmatprep.subr.mxu0 0.0
      %3523 = vmatpush1.msra.mxu0 0.0
      %3524 = vmatprep.subr.mxu0 0.0
      %3525 = vmatpush1.msra.mxu0 0.0
      %3526 = vmatprep.subr.mxu0 0.0
      %3527 = vmatpush1.msra.mxu0 0.0
      %3528 = vmatprep.subr.mxu0 0.0
      %3529 = vmatpush1.msra.mxu0 0.0
      %3530 = vmatprep.subr.mxu0 0.0
      %3531 = vmatpush1.msra.mxu0 0.0
      %3532 = vmatprep.subr.mxu0 0.0
      %3533 = vmatpush1.msra.mxu0 0.0
      %3534 = vmatprep.subr.mxu0 0.0
      %3535 = vmatpush1.msra.mxu0 0.0
      %3536 = vmatprep.subr.mxu0 0.0
      %3537 = vmatpush1.msra.mxu0 0.0
      %3538 = vmatprep.subr.mxu0 0.0
      %3539 = vmatpush1.msra.mxu0 0.0
      %3540 = vmatprep.subr.mxu0 0.0
      %3541 = vmatpush1.msra.mxu0 0.0
      %3542 = vmatprep.subr.mxu0 0.0
      %3543 = vmatpush1.msra.mxu0 0.0
      %3544 = vmatprep.subr.mxu0 0.0
      %3545 = vmatpush1.msra.mxu0 0.0
      %3546 = vmatprep.subr.mxu0 0.0
      %3547 = vmatpush1.msra.mxu0 0.0
      %3548 = vmatprep.mubr.f32.mxu0 0.0
      %3549 = vmatmul.mubr.f32.gmra.mrb[0].mxu0 %v3477
      %v3550 = vpop.f32.mrb[0].mxu0
      %v3551 = vadd.f32 0.0, %v3550
      %v3552 = vpop.f32.mrb[0].mxu0
      %3553 = vmatprep.mubr.f32.mxu0 0.0
      %3554 = vmatmul.mubr.f32.gmra.mrb[0].mxu0 %v3480
      %v3555 = vpop.f32.mrb[0].mxu0
      %v3556 = vadd.f32 0.0, %v3555
      %v3557 = vpop.f32.mrb[0].mxu0
      %3558 = vdwg.mxu0
      %3559 = vrot.lane.b32.xlu0 %v2543, 126
      %v3560 = vpop.permute.xlu0 %3559
      %3561 = vrot.lane.b32.xlu0 %v2544, 126
      %v3562 = vpop.permute.xlu0 %3561
      %v3563 = vsel %vm1302, %v3560, %v3562
      %v3565 = vsel %vm2557, %v3466, 0
      %v3568 = vsel %vm2557, %v3467, 0
      %v3570 = vsel %vm2564, %v3563, 0
      %3572 = vmatprep.subr.mxu0 0.0
      %3573 = vmatpush1.msra.mxu0 %v3570
      %3574 = vmatprep.subr.mxu0 0.0
      %3575 = vmatpush1.msra.mxu0 0.0
      %3576 = vmatprep.subr.mxu0 0.0
      %3577 = vmatpush1.msra.mxu0 0.0
      %3578 = vmatprep.subr.mxu0 0.0
      %3579 = vmatpush1.msra.mxu0 0.0
      %3580 = vmatprep.subr.mxu0 0.0
      %3581 = vmatpush1.msra.mxu0 0.0
      %3582 = vmatprep.subr.mxu0 0.0
      %3583 = vmatpush1.msra.mxu0 0.0
      %3584 = vmatprep.subr.mxu0 0.0
      %3585 = vmatpush1.msra.mxu0 0.0
      %3586 = vmatprep.subr.mxu0 0.0
      %3587 = vmatpush1.msra.mxu0 0.0
      %3588 = vmatprep.subr.mxu0 0.0
      %3589 = vmatpush1.msra.mxu0 0.0
      %3590 = vmatprep.subr.mxu0 0.0
      %3591 = vmatpush1.msra.mxu0 0.0
      %3592 = vmatprep.subr.mxu0 0.0
      %3593 = vmatpush1.msra.mxu0 0.0
      %3594 = vmatprep.subr.mxu0 0.0
      %3595 = vmatpush1.msra.mxu0 0.0
      %3596 = vmatprep.subr.mxu0 0.0
      %3597 = vmatpush1.msra.mxu0 0.0
      %3598 = vmatprep.subr.mxu0 0.0
      %3599 = vmatpush1.msra.mxu0 0.0
      %3600 = vmatprep.subr.mxu0 0.0
      %3601 = vmatpush1.msra.mxu0 0.0
      %3602 = vmatprep.subr.mxu0 0.0
      %3603 = vmatpush1.msra.mxu0 0.0
      %3604 = vmatprep.subr.mxu0 0.0
      %3605 = vmatpush1.msra.mxu0 0.0
      %3606 = vmatprep.subr.mxu0 0.0
      %3607 = vmatpush1.msra.mxu0 0.0
      %3608 = vmatprep.subr.mxu0 0.0
      %3609 = vmatpush1.msra.mxu0 0.0
      %3610 = vmatprep.subr.mxu0 0.0
      %3611 = vmatpush1.msra.mxu0 0.0
      %3612 = vmatprep.subr.mxu0 0.0
      %3613 = vmatpush1.msra.mxu0 0.0
      %3614 = vmatprep.subr.mxu0 0.0
      %3615 = vmatpush1.msra.mxu0 0.0
      %3616 = vmatprep.subr.mxu0 0.0
      %3617 = vmatpush1.msra.mxu0 0.0
      %3618 = vmatprep.subr.mxu0 0.0
      %3619 = vmatpush1.msra.mxu0 0.0
      %3620 = vmatprep.subr.mxu0 0.0
      %3621 = vmatpush1.msra.mxu0 0.0
      %3622 = vmatprep.subr.mxu0 0.0
      %3623 = vmatpush1.msra.mxu0 0.0
      %3624 = vmatprep.subr.mxu0 0.0
      %3625 = vmatpush1.msra.mxu0 0.0
      %3626 = vmatprep.subr.mxu0 0.0
      %3627 = vmatpush1.msra.mxu0 0.0
      %3628 = vmatprep.subr.mxu0 0.0
      %3629 = vmatpush1.msra.mxu0 0.0
      %3630 = vmatprep.subr.mxu0 0.0
      %3631 = vmatpush1.msra.mxu0 0.0
      %3632 = vmatprep.subr.mxu0 0.0
      %3633 = vmatpush1.msra.mxu0 0.0
      %3634 = vmatprep.subr.mxu0 0.0
      %3635 = vmatpush1.msra.mxu0 0.0
      %3636 = vmatprep.mubr.f32.mxu0 0.0
      %3637 = vmatmul.mubr.f32.gmra.mrb[0].mxu0 %v3565
      %v3638 = vpop.f32.mrb[0].mxu0
      %v3639 = vadd.f32 %v3551, %v3638
      %v3640 = vpop.f32.mrb[0].mxu0
      %3641 = vmatprep.mubr.f32.mxu0 0.0
      %3642 = vmatmul.mubr.f32.gmra.mrb[0].mxu0 %v3568
      %v3643 = vpop.f32.mrb[0].mxu0
      %v3644 = vadd.f32 %v3556, %v3643
      %v3645 = vpop.f32.mrb[0].mxu0
      %3646 = vdwg.mxu0
      %s3647 = scalar_lea.vmem %s3, 192
      %v3648 = vld [vmem:[%s3647] sm:$0xff]
      %v3649 = vld [vmem:[%s3647 + $0x8] sm:$0xff]
      %3650 = vrot.lane.b32.xlu0 %v2543, 94
      %v3651 = vpop.permute.xlu0 %3650
      %3652 = vrot.lane.b32.xlu0 %v2544, 94
      %v3653 = vpop.permute.xlu0 %3652
      %v3654 = vsel %vm1388, %v3651, %v3653
      %v3656 = vsel %vm2557, %v3648, 0
      %v3659 = vsel %vm2557, %v3649, 0
      %v3661 = vsel %vm2564, %v3654, 0
      %3663 = vmatprep.subr.mxu0 0.0
      %3664 = vmatpush1.msra.mxu0 %v3661
      %3665 = vmatprep.subr.mxu0 0.0
      %3666 = vmatpush1.msra.mxu0 0.0
      %3667 = vmatprep.subr.mxu0 0.0
      %3668 = vmatpush1.msra.mxu0 0.0
      %3669 = vmatprep.subr.mxu0 0.0
      %3670 = vmatpush1.msra.mxu0 0.0
      %3671 = vmatprep.subr.mxu0 0.0
      %3672 = vmatpush1.msra.mxu0 0.0
      %3673 = vmatprep.subr.mxu0 0.0
      %3674 = vmatpush1.msra.mxu0 0.0
      %3675 = vmatprep.subr.mxu0 0.0
      %3676 = vmatpush1.msra.mxu0 0.0
      %3677 = vmatprep.subr.mxu0 0.0
      %3678 = vmatpush1.msra.mxu0 0.0
      %3679 = vmatprep.subr.mxu0 0.0
      %3680 = vmatpush1.msra.mxu0 0.0
      %3681 = vmatprep.subr.mxu0 0.0
      %3682 = vmatpush1.msra.mxu0 0.0
      %3683 = vmatprep.subr.mxu0 0.0
      %3684 = vmatpush1.msra.mxu0 0.0
      %3685 = vmatprep.subr.mxu0 0.0
      %3686 = vmatpush1.msra.mxu0 0.0
      %3687 = vmatprep.subr.mxu0 0.0
      %3688 = vmatpush1.msra.mxu0 0.0
      %3689 = vmatprep.subr.mxu0 0.0
      %3690 = vmatpush1.msra.mxu0 0.0
      %3691 = vmatprep.subr.mxu0 0.0
      %3692 = vmatpush1.msra.mxu0 0.0
      %3693 = vmatprep.subr.mxu0 0.0
      %3694 = vmatpush1.msra.mxu0 0.0
      %3695 = vmatprep.subr.mxu0 0.0
      %3696 = vmatpush1.msra.mxu0 0.0
      %3697 = vmatprep.subr.mxu0 0.0
      %3698 = vmatpush1.msra.mxu0 0.0
      %3699 = vmatprep.subr.mxu0 0.0
      %3700 = vmatpush1.msra.mxu0 0.0
      %3701 = vmatprep.subr.mxu0 0.0
      %3702 = vmatpush1.msra.mxu0 0.0
      %3703 = vmatprep.subr.mxu0 0.0
      %3704 = vmatpush1.msra.mxu0 0.0
      %3705 = vmatprep.subr.mxu0 0.0
      %3706 = vmatpush1.msra.mxu0 0.0
      %3707 = vmatprep.subr.mxu0 0.0
      %3708 = vmatpush1.msra.mxu0 0.0
      %3709 = vmatprep.subr.mxu0 0.0
      %3710 = vmatpush1.msra.mxu0 0.0
      %3711 = vmatprep.subr.mxu0 0.0
      %3712 = vmatpush1.msra.mxu0 0.0
      %3713 = vmatprep.subr.mxu0 0.0
      %3714 = vmatpush1.msra.mxu0 0.0
      %3715 = vmatprep.subr.mxu0 0.0
      %3716 = vmatpush1.msra.mxu0 0.0
      %3717 = vmatprep.subr.mxu0 0.0
      %3718 = vmatpush1.msra.mxu0 0.0
      %3719 = vmatprep.subr.mxu0 0.0
      %3720 = vmatpush1.msra.mxu0 0.0
      %3721 = vmatprep.subr.mxu0 0.0
      %3722 = vmatpush1.msra.mxu0 0.0
      %3723 = vmatprep.subr.mxu0 0.0
      %3724 = vmatpush1.msra.mxu0 0.0
      %3725 = vmatprep.subr.mxu0 0.0
      %3726 = vmatpush1.msra.mxu0 0.0
      %3727 = vmatprep.mubr.f32.mxu0 0.0
      %3728 = vmatmul.mubr.f32.gmra.mrb[0].mxu0 %v3656
      %v3729 = vpop.f32.mrb[0].mxu0
      %v3730 = vadd.f32 0.0, %v3729
      %v3731 = vpop.f32.mrb[0].mxu0
      %3732 = vmatprep.mubr.f32.mxu0 0.0
      %3733 = vmatmul.mubr.f32.gmra.mrb[0].mxu0 %v3659
      %v3734 = vpop.f32.mrb[0].mxu0
      %v3735 = vadd.f32 0.0, %v3734
      %v3736 = vpop.f32.mrb[0].mxu0
      %3737 = vdwg.mxu0
      %v3738 = vadd.f32 %v3639, %v3730
      %v3739 = vadd.f32 %v3644, %v3735
      %s3740 = scalar_lea.vmem %s3, 272
      %v3741 = vld [vmem:[%s3740] sm:$0xff]
      %v3742 = vld [vmem:[%s3740 + $0x8] sm:$0xff]
      %3743 = vrot.lane.b32.xlu0 %v2543, 78
      %v3744 = vpop.permute.xlu0 %3743
      %3745 = vrot.lane.b32.xlu0 %v2544, 78
      %v3746 = vpop.permute.xlu0 %3745
      %v3747 = vsel %vm1476, %v3744, %v3746
      %v3749 = vsel %vm2557, %v3741, 0
      %v3752 = vsel %vm2557, %v3742, 0
      %v3754 = vsel %vm2564, %v3747, 0
      %3756 = vmatprep.subr.mxu0 0.0
      %3757 = vmatpush1.msra.mxu0 %v3754
      %3758 = vmatprep.subr.mxu0 0.0
      %3759 = vmatpush1.msra.mxu0 0.0
      %3760 = vmatprep.subr.mxu0 0.0
      %3761 = vmatpush1.msra.mxu0 0.0
      %3762 = vmatprep.subr.mxu0 0.0
      %3763 = vmatpush1.msra.mxu0 0.0
      %3764 = vmatprep.subr.mxu0 0.0
      %3765 = vmatpush1.msra.mxu0 0.0
      %3766 = vmatprep.subr.mxu0 0.0
      %3767 = vmatpush1.msra.mxu0 0.0
      %3768 = vmatprep.subr.mxu0 0.0
      %3769 = vmatpush1.msra.mxu0 0.0
      %3770 = vmatprep.subr.mxu0 0.0
      %3771 = vmatpush1.msra.mxu0 0.0
      %3772 = vmatprep.subr.mxu0 0.0
      %3773 = vmatpush1.msra.mxu0 0.0
      %3774 = vmatprep.subr.mxu0 0.0
      %3775 = vmatpush1.msra.mxu0 0.0
      %3776 = vmatprep.subr.mxu0 0.0
      %3777 = vmatpush1.msra.mxu0 0.0
      %3778 = vmatprep.subr.mxu0 0.0
      %3779 = vmatpush1.msra.mxu0 0.0
      %3780 = vmatprep.subr.mxu0 0.0
      %3781 = vmatpush1.msra.mxu0 0.0
      %3782 = vmatprep.subr.mxu0 0.0
      %3783 = vmatpush1.msra.mxu0 0.0
      %3784 = vmatprep.subr.mxu0 0.0
      %3785 = vmatpush1.msra.mxu0 0.0
      %3786 = vmatprep.subr.mxu0 0.0
      %3787 = vmatpush1.msra.mxu0 0.0
      %3788 = vmatprep.subr.mxu0 0.0
      %3789 = vmatpush1.msra.mxu0 0.0
      %3790 = vmatprep.subr.mxu0 0.0
      %3791 = vmatpush1.msra.mxu0 0.0
      %3792 = vmatprep.subr.mxu0 0.0
      %3793 = vmatpush1.msra.mxu0 0.0
      %3794 = vmatprep.subr.mxu0 0.0
      %3795 = vmatpush1.msra.mxu0 0.0
      %3796 = vmatprep.subr.mxu0 0.0
      %3797 = vmatpush1.msra.mxu0 0.0
      %3798 = vmatprep.subr.mxu0 0.0
      %3799 = vmatpush1.msra.mxu0 0.0
      %3800 = vmatprep.subr.mxu0 0.0
      %3801 = vmatpush1.msra.mxu0 0.0
      %3802 = vmatprep.subr.mxu0 0.0
      %3803 = vmatpush1.msra.mxu0 0.0
      %3804 = vmatprep.subr.mxu0 0.0
      %3805 = vmatpush1.msra.mxu0 0.0
      %3806 = vmatprep.subr.mxu0 0.0
      %3807 = vmatpush1.msra.mxu0 0.0
      %3808 = vmatprep.subr.mxu0 0.0
      %3809 = vmatpush1.msra.mxu0 0.0
      %3810 = vmatprep.subr.mxu0 0.0
      %3811 = vmatpush1.msra.mxu0 0.0
      %3812 = vmatprep.subr.mxu0 0.0
      %3813 = vmatpush1.msra.mxu0 0.0
      %3814 = vmatprep.subr.mxu0 0.0
      %3815 = vmatpush1.msra.mxu0 0.0
      %3816 = vmatprep.subr.mxu0 0.0
      %3817 = vmatpush1.msra.mxu0 0.0
      %3818 = vmatprep.subr.mxu0 0.0
      %3819 = vmatpush1.msra.mxu0 0.0
      %3820 = vmatprep.mubr.f32.mxu0 0.0
      %3821 = vmatmul.mubr.f32.gmra.mrb[0].mxu0 %v3749
      %v3822 = vpop.f32.mrb[0].mxu0
      %v3823 = vadd.f32 0.0, %v3822
      %v3824 = vpop.f32.mrb[0].mxu0
      %3825 = vmatprep.mubr.f32.mxu0 0.0
      %3826 = vmatmul.mubr.f32.gmra.mrb[0].mxu0 %v3752
      %v3827 = vpop.f32.mrb[0].mxu0
      %v3828 = vadd.f32 0.0, %v3827
      %v3829 = vpop.f32.mrb[0].mxu0
      %3830 = vdwg.mxu0
      %v3831 = vadd.f32 %v3738, %v3823
      %v3832 = vadd.f32 %v3739, %v3828
      %s3833 = scalar_lea.vmem %s3, 352
      %v3834 = vld [vmem:[%s3833] sm:$0xff]
      %v3835 = vld [vmem:[%s3833 + $0x8] sm:$0xff]
      %3836 = vrot.lane.b32.xlu0 %v2543, 62
      %v3837 = vpop.permute.xlu0 %3836
      %3838 = vrot.lane.b32.xlu0 %v2544, 62
      %v3839 = vpop.permute.xlu0 %3838
      %v3840 = vsel %vm1566, %v3837, %v3839
      %v3842 = vsel %vm2557, %v3834, 0
      %v3845 = vsel %vm2557, %v3835, 0
      %v3847 = vsel %vm2564, %v3840, 0
      %3849 = vmatprep.subr.mxu0 0.0
      %3850 = vmatpush1.msra.mxu0 %v3847
      %3851 = vmatprep.subr.mxu0 0.0
      %3852 = vmatpush1.msra.mxu0 0.0
      %3853 = vmatprep.subr.mxu0 0.0
      %3854 = vmatpush1.msra.mxu0 0.0
      %3855 = vmatprep.subr.mxu0 0.0
      %3856 = vmatpush1.msra.mxu0 0.0
      %3857 = vmatprep.subr.mxu0 0.0
      %3858 = vmatpush1.msra.mxu0 0.0
      %3859 = vmatprep.subr.mxu0 0.0
      %3860 = vmatpush1.msra.mxu0 0.0
      %3861 = vmatprep.subr.mxu0 0.0
      %3862 = vmatpush1.msra.mxu0 0.0
      %3863 = vmatprep.subr.mxu0 0.0
      %3864 = vmatpush1.msra.mxu0 0.0
      %3865 = vmatprep.subr.mxu0 0.0
      %3866 = vmatpush1.msra.mxu0 0.0
      %3867 = vmatprep.subr.mxu0 0.0
      %3868 = vmatpush1.msra.mxu0 0.0
      %3869 = vmatprep.subr.mxu0 0.0
      %3870 = vmatpush1.msra.mxu0 0.0
      %3871 = vmatprep.subr.mxu0 0.0
      %3872 = vmatpush1.msra.mxu0 0.0
      %3873 = vmatprep.subr.mxu0 0.0
      %3874 = vmatpush1.msra.mxu0 0.0
      %3875 = vmatprep.subr.mxu0 0.0
      %3876 = vmatpush1.msra.mxu0 0.0
      %3877 = vmatprep.subr.mxu0 0.0
      %3878 = vmatpush1.msra.mxu0 0.0
      %3879 = vmatprep.subr.mxu0 0.0
      %3880 = vmatpush1.msra.mxu0 0.0
      %3881 = vmatprep.subr.mxu0 0.0
      %3882 = vmatpush1.msra.mxu0 0.0
      %3883 = vmatprep.subr.mxu0 0.0
      %3884 = vmatpush1.msra.mxu0 0.0
      %3885 = vmatprep.subr.mxu0 0.0
      %3886 = vmatpush1.msra.mxu0 0.0
      %3887 = vmatprep.subr.mxu0 0.0
      %3888 = vmatpush1.msra.mxu0 0.0
      %3889 = vmatprep.subr.mxu0 0.0
      %3890 = vmatpush1.msra.mxu0 0.0
      %3891 = vmatprep.subr.mxu0 0.0
      %3892 = vmatpush1.msra.mxu0 0.0
      %3893 = vmatprep.subr.mxu0 0.0
      %3894 = vmatpush1.msra.mxu0 0.0
      %3895 = vmatprep.subr.mxu0 0.0
      %3896 = vmatpush1.msra.mxu0 0.0
      %3897 = vmatprep.subr.mxu0 0.0
      %3898 = vmatpush1.msra.mxu0 0.0
      %3899 = vmatprep.subr.mxu0 0.0
      %3900 = vmatpush1.msra.mxu0 0.0
      %3901 = vmatprep.subr.mxu0 0.0
      %3902 = vmatpush1.msra.mxu0 0.0
      %3903 = vmatprep.subr.mxu0 0.0
      %3904 = vmatpush1.msra.mxu0 0.0
      %3905 = vmatprep.subr.mxu0 0.0
      %3906 = vmatpush1.msra.mxu0 0.0
      %3907 = vmatprep.subr.mxu0 0.0
      %3908 = vmatpush1.msra.mxu0 0.0
      %3909 = vmatprep.subr.mxu0 0.0
      %3910 = vmatpush1.msra.mxu0 0.0
      %3911 = vmatprep.subr.mxu0 0.0
      %3912 = vmatpush1.msra.mxu0 0.0
      %3913 = vmatprep.mubr.f32.mxu0 0.0
      %3914 = vmatmul.mubr.f32.gmra.mrb[0].mxu0 %v3842
      %v3915 = vpop.f32.mrb[0].mxu0
      %v3916 = vadd.f32 0.0, %v3915
      %v3917 = vpop.f32.mrb[0].mxu0
      %3918 = vmatprep.mubr.f32.mxu0 0.0
      %3919 = vmatmul.mubr.f32.gmra.mrb[0].mxu0 %v3845
      %v3920 = vpop.f32.mrb[0].mxu0
      %v3921 = vadd.f32 0.0, %v3920
      %v3922 = vpop.f32.mrb[0].mxu0
      %3923 = vdwg.mxu0
      %v3924 = vadd.f32 %v3831, %v3916
      %v3925 = vadd.f32 %v3832, %v3921
      %s3926 = scalar_lea.vmem %s3, 48
      %v3927 = vld [vmem:[%s3926] sm:$0xff]
      %v3928 = vld [vmem:[%s3926 + $0x8] sm:$0xff]
      %s3929 = scalar_lea.vmem %s3, 128
      %v3930 = vld [vmem:[%s3929] sm:$0xff]
      %v3931 = vld [vmem:[%s3929 + $0x8] sm:$0xff]
      %3932 = vrot.lane.b32.xlu0 %v2543, 109
      %v3933 = vpop.permute.xlu0 %3932
      %3934 = vrot.lane.b32.xlu0 %v2544, 109
      %v3935 = vpop.permute.xlu0 %3934
      %v3936 = vsel %vm1657, %v3933, %v3935
      %v3938 = vsel %vm2557, %v3930, 0
      %v3941 = vsel %vm2557, %v3931, 0
      %v3943 = vsel %vm2564, %v3936, 0
      %3945 = vmatprep.subr.mxu0 0.0
      %3946 = vmatpush1.msra.mxu0 %v3943
      %3947 = vmatprep.subr.mxu0 0.0
      %3948 = vmatpush1.msra.mxu0 0.0
      %3949 = vmatprep.subr.mxu0 0.0
      %3950 = vmatpush1.msra.mxu0 0.0
      %3951 = vmatprep.subr.mxu0 0.0
      %3952 = vmatpush1.msra.mxu0 0.0
      %3953 = vmatprep.subr.mxu0 0.0
      %3954 = vmatpush1.msra.mxu0 0.0
      %3955 = vmatprep.subr.mxu0 0.0
      %3956 = vmatpush1.msra.mxu0 0.0
      %3957 = vmatprep.subr.mxu0 0.0
      %3958 = vmatpush1.msra.mxu0 0.0
      %3959 = vmatprep.subr.mxu0 0.0
      %3960 = vmatpush1.msra.mxu0 0.0
      %3961 = vmatprep.subr.mxu0 0.0
      %3962 = vmatpush1.msra.mxu0 0.0
      %3963 = vmatprep.subr.mxu0 0.0
      %3964 = vmatpush1.msra.mxu0 0.0
      %3965 = vmatprep.subr.mxu0 0.0
      %3966 = vmatpush1.msra.mxu0 0.0
      %3967 = vmatprep.subr.mxu0 0.0
      %3968 = vmatpush1.msra.mxu0 0.0
      %3969 = vmatprep.subr.mxu0 0.0
      %3970 = vmatpush1.msra.mxu0 0.0
      %3971 = vmatprep.subr.mxu0 0.0
      %3972 = vmatpush1.msra.mxu0 0.0
      %3973 = vmatprep.subr.mxu0 0.0
      %3974 = vmatpush1.msra.mxu0 0.0
      %3975 = vmatprep.subr.mxu0 0.0
      %3976 = vmatpush1.msra.mxu0 0.0
      %3977 = vmatprep.subr.mxu0 0.0
      %3978 = vmatpush1.msra.mxu0 0.0
      %3979 = vmatprep.subr.mxu0 0.0
      %3980 = vmatpush1.msra.mxu0 0.0
      %3981 = vmatprep.subr.mxu0 0.0
      %3982 = vmatpush1.msra.mxu0 0.0
      %3983 = vmatprep.subr.mxu0 0.0
      %3984 = vmatpush1.msra.mxu0 0.0
      %3985 = vmatprep.subr.mxu0 0.0
      %3986 = vmatpush1.msra.mxu0 0.0
      %3987 = vmatprep.subr.mxu0 0.0
      %3988 = vmatpush1.msra.mxu0 0.0
      %3989 = vmatprep.subr.mxu0 0.0
      %3990 = vmatpush1.msra.mxu0 0.0
      %3991 = vmatprep.subr.mxu0 0.0
      %3992 = vmatpush1.msra.mxu0 0.0
      %3993 = vmatprep.subr.mxu0 0.0
      %3994 = vmatpush1.msra.mxu0 0.0
      %3995 = vmatprep.subr.mxu0 0.0
      %3996 = vmatpush1.msra.mxu0 0.0
      %3997 = vmatprep.subr.mxu0 0.0
      %3998 = vmatpush1.msra.mxu0 0.0
      %3999 = vmatprep.subr.mxu0 0.0
      %4000 = vmatpush1.msra.mxu0 0.0
      %4001 = vmatprep.subr.mxu0 0.0
      %4002 = vmatpush1.msra.mxu0 0.0
      %4003 = vmatprep.subr.mxu0 0.0
      %4004 = vmatpush1.msra.mxu0 0.0
      %4005 = vmatprep.subr.mxu0 0.0
      %4006 = vmatpush1.msra.mxu0 0.0
      %4007 = vmatprep.subr.mxu0 0.0
      %4008 = vmatpush1.msra.mxu0 0.0
      %4009 = vmatprep.mubr.f32.mxu0 0.0
      %4010 = vmatmul.mubr.f32.gmra.mrb[0].mxu0 %v3938
      %v4011 = vpop.f32.mrb[0].mxu0
      %v4012 = vadd.f32 0.0, %v4011
      %v4013 = vpop.f32.mrb[0].mxu0
      %4014 = vmatprep.mubr.f32.mxu0 0.0
      %4015 = vmatmul.mubr.f32.gmra.mrb[0].mxu0 %v3941
      %v4016 = vpop.f32.mrb[0].mxu0
      %v4017 = vadd.f32 0.0, %v4016
      %v4018 = vpop.f32.mrb[0].mxu0
      %4019 = vdwg.mxu0
      %4020 = vrot.lane.b32.xlu0 %v2543, 125
      %v4021 = vpop.permute.xlu0 %4020
      %4022 = vrot.lane.b32.xlu0 %v2544, 125
      %v4023 = vpop.permute.xlu0 %4022
      %v4024 = vsel %vm1741, %v4021, %v4023
      %v4026 = vsel %vm2557, %v3927, 0
      %v4029 = vsel %vm2557, %v3928, 0
      %v4031 = vsel %vm2564, %v4024, 0
      %4033 = vmatprep.subr.mxu0 0.0
      %4034 = vmatpush1.msra.mxu0 %v4031
      %4035 = vmatprep.subr.mxu0 0.0
      %4036 = vmatpush1.msra.mxu0 0.0
      %4037 = vmatprep.subr.mxu0 0.0
      %4038 = vmatpush1.msra.mxu0 0.0
      %4039 = vmatprep.subr.mxu0 0.0
      %4040 = vmatpush1.msra.mxu0 0.0
      %4041 = vmatprep.subr.mxu0 0.0
      %4042 = vmatpush1.msra.mxu0 0.0
      %4043 = vmatprep.subr.mxu0 0.0
      %4044 = vmatpush1.msra.mxu0 0.0
      %4045 = vmatprep.subr.mxu0 0.0
      %4046 = vmatpush1.msra.mxu0 0.0
      %4047 = vmatprep.subr.mxu0 0.0
      %4048 = vmatpush1.msra.mxu0 0.0
      %4049 = vmatprep.subr.mxu0 0.0
      %4050 = vmatpush1.msra.mxu0 0.0
      %4051 = vmatprep.subr.mxu0 0.0
      %4052 = vmatpush1.msra.mxu0 0.0
      %4053 = vmatprep.subr.mxu0 0.0
      %4054 = vmatpush1.msra.mxu0 0.0
      %4055 = vmatprep.subr.mxu0 0.0
      %4056 = vmatpush1.msra.mxu0 0.0
      %4057 = vmatprep.subr.mxu0 0.0
      %4058 = vmatpush1.msra.mxu0 0.0
      %4059 = vmatprep.subr.mxu0 0.0
      %4060 = vmatpush1.msra.mxu0 0.0
      %4061 = vmatprep.subr.mxu0 0.0
      %4062 = vmatpush1.msra.mxu0 0.0
      %4063 = vmatprep.subr.mxu0 0.0
      %4064 = vmatpush1.msra.mxu0 0.0
      %4065 = vmatprep.subr.mxu0 0.0
      %4066 = vmatpush1.msra.mxu0 0.0
      %4067 = vmatprep.subr.mxu0 0.0
      %4068 = vmatpush1.msra.mxu0 0.0
      %4069 = vmatprep.subr.mxu0 0.0
      %4070 = vmatpush1.msra.mxu0 0.0
      %4071 = vmatprep.subr.mxu0 0.0
      %4072 = vmatpush1.msra.mxu0 0.0
      %4073 = vmatprep.subr.mxu0 0.0
      %4074 = vmatpush1.msra.mxu0 0.0
      %4075 = vmatprep.subr.mxu0 0.0
      %4076 = vmatpush1.msra.mxu0 0.0
      %4077 = vmatprep.subr.mxu0 0.0
      %4078 = vmatpush1.msra.mxu0 0.0
      %4079 = vmatprep.subr.mxu0 0.0
      %4080 = vmatpush1.msra.mxu0 0.0
      %4081 = vmatprep.subr.mxu0 0.0
      %4082 = vmatpush1.msra.mxu0 0.0
      %4083 = vmatprep.subr.mxu0 0.0
      %4084 = vmatpush1.msra.mxu0 0.0
      %4085 = vmatprep.subr.mxu0 0.0
      %4086 = vmatpush1.msra.mxu0 0.0
      %4087 = vmatprep.subr.mxu0 0.0
      %4088 = vmatpush1.msra.mxu0 0.0
      %4089 = vmatprep.subr.mxu0 0.0
      %4090 = vmatpush1.msra.mxu0 0.0
      %4091 = vmatprep.subr.mxu0 0.0
      %4092 = vmatpush1.msra.mxu0 0.0
      %4093 = vmatprep.subr.mxu0 0.0
      %4094 = vmatpush1.msra.mxu0 0.0
      %4095 = vmatprep.subr.mxu0 0.0
      %4096 = vmatpush1.msra.mxu0 0.0
      %4097 = vmatprep.mubr.f32.mxu0 0.0
      %4098 = vmatmul.mubr.f32.gmra.mrb[0].mxu0 %v4026
      %v4099 = vpop.f32.mrb[0].mxu0
      %v4100 = vadd.f32 %v4012, %v4099
      %v4101 = vpop.f32.mrb[0].mxu0
      %4102 = vmatprep.mubr.f32.mxu0 0.0
      %4103 = vmatmul.mubr.f32.gmra.mrb[0].mxu0 %v4029
      %v4104 = vpop.f32.mrb[0].mxu0
      %v4105 = vadd.f32 %v4017, %v4104
      %v4106 = vpop.f32.mrb[0].mxu0
      %4107 = vdwg.mxu0
      %s4108 = scalar_lea.vmem %s3, 208
      %v4109 = vld [vmem:[%s4108] sm:$0xff]
      %v4110 = vld [vmem:[%s4108 + $0x8] sm:$0xff]
      %4111 = vrot.lane.b32.xlu0 %v2543, 93
      %v4112 = vpop.permute.xlu0 %4111
      %4113 = vrot.lane.b32.xlu0 %v2544, 93
      %v4114 = vpop.permute.xlu0 %4113
      %v4115 = vsel %vm1827, %v4112, %v4114
      %v4117 = vsel %vm2557, %v4109, 0
      %v4120 = vsel %vm2557, %v4110, 0
      %v4122 = vsel %vm2564, %v4115, 0
      %4124 = vmatprep.subr.mxu0 0.0
      %4125 = vmatpush1.msra.mxu0 %v4122
      %4126 = vmatprep.subr.mxu0 0.0
      %4127 = vmatpush1.msra.mxu0 0.0
      %4128 = vmatprep.subr.mxu0 0.0
      %4129 = vmatpush1.msra.mxu0 0.0
      %4130 = vmatprep.subr.mxu0 0.0
      %4131 = vmatpush1.msra.mxu0 0.0
      %4132 = vmatprep.subr.mxu0 0.0
      %4133 = vmatpush1.msra.mxu0 0.0
      %4134 = vmatprep.subr.mxu0 0.0
      %4135 = vmatpush1.msra.mxu0 0.0
      %4136 = vmatprep.subr.mxu0 0.0
      %4137 = vmatpush1.msra.mxu0 0.0
      %4138 = vmatprep.subr.mxu0 0.0
      %4139 = vmatpush1.msra.mxu0 0.0
      %4140 = vmatprep.subr.mxu0 0.0
      %4141 = vmatpush1.msra.mxu0 0.0
      %4142 = vmatprep.subr.mxu0 0.0
      %4143 = vmatpush1.msra.mxu0 0.0
      %4144 = vmatprep.subr.mxu0 0.0
      %4145 = vmatpush1.msra.mxu0 0.0
      %4146 = vmatprep.subr.mxu0 0.0
      %4147 = vmatpush1.msra.mxu0 0.0
      %4148 = vmatprep.subr.mxu0 0.0
      %4149 = vmatpush1.msra.mxu0 0.0
      %4150 = vmatprep.subr.mxu0 0.0
      %4151 = vmatpush1.msra.mxu0 0.0
      %4152 = vmatprep.subr.mxu0 0.0
      %4153 = vmatpush1.msra.mxu0 0.0
      %4154 = vmatprep.subr.mxu0 0.0
      %4155 = vmatpush1.msra.mxu0 0.0
      %4156 = vmatprep.subr.mxu0 0.0
      %4157 = vmatpush1.msra.mxu0 0.0
      %4158 = vmatprep.subr.mxu0 0.0
      %4159 = vmatpush1.msra.mxu0 0.0
      %4160 = vmatprep.subr.mxu0 0.0
      %4161 = vmatpush1.msra.mxu0 0.0
      %4162 = vmatprep.subr.mxu0 0.0
      %4163 = vmatpush1.msra.mxu0 0.0
      %4164 = vmatprep.subr.mxu0 0.0
      %4165 = vmatpush1.msra.mxu0 0.0
      %4166 = vmatprep.subr.mxu0 0.0
      %4167 = vmatpush1.msra.mxu0 0.0
      %4168 = vmatprep.subr.mxu0 0.0
      %4169 = vmatpush1.msra.mxu0 0.0
      %4170 = vmatprep.subr.mxu0 0.0
      %4171 = vmatpush1.msra.mxu0 0.0
      %4172 = vmatprep.subr.mxu0 0.0
      %4173 = vmatpush1.msra.mxu0 0.0
      %4174 = vmatprep.subr.mxu0 0.0
      %4175 = vmatpush1.msra.mxu0 0.0
      %4176 = vmatprep.subr.mxu0 0.0
      %4177 = vmatpush1.msra.mxu0 0.0
      %4178 = vmatprep.subr.mxu0 0.0
      %4179 = vmatpush1.msra.mxu0 0.0
      %4180 = vmatprep.subr.mxu0 0.0
      %4181 = vmatpush1.msra.mxu0 0.0
      %4182 = vmatprep.subr.mxu0 0.0
      %4183 = vmatpush1.msra.mxu0 0.0
      %4184 = vmatprep.subr.mxu0 0.0
      %4185 = vmatpush1.msra.mxu0 0.0
      %4186 = vmatprep.subr.mxu0 0.0
      %4187 = vmatpush1.msra.mxu0 0.0
      %4188 = vmatprep.mubr.f32.mxu0 0.0
      %4189 = vmatmul.mubr.f32.gmra.mrb[0].mxu0 %v4117
      %v4190 = vpop.f32.mrb[0].mxu0
      %v4191 = vadd.f32 0.0, %v4190
      %v4192 = vpop.f32.mrb[0].mxu0
      %4193 = vmatprep.mubr.f32.mxu0 0.0
      %4194 = vmatmul.mubr.f32.gmra.mrb[0].mxu0 %v4120
      %v4195 = vpop.f32.mrb[0].mxu0
      %v4196 = vadd.f32 0.0, %v4195
      %v4197 = vpop.f32.mrb[0].mxu0
      %4198 = vdwg.mxu0
      %v4199 = vadd.f32 %v4100, %v4191
      %v4200 = vadd.f32 %v4105, %v4196
      %s4201 = scalar_lea.vmem %s3, 288
      %v4202 = vld [vmem:[%s4201] sm:$0xff]
      %v4203 = vld [vmem:[%s4201 + $0x8] sm:$0xff]
      %4204 = vrot.lane.b32.xlu0 %v2543, 77
      %v4205 = vpop.permute.xlu0 %4204
      %4206 = vrot.lane.b32.xlu0 %v2544, 77
      %v4207 = vpop.permute.xlu0 %4206
      %v4208 = vsel %vm1915, %v4205, %v4207
      %v4210 = vsel %vm2557, %v4202, 0
      %v4213 = vsel %vm2557, %v4203, 0
      %v4215 = vsel %vm2564, %v4208, 0
      %4217 = vmatprep.subr.mxu0 0.0
      %4218 = vmatpush1.msra.mxu0 %v4215
      %4219 = vmatprep.subr.mxu0 0.0
      %4220 = vmatpush1.msra.mxu0 0.0
      %4221 = vmatprep.subr.mxu0 0.0
      %4222 = vmatpush1.msra.mxu0 0.0
      %4223 = vmatprep.subr.mxu0 0.0
      %4224 = vmatpush1.msra.mxu0 0.0
      %4225 = vmatprep.subr.mxu0 0.0
      %4226 = vmatpush1.msra.mxu0 0.0
      %4227 = vmatprep.subr.mxu0 0.0
      %4228 = vmatpush1.msra.mxu0 0.0
      %4229 = vmatprep.subr.mxu0 0.0
      %4230 = vmatpush1.msra.mxu0 0.0
      %4231 = vmatprep.subr.mxu0 0.0
      %4232 = vmatpush1.msra.mxu0 0.0
      %4233 = vmatprep.subr.mxu0 0.0
      %4234 = vmatpush1.msra.mxu0 0.0
      %4235 = vmatprep.subr.mxu0 0.0
      %4236 = vmatpush1.msra.mxu0 0.0
      %4237 = vmatprep.subr.mxu0 0.0
      %4238 = vmatpush1.msra.mxu0 0.0
      %4239 = vmatprep.subr.mxu0 0.0
      %4240 = vmatpush1.msra.mxu0 0.0
      %4241 = vmatprep.subr.mxu0 0.0
      %4242 = vmatpush1.msra.mxu0 0.0
      %4243 = vmatprep.subr.mxu0 0.0
      %4244 = vmatpush1.msra.mxu0 0.0
      %4245 = vmatprep.subr.mxu0 0.0
      %4246 = vmatpush1.msra.mxu0 0.0
      %4247 = vmatprep.subr.mxu0 0.0
      %4248 = vmatpush1.msra.mxu0 0.0
      %4249 = vmatprep.subr.mxu0 0.0
      %4250 = vmatpush1.msra.mxu0 0.0
      %4251 = vmatprep.subr.mxu0 0.0
      %4252 = vmatpush1.msra.mxu0 0.0
      %4253 = vmatprep.subr.mxu0 0.0
      %4254 = vmatpush1.msra.mxu0 0.0
      %4255 = vmatprep.subr.mxu0 0.0
      %4256 = vmatpush1.msra.mxu0 0.0
      %4257 = vmatprep.subr.mxu0 0.0
      %4258 = vmatpush1.msra.mxu0 0.0
      %4259 = vmatprep.subr.mxu0 0.0
      %4260 = vmatpush1.msra.mxu0 0.0
      %4261 = vmatprep.subr.mxu0 0.0
      %4262 = vmatpush1.msra.mxu0 0.0
      %4263 = vmatprep.subr.mxu0 0.0
      %4264 = vmatpush1.msra.mxu0 0.0
      %4265 = vmatprep.subr.mxu0 0.0
      %4266 = vmatpush1.msra.mxu0 0.0
      %4267 = vmatprep.subr.mxu0 0.0
      %4268 = vmatpush1.msra.mxu0 0.0
      %4269 = vmatprep.subr.mxu0 0.0
      %4270 = vmatpush1.msra.mxu0 0.0
      %4271 = vmatprep.subr.mxu0 0.0
      %4272 = vmatpush1.msra.mxu0 0.0
      %4273 = vmatprep.subr.mxu0 0.0
      %4274 = vmatpush1.msra.mxu0 0.0
      %4275 = vmatprep.subr.mxu0 0.0
      %4276 = vmatpush1.msra.mxu0 0.0
      %4277 = vmatprep.subr.mxu0 0.0
      %4278 = vmatpush1.msra.mxu0 0.0
      %4279 = vmatprep.subr.mxu0 0.0
      %4280 = vmatpush1.msra.mxu0 0.0
      %4281 = vmatprep.mubr.f32.mxu0 0.0
      %4282 = vmatmul.mubr.f32.gmra.mrb[0].mxu0 %v4210
      %v4283 = vpop.f32.mrb[0].mxu0
      %v4284 = vadd.f32 0.0, %v4283
      %v4285 = vpop.f32.mrb[0].mxu0
      %4286 = vmatprep.mubr.f32.mxu0 0.0
      %4287 = vmatmul.mubr.f32.gmra.mrb[0].mxu0 %v4213
      %v4288 = vpop.f32.mrb[0].mxu0
      %v4289 = vadd.f32 0.0, %v4288
      %v4290 = vpop.f32.mrb[0].mxu0
      %4291 = vdwg.mxu0
      %v4292 = vadd.f32 %v4199, %v4284
      %v4293 = vadd.f32 %v4200, %v4289
      %s4294 = scalar_lea.vmem %s3, 368
      %v4295 = vld [vmem:[%s4294] sm:$0xff]
      %v4296 = vld [vmem:[%s4294 + $0x8] sm:$0xff]
      %4297 = vrot.lane.b32.xlu0 %v2543, 61
      %v4298 = vpop.permute.xlu0 %4297
      %4299 = vrot.lane.b32.xlu0 %v2544, 61
      %v4300 = vpop.permute.xlu0 %4299
      %v4301 = vsel %vm2005, %v4298, %v4300
      %v4303 = vsel %vm2557, %v4295, 0
      %v4306 = vsel %vm2557, %v4296, 0
      %v4308 = vsel %vm2564, %v4301, 0
      %4310 = vmatprep.subr.mxu0 0.0
      %4311 = vmatpush1.msra.mxu0 %v4308
      %4312 = vmatprep.subr.mxu0 0.0
      %4313 = vmatpush1.msra.mxu0 0.0
      %4314 = vmatprep.subr.mxu0 0.0
      %4315 = vmatpush1.msra.mxu0 0.0
      %4316 = vmatprep.subr.mxu0 0.0
      %4317 = vmatpush1.msra.mxu0 0.0
      %4318 = vmatprep.subr.mxu0 0.0
      %4319 = vmatpush1.msra.mxu0 0.0
      %4320 = vmatprep.subr.mxu0 0.0
      %4321 = vmatpush1.msra.mxu0 0.0
      %4322 = vmatprep.subr.mxu0 0.0
      %4323 = vmatpush1.msra.mxu0 0.0
      %4324 = vmatprep.subr.mxu0 0.0
      %4325 = vmatpush1.msra.mxu0 0.0
      %4326 = vmatprep.subr.mxu0 0.0
      %4327 = vmatpush1.msra.mxu0 0.0
      %4328 = vmatprep.subr.mxu0 0.0
      %4329 = vmatpush1.msra.mxu0 0.0
      %4330 = vmatprep.subr.mxu0 0.0
      %4331 = vmatpush1.msra.mxu0 0.0
      %4332 = vmatprep.subr.mxu0 0.0
      %4333 = vmatpush1.msra.mxu0 0.0
      %4334 = vmatprep.subr.mxu0 0.0
      %4335 = vmatpush1.msra.mxu0 0.0
      %4336 = vmatprep.subr.mxu0 0.0
      %4337 = vmatpush1.msra.mxu0 0.0
      %4338 = vmatprep.subr.mxu0 0.0
      %4339 = vmatpush1.msra.mxu0 0.0
      %4340 = vmatprep.subr.mxu0 0.0
      %4341 = vmatpush1.msra.mxu0 0.0
      %4342 = vmatprep.subr.mxu0 0.0
      %4343 = vmatpush1.msra.mxu0 0.0
      %4344 = vmatprep.subr.mxu0 0.0
      %4345 = vmatpush1.msra.mxu0 0.0
      %4346 = vmatprep.subr.mxu0 0.0
      %4347 = vmatpush1.msra.mxu0 0.0
      %4348 = vmatprep.subr.mxu0 0.0
      %4349 = vmatpush1.msra.mxu0 0.0
      %4350 = vmatprep.subr.mxu0 0.0
      %4351 = vmatpush1.msra.mxu0 0.0
      %4352 = vmatprep.subr.mxu0 0.0
      %4353 = vmatpush1.msra.mxu0 0.0
      %4354 = vmatprep.subr.mxu0 0.0
      %4355 = vmatpush1.msra.mxu0 0.0
      %4356 = vmatprep.subr.mxu0 0.0
      %4357 = vmatpush1.msra.mxu0 0.0
      %4358 = vmatprep.subr.mxu0 0.0
      %4359 = vmatpush1.msra.mxu0 0.0
      %4360 = vmatprep.subr.mxu0 0.0
      %4361 = vmatpush1.msra.mxu0 0.0
      %4362 = vmatprep.subr.mxu0 0.0
      %4363 = vmatpush1.msra.mxu0 0.0
      %4364 = vmatprep.subr.mxu0 0.0
      %4365 = vmatpush1.msra.mxu0 0.0
      %4366 = vmatprep.subr.mxu0 0.0
      %4367 = vmatpush1.msra.mxu0 0.0
      %4368 = vmatprep.subr.mxu0 0.0
      %4369 = vmatpush1.msra.mxu0 0.0
      %4370 = vmatprep.subr.mxu0 0.0
      %4371 = vmatpush1.msra.mxu0 0.0
      %4372 = vmatprep.subr.mxu0 0.0
      %4373 = vmatpush1.msra.mxu0 0.0
      %4374 = vmatprep.mubr.f32.mxu0 0.0
      %4375 = vmatmul.mubr.f32.gmra.mrb[0].mxu0 %v4303
      %v4376 = vpop.f32.mrb[0].mxu0
      %v4377 = vadd.f32 0.0, %v4376
      %v4378 = vpop.f32.mrb[0].mxu0
      %4379 = vmatprep.mubr.f32.mxu0 0.0
      %4380 = vmatmul.mubr.f32.gmra.mrb[0].mxu0 %v4306
      %v4381 = vpop.f32.mrb[0].mxu0
      %v4382 = vadd.f32 0.0, %v4381
      %v4383 = vpop.f32.mrb[0].mxu0
      %4384 = vdwg.mxu0
      %v4385 = vadd.f32 %v4292, %v4377
      %v4386 = vadd.f32 %v4293, %v4382
      %s4387 = scalar_lea.vmem %s3, 64
      %v4388 = vld [vmem:[%s4387] sm:$0xff]
      %v4389 = vld [vmem:[%s4387 + $0x8] sm:$0xff]
      %s4390 = scalar_lea.vmem %s3, 144
      %v4391 = vld [vmem:[%s4390] sm:$0xff]
      %v4392 = vld [vmem:[%s4390 + $0x8] sm:$0xff]
      %4393 = vrot.lane.b32.xlu0 %v2543, 108
      %v4394 = vpop.permute.xlu0 %4393
      %4395 = vrot.lane.b32.xlu0 %v2544, 108
      %v4396 = vpop.permute.xlu0 %4395
      %v4397 = vsel %vm2096, %v4394, %v4396
      %v4399 = vsel %vm2557, %v4391, 0
      %v4402 = vsel %vm2557, %v4392, 0
      %v4404 = vsel %vm2564, %v4397, 0
      %4406 = vmatprep.subr.mxu0 0.0
      %4407 = vmatpush1.msra.mxu0 %v4404
      %4408 = vmatprep.subr.mxu0 0.0
      %4409 = vmatpush1.msra.mxu0 0.0
      %4410 = vmatprep.subr.mxu0 0.0
      %4411 = vmatpush1.msra.mxu0 0.0
      %4412 = vmatprep.subr.mxu0 0.0
      %4413 = vmatpush1.msra.mxu0 0.0
      %4414 = vmatprep.subr.mxu0 0.0
      %4415 = vmatpush1.msra.mxu0 0.0
      %4416 = vmatprep.subr.mxu0 0.0
      %4417 = vmatpush1.msra.mxu0 0.0
      %4418 = vmatprep.subr.mxu0 0.0
      %4419 = vmatpush1.msra.mxu0 0.0
      %4420 = vmatprep.subr.mxu0 0.0
      %4421 = vmatpush1.msra.mxu0 0.0
      %4422 = vmatprep.subr.mxu0 0.0
      %4423 = vmatpush1.msra.mxu0 0.0
      %4424 = vmatprep.subr.mxu0 0.0
      %4425 = vmatpush1.msra.mxu0 0.0
      %4426 = vmatprep.subr.mxu0 0.0
      %4427 = vmatpush1.msra.mxu0 0.0
      %4428 = vmatprep.subr.mxu0 0.0
      %4429 = vmatpush1.msra.mxu0 0.0
      %4430 = vmatprep.subr.mxu0 0.0
      %4431 = vmatpush1.msra.mxu0 0.0
      %4432 = vmatprep.subr.mxu0 0.0
      %4433 = vmatpush1.msra.mxu0 0.0
      %4434 = vmatprep.subr.mxu0 0.0
      %4435 = vmatpush1.msra.mxu0 0.0
      %4436 = vmatprep.subr.mxu0 0.0
      %4437 = vmatpush1.msra.mxu0 0.0
      %4438 = vmatprep.subr.mxu0 0.0
      %4439 = vmatpush1.msra.mxu0 0.0
      %4440 = vmatprep.subr.mxu0 0.0
      %4441 = vmatpush1.msra.mxu0 0.0
      %4442 = vmatprep.subr.mxu0 0.0
      %4443 = vmatpush1.msra.mxu0 0.0
      %4444 = vmatprep.subr.mxu0 0.0
      %4445 = vmatpush1.msra.mxu0 0.0
      %4446 = vmatprep.subr.mxu0 0.0
      %4447 = vmatpush1.msra.mxu0 0.0
      %4448 = vmatprep.subr.mxu0 0.0
      %4449 = vmatpush1.msra.mxu0 0.0
      %4450 = vmatprep.subr.mxu0 0.0
      %4451 = vmatpush1.msra.mxu0 0.0
      %4452 = vmatprep.subr.mxu0 0.0
      %4453 = vmatpush1.msra.mxu0 0.0
      %4454 = vmatprep.subr.mxu0 0.0
      %4455 = vmatpush1.msra.mxu0 0.0
      %4456 = vmatprep.subr.mxu0 0.0
      %4457 = vmatpush1.msra.mxu0 0.0
      %4458 = vmatprep.subr.mxu0 0.0
      %4459 = vmatpush1.msra.mxu0 0.0
      %4460 = vmatprep.subr.mxu0 0.0
      %4461 = vmatpush1.msra.mxu0 0.0
      %4462 = vmatprep.subr.mxu0 0.0
      %4463 = vmatpush1.msra.mxu0 0.0
      %4464 = vmatprep.subr.mxu0 0.0
      %4465 = vmatpush1.msra.mxu0 0.0
      %4466 = vmatprep.subr.mxu0 0.0
      %4467 = vmatpush1.msra.mxu0 0.0
      %4468 = vmatprep.subr.mxu0 0.0
      %4469 = vmatpush1.msra.mxu0 0.0
      %4470 = vmatprep.mubr.f32.mxu0 0.0
      %4471 = vmatmul.mubr.f32.gmra.mrb[0].mxu0 %v4399
      %v4472 = vpop.f32.mrb[0].mxu0
      %v4473 = vadd.f32 0.0, %v4472
      %v4474 = vpop.f32.mrb[0].mxu0
      %4475 = vmatprep.mubr.f32.mxu0 0.0
      %4476 = vmatmul.mubr.f32.gmra.mrb[0].mxu0 %v4402
      %v4477 = vpop.f32.mrb[0].mxu0
      %v4478 = vadd.f32 0.0, %v4477
      %v4479 = vpop.f32.mrb[0].mxu0
      %4480 = vdwg.mxu0
      %4481 = vrot.lane.b32.xlu0 %v2543, 124
      %v4482 = vpop.permute.xlu0 %4481
      %4483 = vrot.lane.b32.xlu0 %v2544, 124
      %v4484 = vpop.permute.xlu0 %4483
      %v4485 = vsel %vm2180, %v4482, %v4484
      %v4487 = vsel %vm2557, %v4388, 0
      %v4490 = vsel %vm2557, %v4389, 0
      %v4492 = vsel %vm2564, %v4485, 0
      %4494 = vmatprep.subr.mxu0 0.0
      %4495 = vmatpush1.msra.mxu0 %v4492
      %4496 = vmatprep.subr.mxu0 0.0
      %4497 = vmatpush1.msra.mxu0 0.0
      %4498 = vmatprep.subr.mxu0 0.0
      %4499 = vmatpush1.msra.mxu0 0.0
      %4500 = vmatprep.subr.mxu0 0.0
      %4501 = vmatpush1.msra.mxu0 0.0
      %4502 = vmatprep.subr.mxu0 0.0
      %4503 = vmatpush1.msra.mxu0 0.0
      %4504 = vmatprep.subr.mxu0 0.0
      %4505 = vmatpush1.msra.mxu0 0.0
      %4506 = vmatprep.subr.mxu0 0.0
      %4507 = vmatpush1.msra.mxu0 0.0
      %4508 = vmatprep.subr.mxu0 0.0
      %4509 = vmatpush1.msra.mxu0 0.0
      %4510 = vmatprep.subr.mxu0 0.0
      %4511 = vmatpush1.msra.mxu0 0.0
      %4512 = vmatprep.subr.mxu0 0.0
      %4513 = vmatpush1.msra.mxu0 0.0
      %4514 = vmatprep.subr.mxu0 0.0
      %4515 = vmatpush1.msra.mxu0 0.0
      %4516 = vmatprep.subr.mxu0 0.0
      %4517 = vmatpush1.msra.mxu0 0.0
      %4518 = vmatprep.subr.mxu0 0.0
      %4519 = vmatpush1.msra.mxu0 0.0
      %4520 = vmatprep.subr.mxu0 0.0
      %4521 = vmatpush1.msra.mxu0 0.0
      %4522 = vmatprep.subr.mxu0 0.0
      %4523 = vmatpush1.msra.mxu0 0.0
      %4524 = vmatprep.subr.mxu0 0.0
      %4525 = vmatpush1.msra.mxu0 0.0
      %4526 = vmatprep.subr.mxu0 0.0
      %4527 = vmatpush1.msra.mxu0 0.0
      %4528 = vmatprep.subr.mxu0 0.0
      %4529 = vmatpush1.msra.mxu0 0.0
      %4530 = vmatprep.subr.mxu0 0.0
      %4531 = vmatpush1.msra.mxu0 0.0
      %4532 = vmatprep.subr.mxu0 0.0
      %4533 = vmatpush1.msra.mxu0 0.0
      %4534 = vmatprep.subr.mxu0 0.0
      %4535 = vmatpush1.msra.mxu0 0.0
      %4536 = vmatprep.subr.mxu0 0.0
      %4537 = vmatpush1.msra.mxu0 0.0
      %4538 = vmatprep.subr.mxu0 0.0
      %4539 = vmatpush1.msra.mxu0 0.0
      %4540 = vmatprep.subr.mxu0 0.0
      %4541 = vmatpush1.msra.mxu0 0.0
      %4542 = vmatprep.subr.mxu0 0.0
      %4543 = vmatpush1.msra.mxu0 0.0
      %4544 = vmatprep.subr.mxu0 0.0
      %4545 = vmatpush1.msra.mxu0 0.0
      %4546 = vmatprep.subr.mxu0 0.0
      %4547 = vmatpush1.msra.mxu0 0.0
      %4548 = vmatprep.subr.mxu0 0.0
      %4549 = vmatpush1.msra.mxu0 0.0
      %4550 = vmatprep.subr.mxu0 0.0
      %4551 = vmatpush1.msra.mxu0 0.0
      %4552 = vmatprep.subr.mxu0 0.0
      %4553 = vmatpush1.msra.mxu0 0.0
      %4554 = vmatprep.subr.mxu0 0.0
      %4555 = vmatpush1.msra.mxu0 0.0
      %4556 = vmatprep.subr.mxu0 0.0
      %4557 = vmatpush1.msra.mxu0 0.0
      %4558 = vmatprep.mubr.f32.mxu0 0.0
      %4559 = vmatmul.mubr.f32.gmra.mrb[0].mxu0 %v4487
      %v4560 = vpop.f32.mrb[0].mxu0
      %v4561 = vadd.f32 %v4473, %v4560
      %v4562 = vpop.f32.mrb[0].mxu0
      %4563 = vmatprep.mubr.f32.mxu0 0.0
      %4564 = vmatmul.mubr.f32.gmra.mrb[0].mxu0 %v4490
      %v4565 = vpop.f32.mrb[0].mxu0
      %v4566 = vadd.f32 %v4478, %v4565
      %v4567 = vpop.f32.mrb[0].mxu0
      %4568 = vdwg.mxu0
      %s4569 = scalar_lea.vmem %s3, 224
      %v4570 = vld [vmem:[%s4569] sm:$0xff]
      %v4571 = vld [vmem:[%s4569 + $0x8] sm:$0xff]
      %4572 = vrot.lane.b32.xlu0 %v2543, 92
      %v4573 = vpop.permute.xlu0 %4572
      %4574 = vrot.lane.b32.xlu0 %v2544, 92
      %v4575 = vpop.permute.xlu0 %4574
      %v4576 = vsel %vm2266, %v4573, %v4575
      %v4578 = vsel %vm2557, %v4570, 0
      %v4581 = vsel %vm2557, %v4571, 0
      %v4583 = vsel %vm2564, %v4576, 0
      %4585 = vmatprep.subr.mxu0 0.0
      %4586 = vmatpush1.msra.mxu0 %v4583
      %4587 = vmatprep.subr.mxu0 0.0
      %4588 = vmatpush1.msra.mxu0 0.0
      %4589 = vmatprep.subr.mxu0 0.0
      %4590 = vmatpush1.msra.mxu0 0.0
      %4591 = vmatprep.subr.mxu0 0.0
      %4592 = vmatpush1.msra.mxu0 0.0
      %4593 = vmatprep.subr.mxu0 0.0
      %4594 = vmatpush1.msra.mxu0 0.0
      %4595 = vmatprep.subr.mxu0 0.0
      %4596 = vmatpush1.msra.mxu0 0.0
      %4597 = vmatprep.subr.mxu0 0.0
      %4598 = vmatpush1.msra.mxu0 0.0
      %4599 = vmatprep.subr.mxu0 0.0
      %4600 = vmatpush1.msra.mxu0 0.0
      %4601 = vmatprep.subr.mxu0 0.0
      %4602 = vmatpush1.msra.mxu0 0.0
      %4603 = vmatprep.subr.mxu0 0.0
      %4604 = vmatpush1.msra.mxu0 0.0
      %4605 = vmatprep.subr.mxu0 0.0
      %4606 = vmatpush1.msra.mxu0 0.0
      %4607 = vmatprep.subr.mxu0 0.0
      %4608 = vmatpush1.msra.mxu0 0.0
      %4609 = vmatprep.subr.mxu0 0.0
      %4610 = vmatpush1.msra.mxu0 0.0
      %4611 = vmatprep.subr.mxu0 0.0
      %4612 = vmatpush1.msra.mxu0 0.0
      %4613 = vmatprep.subr.mxu0 0.0
      %4614 = vmatpush1.msra.mxu0 0.0
      %4615 = vmatprep.subr.mxu0 0.0
      %4616 = vmatpush1.msra.mxu0 0.0
      %4617 = vmatprep.subr.mxu0 0.0
      %4618 = vmatpush1.msra.mxu0 0.0
      %4619 = vmatprep.subr.mxu0 0.0
      %4620 = vmatpush1.msra.mxu0 0.0
      %4621 = vmatprep.subr.mxu0 0.0
      %4622 = vmatpush1.msra.mxu0 0.0
      %4623 = vmatprep.subr.mxu0 0.0
      %4624 = vmatpush1.msra.mxu0 0.0
      %4625 = vmatprep.subr.mxu0 0.0
      %4626 = vmatpush1.msra.mxu0 0.0
      %4627 = vmatprep.subr.mxu0 0.0
      %4628 = vmatpush1.msra.mxu0 0.0
      %4629 = vmatprep.subr.mxu0 0.0
      %4630 = vmatpush1.msra.mxu0 0.0
      %4631 = vmatprep.subr.mxu0 0.0
      %4632 = vmatpush1.msra.mxu0 0.0
      %4633 = vmatprep.subr.mxu0 0.0
      %4634 = vmatpush1.msra.mxu0 0.0
      %4635 = vmatprep.subr.mxu0 0.0
      %4636 = vmatpush1.msra.mxu0 0.0
      %4637 = vmatprep.subr.mxu0 0.0
      %4638 = vmatpush1.msra.mxu0 0.0
      %4639 = vmatprep.subr.mxu0 0.0
      %4640 = vmatpush1.msra.mxu0 0.0
      %4641 = vmatprep.subr.mxu0 0.0
      %4642 = vmatpush1.msra.mxu0 0.0
      %4643 = vmatprep.subr.mxu0 0.0
      %4644 = vmatpush1.msra.mxu0 0.0
      %4645 = vmatprep.subr.mxu0 0.0
      %4646 = vmatpush1.msra.mxu0 0.0
      %4647 = vmatprep.subr.mxu0 0.0
      %4648 = vmatpush1.msra.mxu0 0.0
      %4649 = vmatprep.mubr.f32.mxu0 0.0
      %4650 = vmatmul.mubr.f32.gmra.mrb[0].mxu0 %v4578
      %v4651 = vpop.f32.mrb[0].mxu0
      %v4652 = vadd.f32 0.0, %v4651
      %v4653 = vpop.f32.mrb[0].mxu0
      %4654 = vmatprep.mubr.f32.mxu0 0.0
      %4655 = vmatmul.mubr.f32.gmra.mrb[0].mxu0 %v4581
      %v4656 = vpop.f32.mrb[0].mxu0
      %v4657 = vadd.f32 0.0, %v4656
      %v4658 = vpop.f32.mrb[0].mxu0
      %4659 = vdwg.mxu0
      %v4660 = vadd.f32 %v4561, %v4652
      %v4661 = vadd.f32 %v4566, %v4657
      %s4662 = scalar_lea.vmem %s3, 304
      %v4663 = vld [vmem:[%s4662] sm:$0xff]
      %v4664 = vld [vmem:[%s4662 + $0x8] sm:$0xff]
      %4665 = vrot.lane.b32.xlu0 %v2543, 76
      %v4666 = vpop.permute.xlu0 %4665
      %4667 = vrot.lane.b32.xlu0 %v2544, 76
      %v4668 = vpop.permute.xlu0 %4667
      %v4669 = vsel %vm2354, %v4666, %v4668
      %v4671 = vsel %vm2557, %v4663, 0
      %v4674 = vsel %vm2557, %v4664, 0
      %v4676 = vsel %vm2564, %v4669, 0
      %4678 = vmatprep.subr.mxu0 0.0
      %4679 = vmatpush1.msra.mxu0 %v4676
      %4680 = vmatprep.subr.mxu0 0.0
      %4681 = vmatpush1.msra.mxu0 0.0
      %4682 = vmatprep.subr.mxu0 0.0
      %4683 = vmatpush1.msra.mxu0 0.0
      %4684 = vmatprep.subr.mxu0 0.0
      %4685 = vmatpush1.msra.mxu0 0.0
      %4686 = vmatprep.subr.mxu0 0.0
      %4687 = vmatpush1.msra.mxu0 0.0
      %4688 = vmatprep.subr.mxu0 0.0
      %4689 = vmatpush1.msra.mxu0 0.0
      %4690 = vmatprep.subr.mxu0 0.0
      %4691 = vmatpush1.msra.mxu0 0.0
      %4692 = vmatprep.subr.mxu0 0.0
      %4693 = vmatpush1.msra.mxu0 0.0
      %4694 = vmatprep.subr.mxu0 0.0
      %4695 = vmatpush1.msra.mxu0 0.0
      %4696 = vmatprep.subr.mxu0 0.0
      %4697 = vmatpush1.msra.mxu0 0.0
      %4698 = vmatprep.subr.mxu0 0.0
      %4699 = vmatpush1.msra.mxu0 0.0
      %4700 = vmatprep.subr.mxu0 0.0
      %4701 = vmatpush1.msra.mxu0 0.0
      %4702 = vmatprep.subr.mxu0 0.0
      %4703 = vmatpush1.msra.mxu0 0.0
      %4704 = vmatprep.subr.mxu0 0.0
      %4705 = vmatpush1.msra.mxu0 0.0
      %4706 = vmatprep.subr.mxu0 0.0
      %4707 = vmatpush1.msra.mxu0 0.0
      %4708 = vmatprep.subr.mxu0 0.0
      %4709 = vmatpush1.msra.mxu0 0.0
      %4710 = vmatprep.subr.mxu0 0.0
      %4711 = vmatpush1.msra.mxu0 0.0
      %4712 = vmatprep.subr.mxu0 0.0
      %4713 = vmatpush1.msra.mxu0 0.0
      %4714 = vmatprep.subr.mxu0 0.0
      %4715 = vmatpush1.msra.mxu0 0.0
      %4716 = vmatprep.subr.mxu0 0.0
      %4717 = vmatpush1.msra.mxu0 0.0
      %4718 = vmatprep.subr.mxu0 0.0
      %4719 = vmatpush1.msra.mxu0 0.0
      %4720 = vmatprep.subr.mxu0 0.0
      %4721 = vmatpush1.msra.mxu0 0.0
      %4722 = vmatprep.subr.mxu0 0.0
      %4723 = vmatpush1.msra.mxu0 0.0
      %4724 = vmatprep.subr.mxu0 0.0
      %4725 = vmatpush1.msra.mxu0 0.0
      %4726 = vmatprep.subr.mxu0 0.0
      %4727 = vmatpush1.msra.mxu0 0.0
      %4728 = vmatprep.subr.mxu0 0.0
      %4729 = vmatpush1.msra.mxu0 0.0
      %4730 = vmatprep.subr.mxu0 0.0
      %4731 = vmatpush1.msra.mxu0 0.0
      %4732 = vmatprep.subr.mxu0 0.0
      %4733 = vmatpush1.msra.mxu0 0.0
      %4734 = vmatprep.subr.mxu0 0.0
      %4735 = vmatpush1.msra.mxu0 0.0
      %4736 = vmatprep.subr.mxu0 0.0
      %4737 = vmatpush1.msra.mxu0 0.0
      %4738 = vmatprep.subr.mxu0 0.0
      %4739 = vmatpush1.msra.mxu0 0.0
      %4740 = vmatprep.subr.mxu0 0.0
      %4741 = vmatpush1.msra.mxu0 0.0
      %4742 = vmatprep.mubr.f32.mxu0 0.0
      %4743 = vmatmul.mubr.f32.gmra.mrb[0].mxu0 %v4671
      %v4744 = vpop.f32.mrb[0].mxu0
      %v4745 = vadd.f32 0.0, %v4744
      %v4746 = vpop.f32.mrb[0].mxu0
      %4747 = vmatprep.mubr.f32.mxu0 0.0
      %4748 = vmatmul.mubr.f32.gmra.mrb[0].mxu0 %v4674
      %v4749 = vpop.f32.mrb[0].mxu0
      %v4750 = vadd.f32 0.0, %v4749
      %v4751 = vpop.f32.mrb[0].mxu0
      %4752 = vdwg.mxu0
      %v4753 = vadd.f32 %v4660, %v4745
      %v4754 = vadd.f32 %v4661, %v4750
      %s4755 = scalar_lea.vmem %s3, 384
      %v4756 = vld [vmem:[%s4755] sm:$0xff]
      %v4757 = vld [vmem:[%s4755 + $0x8] sm:$0xff]
      %4758 = vrot.lane.b32.xlu0 %v2543, 60
      %v4759 = vpop.permute.xlu0 %4758
      %4760 = vrot.lane.b32.xlu0 %v2544, 60
      %v4761 = vpop.permute.xlu0 %4760
      %v4762 = vsel %vm2444, %v4759, %v4761
      %v4764 = vsel %vm2557, %v4756, 0
      %v4767 = vsel %vm2557, %v4757, 0
      %v4769 = vsel %vm2564, %v4762, 0
      %4771 = vmatprep.subr.mxu0 0.0
      %4772 = vmatpush1.msra.mxu0 %v4769
      %4773 = vmatprep.subr.mxu0 0.0
      %4774 = vmatpush1.msra.mxu0 0.0
      %4775 = vmatprep.subr.mxu0 0.0
      %4776 = vmatpush1.msra.mxu0 0.0
      %4777 = vmatprep.subr.mxu0 0.0
      %4778 = vmatpush1.msra.mxu0 0.0
      %4779 = vmatprep.subr.mxu0 0.0
      %4780 = vmatpush1.msra.mxu0 0.0
      %4781 = vmatprep.subr.mxu0 0.0
      %4782 = vmatpush1.msra.mxu0 0.0
      %4783 = vmatprep.subr.mxu0 0.0
      %4784 = vmatpush1.msra.mxu0 0.0
      %4785 = vmatprep.subr.mxu0 0.0
      %4786 = vmatpush1.msra.mxu0 0.0
      %4787 = vmatprep.subr.mxu0 0.0
      %4788 = vmatpush1.msra.mxu0 0.0
      %4789 = vmatprep.subr.mxu0 0.0
      %4790 = vmatpush1.msra.mxu0 0.0
      %4791 = vmatprep.subr.mxu0 0.0
      %4792 = vmatpush1.msra.mxu0 0.0
      %4793 = vmatprep.subr.mxu0 0.0
      %4794 = vmatpush1.msra.mxu0 0.0
      %4795 = vmatprep.subr.mxu0 0.0
      %4796 = vmatpush1.msra.mxu0 0.0
      %4797 = vmatprep.subr.mxu0 0.0
      %4798 = vmatpush1.msra.mxu0 0.0
      %4799 = vmatprep.subr.mxu0 0.0
      %4800 = vmatpush1.msra.mxu0 0.0
      %4801 = vmatprep.subr.mxu0 0.0
      %4802 = vmatpush1.msra.mxu0 0.0
      %4803 = vmatprep.subr.mxu0 0.0
      %4804 = vmatpush1.msra.mxu0 0.0
      %4805 = vmatprep.subr.mxu0 0.0
      %4806 = vmatpush1.msra.mxu0 0.0
      %4807 = vmatprep.subr.mxu0 0.0
      %4808 = vmatpush1.msra.mxu0 0.0
      %4809 = vmatprep.subr.mxu0 0.0
      %4810 = vmatpush1.msra.mxu0 0.0
      %4811 = vmatprep.subr.mxu0 0.0
      %4812 = vmatpush1.msra.mxu0 0.0
      %4813 = vmatprep.subr.mxu0 0.0
      %4814 = vmatpush1.msra.mxu0 0.0
      %4815 = vmatprep.subr.mxu0 0.0
      %4816 = vmatpush1.msra.mxu0 0.0
      %4817 = vmatprep.subr.mxu0 0.0
      %4818 = vmatpush1.msra.mxu0 0.0
      %4819 = vmatprep.subr.mxu0 0.0
      %4820 = vmatpush1.msra.mxu0 0.0
      %4821 = vmatprep.subr.mxu0 0.0
      %4822 = vmatpush1.msra.mxu0 0.0
      %4823 = vmatprep.subr.mxu0 0.0
      %4824 = vmatpush1.msra.mxu0 0.0
      %4825 = vmatprep.subr.mxu0 0.0
      %4826 = vmatpush1.msra.mxu0 0.0
      %4827 = vmatprep.subr.mxu0 0.0
      %4828 = vmatpush1.msra.mxu0 0.0
      %4829 = vmatprep.subr.mxu0 0.0
      %4830 = vmatpush1.msra.mxu0 0.0
      %4831 = vmatprep.subr.mxu0 0.0
      %4832 = vmatpush1.msra.mxu0 0.0
      %4833 = vmatprep.subr.mxu0 0.0
      %4834 = vmatpush1.msra.mxu0 0.0
      %4835 = vmatprep.mubr.f32.mxu0 0.0
      %4836 = vmatmul.mubr.f32.gmra.mrb[0].mxu0 %v4764
      %v4837 = vpop.f32.mrb[0].mxu0
      %v4838 = vadd.f32 0.0, %v4837
      %v4839 = vpop.f32.mrb[0].mxu0
      %4840 = vmatprep.mubr.f32.mxu0 0.0
      %4841 = vmatmul.mubr.f32.gmra.mrb[0].mxu0 %v4767
      %v4842 = vpop.f32.mrb[0].mxu0
      %v4843 = vadd.f32 0.0, %v4842
      %v4844 = vpop.f32.mrb[0].mxu0
      %4845 = vdwg.mxu0
      %v4846 = vadd.f32 %v4753, %v4838
      %v4847 = vadd.f32 %v4754, %v4843
      %v4848 = vadd.f32 %v3002, %v3463
      %v4849 = vadd.f32 %v3003, %v3464
      %v4850 = vadd.f32 %v3924, %v4385
      %v4851 = vadd.f32 %v3925, %v4386
      %v4852 = vadd.f32 %v4848, %v4850
      %v4853 = vadd.f32 %v4849, %v4851
      %v4854 = vadd.f32 %v4852, %v4846
      %v4855 = vadd.f32 %v4853, %v4847
      %v4856 = vld [vmem:[%s4] sm:$0xff]
      %v4857 = vld [vmem:[%s4 + $0x8] sm:$0xff]
      %4859 = vset.pattern.permute.xlu0 0
      %4860 = vperm.xlu0 %4859, %v4856
      %v4861 = vpop.permute.xlu0 %4860
      %4864 = vset.pattern.permute.xlu0 0
      %4865 = vperm.xlu0 %4864, %v4857
      %v4866 = vpop.permute.xlu0 %4865
      %v4868 = vadd.f32 %v4854, %v4861
      %v4869 = vadd.f32 %v4855, %v4866
      %v4870 = vmax.f32 %v4868, 0.0
      %v4871 = vmax.f32 %v4869, 0.0
      %v4872 = vlaneseq
      %v4873 = vand.u32 %v4872, 127
      %vm4874 = vcmp.lt.s32.totalorder %v4873, 0
      %v4875 = vsub.s32 0, %v4873
      %v4876 = vsel %vm4874, %v4875, %v4873
      %v4877 = vshrl.u32 %v4876, 4
      %v4878 = vand.u32 %v4876, 15
      %v4879 = vsub.s32 0, %v4878
      %v4880 = vsel %vm4874, %v4879, %v4878
      %vm4881 = vcmp.ne.s32.totalorder %v4880, 0
      %vm4882 = vcmp.lt.s32.totalorder %v4880, 0
      %vm4883 = vmand %vm4882, %vm4881
      %v4884 = vadd.s32 %v4880, 16
      %v4885 = vsel %vm4883, %v4884, %v4880
      %vm4886 = vcmp.lt.s32.totalorder %v4885, 8
      %v4887 = vsel %vm4886, 1, 0
      %v4888 = vcvt.s32.f32 %v4887
      %v4889 = vmul.f32 %v4870, %v4888
      %v4890 = vmul.f32 %v4871, %v4888
      %4893 = vrot.lane.b32.xlu0 %v4889, 68
      %v4894 = vpop.permute.xlu0 %4893
      %4895 = vrot.lane.b32.xlu0 %v4890, 68
      %v4896 = vpop.permute.xlu0 %4895
      %vm4899 = vcmask 556032
      %v4900 = vsel %vm4899, 0.0, %v4894
      %v4901 = vsel %vm4899, 0.0, %v4896
      %v4902 = vsel %vm4899, %v4894, 0.0
      %v4903 = vsel %vm4899, %v4896, 0.0
      %v4904 = vld [vmem:[%s5] sm:$0x3f]
      %s4905 = scalar_lea.vmem %s5, 40
      %v4906 = vld [vmem:[%s4905] sm:$0x3f]
      %4911 = vrot.lane.b32.xlu0 %v4900, 112
      %v4912 = vpop.permute.xlu0 %4911
      %4913 = vrot.lane.b32.xlu0 %v4902, 112
      %v4914 = vpop.permute.xlu0 %4913
      %4915 = vrot.lane.b32.xlu0 %v4901, 112
      %v4916 = vpop.permute.xlu0 %4915
      %4917 = vrot.lane.b32.xlu0 %v4903, 112
      %v4918 = vpop.permute.xlu0 %4917
      %v4919 = vsel %vm343, %v4912, %v4914
      %v4920 = vsel %vm343, %v4916, %v4918
      %vm4925 = vcmask 130048
      %v4927 = vsel %vm4925, %v4906, 0
      %4929 = vmatprep.subr.mxu0 %v4914
      %4930 = vmatpush1.msra.mxu0 %v4919
      %4931 = vmatprep.subr.mxu0 %v4918
      %4932 = vmatpush1.msra.mxu0 %v4920
      %4933 = vmatprep.subr.mxu0 0.0
      %4934 = vmatpush1.msra.mxu0 0.0
      %4935 = vmatprep.subr.mxu0 0.0
      %4936 = vmatpush1.msra.mxu0 0.0
      %4937 = vmatprep.subr.mxu0 0.0
      %4938 = vmatpush1.msra.mxu0 0.0
      %4939 = vmatprep.subr.mxu0 0.0
      %4940 = vmatpush1.msra.mxu0 0.0
      %4941 = vmatprep.subr.mxu0 0.0
      %4942 = vmatpush1.msra.mxu0 0.0
      %4943 = vmatprep.subr.mxu0 0.0
      %4944 = vmatpush1.msra.mxu0 0.0
      %4945 = vmatprep.subr.mxu0 0.0
      %4946 = vmatpush1.msra.mxu0 0.0
      %4947 = vmatprep.subr.mxu0 0.0
      %4948 = vmatpush1.msra.mxu0 0.0
      %4949 = vmatprep.subr.mxu0 0.0
      %4950 = vmatpush1.msra.mxu0 0.0
      %4951 = vmatprep.subr.mxu0 0.0
      %4952 = vmatpush1.msra.mxu0 0.0
      %4953 = vmatprep.subr.mxu0 0.0
      %4954 = vmatpush1.msra.mxu0 0.0
      %4955 = vmatprep.subr.mxu0 0.0
      %4956 = vmatpush1.msra.mxu0 0.0
      %4957 = vmatprep.subr.mxu0 0.0
      %4958 = vmatpush1.msra.mxu0 0.0
      %4959 = vmatprep.subr.mxu0 0.0
      %4960 = vmatpush1.msra.mxu0 0.0
      %4961 = vmatprep.subr.mxu0 0.0
      %4962 = vmatpush1.msra.mxu0 0.0
      %4963 = vmatprep.subr.mxu0 0.0
      %4964 = vmatpush1.msra.mxu0 0.0
      %4965 = vmatprep.subr.mxu0 0.0
      %4966 = vmatpush1.msra.mxu0 0.0
      %4967 = vmatprep.subr.mxu0 0.0
      %4968 = vmatpush1.msra.mxu0 0.0
      %4969 = vmatprep.subr.mxu0 0.0
      %4970 = vmatpush1.msra.mxu0 0.0
      %4971 = vmatprep.subr.mxu0 0.0
      %4972 = vmatpush1.msra.mxu0 0.0
      %4973 = vmatprep.subr.mxu0 0.0
      %4974 = vmatpush1.msra.mxu0 0.0
      %4975 = vmatprep.subr.mxu0 0.0
      %4976 = vmatpush1.msra.mxu0 0.0
      %4977 = vmatprep.subr.mxu0 0.0
      %4978 = vmatpush1.msra.mxu0 0.0
      %4979 = vmatprep.subr.mxu0 0.0
      %4980 = vmatpush1.msra.mxu0 0.0
      %4981 = vmatprep.subr.mxu0 0.0
      %4982 = vmatpush1.msra.mxu0 0.0
      %4983 = vmatprep.subr.mxu0 0.0
      %4984 = vmatpush1.msra.mxu0 0.0
      %4985 = vmatprep.subr.mxu0 0.0
      %4986 = vmatpush1.msra.mxu0 0.0
      %4987 = vmatprep.subr.mxu0 0.0
      %4988 = vmatpush1.msra.mxu0 0.0
      %4989 = vmatprep.subr.mxu0 0.0
      %4990 = vmatpush1.msra.mxu0 0.0
      %4991 = vmatprep.subr.mxu0 0.0
      %4992 = vmatpush1.msra.mxu0 0.0
      %4993 = vmatprep.mubr.f32.mxu0 0.0
      %4994 = vmatmul.mubr.f32.gmra.mrb[0].mxu0 %v4927
      %v4995 = vpop.f32.mrb[0].mxu0
      %v4996 = vadd.f32 0.0, %v4995
      %v4997 = vpop.f32.mrb[0].mxu0
      %v4998 = vadd.f32 0.0, %v4997
      %4999 = vdwg.mxu0
      %v5001 = vsel %vm4925, %v4904, 0
      %5003 = vmatprep.subr.mxu0 %v4902
      %5004 = vmatpush1.msra.mxu0 %v4900
      %5005 = vmatprep.subr.mxu0 %v4903
      %5006 = vmatpush1.msra.mxu0 %v4901
      %5007 = vmatprep.subr.mxu0 0.0
      %5008 = vmatpush1.msra.mxu0 0.0
      %5009 = vmatprep.subr.mxu0 0.0
      %5010 = vmatpush1.msra.mxu0 0.0
      %5011 = vmatprep.subr.mxu0 0.0
      %5012 = vmatpush1.msra.mxu0 0.0
      %5013 = vmatprep.subr.mxu0 0.0
      %5014 = vmatpush1.msra.mxu0 0.0
      %5015 = vmatprep.subr.mxu0 0.0
      %5016 = vmatpush1.msra.mxu0 0.0
      %5017 = vmatprep.subr.mxu0 0.0
      %5018 = vmatpush1.msra.mxu0 0.0
      %5019 = vmatprep.subr.mxu0 0.0
      %5020 = vmatpush1.msra.mxu0 0.0
      %5021 = vmatprep.subr.mxu0 0.0
      %5022 = vmatpush1.msra.mxu0 0.0
      %5023 = vmatprep.subr.mxu0 0.0
      %5024 = vmatpush1.msra.mxu0 0.0
      %5025 = vmatprep.subr.mxu0 0.0
      %5026 = vmatpush1.msra.mxu0 0.0
      %5027 = vmatprep.subr.mxu0 0.0
      %5028 = vmatpush1.msra.mxu0 0.0
      %5029 = vmatprep.subr.mxu0 0.0
      %5030 = vmatpush1.msra.mxu0 0.0
      %5031 = vmatprep.subr.mxu0 0.0
      %5032 = vmatpush1.msra.mxu0 0.0
      %5033 = vmatprep.subr.mxu0 0.0
      %5034 = vmatpush1.msra.mxu0 0.0
      %5035 = vmatprep.subr.mxu0 0.0
      %5036 = vmatpush1.msra.mxu0 0.0
      %5037 = vmatprep.subr.mxu0 0.0
      %5038 = vmatpush1.msra.mxu0 0.0
      %5039 = vmatprep.subr.mxu0 0.0
      %5040 = vmatpush1.msra.mxu0 0.0
      %5041 = vmatprep.subr.mxu0 0.0
      %5042 = vmatpush1.msra.mxu0 0.0
      %5043 = vmatprep.subr.mxu0 0.0
      %5044 = vmatpush1.msra.mxu0 0.0
      %5045 = vmatprep.subr.mxu0 0.0
      %5046 = vmatpush1.msra.mxu0 0.0
      %5047 = vmatprep.subr.mxu0 0.0
      %5048 = vmatpush1.msra.mxu0 0.0
      %5049 = vmatprep.subr.mxu0 0.0
      %5050 = vmatpush1.msra.mxu0 0.0
      %5051 = vmatprep.subr.mxu0 0.0
      %5052 = vmatpush1.msra.mxu0 0.0
      %5053 = vmatprep.subr.mxu0 0.0
      %5054 = vmatpush1.msra.mxu0 0.0
      %5055 = vmatprep.subr.mxu0 0.0
      %5056 = vmatpush1.msra.mxu0 0.0
      %5057 = vmatprep.subr.mxu0 0.0
      %5058 = vmatpush1.msra.mxu0 0.0
      %5059 = vmatprep.subr.mxu0 0.0
      %5060 = vmatpush1.msra.mxu0 0.0
      %5061 = vmatprep.subr.mxu0 0.0
      %5062 = vmatpush1.msra.mxu0 0.0
      %5063 = vmatprep.subr.mxu0 0.0
      %5064 = vmatpush1.msra.mxu0 0.0
      %5065 = vmatprep.subr.mxu0 0.0
      %5066 = vmatpush1.msra.mxu0 0.0
      %5067 = vmatprep.mubr.f32.mxu0 0.0
      %5068 = vmatmul.mubr.f32.gmra.mrb[0].mxu0 %v5001
      %v5069 = vpop.f32.mrb[0].mxu0
      %v5070 = vadd.f32 %v4996, %v5069
      %v5071 = vpop.f32.mrb[0].mxu0
      %v5072 = vadd.f32 %v4998, %v5071
      %5073 = vdwg.mxu0
      %s5074 = scalar_lea.vmem %s5, 80
      %v5075 = vld [vmem:[%s5074] sm:$0x3f]
      %5076 = vrot.lane.b32.xlu0 %v4900, 96
      %v5077 = vpop.permute.xlu0 %5076
      %5078 = vrot.lane.b32.xlu0 %v4902, 96
      %v5079 = vpop.permute.xlu0 %5078
      %5080 = vrot.lane.b32.xlu0 %v4901, 96
      %v5081 = vpop.permute.xlu0 %5080
      %5082 = vrot.lane.b32.xlu0 %v4903, 96
      %v5083 = vpop.permute.xlu0 %5082
      %v5084 = vsel %vm509, %v5077, %v5079
      %v5085 = vsel %vm509, %v5081, %v5083
      %v5091 = vsel %vm4925, %v5075, 0
      %5093 = vmatprep.subr.mxu0 %v5079
      %5094 = vmatpush1.msra.mxu0 %v5084
      %5095 = vmatprep.subr.mxu0 %v5083
      %5096 = vmatpush1.msra.mxu0 %v5085
      %5097 = vmatprep.subr.mxu0 0.0
      %5098 = vmatpush1.msra.mxu0 0.0
      %5099 = vmatprep.subr.mxu0 0.0
      %5100 = vmatpush1.msra.mxu0 0.0
      %5101 = vmatprep.subr.mxu0 0.0
      %5102 = vmatpush1.msra.mxu0 0.0
      %5103 = vmatprep.subr.mxu0 0.0
      %5104 = vmatpush1.msra.mxu0 0.0
      %5105 = vmatprep.subr.mxu0 0.0
      %5106 = vmatpush1.msra.mxu0 0.0
      %5107 = vmatprep.subr.mxu0 0.0
      %5108 = vmatpush1.msra.mxu0 0.0
      %5109 = vmatprep.subr.mxu0 0.0
      %5110 = vmatpush1.msra.mxu0 0.0
      %5111 = vmatprep.subr.mxu0 0.0
      %5112 = vmatpush1.msra.mxu0 0.0
      %5113 = vmatprep.subr.mxu0 0.0
      %5114 = vmatpush1.msra.mxu0 0.0
      %5115 = vmatprep.subr.mxu0 0.0
      %5116 = vmatpush1.msra.mxu0 0.0
      %5117 = vmatprep.subr.mxu0 0.0
      %5118 = vmatpush1.msra.mxu0 0.0
      %5119 = vmatprep.subr.mxu0 0.0
      %5120 = vmatpush1.msra.mxu0 0.0
      %5121 = vmatprep.subr.mxu0 0.0
      %5122 = vmatpush1.msra.mxu0 0.0
      %5123 = vmatprep.subr.mxu0 0.0
      %5124 = vmatpush1.msra.mxu0 0.0
      %5125 = vmatprep.subr.mxu0 0.0
      %5126 = vmatpush1.msra.mxu0 0.0
      %5127 = vmatprep.subr.mxu0 0.0
      %5128 = vmatpush1.msra.mxu0 0.0
      %5129 = vmatprep.subr.mxu0 0.0
      %5130 = vmatpush1.msra.mxu0 0.0
      %5131 = vmatprep.subr.mxu0 0.0
      %5132 = vmatpush1.msra.mxu0 0.0
      %5133 = vmatprep.subr.mxu0 0.0
      %5134 = vmatpush1.msra.mxu0 0.0
      %5135 = vmatprep.subr.mxu0 0.0
      %5136 = vmatpush1.msra.mxu0 0.0
      %5137 = vmatprep.subr.mxu0 0.0
      %5138 = vmatpush1.msra.mxu0 0.0
      %5139 = vmatprep.subr.mxu0 0.0
      %5140 = vmatpush1.msra.mxu0 0.0
      %5141 = vmatprep.subr.mxu0 0.0
      %5142 = vmatpush1.msra.mxu0 0.0
      %5143 = vmatprep.subr.mxu0 0.0
      %5144 = vmatpush1.msra.mxu0 0.0
      %5145 = vmatprep.subr.mxu0 0.0
      %5146 = vmatpush1.msra.mxu0 0.0
      %5147 = vmatprep.subr.mxu0 0.0
      %5148 = vmatpush1.msra.mxu0 0.0
      %5149 = vmatprep.subr.mxu0 0.0
      %5150 = vmatpush1.msra.mxu0 0.0
      %5151 = vmatprep.subr.mxu0 0.0
      %5152 = vmatpush1.msra.mxu0 0.0
      %5153 = vmatprep.subr.mxu0 0.0
      %5154 = vmatpush1.msra.mxu0 0.0
      %5155 = vmatprep.subr.mxu0 0.0
      %5156 = vmatpush1.msra.mxu0 0.0
      %5157 = vmatprep.mubr.f32.mxu0 0.0
      %5158 = vmatmul.mubr.f32.gmra.mrb[0].mxu0 %v5091
      %v5159 = vpop.f32.mrb[0].mxu0
      %v5160 = vadd.f32 0.0, %v5159
      %v5161 = vpop.f32.mrb[0].mxu0
      %v5162 = vadd.f32 0.0, %v5161
      %5163 = vdwg.mxu0
      %v5164 = vadd.f32 %v5070, %v5160
      %v5165 = vadd.f32 %v5072, %v5162
      %s5166 = scalar_lea.vmem %s5, 120
      %v5167 = vld [vmem:[%s5166] sm:$0x3f]
      %5168 = vrot.lane.b32.xlu0 %v4900, 80
      %v5169 = vpop.permute.xlu0 %5168
      %5170 = vrot.lane.b32.xlu0 %v4902, 80
      %v5171 = vpop.permute.xlu0 %5170
      %5172 = vrot.lane.b32.xlu0 %v4901, 80
      %v5173 = vpop.permute.xlu0 %5172
      %5174 = vrot.lane.b32.xlu0 %v4903, 80
      %v5175 = vpop.permute.xlu0 %5174
      %v5176 = vsel %vm597, %v5169, %v5171
      %v5177 = vsel %vm597, %v5173, %v5175
      %v5183 = vsel %vm4925, %v5167, 0
      %5185 = vmatprep.subr.mxu0 %v5171
      %5186 = vmatpush1.msra.mxu0 %v5176
      %5187 = vmatprep.subr.mxu0 %v5175
      %5188 = vmatpush1.msra.mxu0 %v5177
      %5189 = vmatprep.subr.mxu0 0.0
      %5190 = vmatpush1.msra.mxu0 0.0
      %5191 = vmatprep.subr.mxu0 0.0
      %5192 = vmatpush1.msra.mxu0 0.0
      %5193 = vmatprep.subr.mxu0 0.0
      %5194 = vmatpush1.msra.mxu0 0.0
      %5195 = vmatprep.subr.mxu0 0.0
      %5196 = vmatpush1.msra.mxu0 0.0
      %5197 = vmatprep.subr.mxu0 0.0
      %5198 = vmatpush1.msra.mxu0 0.0
      %5199 = vmatprep.subr.mxu0 0.0
      %5200 = vmatpush1.msra.mxu0 0.0
      %5201 = vmatprep.subr.mxu0 0.0
      %5202 = vmatpush1.msra.mxu0 0.0
      %5203 = vmatprep.subr.mxu0 0.0
      %5204 = vmatpush1.msra.mxu0 0.0
      %5205 = vmatprep.subr.mxu0 0.0
      %5206 = vmatpush1.msra.mxu0 0.0
      %5207 = vmatprep.subr.mxu0 0.0
      %5208 = vmatpush1.msra.mxu0 0.0
      %5209 = vmatprep.subr.mxu0 0.0
      %5210 = vmatpush1.msra.mxu0 0.0
      %5211 = vmatprep.subr.mxu0 0.0
      %5212 = vmatpush1.msra.mxu0 0.0
      %5213 = vmatprep.subr.mxu0 0.0
      %5214 = vmatpush1.msra.mxu0 0.0
      %5215 = vmatprep.subr.mxu0 0.0
      %5216 = vmatpush1.msra.mxu0 0.0
      %5217 = vmatprep.subr.mxu0 0.0
      %5218 = vmatpush1.msra.mxu0 0.0
      %5219 = vmatprep.subr.mxu0 0.0
      %5220 = vmatpush1.msra.mxu0 0.0
      %5221 = vmatprep.subr.mxu0 0.0
      %5222 = vmatpush1.msra.mxu0 0.0
      %5223 = vmatprep.subr.mxu0 0.0
      %5224 = vmatpush1.msra.mxu0 0.0
      %5225 = vmatprep.subr.mxu0 0.0
      %5226 = vmatpush1.msra.mxu0 0.0
      %5227 = vmatprep.subr.mxu0 0.0
      %5228 = vmatpush1.msra.mxu0 0.0
      %5229 = vmatprep.subr.mxu0 0.0
      %5230 = vmatpush1.msra.mxu0 0.0
      %5231 = vmatprep.subr.mxu0 0.0
      %5232 = vmatpush1.msra.mxu0 0.0
      %5233 = vmatprep.subr.mxu0 0.0
      %5234 = vmatpush1.msra.mxu0 0.0
      %5235 = vmatprep.subr.mxu0 0.0
      %5236 = vmatpush1.msra.mxu0 0.0
      %5237 = vmatprep.subr.mxu0 0.0
      %5238 = vmatpush1.msra.mxu0 0.0
      %5239 = vmatprep.subr.mxu0 0.0
      %5240 = vmatpush1.msra.mxu0 0.0
      %5241 = vmatprep.subr.mxu0 0.0
      %5242 = vmatpush1.msra.mxu0 0.0
      %5243 = vmatprep.subr.mxu0 0.0
      %5244 = vmatpush1.msra.mxu0 0.0
      %5245 = vmatprep.subr.mxu0 0.0
      %5246 = vmatpush1.msra.mxu0 0.0
      %5247 = vmatprep.subr.mxu0 0.0
      %5248 = vmatpush1.msra.mxu0 0.0
      %5249 = vmatprep.mubr.f32.mxu0 0.0
      %5250 = vmatmul.mubr.f32.gmra.mrb[0].mxu0 %v5183
      %v5251 = vpop.f32.mrb[0].mxu0
      %v5252 = vadd.f32 0.0, %v5251
      %v5253 = vpop.f32.mrb[0].mxu0
      %v5254 = vadd.f32 0.0, %v5253
      %5255 = vdwg.mxu0
      %v5256 = vadd.f32 %v5164, %v5252
      %v5257 = vadd.f32 %v5165, %v5254
      %s5258 = scalar_lea.vmem %s5, 160
      %v5259 = vld [vmem:[%s5258] sm:$0x3f]
      %5260 = vrot.lane.b32.xlu0 %v4900, 64
      %v5261 = vpop.permute.xlu0 %5260
      %5262 = vrot.lane.b32.xlu0 %v4902, 64
      %v5263 = vpop.permute.xlu0 %5262
      %5264 = vrot.lane.b32.xlu0 %v4901, 64
      %v5265 = vpop.permute.xlu0 %5264
      %5266 = vrot.lane.b32.xlu0 %v4903, 64
      %v5267 = vpop.permute.xlu0 %5266
      %v5268 = vsel %vm688, %v5261, %v5263
      %v5269 = vsel %vm688, %v5265, %v5267
      %v5275 = vsel %vm4925, %v5259, 0
      %5277 = vmatprep.subr.mxu0 %v5263
      %5278 = vmatpush1.msra.mxu0 %v5268
      %5279 = vmatprep.subr.mxu0 %v5267
      %5280 = vmatpush1.msra.mxu0 %v5269
      %5281 = vmatprep.subr.mxu0 0.0
      %5282 = vmatpush1.msra.mxu0 0.0
      %5283 = vmatprep.subr.mxu0 0.0
      %5284 = vmatpush1.msra.mxu0 0.0
      %5285 = vmatprep.subr.mxu0 0.0
      %5286 = vmatpush1.msra.mxu0 0.0
      %5287 = vmatprep.subr.mxu0 0.0
      %5288 = vmatpush1.msra.mxu0 0.0
      %5289 = vmatprep.subr.mxu0 0.0
      %5290 = vmatpush1.msra.mxu0 0.0
      %5291 = vmatprep.subr.mxu0 0.0
      %5292 = vmatpush1.msra.mxu0 0.0
      %5293 = vmatprep.subr.mxu0 0.0
      %5294 = vmatpush1.msra.mxu0 0.0
      %5295 = vmatprep.subr.mxu0 0.0
      %5296 = vmatpush1.msra.mxu0 0.0
      %5297 = vmatprep.subr.mxu0 0.0
      %5298 = vmatpush1.msra.mxu0 0.0
      %5299 = vmatprep.subr.mxu0 0.0
      %5300 = vmatpush1.msra.mxu0 0.0
      %5301 = vmatprep.subr.mxu0 0.0
      %5302 = vmatpush1.msra.mxu0 0.0
      %5303 = vmatprep.subr.mxu0 0.0
      %5304 = vmatpush1.msra.mxu0 0.0
      %5305 = vmatprep.subr.mxu0 0.0
      %5306 = vmatpush1.msra.mxu0 0.0
      %5307 = vmatprep.subr.mxu0 0.0
      %5308 = vmatpush1.msra.mxu0 0.0
      %5309 = vmatprep.subr.mxu0 0.0
      %5310 = vmatpush1.msra.mxu0 0.0
      %5311 = vmatprep.subr.mxu0 0.0
      %5312 = vmatpush1.msra.mxu0 0.0
      %5313 = vmatprep.subr.mxu0 0.0
      %5314 = vmatpush1.msra.mxu0 0.0
      %5315 = vmatprep.subr.mxu0 0.0
      %5316 = vmatpush1.msra.mxu0 0.0
      %5317 = vmatprep.subr.mxu0 0.0
      %5318 = vmatpush1.msra.mxu0 0.0
      %5319 = vmatprep.subr.mxu0 0.0
      %5320 = vmatpush1.msra.mxu0 0.0
      %5321 = vmatprep.subr.mxu0 0.0
      %5322 = vmatpush1.msra.mxu0 0.0
      %5323 = vmatprep.subr.mxu0 0.0
      %5324 = vmatpush1.msra.mxu0 0.0
      %5325 = vmatprep.subr.mxu0 0.0
      %5326 = vmatpush1.msra.mxu0 0.0
      %5327 = vmatprep.subr.mxu0 0.0
      %5328 = vmatpush1.msra.mxu0 0.0
      %5329 = vmatprep.subr.mxu0 0.0
      %5330 = vmatpush1.msra.mxu0 0.0
      %5331 = vmatprep.subr.mxu0 0.0
      %5332 = vmatpush1.msra.mxu0 0.0
      %5333 = vmatprep.subr.mxu0 0.0
      %5334 = vmatpush1.msra.mxu0 0.0
      %5335 = vmatprep.subr.mxu0 0.0
      %5336 = vmatpush1.msra.mxu0 0.0
      %5337 = vmatprep.subr.mxu0 0.0
      %5338 = vmatpush1.msra.mxu0 0.0
      %5339 = vmatprep.subr.mxu0 0.0
      %5340 = vmatpush1.msra.mxu0 0.0
      %5341 = vmatprep.mubr.f32.mxu0 0.0
      %5342 = vmatmul.mubr.f32.gmra.mrb[0].mxu0 %v5275
      %v5343 = vpop.f32.mrb[0].mxu0
      %v5344 = vadd.f32 0.0, %v5343
      %v5345 = vpop.f32.mrb[0].mxu0
      %v5346 = vadd.f32 0.0, %v5345
      %5347 = vdwg.mxu0
      %v5348 = vadd.f32 %v5256, %v5344
      %v5349 = vadd.f32 %v5257, %v5346
      %s5350 = scalar_lea.vmem %s5, 8
      %v5351 = vld [vmem:[%s5350] sm:$0x3f]
      %s5352 = scalar_lea.vmem %s5, 48
      %v5353 = vld [vmem:[%s5352] sm:$0x3f]
      %5354 = vrot.lane.b32.xlu0 %v4900, 111
      %v5355 = vpop.permute.xlu0 %5354
      %5356 = vrot.lane.b32.xlu0 %v4902, 111
      %v5357 = vpop.permute.xlu0 %5356
      %5358 = vrot.lane.b32.xlu0 %v4901, 111
      %v5359 = vpop.permute.xlu0 %5358
      %5360 = vrot.lane.b32.xlu0 %v4903, 111
      %v5361 = vpop.permute.xlu0 %5360
      %v5362 = vsel %vm779, %v5355, %v5357
      %v5363 = vsel %vm779, %v5359, %v5361
      %v5369 = vsel %vm4925, %v5353, 0
      %5371 = vmatprep.subr.mxu0 %v5357
      %5372 = vmatpush1.msra.mxu0 %v5362
      %5373 = vmatprep.subr.mxu0 %v5361
      %5374 = vmatpush1.msra.mxu0 %v5363
      %5375 = vmatprep.subr.mxu0 0.0
      %5376 = vmatpush1.msra.mxu0 0.0
      %5377 = vmatprep.subr.mxu0 0.0
      %5378 = vmatpush1.msra.mxu0 0.0
      %5379 = vmatprep.subr.mxu0 0.0
      %5380 = vmatpush1.msra.mxu0 0.0
      %5381 = vmatprep.subr.mxu0 0.0
      %5382 = vmatpush1.msra.mxu0 0.0
      %5383 = vmatprep.subr.mxu0 0.0
      %5384 = vmatpush1.msra.mxu0 0.0
      %5385 = vmatprep.subr.mxu0 0.0
      %5386 = vmatpush1.msra.mxu0 0.0
      %5387 = vmatprep.subr.mxu0 0.0
      %5388 = vmatpush1.msra.mxu0 0.0
      %5389 = vmatprep.subr.mxu0 0.0
      %5390 = vmatpush1.msra.mxu0 0.0
      %5391 = vmatprep.subr.mxu0 0.0
      %5392 = vmatpush1.msra.mxu0 0.0
      %5393 = vmatprep.subr.mxu0 0.0
      %5394 = vmatpush1.msra.mxu0 0.0
      %5395 = vmatprep.subr.mxu0 0.0
      %5396 = vmatpush1.msra.mxu0 0.0
      %5397 = vmatprep.subr.mxu0 0.0
      %5398 = vmatpush1.msra.mxu0 0.0
      %5399 = vmatprep.subr.mxu0 0.0
      %5400 = vmatpush1.msra.mxu0 0.0
      %5401 = vmatprep.subr.mxu0 0.0
      %5402 = vmatpush1.msra.mxu0 0.0
      %5403 = vmatprep.subr.mxu0 0.0
      %5404 = vmatpush1.msra.mxu0 0.0
      %5405 = vmatprep.subr.mxu0 0.0
      %5406 = vmatpush1.msra.mxu0 0.0
      %5407 = vmatprep.subr.mxu0 0.0
      %5408 = vmatpush1.msra.mxu0 0.0
      %5409 = vmatprep.subr.mxu0 0.0
      %5410 = vmatpush1.msra.mxu0 0.0
      %5411 = vmatprep.subr.mxu0 0.0
      %5412 = vmatpush1.msra.mxu0 0.0
      %5413 = vmatprep.subr.mxu0 0.0
      %5414 = vmatpush1.msra.mxu0 0.0
      %5415 = vmatprep.subr.mxu0 0.0
      %5416 = vmatpush1.msra.mxu0 0.0
      %5417 = vmatprep.subr.mxu0 0.0
      %5418 = vmatpush1.msra.mxu0 0.0
      %5419 = vmatprep.subr.mxu0 0.0
      %5420 = vmatpush1.msra.mxu0 0.0
      %5421 = vmatprep.subr.mxu0 0.0
      %5422 = vmatpush1.msra.mxu0 0.0
      %5423 = vmatprep.subr.mxu0 0.0
      %5424 = vmatpush1.msra.mxu0 0.0
      %5425 = vmatprep.subr.mxu0 0.0
      %5426 = vmatpush1.msra.mxu0 0.0
      %5427 = vmatprep.subr.mxu0 0.0
      %5428 = vmatpush1.msra.mxu0 0.0
      %5429 = vmatprep.subr.mxu0 0.0
      %5430 = vmatpush1.msra.mxu0 0.0
      %5431 = vmatprep.subr.mxu0 0.0
      %5432 = vmatpush1.msra.mxu0 0.0
      %5433 = vmatprep.subr.mxu0 0.0
      %5434 = vmatpush1.msra.mxu0 0.0
      %5435 = vmatprep.mubr.f32.mxu0 0.0
      %5436 = vmatmul.mubr.f32.gmra.mrb[0].mxu0 %v5369
      %v5437 = vpop.f32.mrb[0].mxu0
      %v5438 = vadd.f32 0.0, %v5437
      %v5439 = vpop.f32.mrb[0].mxu0
      %v5440 = vadd.f32 0.0, %v5439
      %5441 = vdwg.mxu0
      %5442 = vrot.lane.b32.xlu0 %v4900, 127
      %v5443 = vpop.permute.xlu0 %5442
      %5444 = vrot.lane.b32.xlu0 %v4902, 127
      %v5445 = vpop.permute.xlu0 %5444
      %5446 = vrot.lane.b32.xlu0 %v4901, 127
      %v5447 = vpop.permute.xlu0 %5446
      %5448 = vrot.lane.b32.xlu0 %v4903, 127
      %v5449 = vpop.permute.xlu0 %5448
      %v5450 = vsel %vm863, %v5443, %v5445
      %v5451 = vsel %vm863, %v5447, %v5449
      %v5457 = vsel %vm4925, %v5351, 0
      %5459 = vmatprep.subr.mxu0 %v5445
      %5460 = vmatpush1.msra.mxu0 %v5450
      %5461 = vmatprep.subr.mxu0 %v5449
      %5462 = vmatpush1.msra.mxu0 %v5451
      %5463 = vmatprep.subr.mxu0 0.0
      %5464 = vmatpush1.msra.mxu0 0.0
      %5465 = vmatprep.subr.mxu0 0.0
      %5466 = vmatpush1.msra.mxu0 0.0
      %5467 = vmatprep.subr.mxu0 0.0
      %5468 = vmatpush1.msra.mxu0 0.0
      %5469 = vmatprep.subr.mxu0 0.0
      %5470 = vmatpush1.msra.mxu0 0.0
      %5471 = vmatprep.subr.mxu0 0.0
      %5472 = vmatpush1.msra.mxu0 0.0
      %5473 = vmatprep.subr.mxu0 0.0
      %5474 = vmatpush1.msra.mxu0 0.0
      %5475 = vmatprep.subr.mxu0 0.0
      %5476 = vmatpush1.msra.mxu0 0.0
      %5477 = vmatprep.subr.mxu0 0.0
      %5478 = vmatpush1.msra.mxu0 0.0
      %5479 = vmatprep.subr.mxu0 0.0
      %5480 = vmatpush1.msra.mxu0 0.0
      %5481 = vmatprep.subr.mxu0 0.0
      %5482 = vmatpush1.msra.mxu0 0.0
      %5483 = vmatprep.subr.mxu0 0.0
      %5484 = vmatpush1.msra.mxu0 0.0
      %5485 = vmatprep.subr.mxu0 0.0
      %5486 = vmatpush1.msra.mxu0 0.0
      %5487 = vmatprep.subr.mxu0 0.0
      %5488 = vmatpush1.msra.mxu0 0.0
      %5489 = vmatprep.subr.mxu0 0.0
      %5490 = vmatpush1.msra.mxu0 0.0
      %5491 = vmatprep.subr.mxu0 0.0
      %5492 = vmatpush1.msra.mxu0 0.0
      %5493 = vmatprep.subr.mxu0 0.0
      %5494 = vmatpush1.msra.mxu0 0.0
      %5495 = vmatprep.subr.mxu0 0.0
      %5496 = vmatpush1.msra.mxu0 0.0
      %5497 = vmatprep.subr.mxu0 0.0
      %5498 = vmatpush1.msra.mxu0 0.0
      %5499 = vmatprep.subr.mxu0 0.0
      %5500 = vmatpush1.msra.mxu0 0.0
      %5501 = vmatprep.subr.mxu0 0.0
      %5502 = vmatpush1.msra.mxu0 0.0
      %5503 = vmatprep.subr.mxu0 0.0
      %5504 = vmatpush1.msra.mxu0 0.0
      %5505 = vmatprep.subr.mxu0 0.0
      %5506 = vmatpush1.msra.mxu0 0.0
      %5507 = vmatprep.subr.mxu0 0.0
      %5508 = vmatpush1.msra.mxu0 0.0
      %5509 = vmatprep.subr.mxu0 0.0
      %5510 = vmatpush1.msra.mxu0 0.0
      %5511 = vmatprep.subr.mxu0 0.0
      %5512 = vmatpush1.msra.mxu0 0.0
      %5513 = vmatprep.subr.mxu0 0.0
      %5514 = vmatpush1.msra.mxu0 0.0
      %5515 = vmatprep.subr.mxu0 0.0
      %5516 = vmatpush1.msra.mxu0 0.0
      %5517 = vmatprep.subr.mxu0 0.0
      %5518 = vmatpush1.msra.mxu0 0.0
      %5519 = vmatprep.subr.mxu0 0.0
      %5520 = vmatpush1.msra.mxu0 0.0
      %5521 = vmatprep.subr.mxu0 0.0
      %5522 = vmatpush1.msra.mxu0 0.0
      %5523 = vmatprep.mubr.f32.mxu0 0.0
      %5524 = vmatmul.mubr.f32.gmra.mrb[0].mxu0 %v5457
      %v5525 = vpop.f32.mrb[0].mxu0
      %v5526 = vadd.f32 %v5438, %v5525
      %v5527 = vpop.f32.mrb[0].mxu0
      %v5528 = vadd.f32 %v5440, %v5527
      %5529 = vdwg.mxu0
      %s5530 = scalar_lea.vmem %s5, 88
      %v5531 = vld [vmem:[%s5530] sm:$0x3f]
      %5532 = vrot.lane.b32.xlu0 %v4900, 95
      %v5533 = vpop.permute.xlu0 %5532
      %5534 = vrot.lane.b32.xlu0 %v4902, 95
      %v5535 = vpop.permute.xlu0 %5534
      %5536 = vrot.lane.b32.xlu0 %v4901, 95
      %v5537 = vpop.permute.xlu0 %5536
      %5538 = vrot.lane.b32.xlu0 %v4903, 95
      %v5539 = vpop.permute.xlu0 %5538
      %v5540 = vsel %vm949, %v5533, %v5535
      %v5541 = vsel %vm949, %v5537, %v5539
      %v5547 = vsel %vm4925, %v5531, 0
      %5549 = vmatprep.subr.mxu0 %v5535
      %5550 = vmatpush1.msra.mxu0 %v5540
      %5551 = vmatprep.subr.mxu0 %v5539
      %5552 = vmatpush1.msra.mxu0 %v5541
      %5553 = vmatprep.subr.mxu0 0.0
      %5554 = vmatpush1.msra.mxu0 0.0
      %5555 = vmatprep.subr.mxu0 0.0
      %5556 = vmatpush1.msra.mxu0 0.0
      %5557 = vmatprep.subr.mxu0 0.0
      %5558 = vmatpush1.msra.mxu0 0.0
      %5559 = vmatprep.subr.mxu0 0.0
      %5560 = vmatpush1.msra.mxu0 0.0
      %5561 = vmatprep.subr.mxu0 0.0
      %5562 = vmatpush1.msra.mxu0 0.0
      %5563 = vmatprep.subr.mxu0 0.0
      %5564 = vmatpush1.msra.mxu0 0.0
      %5565 = vmatprep.subr.mxu0 0.0
      %5566 = vmatpush1.msra.mxu0 0.0
      %5567 = vmatprep.subr.mxu0 0.0
      %5568 = vmatpush1.msra.mxu0 0.0
      %5569 = vmatprep.subr.mxu0 0.0
      %5570 = vmatpush1.msra.mxu0 0.0
      %5571 = vmatprep.subr.mxu0 0.0
      %5572 = vmatpush1.msra.mxu0 0.0
      %5573 = vmatprep.subr.mxu0 0.0
      %5574 = vmatpush1.msra.mxu0 0.0
      %5575 = vmatprep.subr.mxu0 0.0
      %5576 = vmatpush1.msra.mxu0 0.0
      %5577 = vmatprep.subr.mxu0 0.0
      %5578 = vmatpush1.msra.mxu0 0.0
      %5579 = vmatprep.subr.mxu0 0.0
      %5580 = vmatpush1.msra.mxu0 0.0
      %5581 = vmatprep.subr.mxu0 0.0
      %5582 = vmatpush1.msra.mxu0 0.0
      %5583 = vmatprep.subr.mxu0 0.0
      %5584 = vmatpush1.msra.mxu0 0.0
      %5585 = vmatprep.subr.mxu0 0.0
      %5586 = vmatpush1.msra.mxu0 0.0
      %5587 = vmatprep.subr.mxu0 0.0
      %5588 = vmatpush1.msra.mxu0 0.0
      %5589 = vmatprep.subr.mxu0 0.0
      %5590 = vmatpush1.msra.mxu0 0.0
      %5591 = vmatprep.subr.mxu0 0.0
      %5592 = vmatpush1.msra.mxu0 0.0
      %5593 = vmatprep.subr.mxu0 0.0
      %5594 = vmatpush1.msra.mxu0 0.0
      %5595 = vmatprep.subr.mxu0 0.0
      %5596 = vmatpush1.msra.mxu0 0.0
      %5597 = vmatprep.subr.mxu0 0.0
      %5598 = vmatpush1.msra.mxu0 0.0
      %5599 = vmatprep.subr.mxu0 0.0
      %5600 = vmatpush1.msra.mxu0 0.0
      %5601 = vmatprep.subr.mxu0 0.0
      %5602 = vmatpush1.msra.mxu0 0.0
      %5603 = vmatprep.subr.mxu0 0.0
      %5604 = vmatpush1.msra.mxu0 0.0
      %5605 = vmatprep.subr.mxu0 0.0
      %5606 = vmatpush1.msra.mxu0 0.0
      %5607 = vmatprep.subr.mxu0 0.0
      %5608 = vmatpush1.msra.mxu0 0.0
      %5609 = vmatprep.subr.mxu0 0.0
      %5610 = vmatpush1.msra.mxu0 0.0
      %5611 = vmatprep.subr.mxu0 0.0
      %5612 = vmatpush1.msra.mxu0 0.0
      %5613 = vmatprep.mubr.f32.mxu0 0.0
      %5614 = vmatmul.mubr.f32.gmra.mrb[0].mxu0 %v5547
      %v5615 = vpop.f32.mrb[0].mxu0
      %v5616 = vadd.f32 0.0, %v5615
      %v5617 = vpop.f32.mrb[0].mxu0
      %v5618 = vadd.f32 0.0, %v5617
      %5619 = vdwg.mxu0
      %v5620 = vadd.f32 %v5526, %v5616
      %v5621 = vadd.f32 %v5528, %v5618
      %s5622 = scalar_lea.vmem %s5, 128
      %v5623 = vld [vmem:[%s5622] sm:$0x3f]
      %5624 = vrot.lane.b32.xlu0 %v4900, 79
      %v5625 = vpop.permute.xlu0 %5624
      %5626 = vrot.lane.b32.xlu0 %v4902, 79
      %v5627 = vpop.permute.xlu0 %5626
      %5628 = vrot.lane.b32.xlu0 %v4901, 79
      %v5629 = vpop.permute.xlu0 %5628
      %5630 = vrot.lane.b32.xlu0 %v4903, 79
      %v5631 = vpop.permute.xlu0 %5630
      %v5632 = vsel %vm1037, %v5625, %v5627
      %v5633 = vsel %vm1037, %v5629, %v5631
      %v5639 = vsel %vm4925, %v5623, 0
      %5641 = vmatprep.subr.mxu0 %v5627
      %5642 = vmatpush1.msra.mxu0 %v5632
      %5643 = vmatprep.subr.mxu0 %v5631
      %5644 = vmatpush1.msra.mxu0 %v5633
      %5645 = vmatprep.subr.mxu0 0.0
      %5646 = vmatpush1.msra.mxu0 0.0
      %5647 = vmatprep.subr.mxu0 0.0
      %5648 = vmatpush1.msra.mxu0 0.0
      %5649 = vmatprep.subr.mxu0 0.0
      %5650 = vmatpush1.msra.mxu0 0.0
      %5651 = vmatprep.subr.mxu0 0.0
      %5652 = vmatpush1.msra.mxu0 0.0
      %5653 = vmatprep.subr.mxu0 0.0
      %5654 = vmatpush1.msra.mxu0 0.0
      %5655 = vmatprep.subr.mxu0 0.0
      %5656 = vmatpush1.msra.mxu0 0.0
      %5657 = vmatprep.subr.mxu0 0.0
      %5658 = vmatpush1.msra.mxu0 0.0
      %5659 = vmatprep.subr.mxu0 0.0
      %5660 = vmatpush1.msra.mxu0 0.0
      %5661 = vmatprep.subr.mxu0 0.0
      %5662 = vmatpush1.msra.mxu0 0.0
      %5663 = vmatprep.subr.mxu0 0.0
      %5664 = vmatpush1.msra.mxu0 0.0
      %5665 = vmatprep.subr.mxu0 0.0
      %5666 = vmatpush1.msra.mxu0 0.0
      %5667 = vmatprep.subr.mxu0 0.0
      %5668 = vmatpush1.msra.mxu0 0.0
      %5669 = vmatprep.subr.mxu0 0.0
      %5670 = vmatpush1.msra.mxu0 0.0
      %5671 = vmatprep.subr.mxu0 0.0
      %5672 = vmatpush1.msra.mxu0 0.0
      %5673 = vmatprep.subr.mxu0 0.0
      %5674 = vmatpush1.msra.mxu0 0.0
      %5675 = vmatprep.subr.mxu0 0.0
      %5676 = vmatpush1.msra.mxu0 0.0
      %5677 = vmatprep.subr.mxu0 0.0
      %5678 = vmatpush1.msra.mxu0 0.0
      %5679 = vmatprep.subr.mxu0 0.0
      %5680 = vmatpush1.msra.mxu0 0.0
      %5681 = vmatprep.subr.mxu0 0.0
      %5682 = vmatpush1.msra.mxu0 0.0
      %5683 = vmatprep.subr.mxu0 0.0
      %5684 = vmatpush1.msra.mxu0 0.0
      %5685 = vmatprep.subr.mxu0 0.0
      %5686 = vmatpush1.msra.mxu0 0.0
      %5687 = vmatprep.subr.mxu0 0.0
      %5688 = vmatpush1.msra.mxu0 0.0
      %5689 = vmatprep.subr.mxu0 0.0
      %5690 = vmatpush1.msra.mxu0 0.0
      %5691 = vmatprep.subr.mxu0 0.0
      %5692 = vmatpush1.msra.mxu0 0.0
      %5693 = vmatprep.subr.mxu0 0.0
      %5694 = vmatpush1.msra.mxu0 0.0
      %5695 = vmatprep.subr.mxu0 0.0
      %5696 = vmatpush1.msra.mxu0 0.0
      %5697 = vmatprep.subr.mxu0 0.0
      %5698 = vmatpush1.msra.mxu0 0.0
      %5699 = vmatprep.subr.mxu0 0.0
      %5700 = vmatpush1.msra.mxu0 0.0
      %5701 = vmatprep.subr.mxu0 0.0
      %5702 = vmatpush1.msra.mxu0 0.0
      %5703 = vmatprep.subr.mxu0 0.0
      %5704 = vmatpush1.msra.mxu0 0.0
      %5705 = vmatprep.mubr.f32.mxu0 0.0
      %5706 = vmatmul.mubr.f32.gmra.mrb[0].mxu0 %v5639
      %v5707 = vpop.f32.mrb[0].mxu0
      %v5708 = vadd.f32 0.0, %v5707
      %v5709 = vpop.f32.mrb[0].mxu0
      %v5710 = vadd.f32 0.0, %v5709
      %5711 = vdwg.mxu0
      %v5712 = vadd.f32 %v5620, %v5708
      %v5713 = vadd.f32 %v5621, %v5710
      %s5714 = scalar_lea.vmem %s5, 168
      %v5715 = vld [vmem:[%s5714] sm:$0x3f]
      %5716 = vrot.lane.b32.xlu0 %v4900, 63
      %v5717 = vpop.permute.xlu0 %5716
      %5718 = vrot.lane.b32.xlu0 %v4902, 63
      %v5719 = vpop.permute.xlu0 %5718
      %5720 = vrot.lane.b32.xlu0 %v4901, 63
      %v5721 = vpop.permute.xlu0 %5720
      %5722 = vrot.lane.b32.xlu0 %v4903, 63
      %v5723 = vpop.permute.xlu0 %5722
      %v5724 = vsel %vm1127, %v5717, %v5719
      %v5725 = vsel %vm1127, %v5719, %v1126
      %v5726 = vsel %vm1127, %v5721, %v5723
      %v5727 = vsel %vm1127, %v5723, %v1126
      %v5733 = vsel %vm4925, %v5715, 0
      %5735 = vmatprep.subr.mxu0 %v5725
      %5736 = vmatpush1.msra.mxu0 %v5724
      %5737 = vmatprep.subr.mxu0 %v5727
      %5738 = vmatpush1.msra.mxu0 %v5726
      %5739 = vmatprep.subr.mxu0 0.0
      %5740 = vmatpush1.msra.mxu0 0.0
      %5741 = vmatprep.subr.mxu0 0.0
      %5742 = vmatpush1.msra.mxu0 0.0
      %5743 = vmatprep.subr.mxu0 0.0
      %5744 = vmatpush1.msra.mxu0 0.0
      %5745 = vmatprep.subr.mxu0 0.0
      %5746 = vmatpush1.msra.mxu0 0.0
      %5747 = vmatprep.subr.mxu0 0.0
      %5748 = vmatpush1.msra.mxu0 0.0
      %5749 = vmatprep.subr.mxu0 0.0
      %5750 = vmatpush1.msra.mxu0 0.0
      %5751 = vmatprep.subr.mxu0 0.0
      %5752 = vmatpush1.msra.mxu0 0.0
      %5753 = vmatprep.subr.mxu0 0.0
      %5754 = vmatpush1.msra.mxu0 0.0
      %5755 = vmatprep.subr.mxu0 0.0
      %5756 = vmatpush1.msra.mxu0 0.0
      %5757 = vmatprep.subr.mxu0 0.0
      %5758 = vmatpush1.msra.mxu0 0.0
      %5759 = vmatprep.subr.mxu0 0.0
      %5760 = vmatpush1.msra.mxu0 0.0
      %5761 = vmatprep.subr.mxu0 0.0
      %5762 = vmatpush1.msra.mxu0 0.0
      %5763 = vmatprep.subr.mxu0 0.0
      %5764 = vmatpush1.msra.mxu0 0.0
      %5765 = vmatprep.subr.mxu0 0.0
      %5766 = vmatpush1.msra.mxu0 0.0
      %5767 = vmatprep.subr.mxu0 0.0
      %5768 = vmatpush1.msra.mxu0 0.0
      %5769 = vmatprep.subr.mxu0 0.0
      %5770 = vmatpush1.msra.mxu0 0.0
      %5771 = vmatprep.subr.mxu0 0.0
      %5772 = vmatpush1.msra.mxu0 0.0
      %5773 = vmatprep.subr.mxu0 0.0
      %5774 = vmatpush1.msra.mxu0 0.0
      %5775 = vmatprep.subr.mxu0 0.0
      %5776 = vmatpush1.msra.mxu0 0.0
      %5777 = vmatprep.subr.mxu0 0.0
      %5778 = vmatpush1.msra.mxu0 0.0
      %5779 = vmatprep.subr.mxu0 0.0
      %5780 = vmatpush1.msra.mxu0 0.0
      %5781 = vmatprep.subr.mxu0 0.0
      %5782 = vmatpush1.msra.mxu0 0.0
      %5783 = vmatprep.subr.mxu0 0.0
      %5784 = vmatpush1.msra.mxu0 0.0
      %5785 = vmatprep.subr.mxu0 0.0
      %5786 = vmatpush1.msra.mxu0 0.0
      %5787 = vmatprep.subr.mxu0 0.0
      %5788 = vmatpush1.msra.mxu0 0.0
      %5789 = vmatprep.subr.mxu0 0.0
      %5790 = vmatpush1.msra.mxu0 0.0
      %5791 = vmatprep.subr.mxu0 0.0
      %5792 = vmatpush1.msra.mxu0 0.0
      %5793 = vmatprep.subr.mxu0 0.0
      %5794 = vmatpush1.msra.mxu0 0.0
      %5795 = vmatprep.subr.mxu0 0.0
      %5796 = vmatpush1.msra.mxu0 0.0
      %5797 = vmatprep.subr.mxu0 0.0
      %5798 = vmatpush1.msra.mxu0 0.0
      %5799 = vmatprep.mubr.f32.mxu0 0.0
      %5800 = vmatmul.mubr.f32.gmra.mrb[0].mxu0 %v5733
      %v5801 = vpop.f32.mrb[0].mxu0
      %v5802 = vadd.f32 0.0, %v5801
      %v5803 = vpop.f32.mrb[0].mxu0
      %v5804 = vadd.f32 0.0, %v5803
      %5805 = vdwg.mxu0
      %v5806 = vadd.f32 %v5712, %v5802
      %v5807 = vadd.f32 %v5713, %v5804
      %s5808 = scalar_lea.vmem %s5, 16
      %v5809 = vld [vmem:[%s5808] sm:$0x3f]
      %s5810 = scalar_lea.vmem %s5, 56
      %v5811 = vld [vmem:[%s5810] sm:$0x3f]
      %5812 = vrot.lane.b32.xlu0 %v4900, 110
      %v5813 = vpop.permute.xlu0 %5812
      %5814 = vrot.lane.b32.xlu0 %v4902, 110
      %v5815 = vpop.permute.xlu0 %5814
      %5816 = vrot.lane.b32.xlu0 %v4901, 110
      %v5817 = vpop.permute.xlu0 %5816
      %5818 = vrot.lane.b32.xlu0 %v4903, 110
      %v5819 = vpop.permute.xlu0 %5818
      %v5820 = vsel %vm1218, %v5813, %v5815
      %v5821 = vsel %vm1218, %v5817, %v5819
      %v5827 = vsel %vm4925, %v5811, 0
      %5829 = vmatprep.subr.mxu0 %v5815
      %5830 = vmatpush1.msra.mxu0 %v5820
      %5831 = vmatprep.subr.mxu0 %v5819
      %5832 = vmatpush1.msra.mxu0 %v5821
      %5833 = vmatprep.subr.mxu0 0.0
      %5834 = vmatpush1.msra.mxu0 0.0
      %5835 = vmatprep.subr.mxu0 0.0
      %5836 = vmatpush1.msra.mxu0 0.0
      %5837 = vmatprep.subr.mxu0 0.0
      %5838 = vmatpush1.msra.mxu0 0.0
      %5839 = vmatprep.subr.mxu0 0.0
      %5840 = vmatpush1.msra.mxu0 0.0
      %5841 = vmatprep.subr.mxu0 0.0
      %5842 = vmatpush1.msra.mxu0 0.0
      %5843 = vmatprep.subr.mxu0 0.0
      %5844 = vmatpush1.msra.mxu0 0.0
      %5845 = vmatprep.subr.mxu0 0.0
      %5846 = vmatpush1.msra.mxu0 0.0
      %5847 = vmatprep.subr.mxu0 0.0
      %5848 = vmatpush1.msra.mxu0 0.0
      %5849 = vmatprep.subr.mxu0 0.0
      %5850 = vmatpush1.msra.mxu0 0.0
      %5851 = vmatprep.subr.mxu0 0.0
      %5852 = vmatpush1.msra.mxu0 0.0
      %5853 = vmatprep.subr.mxu0 0.0
      %5854 = vmatpush1.msra.mxu0 0.0
      %5855 = vmatprep.subr.mxu0 0.0
      %5856 = vmatpush1.msra.mxu0 0.0
      %5857 = vmatprep.subr.mxu0 0.0
      %5858 = vmatpush1.msra.mxu0 0.0
      %5859 = vmatprep.subr.mxu0 0.0
      %5860 = vmatpush1.msra.mxu0 0.0
      %5861 = vmatprep.subr.mxu0 0.0
      %5862 = vmatpush1.msra.mxu0 0.0
      %5863 = vmatprep.subr.mxu0 0.0
      %5864 = vmatpush1.msra.mxu0 0.0
      %5865 = vmatprep.subr.mxu0 0.0
      %5866 = vmatpush1.msra.mxu0 0.0
      %5867 = vmatprep.subr.mxu0 0.0
      %5868 = vmatpush1.msra.mxu0 0.0
      %5869 = vmatprep.subr.mxu0 0.0
      %5870 = vmatpush1.msra.mxu0 0.0
      %5871 = vmatprep.subr.mxu0 0.0
      %5872 = vmatpush1.msra.mxu0 0.0
      %5873 = vmatprep.subr.mxu0 0.0
      %5874 = vmatpush1.msra.mxu0 0.0
      %5875 = vmatprep.subr.mxu0 0.0
      %5876 = vmatpush1.msra.mxu0 0.0
      %5877 = vmatprep.subr.mxu0 0.0
      %5878 = vmatpush1.msra.mxu0 0.0
      %5879 = vmatprep.subr.mxu0 0.0
      %5880 = vmatpush1.msra.mxu0 0.0
      %5881 = vmatprep.subr.mxu0 0.0
      %5882 = vmatpush1.msra.mxu0 0.0
      %5883 = vmatprep.subr.mxu0 0.0
      %5884 = vmatpush1.msra.mxu0 0.0
      %5885 = vmatprep.subr.mxu0 0.0
      %5886 = vmatpush1.msra.mxu0 0.0
      %5887 = vmatprep.subr.mxu0 0.0
      %5888 = vmatpush1.msra.mxu0 0.0
      %5889 = vmatprep.subr.mxu0 0.0
      %5890 = vmatpush1.msra.mxu0 0.0
      %5891 = vmatprep.subr.mxu0 0.0
      %5892 = vmatpush1.msra.mxu0 0.0
      %5893 = vmatprep.mubr.f32.mxu0 0.0
      %5894 = vmatmul.mubr.f32.gmra.mrb[0].mxu0 %v5827
      %v5895 = vpop.f32.mrb[0].mxu0
      %v5896 = vadd.f32 0.0, %v5895
      %v5897 = vpop.f32.mrb[0].mxu0
      %v5898 = vadd.f32 0.0, %v5897
      %5899 = vdwg.mxu0
      %5900 = vrot.lane.b32.xlu0 %v4900, 126
      %v5901 = vpop.permute.xlu0 %5900
      %5902 = vrot.lane.b32.xlu0 %v4902, 126
      %v5903 = vpop.permute.xlu0 %5902
      %5904 = vrot.lane.b32.xlu0 %v4901, 126
      %v5905 = vpop.permute.xlu0 %5904
      %5906 = vrot.lane.b32.xlu0 %v4903, 126
      %v5907 = vpop.permute.xlu0 %5906
      %v5908 = vsel %vm1302, %v5901, %v5903
      %v5909 = vsel %vm1302, %v5905, %v5907
      %v5915 = vsel %vm4925, %v5809, 0
      %5917 = vmatprep.subr.mxu0 %v5903
      %5918 = vmatpush1.msra.mxu0 %v5908
      %5919 = vmatprep.subr.mxu0 %v5907
      %5920 = vmatpush1.msra.mxu0 %v5909
      %5921 = vmatprep.subr.mxu0 0.0
      %5922 = vmatpush1.msra.mxu0 0.0
      %5923 = vmatprep.subr.mxu0 0.0
      %5924 = vmatpush1.msra.mxu0 0.0
      %5925 = vmatprep.subr.mxu0 0.0
      %5926 = vmatpush1.msra.mxu0 0.0
      %5927 = vmatprep.subr.mxu0 0.0
      %5928 = vmatpush1.msra.mxu0 0.0
      %5929 = vmatprep.subr.mxu0 0.0
      %5930 = vmatpush1.msra.mxu0 0.0
      %5931 = vmatprep.subr.mxu0 0.0
      %5932 = vmatpush1.msra.mxu0 0.0
      %5933 = vmatprep.subr.mxu0 0.0
      %5934 = vmatpush1.msra.mxu0 0.0
      %5935 = vmatprep.subr.mxu0 0.0
      %5936 = vmatpush1.msra.mxu0 0.0
      %5937 = vmatprep.subr.mxu0 0.0
      %5938 = vmatpush1.msra.mxu0 0.0
      %5939 = vmatprep.subr.mxu0 0.0
      %5940 = vmatpush1.msra.mxu0 0.0
      %5941 = vmatprep.subr.mxu0 0.0
      %5942 = vmatpush1.msra.mxu0 0.0
      %5943 = vmatprep.subr.mxu0 0.0
      %5944 = vmatpush1.msra.mxu0 0.0
      %5945 = vmatprep.subr.mxu0 0.0
      %5946 = vmatpush1.msra.mxu0 0.0
      %5947 = vmatprep.subr.mxu0 0.0
      %5948 = vmatpush1.msra.mxu0 0.0
      %5949 = vmatprep.subr.mxu0 0.0
      %5950 = vmatpush1.msra.mxu0 0.0
      %5951 = vmatprep.subr.mxu0 0.0
      %5952 = vmatpush1.msra.mxu0 0.0
      %5953 = vmatprep.subr.mxu0 0.0
      %5954 = vmatpush1.msra.mxu0 0.0
      %5955 = vmatprep.subr.mxu0 0.0
      %5956 = vmatpush1.msra.mxu0 0.0
      %5957 = vmatprep.subr.mxu0 0.0
      %5958 = vmatpush1.msra.mxu0 0.0
      %5959 = vmatprep.subr.mxu0 0.0
      %5960 = vmatpush1.msra.mxu0 0.0
      %5961 = vmatprep.subr.mxu0 0.0
      %5962 = vmatpush1.msra.mxu0 0.0
      %5963 = vmatprep.subr.mxu0 0.0
      %5964 = vmatpush1.msra.mxu0 0.0
      %5965 = vmatprep.subr.mxu0 0.0
      %5966 = vmatpush1.msra.mxu0 0.0
      %5967 = vmatprep.subr.mxu0 0.0
      %5968 = vmatpush1.msra.mxu0 0.0
      %5969 = vmatprep.subr.mxu0 0.0
      %5970 = vmatpush1.msra.mxu0 0.0
      %5971 = vmatprep.subr.mxu0 0.0
      %5972 = vmatpush1.msra.mxu0 0.0
      %5973 = vmatprep.subr.mxu0 0.0
      %5974 = vmatpush1.msra.mxu0 0.0
      %5975 = vmatprep.subr.mxu0 0.0
      %5976 = vmatpush1.msra.mxu0 0.0
      %5977 = vmatprep.subr.mxu0 0.0
      %5978 = vmatpush1.msra.mxu0 0.0
      %5979 = vmatprep.subr.mxu0 0.0
      %5980 = vmatpush1.msra.mxu0 0.0
      %5981 = vmatprep.mubr.f32.mxu0 0.0
      %5982 = vmatmul.mubr.f32.gmra.mrb[0].mxu0 %v5915
      %v5983 = vpop.f32.mrb[0].mxu0
      %v5984 = vadd.f32 %v5896, %v5983
      %v5985 = vpop.f32.mrb[0].mxu0
      %v5986 = vadd.f32 %v5898, %v5985
      %5987 = vdwg.mxu0
      %s5988 = scalar_lea.vmem %s5, 96
      %v5989 = vld [vmem:[%s5988] sm:$0x3f]
      %5990 = vrot.lane.b32.xlu0 %v4900, 94
      %v5991 = vpop.permute.xlu0 %5990
      %5992 = vrot.lane.b32.xlu0 %v4902, 94
      %v5993 = vpop.permute.xlu0 %5992
      %5994 = vrot.lane.b32.xlu0 %v4901, 94
      %v5995 = vpop.permute.xlu0 %5994
      %5996 = vrot.lane.b32.xlu0 %v4903, 94
      %v5997 = vpop.permute.xlu0 %5996
      %v5998 = vsel %vm1388, %v5991, %v5993
      %v5999 = vsel %vm1388, %v5995, %v5997
      %v6005 = vsel %vm4925, %v5989, 0
      %6007 = vmatprep.subr.mxu0 %v5993
      %6008 = vmatpush1.msra.mxu0 %v5998
      %6009 = vmatprep.subr.mxu0 %v5997
      %6010 = vmatpush1.msra.mxu0 %v5999
      %6011 = vmatprep.subr.mxu0 0.0
      %6012 = vmatpush1.msra.mxu0 0.0
      %6013 = vmatprep.subr.mxu0 0.0
      %6014 = vmatpush1.msra.mxu0 0.0
      %6015 = vmatprep.subr.mxu0 0.0
      %6016 = vmatpush1.msra.mxu0 0.0
      %6017 = vmatprep.subr.mxu0 0.0
      %6018 = vmatpush1.msra.mxu0 0.0
      %6019 = vmatprep.subr.mxu0 0.0
      %6020 = vmatpush1.msra.mxu0 0.0
      %6021 = vmatprep.subr.mxu0 0.0
      %6022 = vmatpush1.msra.mxu0 0.0
      %6023 = vmatprep.subr.mxu0 0.0
      %6024 = vmatpush1.msra.mxu0 0.0
      %6025 = vmatprep.subr.mxu0 0.0
      %6026 = vmatpush1.msra.mxu0 0.0
      %6027 = vmatprep.subr.mxu0 0.0
      %6028 = vmatpush1.msra.mxu0 0.0
      %6029 = vmatprep.subr.mxu0 0.0
      %6030 = vmatpush1.msra.mxu0 0.0
      %6031 = vmatprep.subr.mxu0 0.0
      %6032 = vmatpush1.msra.mxu0 0.0
      %6033 = vmatprep.subr.mxu0 0.0
      %6034 = vmatpush1.msra.mxu0 0.0
      %6035 = vmatprep.subr.mxu0 0.0
      %6036 = vmatpush1.msra.mxu0 0.0
      %6037 = vmatprep.subr.mxu0 0.0
      %6038 = vmatpush1.msra.mxu0 0.0
      %6039 = vmatprep.subr.mxu0 0.0
      %6040 = vmatpush1.msra.mxu0 0.0
      %6041 = vmatprep.subr.mxu0 0.0
      %6042 = vmatpush1.msra.mxu0 0.0
      %6043 = vmatprep.subr.mxu0 0.0
      %6044 = vmatpush1.msra.mxu0 0.0
      %6045 = vmatprep.subr.mxu0 0.0
      %6046 = vmatpush1.msra.mxu0 0.0
      %6047 = vmatprep.subr.mxu0 0.0
      %6048 = vmatpush1.msra.mxu0 0.0
      %6049 = vmatprep.subr.mxu0 0.0
      %6050 = vmatpush1.msra.mxu0 0.0
      %6051 = vmatprep.subr.mxu0 0.0
      %6052 = vmatpush1.msra.mxu0 0.0
      %6053 = vmatprep.subr.mxu0 0.0
      %6054 = vmatpush1.msra.mxu0 0.0
      %6055 = vmatprep.subr.mxu0 0.0
      %6056 = vmatpush1.msra.mxu0 0.0
      %6057 = vmatprep.subr.mxu0 0.0
      %6058 = vmatpush1.msra.mxu0 0.0
      %6059 = vmatprep.subr.mxu0 0.0
      %6060 = vmatpush1.msra.mxu0 0.0
      %6061 = vmatprep.subr.mxu0 0.0
      %6062 = vmatpush1.msra.mxu0 0.0
      %6063 = vmatprep.subr.mxu0 0.0
      %6064 = vmatpush1.msra.mxu0 0.0
      %6065 = vmatprep.subr.mxu0 0.0
      %6066 = vmatpush1.msra.mxu0 0.0
      %6067 = vmatprep.subr.mxu0 0.0
      %6068 = vmatpush1.msra.mxu0 0.0
      %6069 = vmatprep.subr.mxu0 0.0
      %6070 = vmatpush1.msra.mxu0 0.0
      %6071 = vmatprep.mubr.f32.mxu0 0.0
      %6072 = vmatmul.mubr.f32.gmra.mrb[0].mxu0 %v6005
      %v6073 = vpop.f32.mrb[0].mxu0
      %v6074 = vadd.f32 0.0, %v6073
      %v6075 = vpop.f32.mrb[0].mxu0
      %v6076 = vadd.f32 0.0, %v6075
      %6077 = vdwg.mxu0
      %v6078 = vadd.f32 %v5984, %v6074
      %v6079 = vadd.f32 %v5986, %v6076
      %s6080 = scalar_lea.vmem %s5, 136
      %v6081 = vld [vmem:[%s6080] sm:$0x3f]
      %6082 = vrot.lane.b32.xlu0 %v4900, 78
      %v6083 = vpop.permute.xlu0 %6082
      %6084 = vrot.lane.b32.xlu0 %v4902, 78
      %v6085 = vpop.permute.xlu0 %6084
      %6086 = vrot.lane.b32.xlu0 %v4901, 78
      %v6087 = vpop.permute.xlu0 %6086
      %6088 = vrot.lane.b32.xlu0 %v4903, 78
      %v6089 = vpop.permute.xlu0 %6088
      %v6090 = vsel %vm1476, %v6083, %v6085
      %v6091 = vsel %vm1476, %v6087, %v6089
      %v6097 = vsel %vm4925, %v6081, 0
      %6099 = vmatprep.subr.mxu0 %v6085
      %6100 = vmatpush1.msra.mxu0 %v6090
      %6101 = vmatprep.subr.mxu0 %v6089
      %6102 = vmatpush1.msra.mxu0 %v6091
      %6103 = vmatprep.subr.mxu0 0.0
      %6104 = vmatpush1.msra.mxu0 0.0
      %6105 = vmatprep.subr.mxu0 0.0
      %6106 = vmatpush1.msra.mxu0 0.0
      %6107 = vmatprep.subr.mxu0 0.0
      %6108 = vmatpush1.msra.mxu0 0.0
      %6109 = vmatprep.subr.mxu0 0.0
      %6110 = vmatpush1.msra.mxu0 0.0
      %6111 = vmatprep.subr.mxu0 0.0
      %6112 = vmatpush1.msra.mxu0 0.0
      %6113 = vmatprep.subr.mxu0 0.0
      %6114 = vmatpush1.msra.mxu0 0.0
      %6115 = vmatprep.subr.mxu0 0.0
      %6116 = vmatpush1.msra.mxu0 0.0
      %6117 = vmatprep.subr.mxu0 0.0
      %6118 = vmatpush1.msra.mxu0 0.0
      %6119 = vmatprep.subr.mxu0 0.0
      %6120 = vmatpush1.msra.mxu0 0.0
      %6121 = vmatprep.subr.mxu0 0.0
      %6122 = vmatpush1.msra.mxu0 0.0
      %6123 = vmatprep.subr.mxu0 0.0
      %6124 = vmatpush1.msra.mxu0 0.0
      %6125 = vmatprep.subr.mxu0 0.0
      %6126 = vmatpush1.msra.mxu0 0.0
      %6127 = vmatprep.subr.mxu0 0.0
      %6128 = vmatpush1.msra.mxu0 0.0
      %6129 = vmatprep.subr.mxu0 0.0
      %6130 = vmatpush1.msra.mxu0 0.0
      %6131 = vmatprep.subr.mxu0 0.0
      %6132 = vmatpush1.msra.mxu0 0.0
      %6133 = vmatprep.subr.mxu0 0.0
      %6134 = vmatpush1.msra.mxu0 0.0
      %6135 = vmatprep.subr.mxu0 0.0
      %6136 = vmatpush1.msra.mxu0 0.0
      %6137 = vmatprep.subr.mxu0 0.0
      %6138 = vmatpush1.msra.mxu0 0.0
      %6139 = vmatprep.subr.mxu0 0.0
      %6140 = vmatpush1.msra.mxu0 0.0
      %6141 = vmatprep.subr.mxu0 0.0
      %6142 = vmatpush1.msra.mxu0 0.0
      %6143 = vmatprep.subr.mxu0 0.0
      %6144 = vmatpush1.msra.mxu0 0.0
      %6145 = vmatprep.subr.mxu0 0.0
      %6146 = vmatpush1.msra.mxu0 0.0
      %6147 = vmatprep.subr.mxu0 0.0
      %6148 = vmatpush1.msra.mxu0 0.0
      %6149 = vmatprep.subr.mxu0 0.0
      %6150 = vmatpush1.msra.mxu0 0.0
      %6151 = vmatprep.subr.mxu0 0.0
      %6152 = vmatpush1.msra.mxu0 0.0
      %6153 = vmatprep.subr.mxu0 0.0
      %6154 = vmatpush1.msra.mxu0 0.0
      %6155 = vmatprep.subr.mxu0 0.0
      %6156 = vmatpush1.msra.mxu0 0.0
      %6157 = vmatprep.subr.mxu0 0.0
      %6158 = vmatpush1.msra.mxu0 0.0
      %6159 = vmatprep.subr.mxu0 0.0
      %6160 = vmatpush1.msra.mxu0 0.0
      %6161 = vmatprep.subr.mxu0 0.0
      %6162 = vmatpush1.msra.mxu0 0.0
      %6163 = vmatprep.mubr.f32.mxu0 0.0
      %6164 = vmatmul.mubr.f32.gmra.mrb[0].mxu0 %v6097
      %v6165 = vpop.f32.mrb[0].mxu0
      %v6166 = vadd.f32 0.0, %v6165
      %v6167 = vpop.f32.mrb[0].mxu0
      %v6168 = vadd.f32 0.0, %v6167
      %6169 = vdwg.mxu0
      %v6170 = vadd.f32 %v6078, %v6166
      %v6171 = vadd.f32 %v6079, %v6168
      %s6172 = scalar_lea.vmem %s5, 176
      %v6173 = vld [vmem:[%s6172] sm:$0x3f]
      %6174 = vrot.lane.b32.xlu0 %v4900, 62
      %v6175 = vpop.permute.xlu0 %6174
      %6176 = vrot.lane.b32.xlu0 %v4902, 62
      %v6177 = vpop.permute.xlu0 %6176
      %6178 = vrot.lane.b32.xlu0 %v4901, 62
      %v6179 = vpop.permute.xlu0 %6178
      %6180 = vrot.lane.b32.xlu0 %v4903, 62
      %v6181 = vpop.permute.xlu0 %6180
      %v6182 = vsel %vm1566, %v6175, %v6177
      %v6183 = vsel %vm1566, %v6177, %v1565
      %v6184 = vsel %vm1566, %v6179, %v6181
      %v6185 = vsel %vm1566, %v6181, %v1565
      %v6191 = vsel %vm4925, %v6173, 0
      %6193 = vmatprep.subr.mxu0 %v6183
      %6194 = vmatpush1.msra.mxu0 %v6182
      %6195 = vmatprep.subr.mxu0 %v6185
      %6196 = vmatpush1.msra.mxu0 %v6184
      %6197 = vmatprep.subr.mxu0 0.0
      %6198 = vmatpush1.msra.mxu0 0.0
      %6199 = vmatprep.subr.mxu0 0.0
      %6200 = vmatpush1.msra.mxu0 0.0
      %6201 = vmatprep.subr.mxu0 0.0
      %6202 = vmatpush1.msra.mxu0 0.0
      %6203 = vmatprep.subr.mxu0 0.0
      %6204 = vmatpush1.msra.mxu0 0.0
      %6205 = vmatprep.subr.mxu0 0.0
      %6206 = vmatpush1.msra.mxu0 0.0
      %6207 = vmatprep.subr.mxu0 0.0
      %6208 = vmatpush1.msra.mxu0 0.0
      %6209 = vmatprep.subr.mxu0 0.0
      %6210 = vmatpush1.msra.mxu0 0.0
      %6211 = vmatprep.subr.mxu0 0.0
      %6212 = vmatpush1.msra.mxu0 0.0
      %6213 = vmatprep.subr.mxu0 0.0
      %6214 = vmatpush1.msra.mxu0 0.0
      %6215 = vmatprep.subr.mxu0 0.0
      %6216 = vmatpush1.msra.mxu0 0.0
      %6217 = vmatprep.subr.mxu0 0.0
      %6218 = vmatpush1.msra.mxu0 0.0
      %6219 = vmatprep.subr.mxu0 0.0
      %6220 = vmatpush1.msra.mxu0 0.0
      %6221 = vmatprep.subr.mxu0 0.0
      %6222 = vmatpush1.msra.mxu0 0.0
      %6223 = vmatprep.subr.mxu0 0.0
      %6224 = vmatpush1.msra.mxu0 0.0
      %6225 = vmatprep.subr.mxu0 0.0
      %6226 = vmatpush1.msra.mxu0 0.0
      %6227 = vmatprep.subr.mxu0 0.0
      %6228 = vmatpush1.msra.mxu0 0.0
      %6229 = vmatprep.subr.mxu0 0.0
      %6230 = vmatpush1.msra.mxu0 0.0
      %6231 = vmatprep.subr.mxu0 0.0
      %6232 = vmatpush1.msra.mxu0 0.0
      %6233 = vmatprep.subr.mxu0 0.0
      %6234 = vmatpush1.msra.mxu0 0.0
      %6235 = vmatprep.subr.mxu0 0.0
      %6236 = vmatpush1.msra.mxu0 0.0
      %6237 = vmatprep.subr.mxu0 0.0
      %6238 = vmatpush1.msra.mxu0 0.0
      %6239 = vmatprep.subr.mxu0 0.0
      %6240 = vmatpush1.msra.mxu0 0.0
      %6241 = vmatprep.subr.mxu0 0.0
      %6242 = vmatpush1.msra.mxu0 0.0
      %6243 = vmatprep.subr.mxu0 0.0
      %6244 = vmatpush1.msra.mxu0 0.0
      %6245 = vmatprep.subr.mxu0 0.0
      %6246 = vmatpush1.msra.mxu0 0.0
      %6247 = vmatprep.subr.mxu0 0.0
      %6248 = vmatpush1.msra.mxu0 0.0
      %6249 = vmatprep.subr.mxu0 0.0
      %6250 = vmatpush1.msra.mxu0 0.0
      %6251 = vmatprep.subr.mxu0 0.0
      %6252 = vmatpush1.msra.mxu0 0.0
      %6253 = vmatprep.subr.mxu0 0.0
      %6254 = vmatpush1.msra.mxu0 0.0
      %6255 = vmatprep.subr.mxu0 0.0
      %6256 = vmatpush1.msra.mxu0 0.0
      %6257 = vmatprep.mubr.f32.mxu0 0.0
      %6258 = vmatmul.mubr.f32.gmra.mrb[0].mxu0 %v6191
      %v6259 = vpop.f32.mrb[0].mxu0
      %v6260 = vadd.f32 0.0, %v6259
      %v6261 = vpop.f32.mrb[0].mxu0
      %v6262 = vadd.f32 0.0, %v6261
      %6263 = vdwg.mxu0
      %v6264 = vadd.f32 %v6170, %v6260
      %v6265 = vadd.f32 %v6171, %v6262
      %s6266 = scalar_lea.vmem %s5, 24
      %v6267 = vld [vmem:[%s6266] sm:$0x3f]
      %s6268 = scalar_lea.vmem %s5, 64
      %v6269 = vld [vmem:[%s6268] sm:$0x3f]
      %6270 = vrot.lane.b32.xlu0 %v4900, 109
      %v6271 = vpop.permute.xlu0 %6270
      %6272 = vrot.lane.b32.xlu0 %v4902, 109
      %v6273 = vpop.permute.xlu0 %6272
      %6274 = vrot.lane.b32.xlu0 %v4901, 109
      %v6275 = vpop.permute.xlu0 %6274
      %6276 = vrot.lane.b32.xlu0 %v4903, 109
      %v6277 = vpop.permute.xlu0 %6276
      %v6278 = vsel %vm1657, %v6271, %v6273
      %v6279 = vsel %vm1657, %v6275, %v6277
      %v6285 = vsel %vm4925, %v6269, 0
      %6287 = vmatprep.subr.mxu0 %v6273
      %6288 = vmatpush1.msra.mxu0 %v6278
      %6289 = vmatprep.subr.mxu0 %v6277
      %6290 = vmatpush1.msra.mxu0 %v6279
      %6291 = vmatprep.subr.mxu0 0.0
      %6292 = vmatpush1.msra.mxu0 0.0
      %6293 = vmatprep.subr.mxu0 0.0
      %6294 = vmatpush1.msra.mxu0 0.0
      %6295 = vmatprep.subr.mxu0 0.0
      %6296 = vmatpush1.msra.mxu0 0.0
      %6297 = vmatprep.subr.mxu0 0.0
      %6298 = vmatpush1.msra.mxu0 0.0
      %6299 = vmatprep.subr.mxu0 0.0
      %6300 = vmatpush1.msra.mxu0 0.0
      %6301 = vmatprep.subr.mxu0 0.0
      %6302 = vmatpush1.msra.mxu0 0.0
      %6303 = vmatprep.subr.mxu0 0.0
      %6304 = vmatpush1.msra.mxu0 0.0
      %6305 = vmatprep.subr.mxu0 0.0
      %6306 = vmatpush1.msra.mxu0 0.0
      %6307 = vmatprep.subr.mxu0 0.0
      %6308 = vmatpush1.msra.mxu0 0.0
      %6309 = vmatprep.subr.mxu0 0.0
      %6310 = vmatpush1.msra.mxu0 0.0
      %6311 = vmatprep.subr.mxu0 0.0
      %6312 = vmatpush1.msra.mxu0 0.0
      %6313 = vmatprep.subr.mxu0 0.0
      %6314 = vmatpush1.msra.mxu0 0.0
      %6315 = vmatprep.subr.mxu0 0.0
      %6316 = vmatpush1.msra.mxu0 0.0
      %6317 = vmatprep.subr.mxu0 0.0
      %6318 = vmatpush1.msra.mxu0 0.0
      %6319 = vmatprep.subr.mxu0 0.0
      %6320 = vmatpush1.msra.mxu0 0.0
      %6321 = vmatprep.subr.mxu0 0.0
      %6322 = vmatpush1.msra.mxu0 0.0
      %6323 = vmatprep.subr.mxu0 0.0
      %6324 = vmatpush1.msra.mxu0 0.0
      %6325 = vmatprep.subr.mxu0 0.0
      %6326 = vmatpush1.msra.mxu0 0.0
      %6327 = vmatprep.subr.mxu0 0.0
      %6328 = vmatpush1.msra.mxu0 0.0
      %6329 = vmatprep.subr.mxu0 0.0
      %6330 = vmatpush1.msra.mxu0 0.0
      %6331 = vmatprep.subr.mxu0 0.0
      %6332 = vmatpush1.msra.mxu0 0.0
      %6333 = vmatprep.subr.mxu0 0.0
      %6334 = vmatpush1.msra.mxu0 0.0
      %6335 = vmatprep.subr.mxu0 0.0
      %6336 = vmatpush1.msra.mxu0 0.0
      %6337 = vmatprep.subr.mxu0 0.0
      %6338 = vmatpush1.msra.mxu0 0.0
      %6339 = vmatprep.subr.mxu0 0.0
      %6340 = vmatpush1.msra.mxu0 0.0
      %6341 = vmatprep.subr.mxu0 0.0
      %6342 = vmatpush1.msra.mxu0 0.0
      %6343 = vmatprep.subr.mxu0 0.0
      %6344 = vmatpush1.msra.mxu0 0.0
      %6345 = vmatprep.subr.mxu0 0.0
      %6346 = vmatpush1.msra.mxu0 0.0
      %6347 = vmatprep.subr.mxu0 0.0
      %6348 = vmatpush1.msra.mxu0 0.0
      %6349 = vmatprep.subr.mxu0 0.0
      %6350 = vmatpush1.msra.mxu0 0.0
      %6351 = vmatprep.mubr.f32.mxu0 0.0
      %6352 = vmatmul.mubr.f32.gmra.mrb[0].mxu0 %v6285
      %v6353 = vpop.f32.mrb[0].mxu0
      %v6354 = vadd.f32 0.0, %v6353
      %v6355 = vpop.f32.mrb[0].mxu0
      %v6356 = vadd.f32 0.0, %v6355
      %6357 = vdwg.mxu0
      %6358 = vrot.lane.b32.xlu0 %v4900, 125
      %v6359 = vpop.permute.xlu0 %6358
      %6360 = vrot.lane.b32.xlu0 %v4902, 125
      %v6361 = vpop.permute.xlu0 %6360
      %6362 = vrot.lane.b32.xlu0 %v4901, 125
      %v6363 = vpop.permute.xlu0 %6362
      %6364 = vrot.lane.b32.xlu0 %v4903, 125
      %v6365 = vpop.permute.xlu0 %6364
      %v6366 = vsel %vm1741, %v6359, %v6361
      %v6367 = vsel %vm1741, %v6363, %v6365
      %v6373 = vsel %vm4925, %v6267, 0
      %6375 = vmatprep.subr.mxu0 %v6361
      %6376 = vmatpush1.msra.mxu0 %v6366
      %6377 = vmatprep.subr.mxu0 %v6365
      %6378 = vmatpush1.msra.mxu0 %v6367
      %6379 = vmatprep.subr.mxu0 0.0
      %6380 = vmatpush1.msra.mxu0 0.0
      %6381 = vmatprep.subr.mxu0 0.0
      %6382 = vmatpush1.msra.mxu0 0.0
      %6383 = vmatprep.subr.mxu0 0.0
      %6384 = vmatpush1.msra.mxu0 0.0
      %6385 = vmatprep.subr.mxu0 0.0
      %6386 = vmatpush1.msra.mxu0 0.0
      %6387 = vmatprep.subr.mxu0 0.0
      %6388 = vmatpush1.msra.mxu0 0.0
      %6389 = vmatprep.subr.mxu0 0.0
      %6390 = vmatpush1.msra.mxu0 0.0
      %6391 = vmatprep.subr.mxu0 0.0
      %6392 = vmatpush1.msra.mxu0 0.0
      %6393 = vmatprep.subr.mxu0 0.0
      %6394 = vmatpush1.msra.mxu0 0.0
      %6395 = vmatprep.subr.mxu0 0.0
      %6396 = vmatpush1.msra.mxu0 0.0
      %6397 = vmatprep.subr.mxu0 0.0
      %6398 = vmatpush1.msra.mxu0 0.0
      %6399 = vmatprep.subr.mxu0 0.0
      %6400 = vmatpush1.msra.mxu0 0.0
      %6401 = vmatprep.subr.mxu0 0.0
      %6402 = vmatpush1.msra.mxu0 0.0
      %6403 = vmatprep.subr.mxu0 0.0
      %6404 = vmatpush1.msra.mxu0 0.0
      %6405 = vmatprep.subr.mxu0 0.0
      %6406 = vmatpush1.msra.mxu0 0.0
      %6407 = vmatprep.subr.mxu0 0.0
      %6408 = vmatpush1.msra.mxu0 0.0
      %6409 = vmatprep.subr.mxu0 0.0
      %6410 = vmatpush1.msra.mxu0 0.0
      %6411 = vmatprep.subr.mxu0 0.0
      %6412 = vmatpush1.msra.mxu0 0.0
      %6413 = vmatprep.subr.mxu0 0.0
      %6414 = vmatpush1.msra.mxu0 0.0
      %6415 = vmatprep.subr.mxu0 0.0
      %6416 = vmatpush1.msra.mxu0 0.0
      %6417 = vmatprep.subr.mxu0 0.0
      %6418 = vmatpush1.msra.mxu0 0.0
      %6419 = vmatprep.subr.mxu0 0.0
      %6420 = vmatpush1.msra.mxu0 0.0
      %6421 = vmatprep.subr.mxu0 0.0
      %6422 = vmatpush1.msra.mxu0 0.0
      %6423 = vmatprep.subr.mxu0 0.0
      %6424 = vmatpush1.msra.mxu0 0.0
      %6425 = vmatprep.subr.mxu0 0.0
      %6426 = vmatpush1.msra.mxu0 0.0
      %6427 = vmatprep.subr.mxu0 0.0
      %6428 = vmatpush1.msra.mxu0 0.0
      %6429 = vmatprep.subr.mxu0 0.0
      %6430 = vmatpush1.msra.mxu0 0.0
      %6431 = vmatprep.subr.mxu0 0.0
      %6432 = vmatpush1.msra.mxu0 0.0
      %6433 = vmatprep.subr.mxu0 0.0
      %6434 = vmatpush1.msra.mxu0 0.0
      %6435 = vmatprep.subr.mxu0 0.0
      %6436 = vmatpush1.msra.mxu0 0.0
      %6437 = vmatprep.subr.mxu0 0.0
      %6438 = vmatpush1.msra.mxu0 0.0
      %6439 = vmatprep.mubr.f32.mxu0 0.0
      %6440 = vmatmul.mubr.f32.gmra.mrb[0].mxu0 %v6373
      %v6441 = vpop.f32.mrb[0].mxu0
      %v6442 = vadd.f32 %v6354, %v6441
      %v6443 = vpop.f32.mrb[0].mxu0
      %v6444 = vadd.f32 %v6356, %v6443
      %6445 = vdwg.mxu0
      %s6446 = scalar_lea.vmem %s5, 104
      %v6447 = vld [vmem:[%s6446] sm:$0x3f]
      %6448 = vrot.lane.b32.xlu0 %v4900, 93
      %v6449 = vpop.permute.xlu0 %6448
      %6450 = vrot.lane.b32.xlu0 %v4902, 93
      %v6451 = vpop.permute.xlu0 %6450
      %6452 = vrot.lane.b32.xlu0 %v4901, 93
      %v6453 = vpop.permute.xlu0 %6452
      %6454 = vrot.lane.b32.xlu0 %v4903, 93
      %v6455 = vpop.permute.xlu0 %6454
      %v6456 = vsel %vm1827, %v6449, %v6451
      %v6457 = vsel %vm1827, %v6453, %v6455
      %v6463 = vsel %vm4925, %v6447, 0
      %6465 = vmatprep.subr.mxu0 %v6451
      %6466 = vmatpush1.msra.mxu0 %v6456
      %6467 = vmatprep.subr.mxu0 %v6455
      %6468 = vmatpush1.msra.mxu0 %v6457
      %6469 = vmatprep.subr.mxu0 0.0
      %6470 = vmatpush1.msra.mxu0 0.0
      %6471 = vmatprep.subr.mxu0 0.0
      %6472 = vmatpush1.msra.mxu0 0.0
      %6473 = vmatprep.subr.mxu0 0.0
      %6474 = vmatpush1.msra.mxu0 0.0
      %6475 = vmatprep.subr.mxu0 0.0
      %6476 = vmatpush1.msra.mxu0 0.0
      %6477 = vmatprep.subr.mxu0 0.0
      %6478 = vmatpush1.msra.mxu0 0.0
      %6479 = vmatprep.subr.mxu0 0.0
      %6480 = vmatpush1.msra.mxu0 0.0
      %6481 = vmatprep.subr.mxu0 0.0
      %6482 = vmatpush1.msra.mxu0 0.0
      %6483 = vmatprep.subr.mxu0 0.0
      %6484 = vmatpush1.msra.mxu0 0.0
      %6485 = vmatprep.subr.mxu0 0.0
      %6486 = vmatpush1.msra.mxu0 0.0
      %6487 = vmatprep.subr.mxu0 0.0
      %6488 = vmatpush1.msra.mxu0 0.0
      %6489 = vmatprep.subr.mxu0 0.0
      %6490 = vmatpush1.msra.mxu0 0.0
      %6491 = vmatprep.subr.mxu0 0.0
      %6492 = vmatpush1.msra.mxu0 0.0
      %6493 = vmatprep.subr.mxu0 0.0
      %6494 = vmatpush1.msra.mxu0 0.0
      %6495 = vmatprep.subr.mxu0 0.0
      %6496 = vmatpush1.msra.mxu0 0.0
      %6497 = vmatprep.subr.mxu0 0.0
      %6498 = vmatpush1.msra.mxu0 0.0
      %6499 = vmatprep.subr.mxu0 0.0
      %6500 = vmatpush1.msra.mxu0 0.0
      %6501 = vmatprep.subr.mxu0 0.0
      %6502 = vmatpush1.msra.mxu0 0.0
      %6503 = vmatprep.subr.mxu0 0.0
      %6504 = vmatpush1.msra.mxu0 0.0
      %6505 = vmatprep.subr.mxu0 0.0
      %6506 = vmatpush1.msra.mxu0 0.0
      %6507 = vmatprep.subr.mxu0 0.0
      %6508 = vmatpush1.msra.mxu0 0.0
      %6509 = vmatprep.subr.mxu0 0.0
      %6510 = vmatpush1.msra.mxu0 0.0
      %6511 = vmatprep.subr.mxu0 0.0
      %6512 = vmatpush1.msra.mxu0 0.0
      %6513 = vmatprep.subr.mxu0 0.0
      %6514 = vmatpush1.msra.mxu0 0.0
      %6515 = vmatprep.subr.mxu0 0.0
      %6516 = vmatpush1.msra.mxu0 0.0
      %6517 = vmatprep.subr.mxu0 0.0
      %6518 = vmatpush1.msra.mxu0 0.0
      %6519 = vmatprep.subr.mxu0 0.0
      %6520 = vmatpush1.msra.mxu0 0.0
      %6521 = vmatprep.subr.mxu0 0.0
      %6522 = vmatpush1.msra.mxu0 0.0
      %6523 = vmatprep.subr.mxu0 0.0
      %6524 = vmatpush1.msra.mxu0 0.0
      %6525 = vmatprep.subr.mxu0 0.0
      %6526 = vmatpush1.msra.mxu0 0.0
      %6527 = vmatprep.subr.mxu0 0.0
      %6528 = vmatpush1.msra.mxu0 0.0
      %6529 = vmatprep.mubr.f32.mxu0 0.0
      %6530 = vmatmul.mubr.f32.gmra.mrb[0].mxu0 %v6463
      %v6531 = vpop.f32.mrb[0].mxu0
      %v6532 = vadd.f32 0.0, %v6531
      %v6533 = vpop.f32.mrb[0].mxu0
      %v6534 = vadd.f32 0.0, %v6533
      %6535 = vdwg.mxu0
      %v6536 = vadd.f32 %v6442, %v6532
      %v6537 = vadd.f32 %v6444, %v6534
      %s6538 = scalar_lea.vmem %s5, 144
      %v6539 = vld [vmem:[%s6538] sm:$0x3f]
      %6540 = vrot.lane.b32.xlu0 %v4900, 77
      %v6541 = vpop.permute.xlu0 %6540
      %6542 = vrot.lane.b32.xlu0 %v4902, 77
      %v6543 = vpop.permute.xlu0 %6542
      %6544 = vrot.lane.b32.xlu0 %v4901, 77
      %v6545 = vpop.permute.xlu0 %6544
      %6546 = vrot.lane.b32.xlu0 %v4903, 77
      %v6547 = vpop.permute.xlu0 %6546
      %v6548 = vsel %vm1915, %v6541, %v6543
      %v6549 = vsel %vm1915, %v6545, %v6547
      %v6555 = vsel %vm4925, %v6539, 0
      %6557 = vmatprep.subr.mxu0 %v6543
      %6558 = vmatpush1.msra.mxu0 %v6548
      %6559 = vmatprep.subr.mxu0 %v6547
      %6560 = vmatpush1.msra.mxu0 %v6549
      %6561 = vmatprep.subr.mxu0 0.0
      %6562 = vmatpush1.msra.mxu0 0.0
      %6563 = vmatprep.subr.mxu0 0.0
      %6564 = vmatpush1.msra.mxu0 0.0
      %6565 = vmatprep.subr.mxu0 0.0
      %6566 = vmatpush1.msra.mxu0 0.0
      %6567 = vmatprep.subr.mxu0 0.0
      %6568 = vmatpush1.msra.mxu0 0.0
      %6569 = vmatprep.subr.mxu0 0.0
      %6570 = vmatpush1.msra.mxu0 0.0
      %6571 = vmatprep.subr.mxu0 0.0
      %6572 = vmatpush1.msra.mxu0 0.0
      %6573 = vmatprep.subr.mxu0 0.0
      %6574 = vmatpush1.msra.mxu0 0.0
      %6575 = vmatprep.subr.mxu0 0.0
      %6576 = vmatpush1.msra.mxu0 0.0
      %6577 = vmatprep.subr.mxu0 0.0
      %6578 = vmatpush1.msra.mxu0 0.0
      %6579 = vmatprep.subr.mxu0 0.0
      %6580 = vmatpush1.msra.mxu0 0.0
      %6581 = vmatprep.subr.mxu0 0.0
      %6582 = vmatpush1.msra.mxu0 0.0
      %6583 = vmatprep.subr.mxu0 0.0
      %6584 = vmatpush1.msra.mxu0 0.0
      %6585 = vmatprep.subr.mxu0 0.0
      %6586 = vmatpush1.msra.mxu0 0.0
      %6587 = vmatprep.subr.mxu0 0.0
      %6588 = vmatpush1.msra.mxu0 0.0
      %6589 = vmatprep.subr.mxu0 0.0
      %6590 = vmatpush1.msra.mxu0 0.0
      %6591 = vmatprep.subr.mxu0 0.0
      %6592 = vmatpush1.msra.mxu0 0.0
      %6593 = vmatprep.subr.mxu0 0.0
      %6594 = vmatpush1.msra.mxu0 0.0
      %6595 = vmatprep.subr.mxu0 0.0
      %6596 = vmatpush1.msra.mxu0 0.0
      %6597 = vmatprep.subr.mxu0 0.0
      %6598 = vmatpush1.msra.mxu0 0.0
      %6599 = vmatprep.subr.mxu0 0.0
      %6600 = vmatpush1.msra.mxu0 0.0
      %6601 = vmatprep.subr.mxu0 0.0
      %6602 = vmatpush1.msra.mxu0 0.0
      %6603 = vmatprep.subr.mxu0 0.0
      %6604 = vmatpush1.msra.mxu0 0.0
      %6605 = vmatprep.subr.mxu0 0.0
      %6606 = vmatpush1.msra.mxu0 0.0
      %6607 = vmatprep.subr.mxu0 0.0
      %6608 = vmatpush1.msra.mxu0 0.0
      %6609 = vmatprep.subr.mxu0 0.0
      %6610 = vmatpush1.msra.mxu0 0.0
      %6611 = vmatprep.subr.mxu0 0.0
      %6612 = vmatpush1.msra.mxu0 0.0
      %6613 = vmatprep.subr.mxu0 0.0
      %6614 = vmatpush1.msra.mxu0 0.0
      %6615 = vmatprep.subr.mxu0 0.0
      %6616 = vmatpush1.msra.mxu0 0.0
      %6617 = vmatprep.subr.mxu0 0.0
      %6618 = vmatpush1.msra.mxu0 0.0
      %6619 = vmatprep.subr.mxu0 0.0
      %6620 = vmatpush1.msra.mxu0 0.0
      %6621 = vmatprep.mubr.f32.mxu0 0.0
      %6622 = vmatmul.mubr.f32.gmra.mrb[0].mxu0 %v6555
      %v6623 = vpop.f32.mrb[0].mxu0
      %v6624 = vadd.f32 0.0, %v6623
      %v6625 = vpop.f32.mrb[0].mxu0
      %v6626 = vadd.f32 0.0, %v6625
      %6627 = vdwg.mxu0
      %v6628 = vadd.f32 %v6536, %v6624
      %v6629 = vadd.f32 %v6537, %v6626
      %s6630 = scalar_lea.vmem %s5, 184
      %v6631 = vld [vmem:[%s6630] sm:$0x3f]
      %6632 = vrot.lane.b32.xlu0 %v4900, 61
      %v6633 = vpop.permute.xlu0 %6632
      %6634 = vrot.lane.b32.xlu0 %v4902, 61
      %v6635 = vpop.permute.xlu0 %6634
      %6636 = vrot.lane.b32.xlu0 %v4901, 61
      %v6637 = vpop.permute.xlu0 %6636
      %6638 = vrot.lane.b32.xlu0 %v4903, 61
      %v6639 = vpop.permute.xlu0 %6638
      %v6640 = vsel %vm2005, %v6633, %v6635
      %v6641 = vsel %vm2005, %v6635, %v2004
      %v6642 = vsel %vm2005, %v6637, %v6639
      %v6643 = vsel %vm2005, %v6639, %v2004
      %v6649 = vsel %vm4925, %v6631, 0
      %6651 = vmatprep.subr.mxu0 %v6641
      %6652 = vmatpush1.msra.mxu0 %v6640
      %6653 = vmatprep.subr.mxu0 %v6643
      %6654 = vmatpush1.msra.mxu0 %v6642
      %6655 = vmatprep.subr.mxu0 0.0
      %6656 = vmatpush1.msra.mxu0 0.0
      %6657 = vmatprep.subr.mxu0 0.0
      %6658 = vmatpush1.msra.mxu0 0.0
      %6659 = vmatprep.subr.mxu0 0.0
      %6660 = vmatpush1.msra.mxu0 0.0
      %6661 = vmatprep.subr.mxu0 0.0
      %6662 = vmatpush1.msra.mxu0 0.0
      %6663 = vmatprep.subr.mxu0 0.0
      %6664 = vmatpush1.msra.mxu0 0.0
      %6665 = vmatprep.subr.mxu0 0.0
      %6666 = vmatpush1.msra.mxu0 0.0
      %6667 = vmatprep.subr.mxu0 0.0
      %6668 = vmatpush1.msra.mxu0 0.0
      %6669 = vmatprep.subr.mxu0 0.0
      %6670 = vmatpush1.msra.mxu0 0.0
      %6671 = vmatprep.subr.mxu0 0.0
      %6672 = vmatpush1.msra.mxu0 0.0
      %6673 = vmatprep.subr.mxu0 0.0
      %6674 = vmatpush1.msra.mxu0 0.0
      %6675 = vmatprep.subr.mxu0 0.0
      %6676 = vmatpush1.msra.mxu0 0.0
      %6677 = vmatprep.subr.mxu0 0.0
      %6678 = vmatpush1.msra.mxu0 0.0
      %6679 = vmatprep.subr.mxu0 0.0
      %6680 = vmatpush1.msra.mxu0 0.0
      %6681 = vmatprep.subr.mxu0 0.0
      %6682 = vmatpush1.msra.mxu0 0.0
      %6683 = vmatprep.subr.mxu0 0.0
      %6684 = vmatpush1.msra.mxu0 0.0
      %6685 = vmatprep.subr.mxu0 0.0
      %6686 = vmatpush1.msra.mxu0 0.0
      %6687 = vmatprep.subr.mxu0 0.0
      %6688 = vmatpush1.msra.mxu0 0.0
      %6689 = vmatprep.subr.mxu0 0.0
      %6690 = vmatpush1.msra.mxu0 0.0
      %6691 = vmatprep.subr.mxu0 0.0
      %6692 = vmatpush1.msra.mxu0 0.0
      %6693 = vmatprep.subr.mxu0 0.0
      %6694 = vmatpush1.msra.mxu0 0.0
      %6695 = vmatprep.subr.mxu0 0.0
      %6696 = vmatpush1.msra.mxu0 0.0
      %6697 = vmatprep.subr.mxu0 0.0
      %6698 = vmatpush1.msra.mxu0 0.0
      %6699 = vmatprep.subr.mxu0 0.0
      %6700 = vmatpush1.msra.mxu0 0.0
      %6701 = vmatprep.subr.mxu0 0.0
      %6702 = vmatpush1.msra.mxu0 0.0
      %6703 = vmatprep.subr.mxu0 0.0
      %6704 = vmatpush1.msra.mxu0 0.0
      %6705 = vmatprep.subr.mxu0 0.0
      %6706 = vmatpush1.msra.mxu0 0.0
      %6707 = vmatprep.subr.mxu0 0.0
      %6708 = vmatpush1.msra.mxu0 0.0
      %6709 = vmatprep.subr.mxu0 0.0
      %6710 = vmatpush1.msra.mxu0 0.0
      %6711 = vmatprep.subr.mxu0 0.0
      %6712 = vmatpush1.msra.mxu0 0.0
      %6713 = vmatprep.subr.mxu0 0.0
      %6714 = vmatpush1.msra.mxu0 0.0
      %6715 = vmatprep.mubr.f32.mxu0 0.0
      %6716 = vmatmul.mubr.f32.gmra.mrb[0].mxu0 %v6649
      %v6717 = vpop.f32.mrb[0].mxu0
      %v6718 = vadd.f32 0.0, %v6717
      %v6719 = vpop.f32.mrb[0].mxu0
      %v6720 = vadd.f32 0.0, %v6719
      %6721 = vdwg.mxu0
      %v6722 = vadd.f32 %v6628, %v6718
      %v6723 = vadd.f32 %v6629, %v6720
      %s6724 = scalar_lea.vmem %s5, 32
      %v6725 = vld [vmem:[%s6724] sm:$0x3f]
      %s6726 = scalar_lea.vmem %s5, 72
      %v6727 = vld [vmem:[%s6726] sm:$0x3f]
      %6728 = vrot.lane.b32.xlu0 %v4900, 108
      %v6729 = vpop.permute.xlu0 %6728
      %6730 = vrot.lane.b32.xlu0 %v4902, 108
      %v6731 = vpop.permute.xlu0 %6730
      %6732 = vrot.lane.b32.xlu0 %v4901, 108
      %v6733 = vpop.permute.xlu0 %6732
      %6734 = vrot.lane.b32.xlu0 %v4903, 108
      %v6735 = vpop.permute.xlu0 %6734
      %v6736 = vsel %vm2096, %v6729, %v6731
      %v6737 = vsel %vm2096, %v6733, %v6735
      %v6743 = vsel %vm4925, %v6727, 0
      %6745 = vmatprep.subr.mxu0 %v6731
      %6746 = vmatpush1.msra.mxu0 %v6736
      %6747 = vmatprep.subr.mxu0 %v6735
      %6748 = vmatpush1.msra.mxu0 %v6737
      %6749 = vmatprep.subr.mxu0 0.0
      %6750 = vmatpush1.msra.mxu0 0.0
      %6751 = vmatprep.subr.mxu0 0.0
      %6752 = vmatpush1.msra.mxu0 0.0
      %6753 = vmatprep.subr.mxu0 0.0
      %6754 = vmatpush1.msra.mxu0 0.0
      %6755 = vmatprep.subr.mxu0 0.0
      %6756 = vmatpush1.msra.mxu0 0.0
      %6757 = vmatprep.subr.mxu0 0.0
      %6758 = vmatpush1.msra.mxu0 0.0
      %6759 = vmatprep.subr.mxu0 0.0
      %6760 = vmatpush1.msra.mxu0 0.0
      %6761 = vmatprep.subr.mxu0 0.0
      %6762 = vmatpush1.msra.mxu0 0.0
      %6763 = vmatprep.subr.mxu0 0.0
      %6764 = vmatpush1.msra.mxu0 0.0
      %6765 = vmatprep.subr.mxu0 0.0
      %6766 = vmatpush1.msra.mxu0 0.0
      %6767 = vmatprep.subr.mxu0 0.0
      %6768 = vmatpush1.msra.mxu0 0.0
      %6769 = vmatprep.subr.mxu0 0.0
      %6770 = vmatpush1.msra.mxu0 0.0
      %6771 = vmatprep.subr.mxu0 0.0
      %6772 = vmatpush1.msra.mxu0 0.0
      %6773 = vmatprep.subr.mxu0 0.0
      %6774 = vmatpush1.msra.mxu0 0.0
      %6775 = vmatprep.subr.mxu0 0.0
      %6776 = vmatpush1.msra.mxu0 0.0
      %6777 = vmatprep.subr.mxu0 0.0
      %6778 = vmatpush1.msra.mxu0 0.0
      %6779 = vmatprep.subr.mxu0 0.0
      %6780 = vmatpush1.msra.mxu0 0.0
      %6781 = vmatprep.subr.mxu0 0.0
      %6782 = vmatpush1.msra.mxu0 0.0
      %6783 = vmatprep.subr.mxu0 0.0
      %6784 = vmatpush1.msra.mxu0 0.0
      %6785 = vmatprep.subr.mxu0 0.0
      %6786 = vmatpush1.msra.mxu0 0.0
      %6787 = vmatprep.subr.mxu0 0.0
      %6788 = vmatpush1.msra.mxu0 0.0
      %6789 = vmatprep.subr.mxu0 0.0
      %6790 = vmatpush1.msra.mxu0 0.0
      %6791 = vmatprep.subr.mxu0 0.0
      %6792 = vmatpush1.msra.mxu0 0.0
      %6793 = vmatprep.subr.mxu0 0.0
      %6794 = vmatpush1.msra.mxu0 0.0
      %6795 = vmatprep.subr.mxu0 0.0
      %6796 = vmatpush1.msra.mxu0 0.0
      %6797 = vmatprep.subr.mxu0 0.0
      %6798 = vmatpush1.msra.mxu0 0.0
      %6799 = vmatprep.subr.mxu0 0.0
      %6800 = vmatpush1.msra.mxu0 0.0
      %6801 = vmatprep.subr.mxu0 0.0
      %6802 = vmatpush1.msra.mxu0 0.0
      %6803 = vmatprep.subr.mxu0 0.0
      %6804 = vmatpush1.msra.mxu0 0.0
      %6805 = vmatprep.subr.mxu0 0.0
      %6806 = vmatpush1.msra.mxu0 0.0
      %6807 = vmatprep.subr.mxu0 0.0
      %6808 = vmatpush1.msra.mxu0 0.0
      %6809 = vmatprep.mubr.f32.mxu0 0.0
      %6810 = vmatmul.mubr.f32.gmra.mrb[0].mxu0 %v6743
      %v6811 = vpop.f32.mrb[0].mxu0
      %v6812 = vadd.f32 0.0, %v6811
      %v6813 = vpop.f32.mrb[0].mxu0
      %v6814 = vadd.f32 0.0, %v6813
      %6815 = vdwg.mxu0
      %6816 = vrot.lane.b32.xlu0 %v4900, 124
      %v6817 = vpop.permute.xlu0 %6816
      %6818 = vrot.lane.b32.xlu0 %v4902, 124
      %v6819 = vpop.permute.xlu0 %6818
      %6820 = vrot.lane.b32.xlu0 %v4901, 124
      %v6821 = vpop.permute.xlu0 %6820
      %6822 = vrot.lane.b32.xlu0 %v4903, 124
      %v6823 = vpop.permute.xlu0 %6822
      %v6824 = vsel %vm2180, %v6817, %v6819
      %v6825 = vsel %vm2180, %v6821, %v6823
      %v6831 = vsel %vm4925, %v6725, 0
      %6833 = vmatprep.subr.mxu0 %v6819
      %6834 = vmatpush1.msra.mxu0 %v6824
      %6835 = vmatprep.subr.mxu0 %v6823
      %6836 = vmatpush1.msra.mxu0 %v6825
      %6837 = vmatprep.subr.mxu0 0.0
      %6838 = vmatpush1.msra.mxu0 0.0
      %6839 = vmatprep.subr.mxu0 0.0
      %6840 = vmatpush1.msra.mxu0 0.0
      %6841 = vmatprep.subr.mxu0 0.0
      %6842 = vmatpush1.msra.mxu0 0.0
      %6843 = vmatprep.subr.mxu0 0.0
      %6844 = vmatpush1.msra.mxu0 0.0
      %6845 = vmatprep.subr.mxu0 0.0
      %6846 = vmatpush1.msra.mxu0 0.0
      %6847 = vmatprep.subr.mxu0 0.0
      %6848 = vmatpush1.msra.mxu0 0.0
      %6849 = vmatprep.subr.mxu0 0.0
      %6850 = vmatpush1.msra.mxu0 0.0
      %6851 = vmatprep.subr.mxu0 0.0
      %6852 = vmatpush1.msra.mxu0 0.0
      %6853 = vmatprep.subr.mxu0 0.0
      %6854 = vmatpush1.msra.mxu0 0.0
      %6855 = vmatprep.subr.mxu0 0.0
      %6856 = vmatpush1.msra.mxu0 0.0
      %6857 = vmatprep.subr.mxu0 0.0
      %6858 = vmatpush1.msra.mxu0 0.0
      %6859 = vmatprep.subr.mxu0 0.0
      %6860 = vmatpush1.msra.mxu0 0.0
      %6861 = vmatprep.subr.mxu0 0.0
      %6862 = vmatpush1.msra.mxu0 0.0
      %6863 = vmatprep.subr.mxu0 0.0
      %6864 = vmatpush1.msra.mxu0 0.0
      %6865 = vmatprep.subr.mxu0 0.0
      %6866 = vmatpush1.msra.mxu0 0.0
      %6867 = vmatprep.subr.mxu0 0.0
      %6868 = vmatpush1.msra.mxu0 0.0
      %6869 = vmatprep.subr.mxu0 0.0
      %6870 = vmatpush1.msra.mxu0 0.0
      %6871 = vmatprep.subr.mxu0 0.0
      %6872 = vmatpush1.msra.mxu0 0.0
      %6873 = vmatprep.subr.mxu0 0.0
      %6874 = vmatpush1.msra.mxu0 0.0
      %6875 = vmatprep.subr.mxu0 0.0
      %6876 = vmatpush1.msra.mxu0 0.0
      %6877 = vmatprep.subr.mxu0 0.0
      %6878 = vmatpush1.msra.mxu0 0.0
      %6879 = vmatprep.subr.mxu0 0.0
      %6880 = vmatpush1.msra.mxu0 0.0
      %6881 = vmatprep.subr.mxu0 0.0
      %6882 = vmatpush1.msra.mxu0 0.0
      %6883 = vmatprep.subr.mxu0 0.0
      %6884 = vmatpush1.msra.mxu0 0.0
      %6885 = vmatprep.subr.mxu0 0.0
      %6886 = vmatpush1.msra.mxu0 0.0
      %6887 = vmatprep.subr.mxu0 0.0
      %6888 = vmatpush1.msra.mxu0 0.0
      %6889 = vmatprep.subr.mxu0 0.0
      %6890 = vmatpush1.msra.mxu0 0.0
      %6891 = vmatprep.subr.mxu0 0.0
      %6892 = vmatpush1.msra.mxu0 0.0
      %6893 = vmatprep.subr.mxu0 0.0
      %6894 = vmatpush1.msra.mxu0 0.0
      %6895 = vmatprep.subr.mxu0 0.0
      %6896 = vmatpush1.msra.mxu0 0.0
      %6897 = vmatprep.mubr.f32.mxu0 0.0
      %6898 = vmatmul.mubr.f32.gmra.mrb[0].mxu0 %v6831
      %v6899 = vpop.f32.mrb[0].mxu0
      %v6900 = vadd.f32 %v6812, %v6899
      %v6901 = vpop.f32.mrb[0].mxu0
      %v6902 = vadd.f32 %v6814, %v6901
      %6903 = vdwg.mxu0
      %s6904 = scalar_lea.vmem %s5, 112
      %v6905 = vld [vmem:[%s6904] sm:$0x3f]
      %6906 = vrot.lane.b32.xlu0 %v4900, 92
      %v6907 = vpop.permute.xlu0 %6906
      %6908 = vrot.lane.b32.xlu0 %v4902, 92
      %v6909 = vpop.permute.xlu0 %6908
      %6910 = vrot.lane.b32.xlu0 %v4901, 92
      %v6911 = vpop.permute.xlu0 %6910
      %6912 = vrot.lane.b32.xlu0 %v4903, 92
      %v6913 = vpop.permute.xlu0 %6912
      %v6914 = vsel %vm2266, %v6907, %v6909
      %v6915 = vsel %vm2266, %v6911, %v6913
      %v6921 = vsel %vm4925, %v6905, 0
      %6923 = vmatprep.subr.mxu0 %v6909
      %6924 = vmatpush1.msra.mxu0 %v6914
      %6925 = vmatprep.subr.mxu0 %v6913
      %6926 = vmatpush1.msra.mxu0 %v6915
      %6927 = vmatprep.subr.mxu0 0.0
      %6928 = vmatpush1.msra.mxu0 0.0
      %6929 = vmatprep.subr.mxu0 0.0
      %6930 = vmatpush1.msra.mxu0 0.0
      %6931 = vmatprep.subr.mxu0 0.0
      %6932 = vmatpush1.msra.mxu0 0.0
      %6933 = vmatprep.subr.mxu0 0.0
      %6934 = vmatpush1.msra.mxu0 0.0
      %6935 = vmatprep.subr.mxu0 0.0
      %6936 = vmatpush1.msra.mxu0 0.0
      %6937 = vmatprep.subr.mxu0 0.0
      %6938 = vmatpush1.msra.mxu0 0.0
      %6939 = vmatprep.subr.mxu0 0.0
      %6940 = vmatpush1.msra.mxu0 0.0
      %6941 = vmatprep.subr.mxu0 0.0
      %6942 = vmatpush1.msra.mxu0 0.0
      %6943 = vmatprep.subr.mxu0 0.0
      %6944 = vmatpush1.msra.mxu0 0.0
      %6945 = vmatprep.subr.mxu0 0.0
      %6946 = vmatpush1.msra.mxu0 0.0
      %6947 = vmatprep.subr.mxu0 0.0
      %6948 = vmatpush1.msra.mxu0 0.0
      %6949 = vmatprep.subr.mxu0 0.0
      %6950 = vmatpush1.msra.mxu0 0.0
      %6951 = vmatprep.subr.mxu0 0.0
      %6952 = vmatpush1.msra.mxu0 0.0
      %6953 = vmatprep.subr.mxu0 0.0
      %6954 = vmatpush1.msra.mxu0 0.0
      %6955 = vmatprep.subr.mxu0 0.0
      %6956 = vmatpush1.msra.mxu0 0.0
      %6957 = vmatprep.subr.mxu0 0.0
      %6958 = vmatpush1.msra.mxu0 0.0
      %6959 = vmatprep.subr.mxu0 0.0
      %6960 = vmatpush1.msra.mxu0 0.0
      %6961 = vmatprep.subr.mxu0 0.0
      %6962 = vmatpush1.msra.mxu0 0.0
      %6963 = vmatprep.subr.mxu0 0.0
      %6964 = vmatpush1.msra.mxu0 0.0
      %6965 = vmatprep.subr.mxu0 0.0
      %6966 = vmatpush1.msra.mxu0 0.0
      %6967 = vmatprep.subr.mxu0 0.0
      %6968 = vmatpush1.msra.mxu0 0.0
      %6969 = vmatprep.subr.mxu0 0.0
      %6970 = vmatpush1.msra.mxu0 0.0
      %6971 = vmatprep.subr.mxu0 0.0
      %6972 = vmatpush1.msra.mxu0 0.0
      %6973 = vmatprep.subr.mxu0 0.0
      %6974 = vmatpush1.msra.mxu0 0.0
      %6975 = vmatprep.subr.mxu0 0.0
      %6976 = vmatpush1.msra.mxu0 0.0
      %6977 = vmatprep.subr.mxu0 0.0
      %6978 = vmatpush1.msra.mxu0 0.0
      %6979 = vmatprep.subr.mxu0 0.0
      %6980 = vmatpush1.msra.mxu0 0.0
      %6981 = vmatprep.subr.mxu0 0.0
      %6982 = vmatpush1.msra.mxu0 0.0
      %6983 = vmatprep.subr.mxu0 0.0
      %6984 = vmatpush1.msra.mxu0 0.0
      %6985 = vmatprep.subr.mxu0 0.0
      %6986 = vmatpush1.msra.mxu0 0.0
      %6987 = vmatprep.mubr.f32.mxu0 0.0
      %6988 = vmatmul.mubr.f32.gmra.mrb[0].mxu0 %v6921
      %v6989 = vpop.f32.mrb[0].mxu0
      %v6990 = vadd.f32 0.0, %v6989
      %v6991 = vpop.f32.mrb[0].mxu0
      %v6992 = vadd.f32 0.0, %v6991
      %6993 = vdwg.mxu0
      %v6994 = vadd.f32 %v6900, %v6990
      %v6995 = vadd.f32 %v6902, %v6992
      %s6996 = scalar_lea.vmem %s5, 152
      %v6997 = vld [vmem:[%s6996] sm:$0x3f]
      %6998 = vrot.lane.b32.xlu0 %v4900, 76
      %v6999 = vpop.permute.xlu0 %6998
      %7000 = vrot.lane.b32.xlu0 %v4902, 76
      %v7001 = vpop.permute.xlu0 %7000
      %7002 = vrot.lane.b32.xlu0 %v4901, 76
      %v7003 = vpop.permute.xlu0 %7002
      %7004 = vrot.lane.b32.xlu0 %v4903, 76
      %v7005 = vpop.permute.xlu0 %7004
      %v7006 = vsel %vm2354, %v6999, %v7001
      %v7007 = vsel %vm2354, %v7003, %v7005
      %v7013 = vsel %vm4925, %v6997, 0
      %7015 = vmatprep.subr.mxu0 %v7001
      %7016 = vmatpush1.msra.mxu0 %v7006
      %7017 = vmatprep.subr.mxu0 %v7005
      %7018 = vmatpush1.msra.mxu0 %v7007
      %7019 = vmatprep.subr.mxu0 0.0
      %7020 = vmatpush1.msra.mxu0 0.0
      %7021 = vmatprep.subr.mxu0 0.0
      %7022 = vmatpush1.msra.mxu0 0.0
      %7023 = vmatprep.subr.mxu0 0.0
      %7024 = vmatpush1.msra.mxu0 0.0
      %7025 = vmatprep.subr.mxu0 0.0
      %7026 = vmatpush1.msra.mxu0 0.0
      %7027 = vmatprep.subr.mxu0 0.0
      %7028 = vmatpush1.msra.mxu0 0.0
      %7029 = vmatprep.subr.mxu0 0.0
      %7030 = vmatpush1.msra.mxu0 0.0
      %7031 = vmatprep.subr.mxu0 0.0
      %7032 = vmatpush1.msra.mxu0 0.0
      %7033 = vmatprep.subr.mxu0 0.0
      %7034 = vmatpush1.msra.mxu0 0.0
      %7035 = vmatprep.subr.mxu0 0.0
      %7036 = vmatpush1.msra.mxu0 0.0
      %7037 = vmatprep.subr.mxu0 0.0
      %7038 = vmatpush1.msra.mxu0 0.0
      %7039 = vmatprep.subr.mxu0 0.0
      %7040 = vmatpush1.msra.mxu0 0.0
      %7041 = vmatprep.subr.mxu0 0.0
      %7042 = vmatpush1.msra.mxu0 0.0
      %7043 = vmatprep.subr.mxu0 0.0
      %7044 = vmatpush1.msra.mxu0 0.0
      %7045 = vmatprep.subr.mxu0 0.0
      %7046 = vmatpush1.msra.mxu0 0.0
      %7047 = vmatprep.subr.mxu0 0.0
      %7048 = vmatpush1.msra.mxu0 0.0
      %7049 = vmatprep.subr.mxu0 0.0
      %7050 = vmatpush1.msra.mxu0 0.0
      %7051 = vmatprep.subr.mxu0 0.0
      %7052 = vmatpush1.msra.mxu0 0.0
      %7053 = vmatprep.subr.mxu0 0.0
      %7054 = vmatpush1.msra.mxu0 0.0
      %7055 = vmatprep.subr.mxu0 0.0
      %7056 = vmatpush1.msra.mxu0 0.0
      %7057 = vmatprep.subr.mxu0 0.0
      %7058 = vmatpush1.msra.mxu0 0.0
      %7059 = vmatprep.subr.mxu0 0.0
      %7060 = vmatpush1.msra.mxu0 0.0
      %7061 = vmatprep.subr.mxu0 0.0
      %7062 = vmatpush1.msra.mxu0 0.0
      %7063 = vmatprep.subr.mxu0 0.0
      %7064 = vmatpush1.msra.mxu0 0.0
      %7065 = vmatprep.subr.mxu0 0.0
      %7066 = vmatpush1.msra.mxu0 0.0
      %7067 = vmatprep.subr.mxu0 0.0
      %7068 = vmatpush1.msra.mxu0 0.0
      %7069 = vmatprep.subr.mxu0 0.0
      %7070 = vmatpush1.msra.mxu0 0.0
      %7071 = vmatprep.subr.mxu0 0.0
      %7072 = vmatpush1.msra.mxu0 0.0
      %7073 = vmatprep.subr.mxu0 0.0
      %7074 = vmatpush1.msra.mxu0 0.0
      %7075 = vmatprep.subr.mxu0 0.0
      %7076 = vmatpush1.msra.mxu0 0.0
      %7077 = vmatprep.subr.mxu0 0.0
      %7078 = vmatpush1.msra.mxu0 0.0
      %7079 = vmatprep.mubr.f32.mxu0 0.0
      %7080 = vmatmul.mubr.f32.gmra.mrb[0].mxu0 %v7013
      %v7081 = vpop.f32.mrb[0].mxu0
      %v7082 = vadd.f32 0.0, %v7081
      %v7083 = vpop.f32.mrb[0].mxu0
      %v7084 = vadd.f32 0.0, %v7083
      %7085 = vdwg.mxu0
      %v7086 = vadd.f32 %v6994, %v7082
      %v7087 = vadd.f32 %v6995, %v7084
      %s7088 = scalar_lea.vmem %s5, 192
      %v7089 = vld [vmem:[%s7088] sm:$0x3f]
      %7090 = vrot.lane.b32.xlu0 %v4900, 60
      %v7091 = vpop.permute.xlu0 %7090
      %7092 = vrot.lane.b32.xlu0 %v4902, 60
      %v7093 = vpop.permute.xlu0 %7092
      %7094 = vrot.lane.b32.xlu0 %v4901, 60
      %v7095 = vpop.permute.xlu0 %7094
      %7096 = vrot.lane.b32.xlu0 %v4903, 60
      %v7097 = vpop.permute.xlu0 %7096
      %v7098 = vsel %vm2444, %v7091, %v7093
      %v7099 = vsel %vm2444, %v7093, %v2443
      %v7100 = vsel %vm2444, %v7095, %v7097
      %v7101 = vsel %vm2444, %v7097, %v2443
      %v7107 = vsel %vm4925, %v7089, 0
      %7109 = vmatprep.subr.mxu0 %v7099
      %7110 = vmatpush1.msra.mxu0 %v7098
      %7111 = vmatprep.subr.mxu0 %v7101
      %7112 = vmatpush1.msra.mxu0 %v7100
      %7113 = vmatprep.subr.mxu0 0.0
      %7114 = vmatpush1.msra.mxu0 0.0
      %7115 = vmatprep.subr.mxu0 0.0
      %7116 = vmatpush1.msra.mxu0 0.0
      %7117 = vmatprep.subr.mxu0 0.0
      %7118 = vmatpush1.msra.mxu0 0.0
      %7119 = vmatprep.subr.mxu0 0.0
      %7120 = vmatpush1.msra.mxu0 0.0
      %7121 = vmatprep.subr.mxu0 0.0
      %7122 = vmatpush1.msra.mxu0 0.0
      %7123 = vmatprep.subr.mxu0 0.0
      %7124 = vmatpush1.msra.mxu0 0.0
      %7125 = vmatprep.subr.mxu0 0.0
      %7126 = vmatpush1.msra.mxu0 0.0
      %7127 = vmatprep.subr.mxu0 0.0
      %7128 = vmatpush1.msra.mxu0 0.0
      %7129 = vmatprep.subr.mxu0 0.0
      %7130 = vmatpush1.msra.mxu0 0.0
      %7131 = vmatprep.subr.mxu0 0.0
      %7132 = vmatpush1.msra.mxu0 0.0
      %7133 = vmatprep.subr.mxu0 0.0
      %7134 = vmatpush1.msra.mxu0 0.0
      %7135 = vmatprep.subr.mxu0 0.0
      %7136 = vmatpush1.msra.mxu0 0.0
      %7137 = vmatprep.subr.mxu0 0.0
      %7138 = vmatpush1.msra.mxu0 0.0
      %7139 = vmatprep.subr.mxu0 0.0
      %7140 = vmatpush1.msra.mxu0 0.0
      %7141 = vmatprep.subr.mxu0 0.0
      %7142 = vmatpush1.msra.mxu0 0.0
      %7143 = vmatprep.subr.mxu0 0.0
      %7144 = vmatpush1.msra.mxu0 0.0
      %7145 = vmatprep.subr.mxu0 0.0
      %7146 = vmatpush1.msra.mxu0 0.0
      %7147 = vmatprep.subr.mxu0 0.0
      %7148 = vmatpush1.msra.mxu0 0.0
      %7149 = vmatprep.subr.mxu0 0.0
      %7150 = vmatpush1.msra.mxu0 0.0
      %7151 = vmatprep.subr.mxu0 0.0
      %7152 = vmatpush1.msra.mxu0 0.0
      %7153 = vmatprep.subr.mxu0 0.0
      %7154 = vmatpush1.msra.mxu0 0.0
      %7155 = vmatprep.subr.mxu0 0.0
      %7156 = vmatpush1.msra.mxu0 0.0
      %7157 = vmatprep.subr.mxu0 0.0
      %7158 = vmatpush1.msra.mxu0 0.0
      %7159 = vmatprep.subr.mxu0 0.0
      %7160 = vmatpush1.msra.mxu0 0.0
      %7161 = vmatprep.subr.mxu0 0.0
      %7162 = vmatpush1.msra.mxu0 0.0
      %7163 = vmatprep.subr.mxu0 0.0
      %7164 = vmatpush1.msra.mxu0 0.0
      %7165 = vmatprep.subr.mxu0 0.0
      %7166 = vmatpush1.msra.mxu0 0.0
      %7167 = vmatprep.subr.mxu0 0.0
      %7168 = vmatpush1.msra.mxu0 0.0
      %7169 = vmatprep.subr.mxu0 0.0
      %7170 = vmatpush1.msra.mxu0 0.0
      %7171 = vmatprep.subr.mxu0 0.0
      %7172 = vmatpush1.msra.mxu0 0.0
      %7173 = vmatprep.mubr.f32.mxu0 0.0
      %7174 = vmatmul.mubr.f32.gmra.mrb[0].mxu0 %v7107
      %v7175 = vpop.f32.mrb[0].mxu0
      %v7176 = vadd.f32 0.0, %v7175
      %v7177 = vpop.f32.mrb[0].mxu0
      %v7178 = vadd.f32 0.0, %v7177
      %7179 = vdwg.mxu0
      %v7180 = vadd.f32 %v7086, %v7176
      %v7181 = vadd.f32 %v7087, %v7178
      %v7182 = vadd.f32 %v5348, %v5806
      %v7183 = vadd.f32 %v5349, %v5807
      %v7184 = vadd.f32 %v6264, %v6722
      %v7185 = vadd.f32 %v6265, %v6723
      %v7186 = vadd.f32 %v7182, %v7184
      %v7187 = vadd.f32 %v7183, %v7185
      %v7188 = vadd.f32 %v7186, %v7180
      %v7189 = vadd.f32 %v7187, %v7181
      %v7190 = vld [vmem:[%s6] sm:$0x3f]
      %7192 = vset.pattern.permute.xlu0 0
      %7193 = vperm.xlu0 %7192, %v7190
      %v7194 = vpop.permute.xlu0 %7193
      %v7196 = vadd.f32 %v7188, %v7194
      %v7197 = vadd.f32 %v7189, %v7194
      %v7198 = vmax.f32 %v7196, 0.0
      %v7199 = vmax.f32 %v7197, 0.0
      %v7200 = vadd.s32 %v4873, 128
      %vm7201 = vcmp.lt.s32.totalorder %v7200, 0
      %v7202 = vsub.s32 0, %v7200
      %v7203 = vsel %vm7201, %v7202, %v7200
      %v7204 = vshrl.u32 %v7203, 4
      %v7205 = vand.u32 %v7203, 15
      %v7206 = vsub.s32 0, %v7205
      %v7207 = vsel %vm7201, %v7206, %v7205
      %vm7208 = vcmp.ne.s32.totalorder %v7207, 0
      %vm7209 = vcmp.lt.s32.totalorder %v7207, 0
      %vm7210 = vmand %vm7209, %vm7208
      %v7211 = vadd.s32 %v7207, 16
      %v7212 = vsel %vm7210, %v7211, %v7207
      %vm7213 = vcmp.lt.s32.totalorder %v4885, 12
      %vm7214 = vcmp.lt.s32.totalorder %v7212, 12
      %v7215 = vsel %vm7213, 1, 0
      %v7216 = vsel %vm7214, 1, 0
      %v7217 = vcvt.s32.f32 %v7215
      %v7218 = vcvt.s32.f32 %v7216
      %v7219 = vmul.f32 %v7198, %v7217
      %v7220 = vmul.f32 %v7199, %v7218
      %7223 = vrot.lane.b32.xlu0 %v7219, 68
      %v7224 = vpop.permute.xlu0 %7223
      %7225 = vrot.lane.b32.xlu0 %v7220, 68
      %v7226 = vpop.permute.xlu0 %7225
      %v7227 = vsel %vm4899, %v7224, %v7226
      %v7230 = vsel %vm4899, 0.0, %v7224
      %vm7231 = vcmask 31744
      %v7232 = vsel %vm7231, %v7226, 0.0
      %v7233 = vld [vmem:[%s7] sm:$0x7]
      %s7234 = scalar_lea.vmem %s7, 20
      %v7235 = vld [vmem:[%s7234] sm:$0x7]
      %7238 = vrot.lane.b32.xlu0 %v7230, 112
      %v7239 = vpop.permute.xlu0 %7238
      %7240 = vrot.lane.b32.xlu0 %v7227, 112
      %v7241 = vpop.permute.xlu0 %7240
      %7242 = vrot.lane.b32.xlu0 %v7232, 112
      %v7243 = vpop.permute.xlu0 %7242
      %v7244 = vsel %vm343, %v7239, %v7241
      %v7245 = vsel %vm343, %v7241, %v7243
      %v7247 = vsel %vm2557, %v7235, 0
      %v7249 = vsel %vm2564, %v7244, 0
      %v7251 = vsel %vm2564, %v7245, 0
      %7253 = vmatprep.subr.mxu0 %v7251
      %7254 = vmatpush1.msra.mxu0 %v7249
      %7255 = vmatprep.subr.mxu0 0.0
      %7256 = vmatpush1.msra.mxu0 0.0
      %7257 = vmatprep.subr.mxu0 0.0
      %7258 = vmatpush1.msra.mxu0 0.0
      %7259 = vmatprep.subr.mxu0 0.0
      %7260 = vmatpush1.msra.mxu0 0.0
      %7261 = vmatprep.subr.mxu0 0.0
      %7262 = vmatpush1.msra.mxu0 0.0
      %7263 = vmatprep.subr.mxu0 0.0
      %7264 = vmatpush1.msra.mxu0 0.0
      %7265 = vmatprep.subr.mxu0 0.0
      %7266 = vmatpush1.msra.mxu0 0.0
      %7267 = vmatprep.subr.mxu0 0.0
      %7268 = vmatpush1.msra.mxu0 0.0
      %7269 = vmatprep.subr.mxu0 0.0
      %7270 = vmatpush1.msra.mxu0 0.0
      %7271 = vmatprep.subr.mxu0 0.0
      %7272 = vmatpush1.msra.mxu0 0.0
      %7273 = vmatprep.subr.mxu0 0.0
      %7274 = vmatpush1.msra.mxu0 0.0
      %7275 = vmatprep.subr.mxu0 0.0
      %7276 = vmatpush1.msra.mxu0 0.0
      %7277 = vmatprep.subr.mxu0 0.0
      %7278 = vmatpush1.msra.mxu0 0.0
      %7279 = vmatprep.subr.mxu0 0.0
      %7280 = vmatpush1.msra.mxu0 0.0
      %7281 = vmatprep.subr.mxu0 0.0
      %7282 = vmatpush1.msra.mxu0 0.0
      %7283 = vmatprep.subr.mxu0 0.0
      %7284 = vmatpush1.msra.mxu0 0.0
      %7285 = vmatprep.subr.mxu0 0.0
      %7286 = vmatpush1.msra.mxu0 0.0
      %7287 = vmatprep.subr.mxu0 0.0
      %7288 = vmatpush1.msra.mxu0 0.0
      %7289 = vmatprep.subr.mxu0 0.0
      %7290 = vmatpush1.msra.mxu0 0.0
      %7291 = vmatprep.subr.mxu0 0.0
      %7292 = vmatpush1.msra.mxu0 0.0
      %7293 = vmatprep.subr.mxu0 0.0
      %7294 = vmatpush1.msra.mxu0 0.0
      %7295 = vmatprep.subr.mxu0 0.0
      %7296 = vmatpush1.msra.mxu0 0.0
      %7297 = vmatprep.subr.mxu0 0.0
      %7298 = vmatpush1.msra.mxu0 0.0
      %7299 = vmatprep.subr.mxu0 0.0
      %7300 = vmatpush1.msra.mxu0 0.0
      %7301 = vmatprep.subr.mxu0 0.0
      %7302 = vmatpush1.msra.mxu0 0.0
      %7303 = vmatprep.subr.mxu0 0.0
      %7304 = vmatpush1.msra.mxu0 0.0
      %7305 = vmatprep.subr.mxu0 0.0
      %7306 = vmatpush1.msra.mxu0 0.0
      %7307 = vmatprep.subr.mxu0 0.0
      %7308 = vmatpush1.msra.mxu0 0.0
      %7309 = vmatprep.subr.mxu0 0.0
      %7310 = vmatpush1.msra.mxu0 0.0
      %7311 = vmatprep.subr.mxu0 0.0
      %7312 = vmatpush1.msra.mxu0 0.0
      %7313 = vmatprep.subr.mxu0 0.0
      %7314 = vmatpush1.msra.mxu0 0.0
      %7315 = vmatprep.subr.mxu0 0.0
      %7316 = vmatpush1.msra.mxu0 0.0
      %7317 = vmatprep.mubr.f32.mxu0 0.0
      %7318 = vmatmul.mubr.f32.gmra.mrb[0].mxu0 %v7247
      %v7319 = vpop.f32.mrb[0].mxu0
      %v7320 = vadd.f32 0.0, %v7319
      %v7321 = vpop.f32.mrb[0].mxu0
      %v7322 = vadd.f32 0.0, %v7321
      %7323 = vdwg.mxu0
      %v7325 = vsel %vm2557, %v7233, 0
      %v7327 = vsel %vm2564, %v7230, 0
      %v7329 = vsel %vm2564, %v7227, 0
      %7331 = vmatprep.subr.mxu0 %v7329
      %7332 = vmatpush1.msra.mxu0 %v7327
      %7333 = vmatprep.subr.mxu0 0.0
      %7334 = vmatpush1.msra.mxu0 0.0
      %7335 = vmatprep.subr.mxu0 0.0
      %7336 = vmatpush1.msra.mxu0 0.0
      %7337 = vmatprep.subr.mxu0 0.0
      %7338 = vmatpush1.msra.mxu0 0.0
      %7339 = vmatprep.subr.mxu0 0.0
      %7340 = vmatpush1.msra.mxu0 0.0
      %7341 = vmatprep.subr.mxu0 0.0
      %7342 = vmatpush1.msra.mxu0 0.0
      %7343 = vmatprep.subr.mxu0 0.0
      %7344 = vmatpush1.msra.mxu0 0.0
      %7345 = vmatprep.subr.mxu0 0.0
      %7346 = vmatpush1.msra.mxu0 0.0
      %7347 = vmatprep.subr.mxu0 0.0
      %7348 = vmatpush1.msra.mxu0 0.0
      %7349 = vmatprep.subr.mxu0 0.0
      %7350 = vmatpush1.msra.mxu0 0.0
      %7351 = vmatprep.subr.mxu0 0.0
      %7352 = vmatpush1.msra.mxu0 0.0
      %7353 = vmatprep.subr.mxu0 0.0
      %7354 = vmatpush1.msra.mxu0 0.0
      %7355 = vmatprep.subr.mxu0 0.0
      %7356 = vmatpush1.msra.mxu0 0.0
      %7357 = vmatprep.subr.mxu0 0.0
      %7358 = vmatpush1.msra.mxu0 0.0
      %7359 = vmatprep.subr.mxu0 0.0
      %7360 = vmatpush1.msra.mxu0 0.0
      %7361 = vmatprep.subr.mxu0 0.0
      %7362 = vmatpush1.msra.mxu0 0.0
      %7363 = vmatprep.subr.mxu0 0.0
      %7364 = vmatpush1.msra.mxu0 0.0
      %7365 = vmatprep.subr.mxu0 0.0
      %7366 = vmatpush1.msra.mxu0 0.0
      %7367 = vmatprep.subr.mxu0 0.0
      %7368 = vmatpush1.msra.mxu0 0.0
      %7369 = vmatprep.subr.mxu0 0.0
      %7370 = vmatpush1.msra.mxu0 0.0
      %7371 = vmatprep.subr.mxu0 0.0
      %7372 = vmatpush1.msra.mxu0 0.0
      %7373 = vmatprep.subr.mxu0 0.0
      %7374 = vmatpush1.msra.mxu0 0.0
      %7375 = vmatprep.subr.mxu0 0.0
      %7376 = vmatpush1.msra.mxu0 0.0
      %7377 = vmatprep.subr.mxu0 0.0
      %7378 = vmatpush1.msra.mxu0 0.0
      %7379 = vmatprep.subr.mxu0 0.0
      %7380 = vmatpush1.msra.mxu0 0.0
      %7381 = vmatprep.subr.mxu0 0.0
      %7382 = vmatpush1.msra.mxu0 0.0
      %7383 = vmatprep.subr.mxu0 0.0
      %7384 = vmatpush1.msra.mxu0 0.0
      %7385 = vmatprep.subr.mxu0 0.0
      %7386 = vmatpush1.msra.mxu0 0.0
      %7387 = vmatprep.subr.mxu0 0.0
      %7388 = vmatpush1.msra.mxu0 0.0
      %7389 = vmatprep.subr.mxu0 0.0
      %7390 = vmatpush1.msra.mxu0 0.0
      %7391 = vmatprep.subr.mxu0 0.0
      %7392 = vmatpush1.msra.mxu0 0.0
      %7393 = vmatprep.subr.mxu0 0.0
      %7394 = vmatpush1.msra.mxu0 0.0
      %7395 = vmatprep.mubr.f32.mxu0 0.0
      %7396 = vmatmul.mubr.f32.gmra.mrb[0].mxu0 %v7325
      %v7397 = vpop.f32.mrb[0].mxu0
      %v7398 = vadd.f32 %v7320, %v7397
      %v7399 = vpop.f32.mrb[0].mxu0
      %v7400 = vadd.f32 %v7322, %v7399
      %7401 = vdwg.mxu0
      %s7402 = scalar_lea.vmem %s7, 40
      %v7403 = vld [vmem:[%s7402] sm:$0x7]
      %7404 = vrot.lane.b32.xlu0 %v7230, 96
      %v7405 = vpop.permute.xlu0 %7404
      %7406 = vrot.lane.b32.xlu0 %v7227, 96
      %v7407 = vpop.permute.xlu0 %7406
      %7408 = vrot.lane.b32.xlu0 %v7232, 96
      %v7409 = vpop.permute.xlu0 %7408
      %v7410 = vsel %vm509, %v7405, %v7407
      %v7411 = vsel %vm509, %v7407, %v7409
      %v7413 = vsel %vm2557, %v7403, 0
      %v7415 = vsel %vm2564, %v7410, 0
      %v7417 = vsel %vm2564, %v7411, 0
      %7419 = vmatprep.subr.mxu0 %v7417
      %7420 = vmatpush1.msra.mxu0 %v7415
      %7421 = vmatprep.subr.mxu0 0.0
      %7422 = vmatpush1.msra.mxu0 0.0
      %7423 = vmatprep.subr.mxu0 0.0
      %7424 = vmatpush1.msra.mxu0 0.0
      %7425 = vmatprep.subr.mxu0 0.0
      %7426 = vmatpush1.msra.mxu0 0.0
      %7427 = vmatprep.subr.mxu0 0.0
      %7428 = vmatpush1.msra.mxu0 0.0
      %7429 = vmatprep.subr.mxu0 0.0
      %7430 = vmatpush1.msra.mxu0 0.0
      %7431 = vmatprep.subr.mxu0 0.0
      %7432 = vmatpush1.msra.mxu0 0.0
      %7433 = vmatprep.subr.mxu0 0.0
      %7434 = vmatpush1.msra.mxu0 0.0
      %7435 = vmatprep.subr.mxu0 0.0
      %7436 = vmatpush1.msra.mxu0 0.0
      %7437 = vmatprep.subr.mxu0 0.0
      %7438 = vmatpush1.msra.mxu0 0.0
      %7439 = vmatprep.subr.mxu0 0.0
      %7440 = vmatpush1.msra.mxu0 0.0
      %7441 = vmatprep.subr.mxu0 0.0
      %7442 = vmatpush1.msra.mxu0 0.0
      %7443 = vmatprep.subr.mxu0 0.0
      %7444 = vmatpush1.msra.mxu0 0.0
      %7445 = vmatprep.subr.mxu0 0.0
      %7446 = vmatpush1.msra.mxu0 0.0
      %7447 = vmatprep.subr.mxu0 0.0
      %7448 = vmatpush1.msra.mxu0 0.0
      %7449 = vmatprep.subr.mxu0 0.0
      %7450 = vmatpush1.msra.mxu0 0.0
      %7451 = vmatprep.subr.mxu0 0.0
      %7452 = vmatpush1.msra.mxu0 0.0
      %7453 = vmatprep.subr.mxu0 0.0
      %7454 = vmatpush1.msra.mxu0 0.0
      %7455 = vmatprep.subr.mxu0 0.0
      %7456 = vmatpush1.msra.mxu0 0.0
      %7457 = vmatprep.subr.mxu0 0.0
      %7458 = vmatpush1.msra.mxu0 0.0
      %7459 = vmatprep.subr.mxu0 0.0
      %7460 = vmatpush1.msra.mxu0 0.0
      %7461 = vmatprep.subr.mxu0 0.0
      %7462 = vmatpush1.msra.mxu0 0.0
      %7463 = vmatprep.subr.mxu0 0.0
      %7464 = vmatpush1.msra.mxu0 0.0
      %7465 = vmatprep.subr.mxu0 0.0
      %7466 = vmatpush1.msra.mxu0 0.0
      %7467 = vmatprep.subr.mxu0 0.0
      %7468 = vmatpush1.msra.mxu0 0.0
      %7469 = vmatprep.subr.mxu0 0.0
      %7470 = vmatpush1.msra.mxu0 0.0
      %7471 = vmatprep.subr.mxu0 0.0
      %7472 = vmatpush1.msra.mxu0 0.0
      %7473 = vmatprep.subr.mxu0 0.0
      %7474 = vmatpush1.msra.mxu0 0.0
      %7475 = vmatprep.subr.mxu0 0.0
      %7476 = vmatpush1.msra.mxu0 0.0
      %7477 = vmatprep.subr.mxu0 0.0
      %7478 = vmatpush1.msra.mxu0 0.0
      %7479 = vmatprep.subr.mxu0 0.0
      %7480 = vmatpush1.msra.mxu0 0.0
      %7481 = vmatprep.subr.mxu0 0.0
      %7482 = vmatpush1.msra.mxu0 0.0
      %7483 = vmatprep.mubr.f32.mxu0 0.0
      %7484 = vmatmul.mubr.f32.gmra.mrb[0].mxu0 %v7413
      %v7485 = vpop.f32.mrb[0].mxu0
      %v7486 = vadd.f32 0.0, %v7485
      %v7487 = vpop.f32.mrb[0].mxu0
      %v7488 = vadd.f32 0.0, %v7487
      %7489 = vdwg.mxu0
      %v7490 = vadd.f32 %v7398, %v7486
      %v7491 = vadd.f32 %v7400, %v7488
      %s7492 = scalar_lea.vmem %s7, 60
      %v7493 = vld [vmem:[%s7492] sm:$0x7]
      %7494 = vrot.lane.b32.xlu0 %v7230, 80
      %v7495 = vpop.permute.xlu0 %7494
      %7496 = vrot.lane.b32.xlu0 %v7227, 80
      %v7497 = vpop.permute.xlu0 %7496
      %7498 = vrot.lane.b32.xlu0 %v7232, 80
      %v7499 = vpop.permute.xlu0 %7498
      %v7500 = vsel %vm597, %v7495, %v7497
      %v7501 = vsel %vm597, %v7497, %v7499
      %v7503 = vsel %vm2557, %v7493, 0
      %v7505 = vsel %vm2564, %v7500, 0
      %v7507 = vsel %vm2564, %v7501, 0
      %7509 = vmatprep.subr.mxu0 %v7507
      %7510 = vmatpush1.msra.mxu0 %v7505
      %7511 = vmatprep.subr.mxu0 0.0
      %7512 = vmatpush1.msra.mxu0 0.0
      %7513 = vmatprep.subr.mxu0 0.0
      %7514 = vmatpush1.msra.mxu0 0.0
      %7515 = vmatprep.subr.mxu0 0.0
      %7516 = vmatpush1.msra.mxu0 0.0
      %7517 = vmatprep.subr.mxu0 0.0
      %7518 = vmatpush1.msra.mxu0 0.0
      %7519 = vmatprep.subr.mxu0 0.0
      %7520 = vmatpush1.msra.mxu0 0.0
      %7521 = vmatprep.subr.mxu0 0.0
      %7522 = vmatpush1.msra.mxu0 0.0
      %7523 = vmatprep.subr.mxu0 0.0
      %7524 = vmatpush1.msra.mxu0 0.0
      %7525 = vmatprep.subr.mxu0 0.0
      %7526 = vmatpush1.msra.mxu0 0.0
      %7527 = vmatprep.subr.mxu0 0.0
      %7528 = vmatpush1.msra.mxu0 0.0
      %7529 = vmatprep.subr.mxu0 0.0
      %7530 = vmatpush1.msra.mxu0 0.0
      %7531 = vmatprep.subr.mxu0 0.0
      %7532 = vmatpush1.msra.mxu0 0.0
      %7533 = vmatprep.subr.mxu0 0.0
      %7534 = vmatpush1.msra.mxu0 0.0
      %7535 = vmatprep.subr.mxu0 0.0
      %7536 = vmatpush1.msra.mxu0 0.0
      %7537 = vmatprep.subr.mxu0 0.0
      %7538 = vmatpush1.msra.mxu0 0.0
      %7539 = vmatprep.subr.mxu0 0.0
      %7540 = vmatpush1.msra.mxu0 0.0
      %7541 = vmatprep.subr.mxu0 0.0
      %7542 = vmatpush1.msra.mxu0 0.0
      %7543 = vmatprep.subr.mxu0 0.0
      %7544 = vmatpush1.msra.mxu0 0.0
      %7545 = vmatprep.subr.mxu0 0.0
      %7546 = vmatpush1.msra.mxu0 0.0
      %7547 = vmatprep.subr.mxu0 0.0
      %7548 = vmatpush1.msra.mxu0 0.0
      %7549 = vmatprep.subr.mxu0 0.0
      %7550 = vmatpush1.msra.mxu0 0.0
      %7551 = vmatprep.subr.mxu0 0.0
      %7552 = vmatpush1.msra.mxu0 0.0
      %7553 = vmatprep.subr.mxu0 0.0
      %7554 = vmatpush1.msra.mxu0 0.0
      %7555 = vmatprep.subr.mxu0 0.0
      %7556 = vmatpush1.msra.mxu0 0.0
      %7557 = vmatprep.subr.mxu0 0.0
      %7558 = vmatpush1.msra.mxu0 0.0
      %7559 = vmatprep.subr.mxu0 0.0
      %7560 = vmatpush1.msra.mxu0 0.0
      %7561 = vmatprep.subr.mxu0 0.0
      %7562 = vmatpush1.msra.mxu0 0.0
      %7563 = vmatprep.subr.mxu0 0.0
      %7564 = vmatpush1.msra.mxu0 0.0
      %7565 = vmatprep.subr.mxu0 0.0
      %7566 = vmatpush1.msra.mxu0 0.0
      %7567 = vmatprep.subr.mxu0 0.0
      %7568 = vmatpush1.msra.mxu0 0.0
      %7569 = vmatprep.subr.mxu0 0.0
      %7570 = vmatpush1.msra.mxu0 0.0
      %7571 = vmatprep.subr.mxu0 0.0
      %7572 = vmatpush1.msra.mxu0 0.0
      %7573 = vmatprep.mubr.f32.mxu0 0.0
      %7574 = vmatmul.mubr.f32.gmra.mrb[0].mxu0 %v7503
      %v7575 = vpop.f32.mrb[0].mxu0
      %v7576 = vadd.f32 0.0, %v7575
      %v7577 = vpop.f32.mrb[0].mxu0
      %v7578 = vadd.f32 0.0, %v7577
      %7579 = vdwg.mxu0
      %v7580 = vadd.f32 %v7490, %v7576
      %v7581 = vadd.f32 %v7491, %v7578
      %s7582 = scalar_lea.vmem %s7, 80
      %v7583 = vld [vmem:[%s7582] sm:$0x7]
      %7584 = vrot.lane.b32.xlu0 %v7230, 64
      %v7585 = vpop.permute.xlu0 %7584
      %7586 = vrot.lane.b32.xlu0 %v7227, 64
      %v7587 = vpop.permute.xlu0 %7586
      %7588 = vrot.lane.b32.xlu0 %v7232, 64
      %v7589 = vpop.permute.xlu0 %7588
      %v7590 = vsel %vm688, %v7585, %v7587
      %v7591 = vsel %vm688, %v7587, %v7589
      %v7593 = vsel %vm2557, %v7583, 0
      %v7595 = vsel %vm2564, %v7590, 0
      %v7597 = vsel %vm2564, %v7591, 0
      %7599 = vmatprep.subr.mxu0 %v7597
      %7600 = vmatpush1.msra.mxu0 %v7595
      %7601 = vmatprep.subr.mxu0 0.0
      %7602 = vmatpush1.msra.mxu0 0.0
      %7603 = vmatprep.subr.mxu0 0.0
      %7604 = vmatpush1.msra.mxu0 0.0
      %7605 = vmatprep.subr.mxu0 0.0
      %7606 = vmatpush1.msra.mxu0 0.0
      %7607 = vmatprep.subr.mxu0 0.0
      %7608 = vmatpush1.msra.mxu0 0.0
      %7609 = vmatprep.subr.mxu0 0.0
      %7610 = vmatpush1.msra.mxu0 0.0
      %7611 = vmatprep.subr.mxu0 0.0
      %7612 = vmatpush1.msra.mxu0 0.0
      %7613 = vmatprep.subr.mxu0 0.0
      %7614 = vmatpush1.msra.mxu0 0.0
      %7615 = vmatprep.subr.mxu0 0.0
      %7616 = vmatpush1.msra.mxu0 0.0
      %7617 = vmatprep.subr.mxu0 0.0
      %7618 = vmatpush1.msra.mxu0 0.0
      %7619 = vmatprep.subr.mxu0 0.0
      %7620 = vmatpush1.msra.mxu0 0.0
      %7621 = vmatprep.subr.mxu0 0.0
      %7622 = vmatpush1.msra.mxu0 0.0
      %7623 = vmatprep.subr.mxu0 0.0
      %7624 = vmatpush1.msra.mxu0 0.0
      %7625 = vmatprep.subr.mxu0 0.0
      %7626 = vmatpush1.msra.mxu0 0.0
      %7627 = vmatprep.subr.mxu0 0.0
      %7628 = vmatpush1.msra.mxu0 0.0
      %7629 = vmatprep.subr.mxu0 0.0
      %7630 = vmatpush1.msra.mxu0 0.0
      %7631 = vmatprep.subr.mxu0 0.0
      %7632 = vmatpush1.msra.mxu0 0.0
      %7633 = vmatprep.subr.mxu0 0.0
      %7634 = vmatpush1.msra.mxu0 0.0
      %7635 = vmatprep.subr.mxu0 0.0
      %7636 = vmatpush1.msra.mxu0 0.0
      %7637 = vmatprep.subr.mxu0 0.0
      %7638 = vmatpush1.msra.mxu0 0.0
      %7639 = vmatprep.subr.mxu0 0.0
      %7640 = vmatpush1.msra.mxu0 0.0
      %7641 = vmatprep.subr.mxu0 0.0
      %7642 = vmatpush1.msra.mxu0 0.0
      %7643 = vmatprep.subr.mxu0 0.0
      %7644 = vmatpush1.msra.mxu0 0.0
      %7645 = vmatprep.subr.mxu0 0.0
      %7646 = vmatpush1.msra.mxu0 0.0
      %7647 = vmatprep.subr.mxu0 0.0
      %7648 = vmatpush1.msra.mxu0 0.0
      %7649 = vmatprep.subr.mxu0 0.0
      %7650 = vmatpush1.msra.mxu0 0.0
      %7651 = vmatprep.subr.mxu0 0.0
      %7652 = vmatpush1.msra.mxu0 0.0
      %7653 = vmatprep.subr.mxu0 0.0
      %7654 = vmatpush1.msra.mxu0 0.0
      %7655 = vmatprep.subr.mxu0 0.0
      %7656 = vmatpush1.msra.mxu0 0.0
      %7657 = vmatprep.subr.mxu0 0.0
      %7658 = vmatpush1.msra.mxu0 0.0
      %7659 = vmatprep.subr.mxu0 0.0
      %7660 = vmatpush1.msra.mxu0 0.0
      %7661 = vmatprep.subr.mxu0 0.0
      %7662 = vmatpush1.msra.mxu0 0.0
      %7663 = vmatprep.mubr.f32.mxu0 0.0
      %7664 = vmatmul.mubr.f32.gmra.mrb[0].mxu0 %v7593
      %v7665 = vpop.f32.mrb[0].mxu0
      %v7666 = vadd.f32 0.0, %v7665
      %v7667 = vpop.f32.mrb[0].mxu0
      %v7668 = vadd.f32 0.0, %v7667
      %7669 = vdwg.mxu0
      %v7670 = vadd.f32 %v7580, %v7666
      %v7671 = vadd.f32 %v7581, %v7668
      %s7672 = scalar_lea.vmem %s7, 4
      %v7673 = vld [vmem:[%s7672] sm:$0x7]
      %s7674 = scalar_lea.vmem %s7, 24
      %v7675 = vld [vmem:[%s7674] sm:$0x7]
      %7676 = vrot.lane.b32.xlu0 %v7230, 111
      %v7677 = vpop.permute.xlu0 %7676
      %7678 = vrot.lane.b32.xlu0 %v7227, 111
      %v7679 = vpop.permute.xlu0 %7678
      %7680 = vrot.lane.b32.xlu0 %v7232, 111
      %v7681 = vpop.permute.xlu0 %7680
      %v7682 = vsel %vm779, %v7677, %v7679
      %v7683 = vsel %vm779, %v7679, %v7681
      %v7685 = vsel %vm2557, %v7675, 0
      %v7687 = vsel %vm2564, %v7682, 0
      %v7689 = vsel %vm2564, %v7683, 0
      %7691 = vmatprep.subr.mxu0 %v7689
      %7692 = vmatpush1.msra.mxu0 %v7687
      %7693 = vmatprep.subr.mxu0 0.0
      %7694 = vmatpush1.msra.mxu0 0.0
      %7695 = vmatprep.subr.mxu0 0.0
      %7696 = vmatpush1.msra.mxu0 0.0
      %7697 = vmatprep.subr.mxu0 0.0
      %7698 = vmatpush1.msra.mxu0 0.0
      %7699 = vmatprep.subr.mxu0 0.0
      %7700 = vmatpush1.msra.mxu0 0.0
      %7701 = vmatprep.subr.mxu0 0.0
      %7702 = vmatpush1.msra.mxu0 0.0
      %7703 = vmatprep.subr.mxu0 0.0
      %7704 = vmatpush1.msra.mxu0 0.0
      %7705 = vmatprep.subr.mxu0 0.0
      %7706 = vmatpush1.msra.mxu0 0.0
      %7707 = vmatprep.subr.mxu0 0.0
      %7708 = vmatpush1.msra.mxu0 0.0
      %7709 = vmatprep.subr.mxu0 0.0
      %7710 = vmatpush1.msra.mxu0 0.0
      %7711 = vmatprep.subr.mxu0 0.0
      %7712 = vmatpush1.msra.mxu0 0.0
      %7713 = vmatprep.subr.mxu0 0.0
      %7714 = vmatpush1.msra.mxu0 0.0
      %7715 = vmatprep.subr.mxu0 0.0
      %7716 = vmatpush1.msra.mxu0 0.0
      %7717 = vmatprep.subr.mxu0 0.0
      %7718 = vmatpush1.msra.mxu0 0.0
      %7719 = vmatprep.subr.mxu0 0.0
      %7720 = vmatpush1.msra.mxu0 0.0
      %7721 = vmatprep.subr.mxu0 0.0
      %7722 = vmatpush1.msra.mxu0 0.0
      %7723 = vmatprep.subr.mxu0 0.0
      %7724 = vmatpush1.msra.mxu0 0.0
      %7725 = vmatprep.subr.mxu0 0.0
      %7726 = vmatpush1.msra.mxu0 0.0
      %7727 = vmatprep.subr.mxu0 0.0
      %7728 = vmatpush1.msra.mxu0 0.0
      %7729 = vmatprep.subr.mxu0 0.0
      %7730 = vmatpush1.msra.mxu0 0.0
      %7731 = vmatprep.subr.mxu0 0.0
      %7732 = vmatpush1.msra.mxu0 0.0
      %7733 = vmatprep.subr.mxu0 0.0
      %7734 = vmatpush1.msra.mxu0 0.0
      %7735 = vmatprep.subr.mxu0 0.0
      %7736 = vmatpush1.msra.mxu0 0.0
      %7737 = vmatprep.subr.mxu0 0.0
      %7738 = vmatpush1.msra.mxu0 0.0
      %7739 = vmatprep.subr.mxu0 0.0
      %7740 = vmatpush1.msra.mxu0 0.0
      %7741 = vmatprep.subr.mxu0 0.0
      %7742 = vmatpush1.msra.mxu0 0.0
      %7743 = vmatprep.subr.mxu0 0.0
      %7744 = vmatpush1.msra.mxu0 0.0
      %7745 = vmatprep.subr.mxu0 0.0
      %7746 = vmatpush1.msra.mxu0 0.0
      %7747 = vmatprep.subr.mxu0 0.0
      %7748 = vmatpush1.msra.mxu0 0.0
      %7749 = vmatprep.subr.mxu0 0.0
      %7750 = vmatpush1.msra.mxu0 0.0
      %7751 = vmatprep.subr.mxu0 0.0
      %7752 = vmatpush1.msra.mxu0 0.0
      %7753 = vmatprep.subr.mxu0 0.0
      %7754 = vmatpush1.msra.mxu0 0.0
      %7755 = vmatprep.mubr.f32.mxu0 0.0
      %7756 = vmatmul.mubr.f32.gmra.mrb[0].mxu0 %v7685
      %v7757 = vpop.f32.mrb[0].mxu0
      %v7758 = vadd.f32 0.0, %v7757
      %v7759 = vpop.f32.mrb[0].mxu0
      %v7760 = vadd.f32 0.0, %v7759
      %7761 = vdwg.mxu0
      %7762 = vrot.lane.b32.xlu0 %v7230, 127
      %v7763 = vpop.permute.xlu0 %7762
      %7764 = vrot.lane.b32.xlu0 %v7227, 127
      %v7765 = vpop.permute.xlu0 %7764
      %7766 = vrot.lane.b32.xlu0 %v7232, 127
      %v7767 = vpop.permute.xlu0 %7766
      %v7768 = vsel %vm863, %v7763, %v7765
      %v7769 = vsel %vm863, %v7765, %v7767
      %v7771 = vsel %vm2557, %v7673, 0
      %v7773 = vsel %vm2564, %v7768, 0
      %v7775 = vsel %vm2564, %v7769, 0
      %7777 = vmatprep.subr.mxu0 %v7775
      %7778 = vmatpush1.msra.mxu0 %v7773
      %7779 = vmatprep.subr.mxu0 0.0
      %7780 = vmatpush1.msra.mxu0 0.0
      %7781 = vmatprep.subr.mxu0 0.0
      %7782 = vmatpush1.msra.mxu0 0.0
      %7783 = vmatprep.subr.mxu0 0.0
      %7784 = vmatpush1.msra.mxu0 0.0
      %7785 = vmatprep.subr.mxu0 0.0
      %7786 = vmatpush1.msra.mxu0 0.0
      %7787 = vmatprep.subr.mxu0 0.0
      %7788 = vmatpush1.msra.mxu0 0.0
      %7789 = vmatprep.subr.mxu0 0.0
      %7790 = vmatpush1.msra.mxu0 0.0
      %7791 = vmatprep.subr.mxu0 0.0
      %7792 = vmatpush1.msra.mxu0 0.0
      %7793 = vmatprep.subr.mxu0 0.0
      %7794 = vmatpush1.msra.mxu0 0.0
      %7795 = vmatprep.subr.mxu0 0.0
      %7796 = vmatpush1.msra.mxu0 0.0
      %7797 = vmatprep.subr.mxu0 0.0
      %7798 = vmatpush1.msra.mxu0 0.0
      %7799 = vmatprep.subr.mxu0 0.0
      %7800 = vmatpush1.msra.mxu0 0.0
      %7801 = vmatprep.subr.mxu0 0.0
      %7802 = vmatpush1.msra.mxu0 0.0
      %7803 = vmatprep.subr.mxu0 0.0
      %7804 = vmatpush1.msra.mxu0 0.0
      %7805 = vmatprep.subr.mxu0 0.0
      %7806 = vmatpush1.msra.mxu0 0.0
      %7807 = vmatprep.subr.mxu0 0.0
      %7808 = vmatpush1.msra.mxu0 0.0
      %7809 = vmatprep.subr.mxu0 0.0
      %7810 = vmatpush1.msra.mxu0 0.0
      %7811 = vmatprep.subr.mxu0 0.0
      %7812 = vmatpush1.msra.mxu0 0.0
      %7813 = vmatprep.subr.mxu0 0.0
      %7814 = vmatpush1.msra.mxu0 0.0
      %7815 = vmatprep.subr.mxu0 0.0
      %7816 = vmatpush1.msra.mxu0 0.0
      %7817 = vmatprep.subr.mxu0 0.0
      %7818 = vmatpush1.msra.mxu0 0.0
      %7819 = vmatprep.subr.mxu0 0.0
      %7820 = vmatpush1.msra.mxu0 0.0
      %7821 = vmatprep.subr.mxu0 0.0
      %7822 = vmatpush1.msra.mxu0 0.0
      %7823 = vmatprep.subr.mxu0 0.0
      %7824 = vmatpush1.msra.mxu0 0.0
      %7825 = vmatprep.subr.mxu0 0.0
      %7826 = vmatpush1.msra.mxu0 0.0
      %7827 = vmatprep.subr.mxu0 0.0
      %7828 = vmatpush1.msra.mxu0 0.0
      %7829 = vmatprep.subr.mxu0 0.0
      %7830 = vmatpush1.msra.mxu0 0.0
      %7831 = vmatprep.subr.mxu0 0.0
      %7832 = vmatpush1.msra.mxu0 0.0
      %7833 = vmatprep.subr.mxu0 0.0
      %7834 = vmatpush1.msra.mxu0 0.0
      %7835 = vmatprep.subr.mxu0 0.0
      %7836 = vmatpush1.msra.mxu0 0.0
      %7837 = vmatprep.subr.mxu0 0.0
      %7838 = vmatpush1.msra.mxu0 0.0
      %7839 = vmatprep.subr.mxu0 0.0
      %7840 = vmatpush1.msra.mxu0 0.0
      %7841 = vmatprep.mubr.f32.mxu0 0.0
      %7842 = vmatmul.mubr.f32.gmra.mrb[0].mxu0 %v7771
      %v7843 = vpop.f32.mrb[0].mxu0
      %v7844 = vadd.f32 %v7758, %v7843
      %v7845 = vpop.f32.mrb[0].mxu0
      %v7846 = vadd.f32 %v7760, %v7845
      %7847 = vdwg.mxu0
      %s7848 = scalar_lea.vmem %s7, 44
      %v7849 = vld [vmem:[%s7848] sm:$0x7]
      %7850 = vrot.lane.b32.xlu0 %v7230, 95
      %v7851 = vpop.permute.xlu0 %7850
      %7852 = vrot.lane.b32.xlu0 %v7227, 95
      %v7853 = vpop.permute.xlu0 %7852
      %7854 = vrot.lane.b32.xlu0 %v7232, 95
      %v7855 = vpop.permute.xlu0 %7854
      %v7856 = vsel %vm949, %v7851, %v7853
      %v7857 = vsel %vm949, %v7853, %v7855
      %v7859 = vsel %vm2557, %v7849, 0
      %v7861 = vsel %vm2564, %v7856, 0
      %v7863 = vsel %vm2564, %v7857, 0
      %7865 = vmatprep.subr.mxu0 %v7863
      %7866 = vmatpush1.msra.mxu0 %v7861
      %7867 = vmatprep.subr.mxu0 0.0
      %7868 = vmatpush1.msra.mxu0 0.0
      %7869 = vmatprep.subr.mxu0 0.0
      %7870 = vmatpush1.msra.mxu0 0.0
      %7871 = vmatprep.subr.mxu0 0.0
      %7872 = vmatpush1.msra.mxu0 0.0
      %7873 = vmatprep.subr.mxu0 0.0
      %7874 = vmatpush1.msra.mxu0 0.0
      %7875 = vmatprep.subr.mxu0 0.0
      %7876 = vmatpush1.msra.mxu0 0.0
      %7877 = vmatprep.subr.mxu0 0.0
      %7878 = vmatpush1.msra.mxu0 0.0
      %7879 = vmatprep.subr.mxu0 0.0
      %7880 = vmatpush1.msra.mxu0 0.0
      %7881 = vmatprep.subr.mxu0 0.0
      %7882 = vmatpush1.msra.mxu0 0.0
      %7883 = vmatprep.subr.mxu0 0.0
      %7884 = vmatpush1.msra.mxu0 0.0
      %7885 = vmatprep.subr.mxu0 0.0
      %7886 = vmatpush1.msra.mxu0 0.0
      %7887 = vmatprep.subr.mxu0 0.0
      %7888 = vmatpush1.msra.mxu0 0.0
      %7889 = vmatprep.subr.mxu0 0.0
      %7890 = vmatpush1.msra.mxu0 0.0
      %7891 = vmatprep.subr.mxu0 0.0
      %7892 = vmatpush1.msra.mxu0 0.0
      %7893 = vmatprep.subr.mxu0 0.0
      %7894 = vmatpush1.msra.mxu0 0.0
      %7895 = vmatprep.subr.mxu0 0.0
      %7896 = vmatpush1.msra.mxu0 0.0
      %7897 = vmatprep.subr.mxu0 0.0
      %7898 = vmatpush1.msra.mxu0 0.0
      %7899 = vmatprep.subr.mxu0 0.0
      %7900 = vmatpush1.msra.mxu0 0.0
      %7901 = vmatprep.subr.mxu0 0.0
      %7902 = vmatpush1.msra.mxu0 0.0
      %7903 = vmatprep.subr.mxu0 0.0
      %7904 = vmatpush1.msra.mxu0 0.0
      %7905 = vmatprep.subr.mxu0 0.0
      %7906 = vmatpush1.msra.mxu0 0.0
      %7907 = vmatprep.subr.mxu0 0.0
      %7908 = vmatpush1.msra.mxu0 0.0
      %7909 = vmatprep.subr.mxu0 0.0
      %7910 = vmatpush1.msra.mxu0 0.0
      %7911 = vmatprep.subr.mxu0 0.0
      %7912 = vmatpush1.msra.mxu0 0.0
      %7913 = vmatprep.subr.mxu0 0.0
      %7914 = vmatpush1.msra.mxu0 0.0
      %7915 = vmatprep.subr.mxu0 0.0
      %7916 = vmatpush1.msra.mxu0 0.0
      %7917 = vmatprep.subr.mxu0 0.0
      %7918 = vmatpush1.msra.mxu0 0.0
      %7919 = vmatprep.subr.mxu0 0.0
      %7920 = vmatpush1.msra.mxu0 0.0
      %7921 = vmatprep.subr.mxu0 0.0
      %7922 = vmatpush1.msra.mxu0 0.0
      %7923 = vmatprep.subr.mxu0 0.0
      %7924 = vmatpush1.msra.mxu0 0.0
      %7925 = vmatprep.subr.mxu0 0.0
      %7926 = vmatpush1.msra.mxu0 0.0
      %7927 = vmatprep.subr.mxu0 0.0
      %7928 = vmatpush1.msra.mxu0 0.0
      %7929 = vmatprep.mubr.f32.mxu0 0.0
      %7930 = vmatmul.mubr.f32.gmra.mrb[0].mxu0 %v7859
      %v7931 = vpop.f32.mrb[0].mxu0
      %v7932 = vadd.f32 0.0, %v7931
      %v7933 = vpop.f32.mrb[0].mxu0
      %v7934 = vadd.f32 0.0, %v7933
      %7935 = vdwg.mxu0
      %v7936 = vadd.f32 %v7844, %v7932
      %v7937 = vadd.f32 %v7846, %v7934
      %s7938 = scalar_lea.vmem %s7, 64
      %v7939 = vld [vmem:[%s7938] sm:$0x7]
      %7940 = vrot.lane.b32.xlu0 %v7230, 79
      %v7941 = vpop.permute.xlu0 %7940
      %7942 = vrot.lane.b32.xlu0 %v7227, 79
      %v7943 = vpop.permute.xlu0 %7942
      %7944 = vrot.lane.b32.xlu0 %v7232, 79
      %v7945 = vpop.permute.xlu0 %7944
      %v7946 = vsel %vm1037, %v7941, %v7943
      %v7947 = vsel %vm1037, %v7943, %v7945
      %v7949 = vsel %vm2557, %v7939, 0
      %v7951 = vsel %vm2564, %v7946, 0
      %v7953 = vsel %vm2564, %v7947, 0
      %7955 = vmatprep.subr.mxu0 %v7953
      %7956 = vmatpush1.msra.mxu0 %v7951
      %7957 = vmatprep.subr.mxu0 0.0
      %7958 = vmatpush1.msra.mxu0 0.0
      %7959 = vmatprep.subr.mxu0 0.0
      %7960 = vmatpush1.msra.mxu0 0.0
      %7961 = vmatprep.subr.mxu0 0.0
      %7962 = vmatpush1.msra.mxu0 0.0
      %7963 = vmatprep.subr.mxu0 0.0
      %7964 = vmatpush1.msra.mxu0 0.0
      %7965 = vmatprep.subr.mxu0 0.0
      %7966 = vmatpush1.msra.mxu0 0.0
      %7967 = vmatprep.subr.mxu0 0.0
      %7968 = vmatpush1.msra.mxu0 0.0
      %7969 = vmatprep.subr.mxu0 0.0
      %7970 = vmatpush1.msra.mxu0 0.0
      %7971 = vmatprep.subr.mxu0 0.0
      %7972 = vmatpush1.msra.mxu0 0.0
      %7973 = vmatprep.subr.mxu0 0.0
      %7974 = vmatpush1.msra.mxu0 0.0
      %7975 = vmatprep.subr.mxu0 0.0
      %7976 = vmatpush1.msra.mxu0 0.0
      %7977 = vmatprep.subr.mxu0 0.0
      %7978 = vmatpush1.msra.mxu0 0.0
      %7979 = vmatprep.subr.mxu0 0.0
      %7980 = vmatpush1.msra.mxu0 0.0
      %7981 = vmatprep.subr.mxu0 0.0
      %7982 = vmatpush1.msra.mxu0 0.0
      %7983 = vmatprep.subr.mxu0 0.0
      %7984 = vmatpush1.msra.mxu0 0.0
      %7985 = vmatprep.subr.mxu0 0.0
      %7986 = vmatpush1.msra.mxu0 0.0
      %7987 = vmatprep.subr.mxu0 0.0
      %7988 = vmatpush1.msra.mxu0 0.0
      %7989 = vmatprep.subr.mxu0 0.0
      %7990 = vmatpush1.msra.mxu0 0.0
      %7991 = vmatprep.subr.mxu0 0.0
      %7992 = vmatpush1.msra.mxu0 0.0
      %7993 = vmatprep.subr.mxu0 0.0
      %7994 = vmatpush1.msra.mxu0 0.0
      %7995 = vmatprep.subr.mxu0 0.0
      %7996 = vmatpush1.msra.mxu0 0.0
      %7997 = vmatprep.subr.mxu0 0.0
      %7998 = vmatpush1.msra.mxu0 0.0
      %7999 = vmatprep.subr.mxu0 0.0
      %8000 = vmatpush1.msra.mxu0 0.0
      %8001 = vmatprep.subr.mxu0 0.0
      %8002 = vmatpush1.msra.mxu0 0.0
      %8003 = vmatprep.subr.mxu0 0.0
      %8004 = vmatpush1.msra.mxu0 0.0
      %8005 = vmatprep.subr.mxu0 0.0
      %8006 = vmatpush1.msra.mxu0 0.0
      %8007 = vmatprep.subr.mxu0 0.0
      %8008 = vmatpush1.msra.mxu0 0.0
      %8009 = vmatprep.subr.mxu0 0.0
      %8010 = vmatpush1.msra.mxu0 0.0
      %8011 = vmatprep.subr.mxu0 0.0
      %8012 = vmatpush1.msra.mxu0 0.0
      %8013 = vmatprep.subr.mxu0 0.0
      %8014 = vmatpush1.msra.mxu0 0.0
      %8015 = vmatprep.subr.mxu0 0.0
      %8016 = vmatpush1.msra.mxu0 0.0
      %8017 = vmatprep.subr.mxu0 0.0
      %8018 = vmatpush1.msra.mxu0 0.0
      %8019 = vmatprep.mubr.f32.mxu0 0.0
      %8020 = vmatmul.mubr.f32.gmra.mrb[0].mxu0 %v7949
      %v8021 = vpop.f32.mrb[0].mxu0
      %v8022 = vadd.f32 0.0, %v8021
      %v8023 = vpop.f32.mrb[0].mxu0
      %v8024 = vadd.f32 0.0, %v8023
      %8025 = vdwg.mxu0
      %v8026 = vadd.f32 %v7936, %v8022
      %v8027 = vadd.f32 %v7937, %v8024
      %s8028 = scalar_lea.vmem %s7, 84
      %v8029 = vld [vmem:[%s8028] sm:$0x7]
      %8030 = vrot.lane.b32.xlu0 %v7230, 63
      %v8031 = vpop.permute.xlu0 %8030
      %8032 = vrot.lane.b32.xlu0 %v7227, 63
      %v8033 = vpop.permute.xlu0 %8032
      %8034 = vrot.lane.b32.xlu0 %v7232, 63
      %v8035 = vpop.permute.xlu0 %8034
      %v8036 = vsel %vm1127, %v8031, %v8033
      %v8037 = vsel %vm1127, %v8033, %v8035
      %v8039 = vsel %vm2557, %v8029, 0
      %v8041 = vsel %vm2564, %v8036, 0
      %v8043 = vsel %vm2564, %v8037, 0
      %8045 = vmatprep.subr.mxu0 %v8043
      %8046 = vmatpush1.msra.mxu0 %v8041
      %8047 = vmatprep.subr.mxu0 0.0
      %8048 = vmatpush1.msra.mxu0 0.0
      %8049 = vmatprep.subr.mxu0 0.0
      %8050 = vmatpush1.msra.mxu0 0.0
      %8051 = vmatprep.subr.mxu0 0.0
      %8052 = vmatpush1.msra.mxu0 0.0
      %8053 = vmatprep.subr.mxu0 0.0
      %8054 = vmatpush1.msra.mxu0 0.0
      %8055 = vmatprep.subr.mxu0 0.0
      %8056 = vmatpush1.msra.mxu0 0.0
      %8057 = vmatprep.subr.mxu0 0.0
      %8058 = vmatpush1.msra.mxu0 0.0
      %8059 = vmatprep.subr.mxu0 0.0
      %8060 = vmatpush1.msra.mxu0 0.0
      %8061 = vmatprep.subr.mxu0 0.0
      %8062 = vmatpush1.msra.mxu0 0.0
      %8063 = vmatprep.subr.mxu0 0.0
      %8064 = vmatpush1.msra.mxu0 0.0
      %8065 = vmatprep.subr.mxu0 0.0
      %8066 = vmatpush1.msra.mxu0 0.0
      %8067 = vmatprep.subr.mxu0 0.0
      %8068 = vmatpush1.msra.mxu0 0.0
      %8069 = vmatprep.subr.mxu0 0.0
      %8070 = vmatpush1.msra.mxu0 0.0
      %8071 = vmatprep.subr.mxu0 0.0
      %8072 = vmatpush1.msra.mxu0 0.0
      %8073 = vmatprep.subr.mxu0 0.0
      %8074 = vmatpush1.msra.mxu0 0.0
      %8075 = vmatprep.subr.mxu0 0.0
      %8076 = vmatpush1.msra.mxu0 0.0
      %8077 = vmatprep.subr.mxu0 0.0
      %8078 = vmatpush1.msra.mxu0 0.0
      %8079 = vmatprep.subr.mxu0 0.0
      %8080 = vmatpush1.msra.mxu0 0.0
      %8081 = vmatprep.subr.mxu0 0.0
      %8082 = vmatpush1.msra.mxu0 0.0
      %8083 = vmatprep.subr.mxu0 0.0
      %8084 = vmatpush1.msra.mxu0 0.0
      %8085 = vmatprep.subr.mxu0 0.0
      %8086 = vmatpush1.msra.mxu0 0.0
      %8087 = vmatprep.subr.mxu0 0.0
      %8088 = vmatpush1.msra.mxu0 0.0
      %8089 = vmatprep.subr.mxu0 0.0
      %8090 = vmatpush1.msra.mxu0 0.0
      %8091 = vmatprep.subr.mxu0 0.0
      %8092 = vmatpush1.msra.mxu0 0.0
      %8093 = vmatprep.subr.mxu0 0.0
      %8094 = vmatpush1.msra.mxu0 0.0
      %8095 = vmatprep.subr.mxu0 0.0
      %8096 = vmatpush1.msra.mxu0 0.0
      %8097 = vmatprep.subr.mxu0 0.0
      %8098 = vmatpush1.msra.mxu0 0.0
      %8099 = vmatprep.subr.mxu0 0.0
      %8100 = vmatpush1.msra.mxu0 0.0
      %8101 = vmatprep.subr.mxu0 0.0
      %8102 = vmatpush1.msra.mxu0 0.0
      %8103 = vmatprep.subr.mxu0 0.0
      %8104 = vmatpush1.msra.mxu0 0.0
      %8105 = vmatprep.subr.mxu0 0.0
      %8106 = vmatpush1.msra.mxu0 0.0
      %8107 = vmatprep.subr.mxu0 0.0
      %8108 = vmatpush1.msra.mxu0 0.0
      %8109 = vmatprep.mubr.f32.mxu0 0.0
      %8110 = vmatmul.mubr.f32.gmra.mrb[0].mxu0 %v8039
      %v8111 = vpop.f32.mrb[0].mxu0
      %v8112 = vadd.f32 0.0, %v8111
      %v8113 = vpop.f32.mrb[0].mxu0
      %v8114 = vadd.f32 0.0, %v8113
      %8115 = vdwg.mxu0
      %v8116 = vadd.f32 %v8026, %v8112
      %v8117 = vadd.f32 %v8027, %v8114
      %s8118 = scalar_lea.vmem %s7, 8
      %v8119 = vld [vmem:[%s8118] sm:$0x7]
      %s8120 = scalar_lea.vmem %s7, 28
      %v8121 = vld [vmem:[%s8120] sm:$0x7]
      %8122 = vrot.lane.b32.xlu0 %v7230, 110
      %v8123 = vpop.permute.xlu0 %8122
      %8124 = vrot.lane.b32.xlu0 %v7227, 110
      %v8125 = vpop.permute.xlu0 %8124
      %8126 = vrot.lane.b32.xlu0 %v7232, 110
      %v8127 = vpop.permute.xlu0 %8126
      %v8128 = vsel %vm1218, %v8123, %v8125
      %v8129 = vsel %vm1218, %v8125, %v8127
      %v8131 = vsel %vm2557, %v8121, 0
      %v8133 = vsel %vm2564, %v8128, 0
      %v8135 = vsel %vm2564, %v8129, 0
      %8137 = vmatprep.subr.mxu0 %v8135
      %8138 = vmatpush1.msra.mxu0 %v8133
      %8139 = vmatprep.subr.mxu0 0.0
      %8140 = vmatpush1.msra.mxu0 0.0
      %8141 = vmatprep.subr.mxu0 0.0
      %8142 = vmatpush1.msra.mxu0 0.0
      %8143 = vmatprep.subr.mxu0 0.0
      %8144 = vmatpush1.msra.mxu0 0.0
      %8145 = vmatprep.subr.mxu0 0.0
      %8146 = vmatpush1.msra.mxu0 0.0
      %8147 = vmatprep.subr.mxu0 0.0
      %8148 = vmatpush1.msra.mxu0 0.0
      %8149 = vmatprep.subr.mxu0 0.0
      %8150 = vmatpush1.msra.mxu0 0.0
      %8151 = vmatprep.subr.mxu0 0.0
      %8152 = vmatpush1.msra.mxu0 0.0
      %8153 = vmatprep.subr.mxu0 0.0
      %8154 = vmatpush1.msra.mxu0 0.0
      %8155 = vmatprep.subr.mxu0 0.0
      %8156 = vmatpush1.msra.mxu0 0.0
      %8157 = vmatprep.subr.mxu0 0.0
      %8158 = vmatpush1.msra.mxu0 0.0
      %8159 = vmatprep.subr.mxu0 0.0
      %8160 = vmatpush1.msra.mxu0 0.0
      %8161 = vmatprep.subr.mxu0 0.0
      %8162 = vmatpush1.msra.mxu0 0.0
      %8163 = vmatprep.subr.mxu0 0.0
      %8164 = vmatpush1.msra.mxu0 0.0
      %8165 = vmatprep.subr.mxu0 0.0
      %8166 = vmatpush1.msra.mxu0 0.0
      %8167 = vmatprep.subr.mxu0 0.0
      %8168 = vmatpush1.msra.mxu0 0.0
      %8169 = vmatprep.subr.mxu0 0.0
      %8170 = vmatpush1.msra.mxu0 0.0
      %8171 = vmatprep.subr.mxu0 0.0
      %8172 = vmatpush1.msra.mxu0 0.0
      %8173 = vmatprep.subr.mxu0 0.0
      %8174 = vmatpush1.msra.mxu0 0.0
      %8175 = vmatprep.subr.mxu0 0.0
      %8176 = vmatpush1.msra.mxu0 0.0
      %8177 = vmatprep.subr.mxu0 0.0
      %8178 = vmatpush1.msra.mxu0 0.0
      %8179 = vmatprep.subr.mxu0 0.0
      %8180 = vmatpush1.msra.mxu0 0.0
      %8181 = vmatprep.subr.mxu0 0.0
      %8182 = vmatpush1.msra.mxu0 0.0
      %8183 = vmatprep.subr.mxu0 0.0
      %8184 = vmatpush1.msra.mxu0 0.0
      %8185 = vmatprep.subr.mxu0 0.0
      %8186 = vmatpush1.msra.mxu0 0.0
      %8187 = vmatprep.subr.mxu0 0.0
      %8188 = vmatpush1.msra.mxu0 0.0
      %8189 = vmatprep.subr.mxu0 0.0
      %8190 = vmatpush1.msra.mxu0 0.0
      %8191 = vmatprep.subr.mxu0 0.0
      %8192 = vmatpush1.msra.mxu0 0.0
      %8193 = vmatprep.subr.mxu0 0.0
      %8194 = vmatpush1.msra.mxu0 0.0
      %8195 = vmatprep.subr.mxu0 0.0
      %8196 = vmatpush1.msra.mxu0 0.0
      %8197 = vmatprep.subr.mxu0 0.0
      %8198 = vmatpush1.msra.mxu0 0.0
      %8199 = vmatprep.subr.mxu0 0.0
      %8200 = vmatpush1.msra.mxu0 0.0
      %8201 = vmatprep.mubr.f32.mxu0 0.0
      %8202 = vmatmul.mubr.f32.gmra.mrb[0].mxu0 %v8131
      %v8203 = vpop.f32.mrb[0].mxu0
      %v8204 = vadd.f32 0.0, %v8203
      %v8205 = vpop.f32.mrb[0].mxu0
      %v8206 = vadd.f32 0.0, %v8205
      %8207 = vdwg.mxu0
      %8208 = vrot.lane.b32.xlu0 %v7230, 126
      %v8209 = vpop.permute.xlu0 %8208
      %8210 = vrot.lane.b32.xlu0 %v7227, 126
      %v8211 = vpop.permute.xlu0 %8210
      %8212 = vrot.lane.b32.xlu0 %v7232, 126
      %v8213 = vpop.permute.xlu0 %8212
      %v8214 = vsel %vm1302, %v8209, %v8211
      %v8215 = vsel %vm1302, %v8211, %v8213
      %v8217 = vsel %vm2557, %v8119, 0
      %v8219 = vsel %vm2564, %v8214, 0
      %v8221 = vsel %vm2564, %v8215, 0
      %8223 = vmatprep.subr.mxu0 %v8221
      %8224 = vmatpush1.msra.mxu0 %v8219
      %8225 = vmatprep.subr.mxu0 0.0
      %8226 = vmatpush1.msra.mxu0 0.0
      %8227 = vmatprep.subr.mxu0 0.0
      %8228 = vmatpush1.msra.mxu0 0.0
      %8229 = vmatprep.subr.mxu0 0.0
      %8230 = vmatpush1.msra.mxu0 0.0
      %8231 = vmatprep.subr.mxu0 0.0
      %8232 = vmatpush1.msra.mxu0 0.0
      %8233 = vmatprep.subr.mxu0 0.0
      %8234 = vmatpush1.msra.mxu0 0.0
      %8235 = vmatprep.subr.mxu0 0.0
      %8236 = vmatpush1.msra.mxu0 0.0
      %8237 = vmatprep.subr.mxu0 0.0
      %8238 = vmatpush1.msra.mxu0 0.0
      %8239 = vmatprep.subr.mxu0 0.0
      %8240 = vmatpush1.msra.mxu0 0.0
      %8241 = vmatprep.subr.mxu0 0.0
      %8242 = vmatpush1.msra.mxu0 0.0
      %8243 = vmatprep.subr.mxu0 0.0
      %8244 = vmatpush1.msra.mxu0 0.0
      %8245 = vmatprep.subr.mxu0 0.0
      %8246 = vmatpush1.msra.mxu0 0.0
      %8247 = vmatprep.subr.mxu0 0.0
      %8248 = vmatpush1.msra.mxu0 0.0
      %8249 = vmatprep.subr.mxu0 0.0
      %8250 = vmatpush1.msra.mxu0 0.0
      %8251 = vmatprep.subr.mxu0 0.0
      %8252 = vmatpush1.msra.mxu0 0.0
      %8253 = vmatprep.subr.mxu0 0.0
      %8254 = vmatpush1.msra.mxu0 0.0
      %8255 = vmatprep.subr.mxu0 0.0
      %8256 = vmatpush1.msra.mxu0 0.0
      %8257 = vmatprep.subr.mxu0 0.0
      %8258 = vmatpush1.msra.mxu0 0.0
      %8259 = vmatprep.subr.mxu0 0.0
      %8260 = vmatpush1.msra.mxu0 0.0
      %8261 = vmatprep.subr.mxu0 0.0
      %8262 = vmatpush1.msra.mxu0 0.0
      %8263 = vmatprep.subr.mxu0 0.0
      %8264 = vmatpush1.msra.mxu0 0.0
      %8265 = vmatprep.subr.mxu0 0.0
      %8266 = vmatpush1.msra.mxu0 0.0
      %8267 = vmatprep.subr.mxu0 0.0
      %8268 = vmatpush1.msra.mxu0 0.0
      %8269 = vmatprep.subr.mxu0 0.0
      %8270 = vmatpush1.msra.mxu0 0.0
      %8271 = vmatprep.subr.mxu0 0.0
      %8272 = vmatpush1.msra.mxu0 0.0
      %8273 = vmatprep.subr.mxu0 0.0
      %8274 = vmatpush1.msra.mxu0 0.0
      %8275 = vmatprep.subr.mxu0 0.0
      %8276 = vmatpush1.msra.mxu0 0.0
      %8277 = vmatprep.subr.mxu0 0.0
      %8278 = vmatpush1.msra.mxu0 0.0
      %8279 = vmatprep.subr.mxu0 0.0
      %8280 = vmatpush1.msra.mxu0 0.0
      %8281 = vmatprep.subr.mxu0 0.0
      %8282 = vmatpush1.msra.mxu0 0.0
      %8283 = vmatprep.subr.mxu0 0.0
      %8284 = vmatpush1.msra.mxu0 0.0
      %8285 = vmatprep.subr.mxu0 0.0
      %8286 = vmatpush1.msra.mxu0 0.0
      %8287 = vmatprep.mubr.f32.mxu0 0.0
      %8288 = vmatmul.mubr.f32.gmra.mrb[0].mxu0 %v8217
      %v8289 = vpop.f32.mrb[0].mxu0
      %v8290 = vadd.f32 %v8204, %v8289
      %v8291 = vpop.f32.mrb[0].mxu0
      %v8292 = vadd.f32 %v8206, %v8291
      %8293 = vdwg.mxu0
      %s8294 = scalar_lea.vmem %s7, 48
      %v8295 = vld [vmem:[%s8294] sm:$0x7]
      %8296 = vrot.lane.b32.xlu0 %v7230, 94
      %v8297 = vpop.permute.xlu0 %8296
      %8298 = vrot.lane.b32.xlu0 %v7227, 94
      %v8299 = vpop.permute.xlu0 %8298
      %8300 = vrot.lane.b32.xlu0 %v7232, 94
      %v8301 = vpop.permute.xlu0 %8300
      %v8302 = vsel %vm1388, %v8297, %v8299
      %v8303 = vsel %vm1388, %v8299, %v8301
      %v8305 = vsel %vm2557, %v8295, 0
      %v8307 = vsel %vm2564, %v8302, 0
      %v8309 = vsel %vm2564, %v8303, 0
      %8311 = vmatprep.subr.mxu0 %v8309
      %8312 = vmatpush1.msra.mxu0 %v8307
      %8313 = vmatprep.subr.mxu0 0.0
      %8314 = vmatpush1.msra.mxu0 0.0
      %8315 = vmatprep.subr.mxu0 0.0
      %8316 = vmatpush1.msra.mxu0 0.0
      %8317 = vmatprep.subr.mxu0 0.0
      %8318 = vmatpush1.msra.mxu0 0.0
      %8319 = vmatprep.subr.mxu0 0.0
      %8320 = vmatpush1.msra.mxu0 0.0
      %8321 = vmatprep.subr.mxu0 0.0
      %8322 = vmatpush1.msra.mxu0 0.0
      %8323 = vmatprep.subr.mxu0 0.0
      %8324 = vmatpush1.msra.mxu0 0.0
      %8325 = vmatprep.subr.mxu0 0.0
      %8326 = vmatpush1.msra.mxu0 0.0
      %8327 = vmatprep.subr.mxu0 0.0
      %8328 = vmatpush1.msra.mxu0 0.0
      %8329 = vmatprep.subr.mxu0 0.0
      %8330 = vmatpush1.msra.mxu0 0.0
      %8331 = vmatprep.subr.mxu0 0.0
      %8332 = vmatpush1.msra.mxu0 0.0
      %8333 = vmatprep.subr.mxu0 0.0
      %8334 = vmatpush1.msra.mxu0 0.0
      %8335 = vmatprep.subr.mxu0 0.0
      %8336 = vmatpush1.msra.mxu0 0.0
      %8337 = vmatprep.subr.mxu0 0.0
      %8338 = vmatpush1.msra.mxu0 0.0
      %8339 = vmatprep.subr.mxu0 0.0
      %8340 = vmatpush1.msra.mxu0 0.0
      %8341 = vmatprep.subr.mxu0 0.0
      %8342 = vmatpush1.msra.mxu0 0.0
      %8343 = vmatprep.subr.mxu0 0.0
      %8344 = vmatpush1.msra.mxu0 0.0
      %8345 = vmatprep.subr.mxu0 0.0
      %8346 = vmatpush1.msra.mxu0 0.0
      %8347 = vmatprep.subr.mxu0 0.0
      %8348 = vmatpush1.msra.mxu0 0.0
      %8349 = vmatprep.subr.mxu0 0.0
      %8350 = vmatpush1.msra.mxu0 0.0
      %8351 = vmatprep.subr.mxu0 0.0
      %8352 = vmatpush1.msra.mxu0 0.0
      %8353 = vmatprep.subr.mxu0 0.0
      %8354 = vmatpush1.msra.mxu0 0.0
      %8355 = vmatprep.subr.mxu0 0.0
      %8356 = vmatpush1.msra.mxu0 0.0
      %8357 = vmatprep.subr.mxu0 0.0
      %8358 = vmatpush1.msra.mxu0 0.0
      %8359 = vmatprep.subr.mxu0 0.0
      %8360 = vmatpush1.msra.mxu0 0.0
      %8361 = vmatprep.subr.mxu0 0.0
      %8362 = vmatpush1.msra.mxu0 0.0
      %8363 = vmatprep.subr.mxu0 0.0
      %8364 = vmatpush1.msra.mxu0 0.0
      %8365 = vmatprep.subr.mxu0 0.0
      %8366 = vmatpush1.msra.mxu0 0.0
      %8367 = vmatprep.subr.mxu0 0.0
      %8368 = vmatpush1.msra.mxu0 0.0
      %8369 = vmatprep.subr.mxu0 0.0
      %8370 = vmatpush1.msra.mxu0 0.0
      %8371 = vmatprep.subr.mxu0 0.0
      %8372 = vmatpush1.msra.mxu0 0.0
      %8373 = vmatprep.subr.mxu0 0.0
      %8374 = vmatpush1.msra.mxu0 0.0
      %8375 = vmatprep.mubr.f32.mxu0 0.0
      %8376 = vmatmul.mubr.f32.gmra.mrb[0].mxu0 %v8305
      %v8377 = vpop.f32.mrb[0].mxu0
      %v8378 = vadd.f32 0.0, %v8377
      %v8379 = vpop.f32.mrb[0].mxu0
      %v8380 = vadd.f32 0.0, %v8379
      %8381 = vdwg.mxu0
      %v8382 = vadd.f32 %v8290, %v8378
      %v8383 = vadd.f32 %v8292, %v8380
      %s8384 = scalar_lea.vmem %s7, 68
      %v8385 = vld [vmem:[%s8384] sm:$0x7]
      %8386 = vrot.lane.b32.xlu0 %v7230, 78
      %v8387 = vpop.permute.xlu0 %8386
      %8388 = vrot.lane.b32.xlu0 %v7227, 78
      %v8389 = vpop.permute.xlu0 %8388
      %8390 = vrot.lane.b32.xlu0 %v7232, 78
      %v8391 = vpop.permute.xlu0 %8390
      %v8392 = vsel %vm1476, %v8387, %v8389
      %v8393 = vsel %vm1476, %v8389, %v8391
      %v8395 = vsel %vm2557, %v8385, 0
      %v8397 = vsel %vm2564, %v8392, 0
      %v8399 = vsel %vm2564, %v8393, 0
      %8401 = vmatprep.subr.mxu0 %v8399
      %8402 = vmatpush1.msra.mxu0 %v8397
      %8403 = vmatprep.subr.mxu0 0.0
      %8404 = vmatpush1.msra.mxu0 0.0
      %8405 = vmatprep.subr.mxu0 0.0
      %8406 = vmatpush1.msra.mxu0 0.0
      %8407 = vmatprep.subr.mxu0 0.0
      %8408 = vmatpush1.msra.mxu0 0.0
      %8409 = vmatprep.subr.mxu0 0.0
      %8410 = vmatpush1.msra.mxu0 0.0
      %8411 = vmatprep.subr.mxu0 0.0
      %8412 = vmatpush1.msra.mxu0 0.0
      %8413 = vmatprep.subr.mxu0 0.0
      %8414 = vmatpush1.msra.mxu0 0.0
      %8415 = vmatprep.subr.mxu0 0.0
      %8416 = vmatpush1.msra.mxu0 0.0
      %8417 = vmatprep.subr.mxu0 0.0
      %8418 = vmatpush1.msra.mxu0 0.0
      %8419 = vmatprep.subr.mxu0 0.0
      %8420 = vmatpush1.msra.mxu0 0.0
      %8421 = vmatprep.subr.mxu0 0.0
      %8422 = vmatpush1.msra.mxu0 0.0
      %8423 = vmatprep.subr.mxu0 0.0
      %8424 = vmatpush1.msra.mxu0 0.0
      %8425 = vmatprep.subr.mxu0 0.0
      %8426 = vmatpush1.msra.mxu0 0.0
      %8427 = vmatprep.subr.mxu0 0.0
      %8428 = vmatpush1.msra.mxu0 0.0
      %8429 = vmatprep.subr.mxu0 0.0
      %8430 = vmatpush1.msra.mxu0 0.0
      %8431 = vmatprep.subr.mxu0 0.0
      %8432 = vmatpush1.msra.mxu0 0.0
      %8433 = vmatprep.subr.mxu0 0.0
      %8434 = vmatpush1.msra.mxu0 0.0
      %8435 = vmatprep.subr.mxu0 0.0
      %8436 = vmatpush1.msra.mxu0 0.0
      %8437 = vmatprep.subr.mxu0 0.0
      %8438 = vmatpush1.msra.mxu0 0.0
      %8439 = vmatprep.subr.mxu0 0.0
      %8440 = vmatpush1.msra.mxu0 0.0
      %8441 = vmatprep.subr.mxu0 0.0
      %8442 = vmatpush1.msra.mxu0 0.0
      %8443 = vmatprep.subr.mxu0 0.0
      %8444 = vmatpush1.msra.mxu0 0.0
      %8445 = vmatprep.subr.mxu0 0.0
      %8446 = vmatpush1.msra.mxu0 0.0
      %8447 = vmatprep.subr.mxu0 0.0
      %8448 = vmatpush1.msra.mxu0 0.0
      %8449 = vmatprep.subr.mxu0 0.0
      %8450 = vmatpush1.msra.mxu0 0.0
      %8451 = vmatprep.subr.mxu0 0.0
      %8452 = vmatpush1.msra.mxu0 0.0
      %8453 = vmatprep.subr.mxu0 0.0
      %8454 = vmatpush1.msra.mxu0 0.0
      %8455 = vmatprep.subr.mxu0 0.0
      %8456 = vmatpush1.msra.mxu0 0.0
      %8457 = vmatprep.subr.mxu0 0.0
      %8458 = vmatpush1.msra.mxu0 0.0
      %8459 = vmatprep.subr.mxu0 0.0
      %8460 = vmatpush1.msra.mxu0 0.0
      %8461 = vmatprep.subr.mxu0 0.0
      %8462 = vmatpush1.msra.mxu0 0.0
      %8463 = vmatprep.subr.mxu0 0.0
      %8464 = vmatpush1.msra.mxu0 0.0
      %8465 = vmatprep.mubr.f32.mxu0 0.0
      %8466 = vmatmul.mubr.f32.gmra.mrb[0].mxu0 %v8395
      %v8467 = vpop.f32.mrb[0].mxu0
      %v8468 = vadd.f32 0.0, %v8467
      %v8469 = vpop.f32.mrb[0].mxu0
      %v8470 = vadd.f32 0.0, %v8469
      %8471 = vdwg.mxu0
      %v8472 = vadd.f32 %v8382, %v8468
      %v8473 = vadd.f32 %v8383, %v8470
      %s8474 = scalar_lea.vmem %s7, 88
      %v8475 = vld [vmem:[%s8474] sm:$0x7]
      %8476 = vrot.lane.b32.xlu0 %v7230, 62
      %v8477 = vpop.permute.xlu0 %8476
      %8478 = vrot.lane.b32.xlu0 %v7227, 62
      %v8479 = vpop.permute.xlu0 %8478
      %8480 = vrot.lane.b32.xlu0 %v7232, 62
      %v8481 = vpop.permute.xlu0 %8480
      %v8482 = vsel %vm1566, %v8477, %v8479
      %v8483 = vsel %vm1566, %v8479, %v8481
      %v8485 = vsel %vm2557, %v8475, 0
      %v8487 = vsel %vm2564, %v8482, 0
      %v8489 = vsel %vm2564, %v8483, 0
      %8491 = vmatprep.subr.mxu0 %v8489
      %8492 = vmatpush1.msra.mxu0 %v8487
      %8493 = vmatprep.subr.mxu0 0.0
      %8494 = vmatpush1.msra.mxu0 0.0
      %8495 = vmatprep.subr.mxu0 0.0
      %8496 = vmatpush1.msra.mxu0 0.0
      %8497 = vmatprep.subr.mxu0 0.0
      %8498 = vmatpush1.msra.mxu0 0.0
      %8499 = vmatprep.subr.mxu0 0.0
      %8500 = vmatpush1.msra.mxu0 0.0
      %8501 = vmatprep.subr.mxu0 0.0
      %8502 = vmatpush1.msra.mxu0 0.0
      %8503 = vmatprep.subr.mxu0 0.0
      %8504 = vmatpush1.msra.mxu0 0.0
      %8505 = vmatprep.subr.mxu0 0.0
      %8506 = vmatpush1.msra.mxu0 0.0
      %8507 = vmatprep.subr.mxu0 0.0
      %8508 = vmatpush1.msra.mxu0 0.0
      %8509 = vmatprep.subr.mxu0 0.0
      %8510 = vmatpush1.msra.mxu0 0.0
      %8511 = vmatprep.subr.mxu0 0.0
      %8512 = vmatpush1.msra.mxu0 0.0
      %8513 = vmatprep.subr.mxu0 0.0
      %8514 = vmatpush1.msra.mxu0 0.0
      %8515 = vmatprep.subr.mxu0 0.0
      %8516 = vmatpush1.msra.mxu0 0.0
      %8517 = vmatprep.subr.mxu0 0.0
      %8518 = vmatpush1.msra.mxu0 0.0
      %8519 = vmatprep.subr.mxu0 0.0
      %8520 = vmatpush1.msra.mxu0 0.0
      %8521 = vmatprep.subr.mxu0 0.0
      %8522 = vmatpush1.msra.mxu0 0.0
      %8523 = vmatprep.subr.mxu0 0.0
      %8524 = vmatpush1.msra.mxu0 0.0
      %8525 = vmatprep.subr.mxu0 0.0
      %8526 = vmatpush1.msra.mxu0 0.0
      %8527 = vmatprep.subr.mxu0 0.0
      %8528 = vmatpush1.msra.mxu0 0.0
      %8529 = vmatprep.subr.mxu0 0.0
      %8530 = vmatpush1.msra.mxu0 0.0
      %8531 = vmatprep.subr.mxu0 0.0
      %8532 = vmatpush1.msra.mxu0 0.0
      %8533 = vmatprep.subr.mxu0 0.0
      %8534 = vmatpush1.msra.mxu0 0.0
      %8535 = vmatprep.subr.mxu0 0.0
      %8536 = vmatpush1.msra.mxu0 0.0
      %8537 = vmatprep.subr.mxu0 0.0
      %8538 = vmatpush1.msra.mxu0 0.0
      %8539 = vmatprep.subr.mxu0 0.0
      %8540 = vmatpush1.msra.mxu0 0.0
      %8541 = vmatprep.subr.mxu0 0.0
      %8542 = vmatpush1.msra.mxu0 0.0
      %8543 = vmatprep.subr.mxu0 0.0
      %8544 = vmatpush1.msra.mxu0 0.0
      %8545 = vmatprep.subr.mxu0 0.0
      %8546 = vmatpush1.msra.mxu0 0.0
      %8547 = vmatprep.subr.mxu0 0.0
      %8548 = vmatpush1.msra.mxu0 0.0
      %8549 = vmatprep.subr.mxu0 0.0
      %8550 = vmatpush1.msra.mxu0 0.0
      %8551 = vmatprep.subr.mxu0 0.0
      %8552 = vmatpush1.msra.mxu0 0.0
      %8553 = vmatprep.subr.mxu0 0.0
      %8554 = vmatpush1.msra.mxu0 0.0
      %8555 = vmatprep.mubr.f32.mxu0 0.0
      %8556 = vmatmul.mubr.f32.gmra.mrb[0].mxu0 %v8485
      %v8557 = vpop.f32.mrb[0].mxu0
      %v8558 = vadd.f32 0.0, %v8557
      %v8559 = vpop.f32.mrb[0].mxu0
      %v8560 = vadd.f32 0.0, %v8559
      %8561 = vdwg.mxu0
      %v8562 = vadd.f32 %v8472, %v8558
      %v8563 = vadd.f32 %v8473, %v8560
      %s8564 = scalar_lea.vmem %s7, 12
      %v8565 = vld [vmem:[%s8564] sm:$0x7]
      %s8566 = scalar_lea.vmem %s7, 32
      %v8567 = vld [vmem:[%s8566] sm:$0x7]
      %8568 = vrot.lane.b32.xlu0 %v7230, 109
      %v8569 = vpop.permute.xlu0 %8568
      %8570 = vrot.lane.b32.xlu0 %v7227, 109
      %v8571 = vpop.permute.xlu0 %8570
      %8572 = vrot.lane.b32.xlu0 %v7232, 109
      %v8573 = vpop.permute.xlu0 %8572
      %v8574 = vsel %vm1657, %v8569, %v8571
      %v8575 = vsel %vm1657, %v8571, %v8573
      %v8577 = vsel %vm2557, %v8567, 0
      %v8579 = vsel %vm2564, %v8574, 0
      %v8581 = vsel %vm2564, %v8575, 0
      %8583 = vmatprep.subr.mxu0 %v8581
      %8584 = vmatpush1.msra.mxu0 %v8579
      %8585 = vmatprep.subr.mxu0 0.0
      %8586 = vmatpush1.msra.mxu0 0.0
      %8587 = vmatprep.subr.mxu0 0.0
      %8588 = vmatpush1.msra.mxu0 0.0
      %8589 = vmatprep.subr.mxu0 0.0
      %8590 = vmatpush1.msra.mxu0 0.0
      %8591 = vmatprep.subr.mxu0 0.0
      %8592 = vmatpush1.msra.mxu0 0.0
      %8593 = vmatprep.subr.mxu0 0.0
      %8594 = vmatpush1.msra.mxu0 0.0
      %8595 = vmatprep.subr.mxu0 0.0
      %8596 = vmatpush1.msra.mxu0 0.0
      %8597 = vmatprep.subr.mxu0 0.0
      %8598 = vmatpush1.msra.mxu0 0.0
      %8599 = vmatprep.subr.mxu0 0.0
      %8600 = vmatpush1.msra.mxu0 0.0
      %8601 = vmatprep.subr.mxu0 0.0
      %8602 = vmatpush1.msra.mxu0 0.0
      %8603 = vmatprep.subr.mxu0 0.0
      %8604 = vmatpush1.msra.mxu0 0.0
      %8605 = vmatprep.subr.mxu0 0.0
      %8606 = vmatpush1.msra.mxu0 0.0
      %8607 = vmatprep.subr.mxu0 0.0
      %8608 = vmatpush1.msra.mxu0 0.0
      %8609 = vmatprep.subr.mxu0 0.0
      %8610 = vmatpush1.msra.mxu0 0.0
      %8611 = vmatprep.subr.mxu0 0.0
      %8612 = vmatpush1.msra.mxu0 0.0
      %8613 = vmatprep.subr.mxu0 0.0
      %8614 = vmatpush1.msra.mxu0 0.0
      %8615 = vmatprep.subr.mxu0 0.0
      %8616 = vmatpush1.msra.mxu0 0.0
      %8617 = vmatprep.subr.mxu0 0.0
      %8618 = vmatpush1.msra.mxu0 0.0
      %8619 = vmatprep.subr.mxu0 0.0
      %8620 = vmatpush1.msra.mxu0 0.0
      %8621 = vmatprep.subr.mxu0 0.0
      %8622 = vmatpush1.msra.mxu0 0.0
      %8623 = vmatprep.subr.mxu0 0.0
      %8624 = vmatpush1.msra.mxu0 0.0
      %8625 = vmatprep.subr.mxu0 0.0
      %8626 = vmatpush1.msra.mxu0 0.0
      %8627 = vmatprep.subr.mxu0 0.0
      %8628 = vmatpush1.msra.mxu0 0.0
      %8629 = vmatprep.subr.mxu0 0.0
      %8630 = vmatpush1.msra.mxu0 0.0
      %8631 = vmatprep.subr.mxu0 0.0
      %8632 = vmatpush1.msra.mxu0 0.0
      %8633 = vmatprep.subr.mxu0 0.0
      %8634 = vmatpush1.msra.mxu0 0.0
      %8635 = vmatprep.subr.mxu0 0.0
      %8636 = vmatpush1.msra.mxu0 0.0
      %8637 = vmatprep.subr.mxu0 0.0
      %8638 = vmatpush1.msra.mxu0 0.0
      %8639 = vmatprep.subr.mxu0 0.0
      %8640 = vmatpush1.msra.mxu0 0.0
      %8641 = vmatprep.subr.mxu0 0.0
      %8642 = vmatpush1.msra.mxu0 0.0
      %8643 = vmatprep.subr.mxu0 0.0
      %8644 = vmatpush1.msra.mxu0 0.0
      %8645 = vmatprep.subr.mxu0 0.0
      %8646 = vmatpush1.msra.mxu0 0.0
      %8647 = vmatprep.mubr.f32.mxu0 0.0
      %8648 = vmatmul.mubr.f32.gmra.mrb[0].mxu0 %v8577
      %v8649 = vpop.f32.mrb[0].mxu0
      %v8650 = vadd.f32 0.0, %v8649
      %v8651 = vpop.f32.mrb[0].mxu0
      %v8652 = vadd.f32 0.0, %v8651
      %8653 = vdwg.mxu0
      %8654 = vrot.lane.b32.xlu0 %v7230, 125
      %v8655 = vpop.permute.xlu0 %8654
      %8656 = vrot.lane.b32.xlu0 %v7227, 125
      %v8657 = vpop.permute.xlu0 %8656
      %8658 = vrot.lane.b32.xlu0 %v7232, 125
      %v8659 = vpop.permute.xlu0 %8658
      %v8660 = vsel %vm1741, %v8655, %v8657
      %v8661 = vsel %vm1741, %v8657, %v8659
      %v8663 = vsel %vm2557, %v8565, 0
      %v8665 = vsel %vm2564, %v8660, 0
      %v8667 = vsel %vm2564, %v8661, 0
      %8669 = vmatprep.subr.mxu0 %v8667
      %8670 = vmatpush1.msra.mxu0 %v8665
      %8671 = vmatprep.subr.mxu0 0.0
      %8672 = vmatpush1.msra.mxu0 0.0
      %8673 = vmatprep.subr.mxu0 0.0
      %8674 = vmatpush1.msra.mxu0 0.0
      %8675 = vmatprep.subr.mxu0 0.0
      %8676 = vmatpush1.msra.mxu0 0.0
      %8677 = vmatprep.subr.mxu0 0.0
      %8678 = vmatpush1.msra.mxu0 0.0
      %8679 = vmatprep.subr.mxu0 0.0
      %8680 = vmatpush1.msra.mxu0 0.0
      %8681 = vmatprep.subr.mxu0 0.0
      %8682 = vmatpush1.msra.mxu0 0.0
      %8683 = vmatprep.subr.mxu0 0.0
      %8684 = vmatpush1.msra.mxu0 0.0
      %8685 = vmatprep.subr.mxu0 0.0
      %8686 = vmatpush1.msra.mxu0 0.0
      %8687 = vmatprep.subr.mxu0 0.0
      %8688 = vmatpush1.msra.mxu0 0.0
      %8689 = vmatprep.subr.mxu0 0.0
      %8690 = vmatpush1.msra.mxu0 0.0
      %8691 = vmatprep.subr.mxu0 0.0
      %8692 = vmatpush1.msra.mxu0 0.0
      %8693 = vmatprep.subr.mxu0 0.0
      %8694 = vmatpush1.msra.mxu0 0.0
      %8695 = vmatprep.subr.mxu0 0.0
      %8696 = vmatpush1.msra.mxu0 0.0
      %8697 = vmatprep.subr.mxu0 0.0
      %8698 = vmatpush1.msra.mxu0 0.0
      %8699 = vmatprep.subr.mxu0 0.0
      %8700 = vmatpush1.msra.mxu0 0.0
      %8701 = vmatprep.subr.mxu0 0.0
      %8702 = vmatpush1.msra.mxu0 0.0
      %8703 = vmatprep.subr.mxu0 0.0
      %8704 = vmatpush1.msra.mxu0 0.0
      %8705 = vmatprep.subr.mxu0 0.0
      %8706 = vmatpush1.msra.mxu0 0.0
      %8707 = vmatprep.subr.mxu0 0.0
      %8708 = vmatpush1.msra.mxu0 0.0
      %8709 = vmatprep.subr.mxu0 0.0
      %8710 = vmatpush1.msra.mxu0 0.0
      %8711 = vmatprep.subr.mxu0 0.0
      %8712 = vmatpush1.msra.mxu0 0.0
      %8713 = vmatprep.subr.mxu0 0.0
      %8714 = vmatpush1.msra.mxu0 0.0
      %8715 = vmatprep.subr.mxu0 0.0
      %8716 = vmatpush1.msra.mxu0 0.0
      %8717 = vmatprep.subr.mxu0 0.0
      %8718 = vmatpush1.msra.mxu0 0.0
      %8719 = vmatprep.subr.mxu0 0.0
      %8720 = vmatpush1.msra.mxu0 0.0
      %8721 = vmatprep.subr.mxu0 0.0
      %8722 = vmatpush1.msra.mxu0 0.0
      %8723 = vmatprep.subr.mxu0 0.0
      %8724 = vmatpush1.msra.mxu0 0.0
      %8725 = vmatprep.subr.mxu0 0.0
      %8726 = vmatpush1.msra.mxu0 0.0
      %8727 = vmatprep.subr.mxu0 0.0
      %8728 = vmatpush1.msra.mxu0 0.0
      %8729 = vmatprep.subr.mxu0 0.0
      %8730 = vmatpush1.msra.mxu0 0.0
      %8731 = vmatprep.subr.mxu0 0.0
      %8732 = vmatpush1.msra.mxu0 0.0
      %8733 = vmatprep.mubr.f32.mxu0 0.0
      %8734 = vmatmul.mubr.f32.gmra.mrb[0].mxu0 %v8663
      %v8735 = vpop.f32.mrb[0].mxu0
      %v8736 = vadd.f32 %v8650, %v8735
      %v8737 = vpop.f32.mrb[0].mxu0
      %v8738 = vadd.f32 %v8652, %v8737
      %8739 = vdwg.mxu0
      %s8740 = scalar_lea.vmem %s7, 52
      %v8741 = vld [vmem:[%s8740] sm:$0x7]
      %8742 = vrot.lane.b32.xlu0 %v7230, 93
      %v8743 = vpop.permute.xlu0 %8742
      %8744 = vrot.lane.b32.xlu0 %v7227, 93
      %v8745 = vpop.permute.xlu0 %8744
      %8746 = vrot.lane.b32.xlu0 %v7232, 93
      %v8747 = vpop.permute.xlu0 %8746
      %v8748 = vsel %vm1827, %v8743, %v8745
      %v8749 = vsel %vm1827, %v8745, %v8747
      %v8751 = vsel %vm2557, %v8741, 0
      %v8753 = vsel %vm2564, %v8748, 0
      %v8755 = vsel %vm2564, %v8749, 0
      %8757 = vmatprep.subr.mxu0 %v8755
      %8758 = vmatpush1.msra.mxu0 %v8753
      %8759 = vmatprep.subr.mxu0 0.0
      %8760 = vmatpush1.msra.mxu0 0.0
      %8761 = vmatprep.subr.mxu0 0.0
      %8762 = vmatpush1.msra.mxu0 0.0
      %8763 = vmatprep.subr.mxu0 0.0
      %8764 = vmatpush1.msra.mxu0 0.0
      %8765 = vmatprep.subr.mxu0 0.0
      %8766 = vmatpush1.msra.mxu0 0.0
      %8767 = vmatprep.subr.mxu0 0.0
      %8768 = vmatpush1.msra.mxu0 0.0
      %8769 = vmatprep.subr.mxu0 0.0
      %8770 = vmatpush1.msra.mxu0 0.0
      %8771 = vmatprep.subr.mxu0 0.0
      %8772 = vmatpush1.msra.mxu0 0.0
      %8773 = vmatprep.subr.mxu0 0.0
      %8774 = vmatpush1.msra.mxu0 0.0
      %8775 = vmatprep.subr.mxu0 0.0
      %8776 = vmatpush1.msra.mxu0 0.0
      %8777 = vmatprep.subr.mxu0 0.0
      %8778 = vmatpush1.msra.mxu0 0.0
      %8779 = vmatprep.subr.mxu0 0.0
      %8780 = vmatpush1.msra.mxu0 0.0
      %8781 = vmatprep.subr.mxu0 0.0
      %8782 = vmatpush1.msra.mxu0 0.0
      %8783 = vmatprep.subr.mxu0 0.0
      %8784 = vmatpush1.msra.mxu0 0.0
      %8785 = vmatprep.subr.mxu0 0.0
      %8786 = vmatpush1.msra.mxu0 0.0
      %8787 = vmatprep.subr.mxu0 0.0
      %8788 = vmatpush1.msra.mxu0 0.0
      %8789 = vmatprep.subr.mxu0 0.0
      %8790 = vmatpush1.msra.mxu0 0.0
      %8791 = vmatprep.subr.mxu0 0.0
      %8792 = vmatpush1.msra.mxu0 0.0
      %8793 = vmatprep.subr.mxu0 0.0
      %8794 = vmatpush1.msra.mxu0 0.0
      %8795 = vmatprep.subr.mxu0 0.0
      %8796 = vmatpush1.msra.mxu0 0.0
      %8797 = vmatprep.subr.mxu0 0.0
      %8798 = vmatpush1.msra.mxu0 0.0
      %8799 = vmatprep.subr.mxu0 0.0
      %8800 = vmatpush1.msra.mxu0 0.0
      %8801 = vmatprep.subr.mxu0 0.0
      %8802 = vmatpush1.msra.mxu0 0.0
      %8803 = vmatprep.subr.mxu0 0.0
      %8804 = vmatpush1.msra.mxu0 0.0
      %8805 = vmatprep.subr.mxu0 0.0
      %8806 = vmatpush1.msra.mxu0 0.0
      %8807 = vmatprep.subr.mxu0 0.0
      %8808 = vmatpush1.msra.mxu0 0.0
      %8809 = vmatprep.subr.mxu0 0.0
      %8810 = vmatpush1.msra.mxu0 0.0
      %8811 = vmatprep.subr.mxu0 0.0
      %8812 = vmatpush1.msra.mxu0 0.0
      %8813 = vmatprep.subr.mxu0 0.0
      %8814 = vmatpush1.msra.mxu0 0.0
      %8815 = vmatprep.subr.mxu0 0.0
      %8816 = vmatpush1.msra.mxu0 0.0
      %8817 = vmatprep.subr.mxu0 0.0
      %8818 = vmatpush1.msra.mxu0 0.0
      %8819 = vmatprep.subr.mxu0 0.0
      %8820 = vmatpush1.msra.mxu0 0.0
      %8821 = vmatprep.mubr.f32.mxu0 0.0
      %8822 = vmatmul.mubr.f32.gmra.mrb[0].mxu0 %v8751
      %v8823 = vpop.f32.mrb[0].mxu0
      %v8824 = vadd.f32 0.0, %v8823
      %v8825 = vpop.f32.mrb[0].mxu0
      %v8826 = vadd.f32 0.0, %v8825
      %8827 = vdwg.mxu0
      %v8828 = vadd.f32 %v8736, %v8824
      %v8829 = vadd.f32 %v8738, %v8826
      %s8830 = scalar_lea.vmem %s7, 72
      %v8831 = vld [vmem:[%s8830] sm:$0x7]
      %8832 = vrot.lane.b32.xlu0 %v7230, 77
      %v8833 = vpop.permute.xlu0 %8832
      %8834 = vrot.lane.b32.xlu0 %v7227, 77
      %v8835 = vpop.permute.xlu0 %8834
      %8836 = vrot.lane.b32.xlu0 %v7232, 77
      %v8837 = vpop.permute.xlu0 %8836
      %v8838 = vsel %vm1915, %v8833, %v8835
      %v8839 = vsel %vm1915, %v8835, %v8837
      %v8841 = vsel %vm2557, %v8831, 0
      %v8843 = vsel %vm2564, %v8838, 0
      %v8845 = vsel %vm2564, %v8839, 0
      %8847 = vmatprep.subr.mxu0 %v8845
      %8848 = vmatpush1.msra.mxu0 %v8843
      %8849 = vmatprep.subr.mxu0 0.0
      %8850 = vmatpush1.msra.mxu0 0.0
      %8851 = vmatprep.subr.mxu0 0.0
      %8852 = vmatpush1.msra.mxu0 0.0
      %8853 = vmatprep.subr.mxu0 0.0
      %8854 = vmatpush1.msra.mxu0 0.0
      %8855 = vmatprep.subr.mxu0 0.0
      %8856 = vmatpush1.msra.mxu0 0.0
      %8857 = vmatprep.subr.mxu0 0.0
      %8858 = vmatpush1.msra.mxu0 0.0
      %8859 = vmatprep.subr.mxu0 0.0
      %8860 = vmatpush1.msra.mxu0 0.0
      %8861 = vmatprep.subr.mxu0 0.0
      %8862 = vmatpush1.msra.mxu0 0.0
      %8863 = vmatprep.subr.mxu0 0.0
      %8864 = vmatpush1.msra.mxu0 0.0
      %8865 = vmatprep.subr.mxu0 0.0
      %8866 = vmatpush1.msra.mxu0 0.0
      %8867 = vmatprep.subr.mxu0 0.0
      %8868 = vmatpush1.msra.mxu0 0.0
      %8869 = vmatprep.subr.mxu0 0.0
      %8870 = vmatpush1.msra.mxu0 0.0
      %8871 = vmatprep.subr.mxu0 0.0
      %8872 = vmatpush1.msra.mxu0 0.0
      %8873 = vmatprep.subr.mxu0 0.0
      %8874 = vmatpush1.msra.mxu0 0.0
      %8875 = vmatprep.subr.mxu0 0.0
      %8876 = vmatpush1.msra.mxu0 0.0
      %8877 = vmatprep.subr.mxu0 0.0
      %8878 = vmatpush1.msra.mxu0 0.0
      %8879 = vmatprep.subr.mxu0 0.0
      %8880 = vmatpush1.msra.mxu0 0.0
      %8881 = vmatprep.subr.mxu0 0.0
      %8882 = vmatpush1.msra.mxu0 0.0
      %8883 = vmatprep.subr.mxu0 0.0
      %8884 = vmatpush1.msra.mxu0 0.0
      %8885 = vmatprep.subr.mxu0 0.0
      %8886 = vmatpush1.msra.mxu0 0.0
      %8887 = vmatprep.subr.mxu0 0.0
      %8888 = vmatpush1.msra.mxu0 0.0
      %8889 = vmatprep.subr.mxu0 0.0
      %8890 = vmatpush1.msra.mxu0 0.0
      %8891 = vmatprep.subr.mxu0 0.0
      %8892 = vmatpush1.msra.mxu0 0.0
      %8893 = vmatprep.subr.mxu0 0.0
      %8894 = vmatpush1.msra.mxu0 0.0
      %8895 = vmatprep.subr.mxu0 0.0
      %8896 = vmatpush1.msra.mxu0 0.0
      %8897 = vmatprep.subr.mxu0 0.0
      %8898 = vmatpush1.msra.mxu0 0.0
      %8899 = vmatprep.subr.mxu0 0.0
      %8900 = vmatpush1.msra.mxu0 0.0
      %8901 = vmatprep.subr.mxu0 0.0
      %8902 = vmatpush1.msra.mxu0 0.0
      %8903 = vmatprep.subr.mxu0 0.0
      %8904 = vmatpush1.msra.mxu0 0.0
      %8905 = vmatprep.subr.mxu0 0.0
      %8906 = vmatpush1.msra.mxu0 0.0
      %8907 = vmatprep.subr.mxu0 0.0
      %8908 = vmatpush1.msra.mxu0 0.0
      %8909 = vmatprep.subr.mxu0 0.0
      %8910 = vmatpush1.msra.mxu0 0.0
      %8911 = vmatprep.mubr.f32.mxu0 0.0
      %8912 = vmatmul.mubr.f32.gmra.mrb[0].mxu0 %v8841
      %v8913 = vpop.f32.mrb[0].mxu0
      %v8914 = vadd.f32 0.0, %v8913
      %v8915 = vpop.f32.mrb[0].mxu0
      %v8916 = vadd.f32 0.0, %v8915
      %8917 = vdwg.mxu0
      %v8918 = vadd.f32 %v8828, %v8914
      %v8919 = vadd.f32 %v8829, %v8916
      %s8920 = scalar_lea.vmem %s7, 92
      %v8921 = vld [vmem:[%s8920] sm:$0x7]
      %8922 = vrot.lane.b32.xlu0 %v7230, 61
      %v8923 = vpop.permute.xlu0 %8922
      %8924 = vrot.lane.b32.xlu0 %v7227, 61
      %v8925 = vpop.permute.xlu0 %8924
      %8926 = vrot.lane.b32.xlu0 %v7232, 61
      %v8927 = vpop.permute.xlu0 %8926
      %v8928 = vsel %vm2005, %v8923, %v8925
      %v8929 = vsel %vm2005, %v8925, %v8927
      %v8931 = vsel %vm2557, %v8921, 0
      %v8933 = vsel %vm2564, %v8928, 0
      %v8935 = vsel %vm2564, %v8929, 0
      %8937 = vmatprep.subr.mxu0 %v8935
      %8938 = vmatpush1.msra.mxu0 %v8933
      %8939 = vmatprep.subr.mxu0 0.0
      %8940 = vmatpush1.msra.mxu0 0.0
      %8941 = vmatprep.subr.mxu0 0.0
      %8942 = vmatpush1.msra.mxu0 0.0
      %8943 = vmatprep.subr.mxu0 0.0
      %8944 = vmatpush1.msra.mxu0 0.0
      %8945 = vmatprep.subr.mxu0 0.0
      %8946 = vmatpush1.msra.mxu0 0.0
      %8947 = vmatprep.subr.mxu0 0.0
      %8948 = vmatpush1.msra.mxu0 0.0
      %8949 = vmatprep.subr.mxu0 0.0
      %8950 = vmatpush1.msra.mxu0 0.0
      %8951 = vmatprep.subr.mxu0 0.0
      %8952 = vmatpush1.msra.mxu0 0.0
      %8953 = vmatprep.subr.mxu0 0.0
      %8954 = vmatpush1.msra.mxu0 0.0
      %8955 = vmatprep.subr.mxu0 0.0
      %8956 = vmatpush1.msra.mxu0 0.0
      %8957 = vmatprep.subr.mxu0 0.0
      %8958 = vmatpush1.msra.mxu0 0.0
      %8959 = vmatprep.subr.mxu0 0.0
      %8960 = vmatpush1.msra.mxu0 0.0
      %8961 = vmatprep.subr.mxu0 0.0
      %8962 = vmatpush1.msra.mxu0 0.0
      %8963 = vmatprep.subr.mxu0 0.0
      %8964 = vmatpush1.msra.mxu0 0.0
      %8965 = vmatprep.subr.mxu0 0.0
      %8966 = vmatpush1.msra.mxu0 0.0
      %8967 = vmatprep.subr.mxu0 0.0
      %8968 = vmatpush1.msra.mxu0 0.0
      %8969 = vmatprep.subr.mxu0 0.0
      %8970 = vmatpush1.msra.mxu0 0.0
      %8971 = vmatprep.subr.mxu0 0.0
      %8972 = vmatpush1.msra.mxu0 0.0
      %8973 = vmatprep.subr.mxu0 0.0
      %8974 = vmatpush1.msra.mxu0 0.0
      %8975 = vmatprep.subr.mxu0 0.0
      %8976 = vmatpush1.msra.mxu0 0.0
      %8977 = vmatprep.subr.mxu0 0.0
      %8978 = vmatpush1.msra.mxu0 0.0
      %8979 = vmatprep.subr.mxu0 0.0
      %8980 = vmatpush1.msra.mxu0 0.0
      %8981 = vmatprep.subr.mxu0 0.0
      %8982 = vmatpush1.msra.mxu0 0.0
      %8983 = vmatprep.subr.mxu0 0.0
      %8984 = vmatpush1.msra.mxu0 0.0
      %8985 = vmatprep.subr.mxu0 0.0
      %8986 = vmatpush1.msra.mxu0 0.0
      %8987 = vmatprep.subr.mxu0 0.0
      %8988 = vmatpush1.msra.mxu0 0.0
      %8989 = vmatprep.subr.mxu0 0.0
      %8990 = vmatpush1.msra.mxu0 0.0
      %8991 = vmatprep.subr.mxu0 0.0
      %8992 = vmatpush1.msra.mxu0 0.0
      %8993 = vmatprep.subr.mxu0 0.0
      %8994 = vmatpush1.msra.mxu0 0.0
      %8995 = vmatprep.subr.mxu0 0.0
      %8996 = vmatpush1.msra.mxu0 0.0
      %8997 = vmatprep.subr.mxu0 0.0
      %8998 = vmatpush1.msra.mxu0 0.0
      %8999 = vmatprep.subr.mxu0 0.0
      %9000 = vmatpush1.msra.mxu0 0.0
      %9001 = vmatprep.mubr.f32.mxu0 0.0
      %9002 = vmatmul.mubr.f32.gmra.mrb[0].mxu0 %v8931
      %v9003 = vpop.f32.mrb[0].mxu0
      %v9004 = vadd.f32 0.0, %v9003
      %v9005 = vpop.f32.mrb[0].mxu0
      %v9006 = vadd.f32 0.0, %v9005
      %9007 = vdwg.mxu0
      %v9008 = vadd.f32 %v8918, %v9004
      %v9009 = vadd.f32 %v8919, %v9006
      %s9010 = scalar_lea.vmem %s7, 16
      %v9011 = vld [vmem:[%s9010] sm:$0x7]
      %s9012 = scalar_lea.vmem %s7, 36
      %v9013 = vld [vmem:[%s9012] sm:$0x7]
      %9014 = vrot.lane.b32.xlu0 %v7230, 108
      %v9015 = vpop.permute.xlu0 %9014
      %9016 = vrot.lane.b32.xlu0 %v7227, 108
      %v9017 = vpop.permute.xlu0 %9016
      %9018 = vrot.lane.b32.xlu0 %v7232, 108
      %v9019 = vpop.permute.xlu0 %9018
      %v9020 = vsel %vm2096, %v9015, %v9017
      %v9021 = vsel %vm2096, %v9017, %v9019
      %v9023 = vsel %vm2557, %v9013, 0
      %v9025 = vsel %vm2564, %v9020, 0
      %v9027 = vsel %vm2564, %v9021, 0
      %9029 = vmatprep.subr.mxu0 %v9027
      %9030 = vmatpush1.msra.mxu0 %v9025
      %9031 = vmatprep.subr.mxu0 0.0
      %9032 = vmatpush1.msra.mxu0 0.0
      %9033 = vmatprep.subr.mxu0 0.0
      %9034 = vmatpush1.msra.mxu0 0.0
      %9035 = vmatprep.subr.mxu0 0.0
      %9036 = vmatpush1.msra.mxu0 0.0
      %9037 = vmatprep.subr.mxu0 0.0
      %9038 = vmatpush1.msra.mxu0 0.0
      %9039 = vmatprep.subr.mxu0 0.0
      %9040 = vmatpush1.msra.mxu0 0.0
      %9041 = vmatprep.subr.mxu0 0.0
      %9042 = vmatpush1.msra.mxu0 0.0
      %9043 = vmatprep.subr.mxu0 0.0
      %9044 = vmatpush1.msra.mxu0 0.0
      %9045 = vmatprep.subr.mxu0 0.0
      %9046 = vmatpush1.msra.mxu0 0.0
      %9047 = vmatprep.subr.mxu0 0.0
      %9048 = vmatpush1.msra.mxu0 0.0
      %9049 = vmatprep.subr.mxu0 0.0
      %9050 = vmatpush1.msra.mxu0 0.0
      %9051 = vmatprep.subr.mxu0 0.0
      %9052 = vmatpush1.msra.mxu0 0.0
      %9053 = vmatprep.subr.mxu0 0.0
      %9054 = vmatpush1.msra.mxu0 0.0
      %9055 = vmatprep.subr.mxu0 0.0
      %9056 = vmatpush1.msra.mxu0 0.0
      %9057 = vmatprep.subr.mxu0 0.0
      %9058 = vmatpush1.msra.mxu0 0.0
      %9059 = vmatprep.subr.mxu0 0.0
      %9060 = vmatpush1.msra.mxu0 0.0
      %9061 = vmatprep.subr.mxu0 0.0
      %9062 = vmatpush1.msra.mxu0 0.0
      %9063 = vmatprep.subr.mxu0 0.0
      %9064 = vmatpush1.msra.mxu0 0.0
      %9065 = vmatprep.subr.mxu0 0.0
      %9066 = vmatpush1.msra.mxu0 0.0
      %9067 = vmatprep.subr.mxu0 0.0
      %9068 = vmatpush1.msra.mxu0 0.0
      %9069 = vmatprep.subr.mxu0 0.0
      %9070 = vmatpush1.msra.mxu0 0.0
      %9071 = vmatprep.subr.mxu0 0.0
      %9072 = vmatpush1.msra.mxu0 0.0
      %9073 = vmatprep.subr.mxu0 0.0
      %9074 = vmatpush1.msra.mxu0 0.0
      %9075 = vmatprep.subr.mxu0 0.0
      %9076 = vmatpush1.msra.mxu0 0.0
      %9077 = vmatprep.subr.mxu0 0.0
      %9078 = vmatpush1.msra.mxu0 0.0
      %9079 = vmatprep.subr.mxu0 0.0
      %9080 = vmatpush1.msra.mxu0 0.0
      %9081 = vmatprep.subr.mxu0 0.0
      %9082 = vmatpush1.msra.mxu0 0.0
      %9083 = vmatprep.subr.mxu0 0.0
      %9084 = vmatpush1.msra.mxu0 0.0
      %9085 = vmatprep.subr.mxu0 0.0
      %9086 = vmatpush1.msra.mxu0 0.0
      %9087 = vmatprep.subr.mxu0 0.0
      %9088 = vmatpush1.msra.mxu0 0.0
      %9089 = vmatprep.subr.mxu0 0.0
      %9090 = vmatpush1.msra.mxu0 0.0
      %9091 = vmatprep.subr.mxu0 0.0
      %9092 = vmatpush1.msra.mxu0 0.0
      %9093 = vmatprep.mubr.f32.mxu0 0.0
      %9094 = vmatmul.mubr.f32.gmra.mrb[0].mxu0 %v9023
      %v9095 = vpop.f32.mrb[0].mxu0
      %v9096 = vadd.f32 0.0, %v9095
      %v9097 = vpop.f32.mrb[0].mxu0
      %v9098 = vadd.f32 0.0, %v9097
      %9099 = vdwg.mxu0
      %9100 = vrot.lane.b32.xlu0 %v7230, 124
      %v9101 = vpop.permute.xlu0 %9100
      %9102 = vrot.lane.b32.xlu0 %v7227, 124
      %v9103 = vpop.permute.xlu0 %9102
      %9104 = vrot.lane.b32.xlu0 %v7232, 124
      %v9105 = vpop.permute.xlu0 %9104
      %v9106 = vsel %vm2180, %v9101, %v9103
      %v9107 = vsel %vm2180, %v9103, %v9105
      %v9109 = vsel %vm2557, %v9011, 0
      %v9111 = vsel %vm2564, %v9106, 0
      %v9113 = vsel %vm2564, %v9107, 0
      %9115 = vmatprep.subr.mxu0 %v9113
      %9116 = vmatpush1.msra.mxu0 %v9111
      %9117 = vmatprep.subr.mxu0 0.0
      %9118 = vmatpush1.msra.mxu0 0.0
      %9119 = vmatprep.subr.mxu0 0.0
      %9120 = vmatpush1.msra.mxu0 0.0
      %9121 = vmatprep.subr.mxu0 0.0
      %9122 = vmatpush1.msra.mxu0 0.0
      %9123 = vmatprep.subr.mxu0 0.0
      %9124 = vmatpush1.msra.mxu0 0.0
      %9125 = vmatprep.subr.mxu0 0.0
      %9126 = vmatpush1.msra.mxu0 0.0
      %9127 = vmatprep.subr.mxu0 0.0
      %9128 = vmatpush1.msra.mxu0 0.0
      %9129 = vmatprep.subr.mxu0 0.0
      %9130 = vmatpush1.msra.mxu0 0.0
      %9131 = vmatprep.subr.mxu0 0.0
      %9132 = vmatpush1.msra.mxu0 0.0
      %9133 = vmatprep.subr.mxu0 0.0
      %9134 = vmatpush1.msra.mxu0 0.0
      %9135 = vmatprep.subr.mxu0 0.0
      %9136 = vmatpush1.msra.mxu0 0.0
      %9137 = vmatprep.subr.mxu0 0.0
      %9138 = vmatpush1.msra.mxu0 0.0
      %9139 = vmatprep.subr.mxu0 0.0
      %9140 = vmatpush1.msra.mxu0 0.0
      %9141 = vmatprep.subr.mxu0 0.0
      %9142 = vmatpush1.msra.mxu0 0.0
      %9143 = vmatprep.subr.mxu0 0.0
      %9144 = vmatpush1.msra.mxu0 0.0
      %9145 = vmatprep.subr.mxu0 0.0
      %9146 = vmatpush1.msra.mxu0 0.0
      %9147 = vmatprep.subr.mxu0 0.0
      %9148 = vmatpush1.msra.mxu0 0.0
      %9149 = vmatprep.subr.mxu0 0.0
      %9150 = vmatpush1.msra.mxu0 0.0
      %9151 = vmatprep.subr.mxu0 0.0
      %9152 = vmatpush1.msra.mxu0 0.0
      %9153 = vmatprep.subr.mxu0 0.0
      %9154 = vmatpush1.msra.mxu0 0.0
      %9155 = vmatprep.subr.mxu0 0.0
      %9156 = vmatpush1.msra.mxu0 0.0
      %9157 = vmatprep.subr.mxu0 0.0
      %9158 = vmatpush1.msra.mxu0 0.0
      %9159 = vmatprep.subr.mxu0 0.0
      %9160 = vmatpush1.msra.mxu0 0.0
      %9161 = vmatprep.subr.mxu0 0.0
      %9162 = vmatpush1.msra.mxu0 0.0
      %9163 = vmatprep.subr.mxu0 0.0
      %9164 = vmatpush1.msra.mxu0 0.0
      %9165 = vmatprep.subr.mxu0 0.0
      %9166 = vmatpush1.msra.mxu0 0.0
      %9167 = vmatprep.subr.mxu0 0.0
      %9168 = vmatpush1.msra.mxu0 0.0
      %9169 = vmatprep.subr.mxu0 0.0
      %9170 = vmatpush1.msra.mxu0 0.0
      %9171 = vmatprep.subr.mxu0 0.0
      %9172 = vmatpush1.msra.mxu0 0.0
      %9173 = vmatprep.subr.mxu0 0.0
      %9174 = vmatpush1.msra.mxu0 0.0
      %9175 = vmatprep.subr.mxu0 0.0
      %9176 = vmatpush1.msra.mxu0 0.0
      %9177 = vmatprep.subr.mxu0 0.0
      %9178 = vmatpush1.msra.mxu0 0.0
      %9179 = vmatprep.mubr.f32.mxu0 0.0
      %9180 = vmatmul.mubr.f32.gmra.mrb[0].mxu0 %v9109
      %v9181 = vpop.f32.mrb[0].mxu0
      %v9182 = vadd.f32 %v9096, %v9181
      %v9183 = vpop.f32.mrb[0].mxu0
      %v9184 = vadd.f32 %v9098, %v9183
      %9185 = vdwg.mxu0
      %s9186 = scalar_lea.vmem %s7, 56
      %v9187 = vld [vmem:[%s9186] sm:$0x7]
      %9188 = vrot.lane.b32.xlu0 %v7230, 92
      %v9189 = vpop.permute.xlu0 %9188
      %9190 = vrot.lane.b32.xlu0 %v7227, 92
      %v9191 = vpop.permute.xlu0 %9190
      %9192 = vrot.lane.b32.xlu0 %v7232, 92
      %v9193 = vpop.permute.xlu0 %9192
      %v9194 = vsel %vm2266, %v9189, %v9191
      %v9195 = vsel %vm2266, %v9191, %v9193
      %v9197 = vsel %vm2557, %v9187, 0
      %v9199 = vsel %vm2564, %v9194, 0
      %v9201 = vsel %vm2564, %v9195, 0
      %9203 = vmatprep.subr.mxu0 %v9201
      %9204 = vmatpush1.msra.mxu0 %v9199
      %9205 = vmatprep.subr.mxu0 0.0
      %9206 = vmatpush1.msra.mxu0 0.0
      %9207 = vmatprep.subr.mxu0 0.0
      %9208 = vmatpush1.msra.mxu0 0.0
      %9209 = vmatprep.subr.mxu0 0.0
      %9210 = vmatpush1.msra.mxu0 0.0
      %9211 = vmatprep.subr.mxu0 0.0
      %9212 = vmatpush1.msra.mxu0 0.0
      %9213 = vmatprep.subr.mxu0 0.0
      %9214 = vmatpush1.msra.mxu0 0.0
      %9215 = vmatprep.subr.mxu0 0.0
      %9216 = vmatpush1.msra.mxu0 0.0
      %9217 = vmatprep.subr.mxu0 0.0
      %9218 = vmatpush1.msra.mxu0 0.0
      %9219 = vmatprep.subr.mxu0 0.0
      %9220 = vmatpush1.msra.mxu0 0.0
      %9221 = vmatprep.subr.mxu0 0.0
      %9222 = vmatpush1.msra.mxu0 0.0
      %9223 = vmatprep.subr.mxu0 0.0
      %9224 = vmatpush1.msra.mxu0 0.0
      %9225 = vmatprep.subr.mxu0 0.0
      %9226 = vmatpush1.msra.mxu0 0.0
      %9227 = vmatprep.subr.mxu0 0.0
      %9228 = vmatpush1.msra.mxu0 0.0
      %9229 = vmatprep.subr.mxu0 0.0
      %9230 = vmatpush1.msra.mxu0 0.0
      %9231 = vmatprep.subr.mxu0 0.0
      %9232 = vmatpush1.msra.mxu0 0.0
      %9233 = vmatprep.subr.mxu0 0.0
      %9234 = vmatpush1.msra.mxu0 0.0
      %9235 = vmatprep.subr.mxu0 0.0
      %9236 = vmatpush1.msra.mxu0 0.0
      %9237 = vmatprep.subr.mxu0 0.0
      %9238 = vmatpush1.msra.mxu0 0.0
      %9239 = vmatprep.subr.mxu0 0.0
      %9240 = vmatpush1.msra.mxu0 0.0
      %9241 = vmatprep.subr.mxu0 0.0
      %9242 = vmatpush1.msra.mxu0 0.0
      %9243 = vmatprep.subr.mxu0 0.0
      %9244 = vmatpush1.msra.mxu0 0.0
      %9245 = vmatprep.subr.mxu0 0.0
      %9246 = vmatpush1.msra.mxu0 0.0
      %9247 = vmatprep.subr.mxu0 0.0
      %9248 = vmatpush1.msra.mxu0 0.0
      %9249 = vmatprep.subr.mxu0 0.0
      %9250 = vmatpush1.msra.mxu0 0.0
      %9251 = vmatprep.subr.mxu0 0.0
      %9252 = vmatpush1.msra.mxu0 0.0
      %9253 = vmatprep.subr.mxu0 0.0
      %9254 = vmatpush1.msra.mxu0 0.0
      %9255 = vmatprep.subr.mxu0 0.0
      %9256 = vmatpush1.msra.mxu0 0.0
      %9257 = vmatprep.subr.mxu0 0.0
      %9258 = vmatpush1.msra.mxu0 0.0
      %9259 = vmatprep.subr.mxu0 0.0
      %9260 = vmatpush1.msra.mxu0 0.0
      %9261 = vmatprep.subr.mxu0 0.0
      %9262 = vmatpush1.msra.mxu0 0.0
      %9263 = vmatprep.subr.mxu0 0.0
      %9264 = vmatpush1.msra.mxu0 0.0
      %9265 = vmatprep.subr.mxu0 0.0
      %9266 = vmatpush1.msra.mxu0 0.0
      %9267 = vmatprep.mubr.f32.mxu0 0.0
      %9268 = vmatmul.mubr.f32.gmra.mrb[0].mxu0 %v9197
      %v9269 = vpop.f32.mrb[0].mxu0
      %v9270 = vadd.f32 0.0, %v9269
      %v9271 = vpop.f32.mrb[0].mxu0
      %v9272 = vadd.f32 0.0, %v9271
      %9273 = vdwg.mxu0
      %v9274 = vadd.f32 %v9182, %v9270
      %v9275 = vadd.f32 %v9184, %v9272
      %s9276 = scalar_lea.vmem %s7, 76
      %v9277 = vld [vmem:[%s9276] sm:$0x7]
      %9278 = vrot.lane.b32.xlu0 %v7230, 76
      %v9279 = vpop.permute.xlu0 %9278
      %9280 = vrot.lane.b32.xlu0 %v7227, 76
      %v9281 = vpop.permute.xlu0 %9280
      %9282 = vrot.lane.b32.xlu0 %v7232, 76
      %v9283 = vpop.permute.xlu0 %9282
      %v9284 = vsel %vm2354, %v9279, %v9281
      %v9285 = vsel %vm2354, %v9281, %v9283
      %v9287 = vsel %vm2557, %v9277, 0
      %v9289 = vsel %vm2564, %v9284, 0
      %v9291 = vsel %vm2564, %v9285, 0
      %9293 = vmatprep.subr.mxu0 %v9291
      %9294 = vmatpush1.msra.mxu0 %v9289
      %9295 = vmatprep.subr.mxu0 0.0
      %9296 = vmatpush1.msra.mxu0 0.0
      %9297 = vmatprep.subr.mxu0 0.0
      %9298 = vmatpush1.msra.mxu0 0.0
      %9299 = vmatprep.subr.mxu0 0.0
      %9300 = vmatpush1.msra.mxu0 0.0
      %9301 = vmatprep.subr.mxu0 0.0
      %9302 = vmatpush1.msra.mxu0 0.0
      %9303 = vmatprep.subr.mxu0 0.0
      %9304 = vmatpush1.msra.mxu0 0.0
      %9305 = vmatprep.subr.mxu0 0.0
      %9306 = vmatpush1.msra.mxu0 0.0
      %9307 = vmatprep.subr.mxu0 0.0
      %9308 = vmatpush1.msra.mxu0 0.0
      %9309 = vmatprep.subr.mxu0 0.0
      %9310 = vmatpush1.msra.mxu0 0.0
      %9311 = vmatprep.subr.mxu0 0.0
      %9312 = vmatpush1.msra.mxu0 0.0
      %9313 = vmatprep.subr.mxu0 0.0
      %9314 = vmatpush1.msra.mxu0 0.0
      %9315 = vmatprep.subr.mxu0 0.0
      %9316 = vmatpush1.msra.mxu0 0.0
      %9317 = vmatprep.subr.mxu0 0.0
      %9318 = vmatpush1.msra.mxu0 0.0
      %9319 = vmatprep.subr.mxu0 0.0
      %9320 = vmatpush1.msra.mxu0 0.0
      %9321 = vmatprep.subr.mxu0 0.0
      %9322 = vmatpush1.msra.mxu0 0.0
      %9323 = vmatprep.subr.mxu0 0.0
      %9324 = vmatpush1.msra.mxu0 0.0
      %9325 = vmatprep.subr.mxu0 0.0
      %9326 = vmatpush1.msra.mxu0 0.0
      %9327 = vmatprep.subr.mxu0 0.0
      %9328 = vmatpush1.msra.mxu0 0.0
      %9329 = vmatprep.subr.mxu0 0.0
      %9330 = vmatpush1.msra.mxu0 0.0
      %9331 = vmatprep.subr.mxu0 0.0
      %9332 = vmatpush1.msra.mxu0 0.0
      %9333 = vmatprep.subr.mxu0 0.0
      %9334 = vmatpush1.msra.mxu0 0.0
      %9335 = vmatprep.subr.mxu0 0.0
      %9336 = vmatpush1.msra.mxu0 0.0
      %9337 = vmatprep.subr.mxu0 0.0
      %9338 = vmatpush1.msra.mxu0 0.0
      %9339 = vmatprep.subr.mxu0 0.0
      %9340 = vmatpush1.msra.mxu0 0.0
      %9341 = vmatprep.subr.mxu0 0.0
      %9342 = vmatpush1.msra.mxu0 0.0
      %9343 = vmatprep.subr.mxu0 0.0
      %9344 = vmatpush1.msra.mxu0 0.0
      %9345 = vmatprep.subr.mxu0 0.0
      %9346 = vmatpush1.msra.mxu0 0.0
      %9347 = vmatprep.subr.mxu0 0.0
      %9348 = vmatpush1.msra.mxu0 0.0
      %9349 = vmatprep.subr.mxu0 0.0
      %9350 = vmatpush1.msra.mxu0 0.0
      %9351 = vmatprep.subr.mxu0 0.0
      %9352 = vmatpush1.msra.mxu0 0.0
      %9353 = vmatprep.subr.mxu0 0.0
      %9354 = vmatpush1.msra.mxu0 0.0
      %9355 = vmatprep.subr.mxu0 0.0
      %9356 = vmatpush1.msra.mxu0 0.0
      %9357 = vmatprep.mubr.f32.mxu0 0.0
      %9358 = vmatmul.mubr.f32.gmra.mrb[0].mxu0 %v9287
      %v9359 = vpop.f32.mrb[0].mxu0
      %v9360 = vadd.f32 0.0, %v9359
      %v9361 = vpop.f32.mrb[0].mxu0
      %v9362 = vadd.f32 0.0, %v9361
      %9363 = vdwg.mxu0
      %v9364 = vadd.f32 %v9274, %v9360
      %v9365 = vadd.f32 %v9275, %v9362
      %s9366 = scalar_lea.vmem %s7, 96
      %v9367 = vld [vmem:[%s9366] sm:$0x7]
      %9368 = vrot.lane.b32.xlu0 %v7230, 60
      %v9369 = vpop.permute.xlu0 %9368
      %9370 = vrot.lane.b32.xlu0 %v7227, 60
      %v9371 = vpop.permute.xlu0 %9370
      %9372 = vrot.lane.b32.xlu0 %v7232, 60
      %v9373 = vpop.permute.xlu0 %9372
      %v9374 = vsel %vm2444, %v9369, %v9371
      %v9375 = vsel %vm2444, %v9371, %v9373
      %v9377 = vsel %vm2557, %v9367, 0
      %v9379 = vsel %vm2564, %v9374, 0
      %v9381 = vsel %vm2564, %v9375, 0
      %9383 = vmatprep.subr.mxu0 %v9381
      %9384 = vmatpush1.msra.mxu0 %v9379
      %9385 = vmatprep.subr.mxu0 0.0
      %9386 = vmatpush1.msra.mxu0 0.0
      %9387 = vmatprep.subr.mxu0 0.0
      %9388 = vmatpush1.msra.mxu0 0.0
      %9389 = vmatprep.subr.mxu0 0.0
      %9390 = vmatpush1.msra.mxu0 0.0
      %9391 = vmatprep.subr.mxu0 0.0
      %9392 = vmatpush1.msra.mxu0 0.0
      %9393 = vmatprep.subr.mxu0 0.0
      %9394 = vmatpush1.msra.mxu0 0.0
      %9395 = vmatprep.subr.mxu0 0.0
      %9396 = vmatpush1.msra.mxu0 0.0
      %9397 = vmatprep.subr.mxu0 0.0
      %9398 = vmatpush1.msra.mxu0 0.0
      %9399 = vmatprep.subr.mxu0 0.0
      %9400 = vmatpush1.msra.mxu0 0.0
      %9401 = vmatprep.subr.mxu0 0.0
      %9402 = vmatpush1.msra.mxu0 0.0
      %9403 = vmatprep.subr.mxu0 0.0
      %9404 = vmatpush1.msra.mxu0 0.0
      %9405 = vmatprep.subr.mxu0 0.0
      %9406 = vmatpush1.msra.mxu0 0.0
      %9407 = vmatprep.subr.mxu0 0.0
      %9408 = vmatpush1.msra.mxu0 0.0
      %9409 = vmatprep.subr.mxu0 0.0
      %9410 = vmatpush1.msra.mxu0 0.0
      %9411 = vmatprep.subr.mxu0 0.0
      %9412 = vmatpush1.msra.mxu0 0.0
      %9413 = vmatprep.subr.mxu0 0.0
      %9414 = vmatpush1.msra.mxu0 0.0
      %9415 = vmatprep.subr.mxu0 0.0
      %9416 = vmatpush1.msra.mxu0 0.0
      %9417 = vmatprep.subr.mxu0 0.0
      %9418 = vmatpush1.msra.mxu0 0.0
      %9419 = vmatprep.subr.mxu0 0.0
      %9420 = vmatpush1.msra.mxu0 0.0
      %9421 = vmatprep.subr.mxu0 0.0
      %9422 = vmatpush1.msra.mxu0 0.0
      %9423 = vmatprep.subr.mxu0 0.0
      %9424 = vmatpush1.msra.mxu0 0.0
      %9425 = vmatprep.subr.mxu0 0.0
      %9426 = vmatpush1.msra.mxu0 0.0
      %9427 = vmatprep.subr.mxu0 0.0
      %9428 = vmatpush1.msra.mxu0 0.0
      %9429 = vmatprep.subr.mxu0 0.0
      %9430 = vmatpush1.msra.mxu0 0.0
      %9431 = vmatprep.subr.mxu0 0.0
      %9432 = vmatpush1.msra.mxu0 0.0
      %9433 = vmatprep.subr.mxu0 0.0
      %9434 = vmatpush1.msra.mxu0 0.0
      %9435 = vmatprep.subr.mxu0 0.0
      %9436 = vmatpush1.msra.mxu0 0.0
      %9437 = vmatprep.subr.mxu0 0.0
      %9438 = vmatpush1.msra.mxu0 0.0
      %9439 = vmatprep.subr.mxu0 0.0
      %9440 = vmatpush1.msra.mxu0 0.0
      %9441 = vmatprep.subr.mxu0 0.0
      %9442 = vmatpush1.msra.mxu0 0.0
      %9443 = vmatprep.subr.mxu0 0.0
      %9444 = vmatpush1.msra.mxu0 0.0
      %9445 = vmatprep.subr.mxu0 0.0
      %9446 = vmatpush1.msra.mxu0 0.0
      %9447 = vmatprep.mubr.f32.mxu0 0.0
      %9448 = vmatmul.mubr.f32.gmra.mrb[0].mxu0 %v9377
      %v9449 = vpop.f32.mrb[0].mxu0
      %v9450 = vadd.f32 0.0, %v9449
      %v9451 = vpop.f32.mrb[0].mxu0
      %v9452 = vadd.f32 0.0, %v9451
      %9453 = vdwg.mxu0
      %v9454 = vadd.f32 %v9364, %v9450
      %v9455 = vadd.f32 %v9365, %v9452
      %v9456 = vadd.f32 %v7670, %v8116
      %v9457 = vadd.f32 %v7671, %v8117
      %v9458 = vadd.f32 %v8562, %v9008
      %v9459 = vadd.f32 %v8563, %v9009
      %v9460 = vadd.f32 %v9456, %v9458
      %v9461 = vadd.f32 %v9457, %v9459
      %v9462 = vadd.f32 %v9460, %v9454
      %v9463 = vadd.f32 %v9461, %v9455
      %v9464 = vld [vmem:[%s8] sm:$0x7]
      %9466 = vset.pattern.permute.xlu0 0
      %9467 = vperm.xlu0 %9466, %v9464
      %v9468 = vpop.permute.xlu0 %9467
      %v9470 = vadd.f32 %v9462, %v9468
      %v9471 = vadd.f32 %v9463, %v9468
      %v9472 = vmax.f32 %v9470, 0.0
      %v9473 = vmax.f32 %v9471, 0.0
      %v9474 = vxor.u32 %v9472, 2147483648
      %v9475 = vxor.u32 %v9473, 2147483648
      %v9476 = vmul.f32 %v9474, 1.442695
      %v9477 = vpow.pop %v9476
      %v9478 = vmul.f32 %v9475, 1.442695
      %v9479 = vpow.pop %v9478
      %v9480 = vadd.f32 %v9477, 1.0
      %v9481 = vadd.f32 %v9479, 1.0
      %v9482 = vrcp.pop %v9480
      %v9483 = vmul.f32 1.0, %v9482
      %v9484 = vrcp.pop %v9481
      %v9485 = vmul.f32 1.0, %v9484
      %v9488 = vcombine.low %v9483, %v9485
      %9490 = vst [vmem:[%s332] sm:$0x77] %v9488
      %p9491 = scmp.lt.s32.totalorder %s20, 1
      %s9492 = scalar_select %p9491, %s20, 1
      %s9493 = smul.addr %s9492, 2
      %s9494 = smul.addr %s9493, 4
      %s9495 = scalar_lea.vmem %s9, %s9494
      // Predicated region
      $region57: #{basic_autoencoder_forward.1} parent=55 // pred_check
        %p9496 = pneg %p232
      $region58: #{basic_autoencoder_forward.1} parent=55 // pred_check_branch
        %9498 = sbr.rel (%p9496) target = $region60
      $region59: #{basic_autoencoder_forward.1} parent=55 // pred_region
        _
      $region60: #{basic_autoencoder_forward.1} parent=55 // pred_fallthru
        _
    $region56: #{basic_autoencoder_forward.1} parent=5 // pred_fallthru
      _
    %p9499 = scmp.le.s32.totalorder 2, %s15
    // Predicated region
    $region61: #{basic_autoencoder_forward.1} parent=5 // pred_check
      %p9500 = pneg %p9499
    $region62: #{basic_autoencoder_forward.1} parent=5 // pred_check_branch
      %9502 = sbr.rel (%p9500) target = $region64
    $region63: #{basic_autoencoder_forward.1} parent=5 // pred_region
      %s9503 = ssub.s32 %s15, 2
      // Predicated region
      $region65: #{basic_autoencoder_forward.1} parent=63 // pred_check
        %p9504 = pneg %p238
      $region66: #{basic_autoencoder_forward.1} parent=63 // pred_check_branch
        %9506 = sbr.rel (%p9504) target = $region68
      $region67: #{basic_autoencoder_forward.1} parent=63 // pred_region
        %p9507 = scmp.lt.s32.totalorder %s21, 1
        %s9508 = scalar_select %p9507, %s21, 1
        %s9509 = smul.addr %s9508, 2
        %s9510 = smul.addr %s9509, 4
        %s9511 = scalar_lea.vmem %s9, %s9510
      $region68: #{basic_autoencoder_forward.1} parent=63 // pred_fallthru
        _
    $region64: #{basic_autoencoder_forward.1} parent=5 // pred_fallthru
      _
  $region6: #{basic_autoencoder_forward.1} parent=0 // loop_footer
    %s19 = sadd.s32 1, %s15
  $region7: #{basic_autoencoder_forward.1} parent=0 // loop_footer_branch
    %14 = sbr.rel target = $region3
  $region8: #{basic_autoencoder_forward.1} parent=0 // loop_exit
    _

</llo_original>
